<compile_context>
chip_gen: v6e
topology: v6e:2x2x1
jax: 0.10.0
libtpu: 0.0.40
codegen_flags: <defaults>
</compile_context>

<pallas_src>
import functools
import math

import jax
import jax.numpy as jnp
import numpy as np
from jax.experimental import pallas as pl
from jax.experimental.pallas import tpu as pltpu


def _ceil_div(a, b):
    return -(-a // b)


def _round_up(x, m):
    return _ceil_div(x, m) * m


_VMEM_LIMIT = 48 * 1024 * 1024  # < v7x 64 MiB physical, plenty on v5e/v6e.


# ----------------------------------------------------------------------------
# Pallas kernel 1: fused Conv2d (valid padding) on NHWC, stride handled via
# phase/packed layout, tap loop + MXU matmuls fully inside the kernel.
# ----------------------------------------------------------------------------
def _conv_kernel(x_ref, w_ref, b_ref, o_ref, *, KH, G, s, TOH, OWP):
    # x_ref : (Hp, s, Wpk, s*C)   phase-packed input for one image
    # w_ref : (KH*G, s*C, OC)     per-(row-tap, col-group) weight matrices
    # b_ref : (1, OC)             bias (f32)
    # o_ref : (TOH*OWP, OC)       output rows for this grid step
    r = pl.program_id(1)
    row0 = r * TOH
    acc = jnp.zeros(o_ref.shape, jnp.float32)
    for kh in range(KH):
        ph = kh % s
        dr = kh // s
        # rows of the phase `ph` needed by this block of output rows (contiguous)
        blk = x_ref[pl.ds(row0 + dr, TOH), ph, :, :]          # (TOH, Wpk, s*C)
        for g in range(G):
            lhs = blk[:, g:g + OWP, :]                        # (TOH, OWP, s*C)
            lhs = lhs.reshape(TOH * OWP, lhs.shape[-1])
            acc = acc + jnp.dot(lhs, w_ref[kh * G + g, :, :],
                                preferred_element_type=jnp.float32)
    o_ref[...] = (acc + b_ref[...]).astype(o_ref.dtype)


def conv2d_nhwc(x, w_packed, bias, *, KH, KW, s):
    """Valid Conv2d.  x: (B,H,W,C) bf16 NHWC.  w_packed: (KH*G, s*C, OC) bf16.
    bias: (1, OC) f32.  Returns (B, OH, OW, OC) in x.dtype."""
    B, H, W, C = x.shape
    OC = w_packed.shape[-1]
    assert w_packed.shape[1] == s * C, (w_packed.shape, s, C)
    OH = (H - KH) // s + 1
    OW = (W - KW) // s + 1
    OWP = _round_up(OW, 8)            # pad output width to sublane multiple
    G = _ceil_div(KW, s)              # column-tap groups after W packing
    assert w_packed.shape[0] == KH * G
    Wpk = OWP + G - 1                 # packed-column extent needed
    Hp = OH + (KH - 1) // s           # phase-row extent needed
    pad_h = s * Hp - H
    pad_w = s * Wpk - W
    xpad = jnp.pad(x, ((0, 0), (0, pad_h), (0, pad_w), (0, 0)))
    # (B, s*Hp, s*Wpk, C) -> (B*Hp, s, Wpk, s*C): H split into stride phases,
    # each group of s consecutive columns packed into the channel axis.
    xp = xpad.reshape(B * Hp, s, Wpk, s * C)

    # Block of output rows: keep acc + blocks comfortably inside VMEM.
    TOH = OH
    if OH * OWP > 4096:
        TOH = max(d for d in range(1, OH + 1) if OH % d == 0 and d * OWP <= 4096)
    nr = OH // TOH

    kernel = functools.partial(_conv_kernel, KH=KH, G=G, s=s, TOH=TOH, OWP=OWP)
    out = pl.pallas_call(
        kernel,
        out_shape=jax.ShapeDtypeStruct((B * OH * OWP, OC), x.dtype),
        grid=(B, nr),
        in_specs=[
            # full per-image phase-packed input, resident across the row axis
            pl.BlockSpec((Hp, s, Wpk, s * C), lambda b, r: (b, 0, 0, 0)),
            pl.BlockSpec(w_packed.shape, lambda b, r: (0, 0, 0)),
            pl.BlockSpec((1, OC), lambda b, r: (0, 0)),
        ],
        out_specs=pl.BlockSpec((TOH * OWP, OC),
                               lambda b, r, nr=nr: (b * nr + r, 0)),
        compiler_params=pltpu.CompilerParams(
            dimension_semantics=("parallel", "parallel"),
            vmem_limit_bytes=_VMEM_LIMIT),
    )(xp, w_packed, bias)
    out = out.reshape(B, OH, OWP, OC)[:, :, :OW, :]
    return out


# ----------------------------------------------------------------------------
# Pallas kernel 2: 2x2 max-pool (stride 2) on NHWC -> lane-dense (C on lanes)
# ----------------------------------------------------------------------------
def _max4_kernel(a_ref, b_ref, c_ref, d_ref, o_ref):
    o_ref[...] = jnp.maximum(jnp.maximum(a_ref[...], b_ref[...]),
                             jnp.maximum(c_ref[...], d_ref[...]))


def maxpool2x2_nhwc(x):
    B, H, W, C = x.shape
    H2, W2 = H // 2, W // 2
    x = x[:, :H2 * 2, :W2 * 2, :]
    views = [x[:, i::2, j::2, :].reshape(B * H2 * W2, C)
             for i in (0, 1) for j in (0, 1)]
    R = B * H2 * W2
    TR = min(_round_up(R, 8), 2048)
    Rp = _round_up(R, TR)
    views = [jnp.pad(v, ((0, Rp - R), (0, 0))) for v in views]
    spec = pl.BlockSpec((TR, C), lambda i: (i, 0))
    out = pl.pallas_call(
        _max4_kernel,
        out_shape=jax.ShapeDtypeStruct((Rp, C), x.dtype),
        grid=(Rp // TR,),
        in_specs=[spec, spec, spec, spec],
        out_specs=spec,
        compiler_params=pltpu.CompilerParams(dimension_semantics=("parallel",)),
    )(*views)
    return out[:R].reshape(B, H2, W2, C)


# ----------------------------------------------------------------------------
# Pallas kernel 3: Linear (bf16 weights, f32 accumulate) with fused epilogue:
#   "none" | "relu" | "sigmoid" | "relu_bn" (ReLU then BatchNorm1d)
#   | "bn_relu" (BatchNorm1d then ReLU).  BN uses batch stats (training mode),
#   padded batch rows are masked out of mean / variance.
# ----------------------------------------------------------------------------
def _linear_kernel(x_ref, w_ref, b_ref, *rest, epilogue, true_m):
    if epilogue in ("relu_bn", "bn_relu"):
        g_ref, be_ref, o_ref = rest
    else:
        (o_ref,) = rest
    y = jnp.dot(x_ref[...], w_ref[...], preferred_element_type=jnp.float32)
    y = y + b_ref[...]
    if epilogue == "relu":
        y = jnp.maximum(y, 0.0)
    elif epilogue == "sigmoid":
        y = jax.nn.sigmoid(y)
    elif epilogue in ("relu_bn", "bn_relu"):
        if epilogue == "relu_bn":
            y = jnp.maximum(y, 0.0)
        rows = jax.lax.broadcasted_iota(jnp.int32, y.shape, 0)
        mask = rows < true_m
        inv_m = 1.0 / float(true_m)
        ym = jnp.where(mask, y, 0.0)
        mean = jnp.sum(ym, axis=0, keepdims=True) * inv_m
        diff = jnp.where(mask, y - mean, 0.0)
        var = jnp.sum(diff * diff, axis=0, keepdims=True) * inv_m
        y = (y - mean) * jax.lax.rsqrt(var + 1e-5) * g_ref[...] + be_ref[...]
        if epilogue == "bn_relu":
            y = jnp.maximum(y, 0.0)
    o_ref[...] = y.astype(o_ref.dtype)


def pallas_linear(x, w, b, gamma=None, beta=None, *, epilogue="none", out_dim=None):
    """y = epilogue(x @ w + b).  w: (Kp, Np) bf16 (pre-padded at init),
    b/gamma/beta: (1, Np) f32.  x: (M, K) with K <= Kp.  Returns f32 (M, out_dim)."""
    M, K = x.shape
    Kp, Np = w.shape
    Mp = _round_up(M, 8)
    xp = jnp.pad(x.astype(jnp.bfloat16), ((0, Mp - M), (0, Kp - K)))
    TN = Np if Np <= 1024 else 1024
    if Np % TN:
        TN = Np
    has_bn = epilogue in ("relu_bn", "bn_relu")
    in_specs = [
        pl.BlockSpec((Mp, Kp), lambda j: (0, 0)),   # x resident (full K)
        pl.BlockSpec((Kp, TN), lambda j: (0, j)),   # weight streamed per N tile
        pl.BlockSpec((1, TN), lambda j: (0, j)),
    ]
    args = [xp, w, b]
    if has_bn:
        assert gamma is not None and beta is not None
        in_specs += [pl.BlockSpec((1, TN), lambda j: (0, j)),
                     pl.BlockSpec((1, TN), lambda j: (0, j))]
        args += [gamma, beta]
    out = pl.pallas_call(
        functools.partial(_linear_kernel, epilogue=epilogue, true_m=M),
        out_shape=jax.ShapeDtypeStruct((Mp, Np), jnp.float32),
        grid=(Np // TN,),
        in_specs=in_specs,
        out_specs=pl.BlockSpec((Mp, TN), lambda j: (0, j)),
        compiler_params=pltpu.CompilerParams(
            dimension_semantics=("parallel",),
            vmem_limit_bytes=_VMEM_LIMIT),
    )(*args)
    n = Np if out_dim is None else out_dim
    return out[:M, :n]


# ----------------------------------------------------------------------------
# Parameter construction (torch-like uniform init), pre-packed for the kernels
# ----------------------------------------------------------------------------
def _uniform(key, shape, bound):
    return jax.random.uniform(key, shape, jnp.float32, -bound, bound)


def _init_linear_raw(key, fan_in, fan_out):
    k1, k2 = jax.random.split(key)
    bound = 1.0 / math.sqrt(fan_in)
    return _uniform(k1, (fan_in, fan_out), bound), _uniform(k2, (fan_out,), bound)


def _init_conv_raw(key, oc, ic, kh, kw):
    k1, k2 = jax.random.split(key)
    bound = 1.0 / math.sqrt(ic * kh * kw)
    return _uniform(k1, (oc, ic, kh, kw), bound), _uniform(k2, (oc,), bound)


def pack_conv_weight(w, s, c_pad=None, oc_pad=None):
    """(OC, C, KH, KW) f32 -> (KH*G, s*Cp, OCp) bf16 tap/group-packed weights."""
    w = np.asarray(w, np.float32)
    OC, C, KH, KW = w.shape
    Cp = C if c_pad is None else c_pad
    OCp = OC if oc_pad is None else oc_pad
    G = _ceil_div(KW, s)
    out = np.zeros((KH * G, s * Cp, OCp), np.float32)
    for kh in range(KH):
        for kw in range(KW):
            g, q = kw // s, kw % s
            out[kh * G + g, q * Cp:q * Cp + C, :OC] = w[:, :, kh, kw].T
    return jnp.asarray(out).astype(jnp.bfloat16)


def pack_linear_weight(w, b):
    K, N = np.asarray(w).shape
    Kp, Np = _round_up(K, 128), _round_up(N, 128)
    wp = jnp.zeros((Kp, Np), jnp.float32).at[:K, :N].set(w).astype(jnp.bfloat16)
    bp = jnp.zeros((1, Np), jnp.float32).at[0, :N].set(b)
    return wp, bp


def init_raw_params(key, out_features):
    opt = int(out_features)
    kin = int(out_features / 2)
    ks = jax.random.split(key, 13)
    raw = {}
    raw["conv1"] = _init_conv_raw(ks[0], 96, 2 * 25, 5, 5)
    raw["conv2"] = _init_conv_raw(ks[1], 256, 96, 3, 3)
    raw["conv3"] = _init_conv_raw(ks[2], 512, 256, 3, 3)
    raw["conv4"] = _init_conv_raw(ks[3], 512, 512, 3, 3)
    raw["cfc1"] = _init_linear_raw(ks[4], 512 * 2 * 3, 4096)
    raw["cfc2"] = _init_linear_raw(ks[5], 4096, opt)
    raw["kfc1"] = _init_linear_raw(ks[6], 25 * 76, 4096)
    raw["kfc2"] = _init_linear_raw(ks[7], 4096, 1024)
    raw["kfc3"] = _init_linear_raw(ks[8], 1024, 128)
    raw["kfc4"] = _init_linear_raw(ks[9], 128, kin)
    raw["hfc1"] = _init_linear_raw(ks[10], opt + kin, 1024)
    raw["hfc2"] = _init_linear_raw(ks[11], 1024, 512)
    raw["hfc3"] = _init_linear_raw(ks[12], 512, 1)
    return raw


def pack_params(raw):
    p = {}
    # conv1 output channels padded 96->128 (lane-dense stores); conv2 input
    # channels padded to match; extra channels are exact zeros end to end.
    conv_cfg = [("conv1", 2, 50, 128), ("conv2", 2, 128, 256),
                ("conv3", 1, 256, 512), ("conv4", 1, 512, 512)]
    for name, s, c_pad, oc_pad in conv_cfg:
        w, b = raw[name]
        p[name + "_w"] = pack_conv_weight(w, s, c_pad=c_pad, oc_pad=oc_pad)
        bp = jnp.zeros((1, oc_pad), jnp.float32).at[0, :b.shape[0]].set(b)
        p[name + "_b"] = bp
    for name in ["cfc1", "cfc2", "kfc1", "kfc2", "kfc3", "kfc4",
                 "hfc1", "hfc2", "hfc3"]:
        w, b = raw[name]
        p[name + "_w"], p[name + "_b"] = pack_linear_weight(w, b)
    for name, n in [("kbn1", 4096), ("kbn2", 1024), ("hbn1", 1024), ("hbn2", 512)]:
        p[name + "_g"] = jnp.ones((1, n), jnp.float32)
        p[name + "_b"] = jnp.zeros((1, n), jnp.float32)
    return p


# ----------------------------------------------------------------------------
# Full OKNetV2 forward
# ----------------------------------------------------------------------------
def oknet_v2_forward(params, x_flow, x_kin, *, out_features):
    opt = int(out_features)
    kin = int(out_features / 2)
    p = params

    # --- ConvNetStream (optical flow): NHWC, bf16 activations ---
    x = jnp.transpose(x_flow, (0, 2, 3, 1)).astype(jnp.bfloat16)
    x = conv2d_nhwc(x, p["conv1_w"], p["conv1_b"], KH=5, KW=5, s=2)
    x = maxpool2x2_nhwc(x)
    x = conv2d_nhwc(x, p["conv2_w"], p["conv2_b"], KH=3, KW=3, s=2)
    x = maxpool2x2_nhwc(x)
    x = conv2d_nhwc(x, p["conv3_w"], p["conv3_b"], KH=3, KW=3, s=1)
    x = maxpool2x2_nhwc(x)
    x = conv2d_nhwc(x, p["conv4_w"], p["conv4_b"], KH=3, KW=3, s=1)
    x = maxpool2x2_nhwc(x)
    B = x.shape[0]
    # flatten in torch's NCHW order so it matches nn.Linear(512*2*3, ...)
    x = jnp.transpose(x, (0, 3, 1, 2)).reshape(B, -1).astype(jnp.float32)
    x1 = pallas_linear(x, p["cfc1_w"], p["cfc1_b"], epilogue="relu")
    x1 = pallas_linear(x1, p["cfc2_w"], p["cfc2_b"], epilogue="none", out_dim=opt)

    # --- KinematicStream (linear -> relu -> BN fused) ---
    y = x_kin.reshape(-1, 25 * 76).astype(jnp.float32)
    y = pallas_linear(y, p["kfc1_w"], p["kfc1_b"], p["kbn1_g"], p["kbn1_b"],
                      epilogue="relu_bn")
    y = pallas_linear(y, p["kfc2_w"], p["kfc2_b"], p["kbn2_g"], p["kbn2_b"],
                      epilogue="relu_bn")
    y = pallas_linear(y, p["kfc3_w"], p["kfc3_b"], epilogue="relu")
    y = pallas_linear(y, p["kfc4_w"], p["kfc4_b"], epilogue="none", out_dim=kin)

    # --- fusion head (linear -> BN -> relu fused) ---
    z = jnp.concatenate([x1, y], axis=1)
    z = pallas_linear(z, p["hfc1_w"], p["hfc1_b"], p["hbn1_g"], p["hbn1_b"],
                      epilogue="bn_relu")
    z = pallas_linear(z, p["hfc2_w"], p["hfc2_b"], p["hbn2_g"], p["hbn2_b"],
                      epilogue="bn_relu")
    z = pallas_linear(z, p["hfc3_w"], p["hfc3_b"], epilogue="sigmoid", out_dim=1)
    return z  # (B, 1)


# ----------------------------------------------------------------------------
# Self-checks + demo
# ----------------------------------------------------------------------------
def _check_conv(key, B, H, W, C, OC, K, s):
    kx, kw, kb = jax.random.split(key, 3)
    x = jax.random.normal(kx, (B, H, W, C), jnp.float32).astype(jnp.bfloat16)
    w = jax.random.normal(kw, (OC, C, K, K), jnp.float32) * 0.1
    b = jax.random.normal(kb, (OC,), jnp.float32) * 0.1
    wp = pack_conv_weight(w, s)
    bp = jnp.zeros((1, OC), jnp.float32).at[0].set(b)
    got = jax.jit(functools.partial(conv2d_nhwc, KH=K, KW=K, s=s))(x, wp, bp)
    w_bf = w.astype(jnp.bfloat16).astype(jnp.float32)
    ref = jax.lax.conv_general_dilated(
        x.astype(jnp.float32), jnp.transpose(w_bf, (2, 3, 1, 0)),
        (s, s), "VALID", dimension_numbers=("NHWC", "HWIO", "NHWC"),
        precision=jax.lax.Precision.HIGHEST) + b.reshape(1, 1, 1, OC)
    np.testing.assert_allclose(np.asarray(got, np.float32), np.asarray(ref),
                               rtol=5e-2, atol=5e-2)


def _check_linear(key):
    kx, kw, kb = jax.random.split(key, 3)
    M, K, N = 2, 200, 256
    x = jax.random.normal(kx, (M, K), jnp.float32)
    w = jax.random.normal(kw, (K, N), jnp.float32) / math.sqrt(K)
    b = jax.random.normal(kb, (N,), jnp.float32) * 0.05
    wp, bp = pack_linear_weight(w, b)
    g = jnp.ones((1, wp.shape[1]), jnp.float32)
    be = jnp.zeros((1, wp.shape[1]), jnp.float32)
    got = jax.jit(functools.partial(pallas_linear, epilogue="relu_bn"))(x, wp, bp, g, be)
    xb = x.astype(jnp.bfloat16).astype(jnp.float32)
    wb = w.astype(jnp.bfloat16).astype(jnp.float32)
    y = jnp.maximum(xb @ wb + b, 0.0)
    mean = jnp.mean(y, axis=0, keepdims=True)
    var = jnp.mean((y - mean) ** 2, axis=0, keepdims=True)
    ref = (y - mean) * jax.lax.rsqrt(var + 1e-5)
    np.testing.assert_allclose(np.asarray(got), np.asarray(ref), rtol=5e-2, atol=5e-2)


if __name__ == "__main__":
    key = jax.random.PRNGKey(0)
    k_params, k_flow, k_kin, k_t1, k_t2, k_t3 = jax.random.split(key, 6)

    OUT_FEATURES = 64      # optical encoder 64, kinematic encoder 32
    BATCH = 2
    # Minimal spatial size whose conv/pool trace ends at (2, 3), matching the
    # hard-coded linear1 in_features = 512*2*3 in ConvNetStream.
    H, W = 231, 295

    # correctness self-checks for the novel kernels (both conv strides + fused BN)
    _check_conv(k_t1, 2, 37, 45, 10, 16, 5, 2)   # stride-2, 5x5 (phantom col tap)
    _check_conv(k_t2, 2, 11, 13, 24, 32, 3, 1)   # stride-1, 3x3
    _check_linear(k_t3)

    raw = init_raw_params(k_params, OUT_FEATURES)
    params = pack_params(raw)

    x_flow = jax.random.normal(k_flow, (BATCH, 2 * 25, H, W), jnp.float32)
    x_kin = jax.random.normal(k_kin, (BATCH, 25, 76), jnp.float32)

    fwd = jax.jit(functools.partial(oknet_v2_forward, out_features=OUT_FEATURES))
    out = jax.block_until_ready(fwd(params, x_flow, x_kin))
    assert out.shape == (BATCH, 1), out.shape
    assert bool(jnp.all(jnp.isfinite(out)))
    print("KERNEL_OK")
</pallas_src>

<mosaic_0001>
module attributes {stable_mosaic.version = 11 : i64} {
  func.func @_conv_kernel(%arg0: i32, %arg1: i32, %arg2: memref<19x2x26x20xbf16, #tpu.memory_space<vmem>>, %arg3: memref<15x20x16xbf16, #tpu.memory_space<vmem>>, %arg4: memref<1x16xf32, #tpu.memory_space<vmem>>, %arg5: memref<408x16xbf16, #tpu.memory_space<vmem>>) attributes {dimension_semantics = [#tpu.dimension_semantics<parallel>, #tpu.dimension_semantics<parallel>], iteration_bounds = array<i64: 2, 1>, scalar_prefetch = 0 : i64, scratch_operands = 0 : i64, tpu.core_type = #tpu.core_type<tc>, window_params = [{transform_indices = @transform_0, window_bounds = array<i64: 19, 2, 26, 20>}, {pipeline_mode = #tpu.pipeline_mode<synchronous>, transform_indices = @transform_1, window_bounds = array<i64: 15, 20, 16>}, {pipeline_mode = #tpu.pipeline_mode<synchronous>, transform_indices = @transform_2, window_bounds = array<i64: 1, 16>}, {transform_indices = @transform_3, window_bounds = array<i64: 408, 16>}]} {
    %c17_i32 = arith.constant 17 : i32
    %0 = arith.muli %arg1, %c17_i32 : i32
    %cst = arith.constant 0.000000e+00 : f32
    %1 = vector.broadcast %cst : f32 to vector<408x16xf32>
    %c0_i32 = arith.constant 0 : i32
    %2 = arith.addi %0, %c0_i32 : i32
    %3 = arith.index_cast %2 : i32 to index
    %c0 = arith.constant 0 : index
    %c0_0 = arith.constant 0 : index
    %c0_1 = arith.constant 0 : index
    %4 = vector.load %arg2[%3, %c0, %c0_0, %c0_1] : memref<19x2x26x20xbf16, #tpu.memory_space<vmem>>, vector<17x1x26x20xbf16>
    %5 = vector.shape_cast %4 : vector<17x1x26x20xbf16> to vector<17x26x20xbf16>
    %6 = vector.extract_strided_slice %5 {offsets = [0, 0, 0], sizes = [17, 24, 20], strides = [1, 1, 1]} : vector<17x26x20xbf16> to vector<17x24x20xbf16>
    %7 = vector.shape_cast %6 : vector<17x24x20xbf16> to vector<408x20xbf16>
    %c0_2 = arith.constant 0 : index
    %c0_3 = arith.constant 0 : index
    %c0_4 = arith.constant 0 : index
    %8 = vector.load %arg3[%c0_2, %c0_3, %c0_4] : memref<15x20x16xbf16, #tpu.memory_space<vmem>>, vector<1x20x16xbf16>
    %9 = vector.shape_cast %8 : vector<1x20x16xbf16> to vector<20x16xbf16>
    %cst_5 = arith.constant dense<0.000000e+00> : vector<408x16xf32>
    %10 = tpu.matmul %7, %9, %cst_5 {dimension_numbers = #tpu.dot_dimension_numbers<[1], [0], [0], [1], [0, 0, 1, 1], [], []>} : vector<408x20xbf16>, vector<20x16xbf16>, vector<408x16xf32> -> vector<408x16xf32>
    %11 = arith.addf %1, %10 : vector<408x16xf32>
    %12 = vector.extract_strided_slice %5 {offsets = [0, 1, 0], sizes = [17, 24, 20], strides = [1, 1, 1]} : vector<17x26x20xbf16> to vector<17x24x20xbf16>
    %13 = vector.shape_cast %12 : vector<17x24x20xbf16> to vector<408x20xbf16>
    %c1 = arith.constant 1 : index
    %c0_6 = arith.constant 0 : index
    %c0_7 = arith.constant 0 : index
    %14 = vector.load %arg3[%c1, %c0_6, %c0_7] : memref<15x20x16xbf16, #tpu.memory_space<vmem>>, vector<1x20x16xbf16>
    %15 = vector.shape_cast %14 : vector<1x20x16xbf16> to vector<20x16xbf16>
    %cst_8 = arith.constant dense<0.000000e+00> : vector<408x16xf32>
    %16 = tpu.matmul %13, %15, %cst_8 {dimension_numbers = #tpu.dot_dimension_numbers<[1], [0], [0], [1], [0, 0, 1, 1], [], []>} : vector<408x20xbf16>, vector<20x16xbf16>, vector<408x16xf32> -> vector<408x16xf32>
    %17 = arith.addf %11, %16 : vector<408x16xf32>
    %18 = vector.extract_strided_slice %5 {offsets = [0, 2, 0], sizes = [17, 24, 20], strides = [1, 1, 1]} : vector<17x26x20xbf16> to vector<17x24x20xbf16>
    %19 = vector.shape_cast %18 : vector<17x24x20xbf16> to vector<408x20xbf16>
    %c2 = arith.constant 2 : index
    %c0_9 = arith.constant 0 : index
    %c0_10 = arith.constant 0 : index
    %20 = vector.load %arg3[%c2, %c0_9, %c0_10] : memref<15x20x16xbf16, #tpu.memory_space<vmem>>, vector<1x20x16xbf16>
    %21 = vector.shape_cast %20 : vector<1x20x16xbf16> to vector<20x16xbf16>
    %cst_11 = arith.constant dense<0.000000e+00> : vector<408x16xf32>
    %22 = tpu.matmul %19, %21, %cst_11 {dimension_numbers = #tpu.dot_dimension_numbers<[1], [0], [0], [1], [0, 0, 1, 1], [], []>} : vector<408x20xbf16>, vector<20x16xbf16>, vector<408x16xf32> -> vector<408x16xf32>
    %23 = arith.addf %17, %22 : vector<408x16xf32>
    %c0_i32_12 = arith.constant 0 : i32
    %24 = arith.addi %0, %c0_i32_12 : i32
    %25 = arith.index_cast %24 : i32 to index
    %c1_13 = arith.constant 1 : index
    %c0_14 = arith.constant 0 : index
    %c0_15 = arith.constant 0 : index
    %26 = vector.load %arg2[%25, %c1_13, %c0_14, %c0_15] : memref<19x2x26x20xbf16, #tpu.memory_space<vmem>>, vector<17x1x26x20xbf16>
    %27 = vector.shape_cast %26 : vector<17x1x26x20xbf16> to vector<17x26x20xbf16>
    %28 = vector.extract_strided_slice %27 {offsets = [0, 0, 0], sizes = [17, 24, 20], strides = [1, 1, 1]} : vector<17x26x20xbf16> to vector<17x24x20xbf16>
    %29 = vector.shape_cast %28 : vector<17x24x20xbf16> to vector<408x20xbf16>
    %c3 = arith.constant 3 : index
    %c0_16 = arith.constant 0 : index
    %c0_17 = arith.constant 0 : index
    %30 = vector.load %arg3[%c3, %c0_16, %c0_17] : memref<15x20x16xbf16, #tpu.memory_space<vmem>>, vector<1x20x16xbf16>
    %31 = vector.shape_cast %30 : vector<1x20x16xbf16> to vector<20x16xbf16>
    %cst_18 = arith.constant dense<0.000000e+00> : vector<408x16xf32>
    %32 = tpu.matmul %29, %31, %cst_18 {dimension_numbers = #tpu.dot_dimension_numbers<[1], [0], [0], [1], [0, 0, 1, 1], [], []>} : vector<408x20xbf16>, vector<20x16xbf16>, vector<408x16xf32> -> vector<408x16xf32>
    %33 = arith.addf %23, %32 : vector<408x16xf32>
    %34 = vector.extract_strided_slice %27 {offsets = [0, 1, 0], sizes = [17, 24, 20], strides = [1, 1, 1]} : vector<17x26x20xbf16> to vector<17x24x20xbf16>
    %35 = vector.shape_cast %34 : vector<17x24x20xbf16> to vector<408x20xbf16>
    %c4 = arith.constant 4 : index
    %c0_19 = arith.constant 0 : index
    %c0_20 = arith.constant 0 : index
    %36 = vector.load %arg3[%c4, %c0_19, %c0_20] : memref<15x20x16xbf16, #tpu.memory_space<vmem>>, vector<1x20x16xbf16>
    %37 = vector.shape_cast %36 : vector<1x20x16xbf16> to vector<20x16xbf16>
    %cst_21 = arith.constant dense<0.000000e+00> : vector<408x16xf32>
    %38 = tpu.matmul %35, %37, %cst_21 {dimension_numbers = #tpu.dot_dimension_numbers<[1], [0], [0], [1], [0, 0, 1, 1], [], []>} : vector<408x20xbf16>, vector<20x16xbf16>, vector<408x16xf32> -> vector<408x16xf32>
    %39 = arith.addf %33, %38 : vector<408x16xf32>
    %40 = vector.extract_strided_slice %27 {offsets = [0, 2, 0], sizes = [17, 24, 20], strides = [1, 1, 1]} : vector<17x26x20xbf16> to vector<17x24x20xbf16>
    %41 = vector.shape_cast %40 : vector<17x24x20xbf16> to vector<408x20xbf16>
    %c5 = arith.constant 5 : index
    %c0_22 = arith.constant 0 : index
    %c0_23 = arith.constant 0 : index
    %42 = vector.load %arg3[%c5, %c0_22, %c0_23] : memref<15x20x16xbf16, #tpu.memory_space<vmem>>, vector<1x20x16xbf16>
    %43 = vector.shape_cast %42 : vector<1x20x16xbf16> to vector<20x16xbf16>
    %cst_24 = arith.constant dense<0.000000e+00> : vector<408x16xf32>
    %44 = tpu.matmul %41, %43, %cst_24 {dimension_numbers = #tpu.dot_dimension_numbers<[1], [0], [0], [1], [0, 0, 1, 1], [], []>} : vector<408x20xbf16>, vector<20x16xbf16>, vector<408x16xf32> -> vector<408x16xf32>
    %45 = arith.addf %39, %44 : vector<408x16xf32>
    %c1_i32 = arith.constant 1 : i32
    %46 = arith.addi %0, %c1_i32 : i32
    %47 = arith.index_cast %46 : i32 to index
    %c0_25 = arith.constant 0 : index
    %c0_26 = arith.constant 0 : index
    %c0_27 = arith.constant 0 : index
    %48 = vector.load %arg2[%47, %c0_25, %c0_26, %c0_27] : memref<19x2x26x20xbf16, #tpu.memory_space<vmem>>, vector<17x1x26x20xbf16>
    %49 = vector.shape_cast %48 : vector<17x1x26x20xbf16> to vector<17x26x20xbf16>
    %50 = vector.extract_strided_slice %49 {offsets = [0, 0, 0], sizes = [17, 24, 20], strides = [1, 1, 1]} : vector<17x26x20xbf16> to vector<17x24x20xbf16>
    %51 = vector.shape_cast %50 : vector<17x24x20xbf16> to vector<408x20xbf16>
    %c6 = arith.constant 6 : index
    %c0_28 = arith.constant 0 : index
    %c0_29 = arith.constant 0 : index
    %52 = vector.load %arg3[%c6, %c0_28, %c0_29] : memref<15x20x16xbf16, #tpu.memory_space<vmem>>, vector<1x20x16xbf16>
    %53 = vector.shape_cast %52 : vector<1x20x16xbf16> to vector<20x16xbf16>
    %cst_30 = arith.constant dense<0.000000e+00> : vector<408x16xf32>
    %54 = tpu.matmul %51, %53, %cst_30 {dimension_numbers = #tpu.dot_dimension_numbers<[1], [0], [0], [1], [0, 0, 1, 1], [], []>} : vector<408x20xbf16>, vector<20x16xbf16>, vector<408x16xf32> -> vector<408x16xf32>
    %55 = arith.addf %45, %54 : vector<408x16xf32>
    %56 = vector.extract_strided_slice %49 {offsets = [0, 1, 0], sizes = [17, 24, 20], strides = [1, 1, 1]} : vector<17x26x20xbf16> to vector<17x24x20xbf16>
    %57 = vector.shape_cast %56 : vector<17x24x20xbf16> to vector<408x20xbf16>
    %c7 = arith.constant 7 : index
    %c0_31 = arith.constant 0 : index
    %c0_32 = arith.constant 0 : index
    %58 = vector.load %arg3[%c7, %c0_31, %c0_32] : memref<15x20x16xbf16, #tpu.memory_space<vmem>>, vector<1x20x16xbf16>
    %59 = vector.shape_cast %58 : vector<1x20x16xbf16> to vector<20x16xbf16>
    %cst_33 = arith.constant dense<0.000000e+00> : vector<408x16xf32>
    %60 = tpu.matmul %57, %59, %cst_33 {dimension_numbers = #tpu.dot_dimension_numbers<[1], [0], [0], [1], [0, 0, 1, 1], [], []>} : vector<408x20xbf16>, vector<20x16xbf16>, vector<408x16xf32> -> vector<408x16xf32>
    %61 = arith.addf %55, %60 : vector<408x16xf32>
    %62 = vector.extract_strided_slice %49 {offsets = [0, 2, 0], sizes = [17, 24, 20], strides = [1, 1, 1]} : vector<17x26x20xbf16> to vector<17x24x20xbf16>
    %63 = vector.shape_cast %62 : vector<17x24x20xbf16> to vector<408x20xbf16>
    %c8 = arith.constant 8 : index
    %c0_34 = arith.constant 0 : index
    %c0_35 = arith.constant 0 : index
    %64 = vector.load %arg3[%c8, %c0_34, %c0_35] : memref<15x20x16xbf16, #tpu.memory_space<vmem>>, vector<1x20x16xbf16>
    %65 = vector.shape_cast %64 : vector<1x20x16xbf16> to vector<20x16xbf16>
    %cst_36 = arith.constant dense<0.000000e+00> : vector<408x16xf32>
    %66 = tpu.matmul %63, %65, %cst_36 {dimension_numbers = #tpu.dot_dimension_numbers<[1], [0], [0], [1], [0, 0, 1, 1], [], []>} : vector<408x20xbf16>, vector<20x16xbf16>, vector<408x16xf32> -> vector<408x16xf32>
    %67 = arith.addf %61, %66 : vector<408x16xf32>
    %c1_i32_37 = arith.constant 1 : i32
    %68 = arith.addi %0, %c1_i32_37 : i32
    %69 = arith.index_cast %68 : i32 to index
    %c1_38 = arith.constant 1 : index
    %c0_39 = arith.constant 0 : index
    %c0_40 = arith.constant 0 : index
    %70 = vector.load %arg2[%69, %c1_38, %c0_39, %c0_40] : memref<19x2x26x20xbf16, #tpu.memory_space<vmem>>, vector<17x1x26x20xbf16>
    %71 = vector.shape_cast %70 : vector<17x1x26x20xbf16> to vector<17x26x20xbf16>
    %72 = vector.extract_strided_slice %71 {offsets = [0, 0, 0], sizes = [17, 24, 20], strides = [1, 1, 1]} : vector<17x26x20xbf16> to vector<17x24x20xbf16>
    %73 = vector.shape_cast %72 : vector<17x24x20xbf16> to vector<408x20xbf16>
    %c9 = arith.constant 9 : index
    %c0_41 = arith.constant 0 : index
    %c0_42 = arith.constant 0 : index
    %74 = vector.load %arg3[%c9, %c0_41, %c0_42] : memref<15x20x16xbf16, #tpu.memory_space<vmem>>, vector<1x20x16xbf16>
    %75 = vector.shape_cast %74 : vector<1x20x16xbf16> to vector<20x16xbf16>
    %cst_43 = arith.constant dense<0.000000e+00> : vector<408x16xf32>
    %76 = tpu.matmul %73, %75, %cst_43 {dimension_numbers = #tpu.dot_dimension_numbers<[1], [0], [0], [1], [0, 0, 1, 1], [], []>} : vector<408x20xbf16>, vector<20x16xbf16>, vector<408x16xf32> -> vector<408x16xf32>
    %77 = arith.addf %67, %76 : vector<408x16xf32>
    %78 = vector.extract_strided_slice %71 {offsets = [0, 1, 0], sizes = [17, 24, 20], strides = [1, 1, 1]} : vector<17x26x20xbf16> to vector<17x24x20xbf16>
    %79 = vector.shape_cast %78 : vector<17x24x20xbf16> to vector<408x20xbf16>
    %c10 = arith.constant 10 : index
    %c0_44 = arith.constant 0 : index
    %c0_45 = arith.constant 0 : index
    %80 = vector.load %arg3[%c10, %c0_44, %c0_45] : memref<15x20x16xbf16, #tpu.memory_space<vmem>>, vector<1x20x16xbf16>
    %81 = vector.shape_cast %80 : vector<1x20x16xbf16> to vector<20x16xbf16>
    %cst_46 = arith.constant dense<0.000000e+00> : vector<408x16xf32>
    %82 = tpu.matmul %79, %81, %cst_46 {dimension_numbers = #tpu.dot_dimension_numbers<[1], [0], [0], [1], [0, 0, 1, 1], [], []>} : vector<408x20xbf16>, vector<20x16xbf16>, vector<408x16xf32> -> vector<408x16xf32>
    %83 = arith.addf %77, %82 : vector<408x16xf32>
    %84 = vector.extract_strided_slice %71 {offsets = [0, 2, 0], sizes = [17, 24, 20], strides = [1, 1, 1]} : vector<17x26x20xbf16> to vector<17x24x20xbf16>
    %85 = vector.shape_cast %84 : vector<17x24x20xbf16> to vector<408x20xbf16>
    %c11 = arith.constant 11 : index
    %c0_47 = arith.constant 0 : index
    %c0_48 = arith.constant 0 : index
    %86 = vector.load %arg3[%c11, %c0_47, %c0_48] : memref<15x20x16xbf16, #tpu.memory_space<vmem>>, vector<1x20x16xbf16>
    %87 = vector.shape_cast %86 : vector<1x20x16xbf16> to vector<20x16xbf16>
    %cst_49 = arith.constant dense<0.000000e+00> : vector<408x16xf32>
    %88 = tpu.matmul %85, %87, %cst_49 {dimension_numbers = #tpu.dot_dimension_numbers<[1], [0], [0], [1], [0, 0, 1, 1], [], []>} : vector<408x20xbf16>, vector<20x16xbf16>, vector<408x16xf32> -> vector<408x16xf32>
    %89 = arith.addf %83, %88 : vector<408x16xf32>
    %c2_i32 = arith.constant 2 : i32
    %90 = arith.addi %0, %c2_i32 : i32
    %91 = arith.index_cast %90 : i32 to index
    %c0_50 = arith.constant 0 : index
    %c0_51 = arith.constant 0 : index
    %c0_52 = arith.constant 0 : index
    %92 = vector.load %arg2[%91, %c0_50, %c0_51, %c0_52] : memref<19x2x26x20xbf16, #tpu.memory_space<vmem>>, vector<17x1x26x20xbf16>
    %93 = vector.shape_cast %92 : vector<17x1x26x20xbf16> to vector<17x26x20xbf16>
    %94 = vector.extract_strided_slice %93 {offsets = [0, 0, 0], sizes = [17, 24, 20], strides = [1, 1, 1]} : vector<17x26x20xbf16> to vector<17x24x20xbf16>
    %95 = vector.shape_cast %94 : vector<17x24x20xbf16> to vector<408x20xbf16>
    %c12 = arith.constant 12 : index
    %c0_53 = arith.constant 0 : index
    %c0_54 = arith.constant 0 : index
    %96 = vector.load %arg3[%c12, %c0_53, %c0_54] : memref<15x20x16xbf16, #tpu.memory_space<vmem>>, vector<1x20x16xbf16>
    %97 = vector.shape_cast %96 : vector<1x20x16xbf16> to vector<20x16xbf16>
    %cst_55 = arith.constant dense<0.000000e+00> : vector<408x16xf32>
    %98 = tpu.matmul %95, %97, %cst_55 {dimension_numbers = #tpu.dot_dimension_numbers<[1], [0], [0], [1], [0, 0, 1, 1], [], []>} : vector<408x20xbf16>, vector<20x16xbf16>, vector<408x16xf32> -> vector<408x16xf32>
    %99 = arith.addf %89, %98 : vector<408x16xf32>
    %100 = vector.extract_strided_slice %93 {offsets = [0, 1, 0], sizes = [17, 24, 20], strides = [1, 1, 1]} : vector<17x26x20xbf16> to vector<17x24x20xbf16>
    %101 = vector.shape_cast %100 : vector<17x24x20xbf16> to vector<408x20xbf16>
    %c13 = arith.constant 13 : index
    %c0_56 = arith.constant 0 : index
    %c0_57 = arith.constant 0 : index
    %102 = vector.load %arg3[%c13, %c0_56, %c0_57] : memref<15x20x16xbf16, #tpu.memory_space<vmem>>, vector<1x20x16xbf16>
    %103 = vector.shape_cast %102 : vector<1x20x16xbf16> to vector<20x16xbf16>
    %cst_58 = arith.constant dense<0.000000e+00> : vector<408x16xf32>
    %104 = tpu.matmul %101, %103, %cst_58 {dimension_numbers = #tpu.dot_dimension_numbers<[1], [0], [0], [1], [0, 0, 1, 1], [], []>} : vector<408x20xbf16>, vector<20x16xbf16>, vector<408x16xf32> -> vector<408x16xf32>
    %105 = arith.addf %99, %104 : vector<408x16xf32>
    %106 = vector.extract_strided_slice %93 {offsets = [0, 2, 0], sizes = [17, 24, 20], strides = [1, 1, 1]} : vector<17x26x20xbf16> to vector<17x24x20xbf16>
    %107 = vector.shape_cast %106 : vector<17x24x20xbf16> to vector<408x20xbf16>
    %c14 = arith.constant 14 : index
    %c0_59 = arith.constant 0 : index
    %c0_60 = arith.constant 0 : index
    %108 = vector.load %arg3[%c14, %c0_59, %c0_60] : memref<15x20x16xbf16, #tpu.memory_space<vmem>>, vector<1x20x16xbf16>
    %109 = vector.shape_cast %108 : vector<1x20x16xbf16> to vector<20x16xbf16>
    %cst_61 = arith.constant dense<0.000000e+00> : vector<408x16xf32>
    %110 = tpu.matmul %107, %109, %cst_61 {dimension_numbers = #tpu.dot_dimension_numbers<[1], [0], [0], [1], [0, 0, 1, 1], [], []>} : vector<408x20xbf16>, vector<20x16xbf16>, vector<408x16xf32> -> vector<408x16xf32>
    %111 = arith.addf %105, %110 : vector<408x16xf32>
    %c0_62 = arith.constant 0 : index
    %c0_63 = arith.constant 0 : index
    %112 = vector.load %arg4[%c0_62, %c0_63] : memref<1x16xf32, #tpu.memory_space<vmem>>, vector<1x16xf32>
    %113 = vector.broadcast %112 : vector<1x16xf32> to vector<408x16xf32>
    %114 = arith.addf %111, %113 : vector<408x16xf32>
    %115 = arith.truncf %114 : vector<408x16xf32> to vector<408x16xbf16>
    %c0_64 = arith.constant 0 : index
    %c0_65 = arith.constant 0 : index
    %116 = vector.load %arg5[%c0_64, %c0_65] : memref<408x16xbf16, #tpu.memory_space<vmem>>, vector<408x16xbf16>
    tpu.vector_store %arg5[%c0_64, %c0_65], %115 {strides = array<i32>} : memref<408x16xbf16, #tpu.memory_space<vmem>>, vector<408x16xbf16>,
    return
  }
  func.func @transform_0(%arg0: i32, %arg1: i32) -> (i32, i32, i32, i32) {
    %c0_i32 = arith.constant 0 : i32
    %c0_i32_0 = arith.constant 0 : i32
    %c0_i32_1 = arith.constant 0 : i32
    %c0_i32_2 = arith.constant 0 : i32
    return %arg0, %c0_i32, %c0_i32_0, %c0_i32_1 : i32, i32, i32, i32
  }
  func.func @transform_1(%arg0: i32, %arg1: i32) -> (i32, i32, i32) {
    %c0_i32 = arith.constant 0 : i32
    %c0_i32_0 = arith.constant 0 : i32
    %c0_i32_1 = arith.constant 0 : i32
    %c0_i32_2 = arith.constant 0 : i32
    return %c0_i32, %c0_i32_0, %c0_i32_1 : i32, i32, i32
  }
  func.func @transform_2(%arg0: i32, %arg1: i32) -> (i32, i32) {
    %c0_i32 = arith.constant 0 : i32
    %c0_i32_0 = arith.constant 0 : i32
    %c0_i32_1 = arith.constant 0 : i32
    return %c0_i32, %c0_i32_0 : i32, i32
  }
  func.func @transform_3(%arg0: i32, %arg1: i32) -> (i32, i32) {
    %c1_i32 = arith.constant 1 : i32
    %0 = arith.muli %arg0, %c1_i32 : i32
    %1 = arith.addi %0, %arg1 : i32
    %c0_i32 = arith.constant 0 : i32
    %c0_i32_0 = arith.constant 0 : i32
    return %1, %c0_i32 : i32, i32
  }
}

</mosaic_0001>

<llo_original>
// kernel: conv2d_nhwc.1
$region0: #{conv2d_nhwc.1}
  #allocation0 [shape = 'u32[]', space=smem, size = 0x4, offset = 0x4, fixed_abs, tag = 'smem constant byte address 0x4 - core index']
  #allocation1 [shape = 'u32[144,128]{1,0:T(1,128)}', space=vmem, size = 0x12000, scoped, tag = 'internal scratch']
  %s0 = inlined_call_operand.vmem [shape: bf16[38,2,26,20], index: 0, kind: input, shape index: {}]
  %s1 = inlined_call_operand.vmem [shape: bf16[15,20,16], index: 1, kind: input, shape index: {}]
  %s2 = inlined_call_operand.vmem [shape: f32[1,16], index: 2, kind: input, shape index: {}]
  %s3 = inlined_call_operand.vmem [shape: bf16[816,16], index: 3, kind: output, shape index: {}]
  %s4 = sld [smem:[#allocation0]]
  $region45: #{conv2d_nhwc.1} parent=0
    _
  %s6 = ssub.s32 1, %s4
  %s7 = scalar_select 0, %s6, %s4
  loop: start=0, step=1, limit=4
  $region2: #{conv2d_nhwc.1} parent=0 // loop_pre_header
    _
  $region3: #{conv2d_nhwc.1} parent=0 // loop_header
    %s9 = sphi 0, %s13
    %p10 = scmp.ge.s32.totalorder %s9, 4
    %s16 = sphi 0, %s28
    %s17 = sphi 0, %s24
    %s18 = sphi 0, %s16
    %s19 = sphi 0, %s17
    %s20 = sphi 0, %s18
    %s21 = sphi 0, %s19
    %s31 = sphi 0, %s33
    %s34 = sphi 0, %s31
    %s35 = sphi 0, %s34
    %s51 = sphi 0, %s35
    %s55 = sphi 0, %s55
    %s57 = sphi 0, %s55
    %s58 = sphi 0, %s57
    %s72 = sphi 0, %s58
    %s76 = sphi 0, %s76
    %s78 = sphi 0, %s76
    %s79 = sphi 0, %s78
    %s93 = sphi 0, %s79
    %s101 = sphi 0, %s103
    %s104 = sphi 0, %s101
    %s105 = sphi 0, %s104
    %s121 = sphi 0, %s105
  $region4: #{conv2d_nhwc.1} parent=0 // loop_header_branch
    %12 = sbr.rel (%p10) target = $region8
  $region5: #{conv2d_nhwc.1} parent=0 // loop_body
    %s14 = ssub.s32 %s9, 1
    %s15 = ssub.s32 %s9, 2
    %s22 = sadd.s32 1, %s17
    %p23 = scmp.ge.s32.totalorder %s22, 1
    %s24 = scalar_select %p23, 0, %s22
    %s25 = sadd.s32 1, %s16
    %s26 = scalar_select %p23, %s25, %s16
    %p27 = scmp.ge.s32.totalorder %s26, 2
    %s28 = scalar_select %p27, 0, %s26
    %s29 = ssub.s32 %s16, %s28
    %p30 = scmp.eq.s32.totalorder %s29, 0
    %s32 = sadd.s32 %s31, 1
    %s33 = scalar_select %p30, %s31, %s32
    %p36 = pneg %p30
    %p37 = scmp.eq.s32.totalorder %s9, 1
    %p38 = por %p36, %p37
    %p39 = scmp.ne.s32.totalorder %s31, %s34
    %p40 = scmp.eq.s32.totalorder %s9, 0
    %p41 = por %p39, %p40
    %p42 = scmp.ne.s32.totalorder %s31, %s34
    %p43 = scmp.eq.s32.totalorder %s14, 1
    %p44 = por %p42, %p43
    %p45 = scmp.ne.s32.totalorder %s34, %s35
    %p46 = scmp.eq.s32.totalorder %s14, 0
    %p47 = por %p45, %p46
    %p48 = scmp.ne.s32.totalorder %s34, %s35
    %p49 = scmp.eq.s32.totalorder %s15, 1
    %p50 = por %p48, %p49
    %p52 = scmp.ne.s32.totalorder %s35, %s51
    %p53 = scmp.eq.s32.totalorder %s15, 0
    %p54 = por %p52, %p53
    %s56 = sadd.s32 %s55, 1
    %p59 = scmp.eq.s32.totalorder %s9, 1
    %p60 = scmp.ne.s32.totalorder %s55, %s57
    %p61 = scmp.eq.s32.totalorder %s9, 0
    %p62 = por %p60, %p61
    %p63 = scmp.ne.s32.totalorder %s55, %s57
    %p64 = scmp.eq.s32.totalorder %s14, 1
    %p65 = por %p63, %p64
    %p66 = scmp.ne.s32.totalorder %s57, %s58
    %p67 = scmp.eq.s32.totalorder %s14, 0
    %p68 = por %p66, %p67
    %p69 = scmp.ne.s32.totalorder %s57, %s58
    %p70 = scmp.eq.s32.totalorder %s15, 1
    %p71 = por %p69, %p70
    %p73 = scmp.ne.s32.totalorder %s58, %s72
    %p74 = scmp.eq.s32.totalorder %s15, 0
    %p75 = por %p73, %p74
    %s77 = sadd.s32 %s76, 1
    %p80 = scmp.eq.s32.totalorder %s9, 1
    %p81 = scmp.ne.s32.totalorder %s76, %s78
    %p82 = scmp.eq.s32.totalorder %s9, 0
    %p83 = por %p81, %p82
    %p84 = scmp.ne.s32.totalorder %s76, %s78
    %p85 = scmp.eq.s32.totalorder %s14, 1
    %p86 = por %p84, %p85
    %p87 = scmp.ne.s32.totalorder %s78, %s79
    %p88 = scmp.eq.s32.totalorder %s14, 0
    %p89 = por %p87, %p88
    %p90 = scmp.ne.s32.totalorder %s78, %s79
    %p91 = scmp.eq.s32.totalorder %s15, 1
    %p92 = por %p90, %p91
    %p94 = scmp.ne.s32.totalorder %s79, %s93
    %p95 = scmp.eq.s32.totalorder %s15, 0
    %p96 = por %p94, %p95
    %s97 = sadd.s32 %s16, %s17
    %s98 = sadd.s32 %s28, %s24
    %s99 = ssub.s32 %s97, %s98
    %p100 = scmp.eq.s32.totalorder %s99, 0
    %s102 = sadd.s32 %s101, 1
    %s103 = scalar_select %p100, %s101, %s102
    %p106 = pneg %p100
    %p107 = scmp.eq.s32.totalorder %s9, 1
    %p108 = por %p106, %p107
    %p109 = scmp.ne.s32.totalorder %s101, %s104
    %p110 = scmp.eq.s32.totalorder %s9, 0
    %p111 = por %p109, %p110
    %p112 = scmp.ne.s32.totalorder %s101, %s104
    %p113 = scmp.eq.s32.totalorder %s14, 1
    %p114 = por %p112, %p113
    %p115 = scmp.ne.s32.totalorder %s104, %s105
    %p116 = scmp.eq.s32.totalorder %s14, 0
    %p117 = por %p115, %p116
    %p118 = scmp.ne.s32.totalorder %s104, %s105
    %p119 = scmp.eq.s32.totalorder %s15, 1
    %p120 = por %p118, %p119
    %p122 = scmp.ne.s32.totalorder %s105, %s121
    %p123 = scmp.eq.s32.totalorder %s15, 0
    %p124 = por %p122, %p123
    %p125 = scmp.le.s32.totalorder 1, %s9
    %p126 = scmp.lt.s32.totalorder %s9, 3
    %p127 = pnand %p125, %p126
    %p128 = pneg %p127
    // Predicated region
    $region9: #{conv2d_nhwc.1} parent=5 // pred_check
      _
    $region10: #{conv2d_nhwc.1} parent=5 // pred_check_branch
      %130 = sbr.rel (%p127) target = $region12
    $region11: #{conv2d_nhwc.1} parent=5 // pred_region
      %s131 = ssub.s32 %s9, 1
      // Predicated region
      $region13: #{conv2d_nhwc.1} parent=11 // pred_check
        %p132 = pneg %p68
      $region14: #{conv2d_nhwc.1} parent=11 // pred_check_branch
        %134 = sbr.rel (%p132) target = $region16
      $region15: #{conv2d_nhwc.1} parent=11 // pred_region
        _
      $region16: #{conv2d_nhwc.1} parent=11 // pred_fallthru
        _
      // Predicated region
      $region17: #{conv2d_nhwc.1} parent=11 // pred_check
        %p135 = pneg %p89
      $region18: #{conv2d_nhwc.1} parent=11 // pred_check_branch
        %137 = sbr.rel (%p135) target = $region20
      $region19: #{conv2d_nhwc.1} parent=11 // pred_region
        _
      $region20: #{conv2d_nhwc.1} parent=11 // pred_fallthru
        _
    $region12: #{conv2d_nhwc.1} parent=5 // pred_fallthru
      _
    %p138 = scmp.lt.s32.totalorder %s9, 2
    // Predicated region
    $region21: #{conv2d_nhwc.1} parent=5 // pred_check
      %p139 = pneg %p138
    $region22: #{conv2d_nhwc.1} parent=5 // pred_check_branch
      %141 = sbr.rel (%p139) target = $region24
    $region23: #{conv2d_nhwc.1} parent=5 // pred_region
      // Predicated region
      $region25: #{conv2d_nhwc.1} parent=23 // pred_check
        %p142 = pneg %p41
      $region26: #{conv2d_nhwc.1} parent=23 // pred_check_branch
        %144 = sbr.rel (%p142) target = $region28
      $region27: #{conv2d_nhwc.1} parent=23 // pred_region
        %s145 = smul.u32 19, %s16
        %p146 = scmp.lt.s32.totalorder %s145, 37
        %s147 = scalar_select %p146, %s145, 37
        %s148 = smul.addr %s147, 8
        %s149 = smul.addr %s148, 4
        %s150 = scalar_lea.vmem %s0, %s149
        %s151 = smul.u32 19, %s16
      $region28: #{conv2d_nhwc.1} parent=23 // pred_fallthru
        _
    $region24: #{conv2d_nhwc.1} parent=5 // pred_fallthru
      _
    %p152 = scmp.le.s32.totalorder 1, %s9
    %p153 = scmp.lt.s32.totalorder %s9, 3
    %p154 = pnand %p152, %p153
    %p155 = pneg %p154
    // Predicated region
    $region29: #{conv2d_nhwc.1} parent=5 // pred_check
      _
    $region30: #{conv2d_nhwc.1} parent=5 // pred_check_branch
      %157 = sbr.rel (%p154) target = $region32
    $region31: #{conv2d_nhwc.1} parent=5 // pred_region
      %s158 = ssub.s32 %s9, 1
      %s159 = smul.u32 19, %s18
      %p160 = scmp.lt.s32.totalorder %s159, 37
      %s161 = scalar_select %p160, %s159, 37
      %s162 = smul.addr %s161, 8
      %s163 = smul.addr %s162, 4
      %s164 = scalar_lea.vmem %s0, %s163
      %p165 = pneg %p47
      %p166 = pneg %p44
      %p167 = pneg %p68
      %p168 = pneg %p65
      %p169 = pneg %p89
      %p170 = pneg %p86
      %p171 = pneg %p117
      %p172 = pneg %p114
      %s173 = sadd.s32 %s18, %s19
      %s174 = smul.u32 51, %s173
      %p175 = scmp.lt.s32.totalorder %s174, 101
      %s176 = scalar_select %p175, %s174, 101
      %s177 = smul.addr %s176, 4
      %s178 = scalar_lea.vmem %s3, %s177
      %s179 = smul.u32 19, %s18
      %p180 = scmp.lt.s32.totalorder %s179, 37
      %s181 = scalar_select %p180, %s179, 37
      %s182 = smul.addr %s181, 8
      %s183 = smul.addr %s182, 4
      %s184 = scalar_lea.vmem %s0, %s183
      %s185 = smul.u32 19, %s18
      %s186 = sadd.s32 %s18, %s19
      %s187 = smul.u32 51, %s186
      %p188 = scmp.lt.s32.totalorder %s187, 101
      %s189 = scalar_select %p188, %s187, 101
      %s190 = smul.addr %s189, 4
      %s191 = scalar_lea.vmem %s3, %s190
      %s192 = sadd.s32 %s18, %s19
      %s193 = smul.u32 51, %s192
      %s195 = smul.u32 %s19, 17
      %s196 = smul.u32 %s195, 8
      %s197 = smul.addr %s196, 4
      %s198 = scalar_lea.vmem %s184, %s197
      %v199 = vld [vmem:[%s198] sm:$0xf]
      %v200 = vld [vmem:[%s198 + $0x4] sm:$0xf]
      %v201 = vld [vmem:[%s198 + $0x8] sm:$0xf]
      %v202 = vld [vmem:[%s198 + $0xc] sm:$0x1]
      %v203 = vld [vmem:[%s198 + $0x20] sm:$0xf]
      %v204 = vld [vmem:[%s198 + $0x24] sm:$0xf]
      %v205 = vld [vmem:[%s198 + $0x28] sm:$0xf]
      %v206 = vld [vmem:[%s198 + $0x2c] sm:$0x1]
      %v207 = vld [vmem:[%s198 + $0x40] sm:$0xf]
      %v208 = vld [vmem:[%s198 + $0x44] sm:$0xf]
      %v209 = vld [vmem:[%s198 + $0x48] sm:$0xf]
      %v210 = vld [vmem:[%s198 + $0x4c] sm:$0x1]
      %v211 = vld [vmem:[%s198 + $0x60] sm:$0xf]
      %v212 = vld [vmem:[%s198 + $0x64] sm:$0xf]
      %v213 = vld [vmem:[%s198 + $0x68] sm:$0xf]
      %v214 = vld [vmem:[%s198 + $0x6c] sm:$0x1]
      %v215 = vld [vmem:[%s198 + $0x80] sm:$0xf]
      %v216 = vld [vmem:[%s198 + $0x84] sm:$0xf]
      %v217 = vld [vmem:[%s198 + $0x88] sm:$0xf]
      %v218 = vld [vmem:[%s198 + $0x8c] sm:$0x1]
      %v219 = vld [vmem:[%s198 + $0xa0] sm:$0xf]
      %v220 = vld [vmem:[%s198 + $0xa4] sm:$0xf]
      %v221 = vld [vmem:[%s198 + $0xa8] sm:$0xf]
      %v222 = vld [vmem:[%s198 + $0xac] sm:$0x1]
      %v223 = vld [vmem:[%s198 + $0xc0] sm:$0xf]
      %v224 = vld [vmem:[%s198 + $0xc4] sm:$0xf]
      %v225 = vld [vmem:[%s198 + $0xc8] sm:$0xf]
      %v226 = vld [vmem:[%s198 + $0xcc] sm:$0x1]
      %v227 = vld [vmem:[%s198 + $0xe0] sm:$0xf]
      %v228 = vld [vmem:[%s198 + $0xe4] sm:$0xf]
      %v229 = vld [vmem:[%s198 + $0xe8] sm:$0xf]
      %v230 = vld [vmem:[%s198 + $0xec] sm:$0x1]
      %v231 = vld [vmem:[%s198 + $0x100] sm:$0xf]
      %v232 = vld [vmem:[%s198 + $0x104] sm:$0xf]
      %v233 = vld [vmem:[%s198 + $0x108] sm:$0xf]
      %v234 = vld [vmem:[%s198 + $0x10c] sm:$0x1]
      %v235 = vld [vmem:[%s198 + $0x120] sm:$0xf]
      %v236 = vld [vmem:[%s198 + $0x124] sm:$0xf]
      %v237 = vld [vmem:[%s198 + $0x128] sm:$0xf]
      %v238 = vld [vmem:[%s198 + $0x12c] sm:$0x1]
      %v239 = vld [vmem:[%s198 + $0x140] sm:$0xf]
      %v240 = vld [vmem:[%s198 + $0x144] sm:$0xf]
      %v241 = vld [vmem:[%s198 + $0x148] sm:$0xf]
      %v242 = vld [vmem:[%s198 + $0x14c] sm:$0x1]
      %v243 = vld [vmem:[%s198 + $0x160] sm:$0xf]
      %v244 = vld [vmem:[%s198 + $0x164] sm:$0xf]
      %v245 = vld [vmem:[%s198 + $0x168] sm:$0xf]
      %v246 = vld [vmem:[%s198 + $0x16c] sm:$0x1]
      %v247 = vld [vmem:[%s198 + $0x180] sm:$0xf]
      %v248 = vld [vmem:[%s198 + $0x184] sm:$0xf]
      %v249 = vld [vmem:[%s198 + $0x188] sm:$0xf]
      %v250 = vld [vmem:[%s198 + $0x18c] sm:$0x1]
      %v251 = vld [vmem:[%s198 + $0x1a0] sm:$0xf]
      %v252 = vld [vmem:[%s198 + $0x1a4] sm:$0xf]
      %v253 = vld [vmem:[%s198 + $0x1a8] sm:$0xf]
      %v254 = vld [vmem:[%s198 + $0x1ac] sm:$0x1]
      %v255 = vld [vmem:[%s198 + $0x1c0] sm:$0xf]
      %v256 = vld [vmem:[%s198 + $0x1c4] sm:$0xf]
      %v257 = vld [vmem:[%s198 + $0x1c8] sm:$0xf]
      %v258 = vld [vmem:[%s198 + $0x1cc] sm:$0x1]
      %v259 = vld [vmem:[%s198 + $0x1e0] sm:$0xf]
      %v260 = vld [vmem:[%s198 + $0x1e4] sm:$0xf]
      %v261 = vld [vmem:[%s198 + $0x1e8] sm:$0xf]
      %v262 = vld [vmem:[%s198 + $0x1ec] sm:$0x1]
      %v263 = vld [vmem:[%s198 + $0x200] sm:$0xf]
      %v264 = vld [vmem:[%s198 + $0x204] sm:$0xf]
      %v265 = vld [vmem:[%s198 + $0x208] sm:$0xf]
      %v266 = vld [vmem:[%s198 + $0x20c] sm:$0x1]
      %v267 = vld [vmem:[%s1] sm:$0xf]
      %v268 = vld [vmem:[%s1 + $0x4] sm:$0xf]
      %v269 = vld [vmem:[%s1 + $0x8] sm:$0x3]
      %vm270 = vsmask.f32 3328
      %vm271 = vsmask.f32 7440
      %vm272 = vmor %vm270, %vm271
      %v274 = vshrl.u32 %v199, 16
      %v276 = vrot.slane %v274, 4
      %v277 = vshll.u32 %v199, 16
      %v279 = vrot.slane %v277, 5
      %v280 = vor.u32 %v276, %v279
      %v281 = vrot.slane %v280, 4
      %v283 = vshll.u32 %v200, 16
      %v285 = vrot.slane %v283, 5
      %v286 = vsel %vm272, %v281, %v285
      %v287 = vshrl.u32 %v200, 16
      %v289 = vrot.slane %v287, 4
      %v290 = vor.u32 %v289, %v285
      %v291 = vrot.slane %v290, 4
      %v293 = vshll.u32 %v201, 16
      %v295 = vrot.slane %v293, 5
      %v296 = vsel %vm272, %v291, %v295
      %v297 = vshrl.u32 %v201, 16
      %v299 = vrot.slane %v297, 4
      %v300 = vor.u32 %v299, %v295
      %v301 = vrot.slane %v300, 4
      %v303 = vshll.u32 %v202, 16
      %v305 = vrot.slane %v303, 5
      %v306 = vsel %vm272, %v301, %v305
      %v308 = vshrl.u32 %v203, 16
      %v310 = vrot.slane %v308, 4
      %v311 = vshll.u32 %v203, 16
      %v313 = vrot.slane %v311, 5
      %v314 = vor.u32 %v310, %v313
      %v315 = vrot.slane %v314, 4
      %v317 = vshll.u32 %v204, 16
      %v319 = vrot.slane %v317, 5
      %v320 = vsel %vm272, %v315, %v319
      %v321 = vshrl.u32 %v204, 16
      %v323 = vrot.slane %v321, 4
      %v324 = vor.u32 %v323, %v319
      %v325 = vrot.slane %v324, 4
      %v327 = vshll.u32 %v205, 16
      %v329 = vrot.slane %v327, 5
      %v330 = vsel %vm272, %v325, %v329
      %v331 = vshrl.u32 %v205, 16
      %v333 = vrot.slane %v331, 4
      %v334 = vor.u32 %v333, %v329
      %v335 = vrot.slane %v334, 4
      %v337 = vshll.u32 %v206, 16
      %v339 = vrot.slane %v337, 5
      %v340 = vsel %vm272, %v335, %v339
      %v342 = vshrl.u32 %v207, 16
      %v344 = vrot.slane %v342, 4
      %v345 = vshll.u32 %v207, 16
      %v347 = vrot.slane %v345, 5
      %v348 = vor.u32 %v344, %v347
      %v349 = vrot.slane %v348, 4
      %v351 = vshll.u32 %v208, 16
      %v353 = vrot.slane %v351, 5
      %v354 = vsel %vm272, %v349, %v353
      %v355 = vshrl.u32 %v208, 16
      %v357 = vrot.slane %v355, 4
      %v358 = vor.u32 %v357, %v353
      %v359 = vrot.slane %v358, 4
      %v361 = vshll.u32 %v209, 16
      %v363 = vrot.slane %v361, 5
      %v364 = vsel %vm272, %v359, %v363
      %v365 = vshrl.u32 %v209, 16
      %v367 = vrot.slane %v365, 4
      %v368 = vor.u32 %v367, %v363
      %v369 = vrot.slane %v368, 4
      %v371 = vshll.u32 %v210, 16
      %v373 = vrot.slane %v371, 5
      %v374 = vsel %vm272, %v369, %v373
      %v376 = vshrl.u32 %v211, 16
      %v378 = vrot.slane %v376, 4
      %v379 = vshll.u32 %v211, 16
      %v381 = vrot.slane %v379, 5
      %v382 = vor.u32 %v378, %v381
      %v383 = vrot.slane %v382, 4
      %v385 = vshll.u32 %v212, 16
      %v387 = vrot.slane %v385, 5
      %v388 = vsel %vm272, %v383, %v387
      %v389 = vshrl.u32 %v212, 16
      %v391 = vrot.slane %v389, 4
      %v392 = vor.u32 %v391, %v387
      %v393 = vrot.slane %v392, 4
      %v395 = vshll.u32 %v213, 16
      %v397 = vrot.slane %v395, 5
      %v398 = vsel %vm272, %v393, %v397
      %v399 = vshrl.u32 %v213, 16
      %v401 = vrot.slane %v399, 4
      %v402 = vor.u32 %v401, %v397
      %v403 = vrot.slane %v402, 4
      %v405 = vshll.u32 %v214, 16
      %v407 = vrot.slane %v405, 5
      %v408 = vsel %vm272, %v403, %v407
      %v410 = vshrl.u32 %v215, 16
      %v412 = vrot.slane %v410, 4
      %v413 = vshll.u32 %v215, 16
      %v415 = vrot.slane %v413, 5
      %v416 = vor.u32 %v412, %v415
      %v417 = vrot.slane %v416, 4
      %v419 = vshll.u32 %v216, 16
      %v421 = vrot.slane %v419, 5
      %v422 = vsel %vm272, %v417, %v421
      %v423 = vshrl.u32 %v216, 16
      %v425 = vrot.slane %v423, 4
      %v426 = vor.u32 %v425, %v421
      %v427 = vrot.slane %v426, 4
      %v429 = vshll.u32 %v217, 16
      %v431 = vrot.slane %v429, 5
      %v432 = vsel %vm272, %v427, %v431
      %v433 = vshrl.u32 %v217, 16
      %v435 = vrot.slane %v433, 4
      %v436 = vor.u32 %v435, %v431
      %v437 = vrot.slane %v436, 4
      %v439 = vshll.u32 %v218, 16
      %v441 = vrot.slane %v439, 5
      %v442 = vsel %vm272, %v437, %v441
      %v444 = vshrl.u32 %v219, 16
      %v446 = vrot.slane %v444, 4
      %v447 = vshll.u32 %v219, 16
      %v449 = vrot.slane %v447, 5
      %v450 = vor.u32 %v446, %v449
      %v451 = vrot.slane %v450, 4
      %v453 = vshll.u32 %v220, 16
      %v455 = vrot.slane %v453, 5
      %v456 = vsel %vm272, %v451, %v455
      %v457 = vshrl.u32 %v220, 16
      %v459 = vrot.slane %v457, 4
      %v460 = vor.u32 %v459, %v455
      %v461 = vrot.slane %v460, 4
      %v463 = vshll.u32 %v221, 16
      %v465 = vrot.slane %v463, 5
      %v466 = vsel %vm272, %v461, %v465
      %v467 = vshrl.u32 %v221, 16
      %v469 = vrot.slane %v467, 4
      %v470 = vor.u32 %v469, %v465
      %v471 = vrot.slane %v470, 4
      %v473 = vshll.u32 %v222, 16
      %v475 = vrot.slane %v473, 5
      %v476 = vsel %vm272, %v471, %v475
      %v478 = vshrl.u32 %v223, 16
      %v480 = vrot.slane %v478, 4
      %v481 = vshll.u32 %v223, 16
      %v483 = vrot.slane %v481, 5
      %v484 = vor.u32 %v480, %v483
      %v485 = vrot.slane %v484, 4
      %v487 = vshll.u32 %v224, 16
      %v489 = vrot.slane %v487, 5
      %v490 = vsel %vm272, %v485, %v489
      %v491 = vshrl.u32 %v224, 16
      %v493 = vrot.slane %v491, 4
      %v494 = vor.u32 %v493, %v489
      %v495 = vrot.slane %v494, 4
      %v497 = vshll.u32 %v225, 16
      %v499 = vrot.slane %v497, 5
      %v500 = vsel %vm272, %v495, %v499
      %v501 = vshrl.u32 %v225, 16
      %v503 = vrot.slane %v501, 4
      %v504 = vor.u32 %v503, %v499
      %v505 = vrot.slane %v504, 4
      %v507 = vshll.u32 %v226, 16
      %v509 = vrot.slane %v507, 5
      %v510 = vsel %vm272, %v505, %v509
      %v512 = vshrl.u32 %v227, 16
      %v514 = vrot.slane %v512, 4
      %v515 = vshll.u32 %v227, 16
      %v517 = vrot.slane %v515, 5
      %v518 = vor.u32 %v514, %v517
      %v519 = vrot.slane %v518, 4
      %v521 = vshll.u32 %v228, 16
      %v523 = vrot.slane %v521, 5
      %v524 = vsel %vm272, %v519, %v523
      %v525 = vshrl.u32 %v228, 16
      %v527 = vrot.slane %v525, 4
      %v528 = vor.u32 %v527, %v523
      %v529 = vrot.slane %v528, 4
      %v531 = vshll.u32 %v229, 16
      %v533 = vrot.slane %v531, 5
      %v534 = vsel %vm272, %v529, %v533
      %v535 = vshrl.u32 %v229, 16
      %v537 = vrot.slane %v535, 4
      %v538 = vor.u32 %v537, %v533
      %v539 = vrot.slane %v538, 4
      %v541 = vshll.u32 %v230, 16
      %v543 = vrot.slane %v541, 5
      %v544 = vsel %vm272, %v539, %v543
      %v546 = vshrl.u32 %v231, 16
      %v548 = vrot.slane %v546, 4
      %v549 = vshll.u32 %v231, 16
      %v551 = vrot.slane %v549, 5
      %v552 = vor.u32 %v548, %v551
      %v553 = vrot.slane %v552, 4
      %v555 = vshll.u32 %v232, 16
      %v557 = vrot.slane %v555, 5
      %v558 = vsel %vm272, %v553, %v557
      %v559 = vshrl.u32 %v232, 16
      %v561 = vrot.slane %v559, 4
      %v562 = vor.u32 %v561, %v557
      %v563 = vrot.slane %v562, 4
      %v565 = vshll.u32 %v233, 16
      %v567 = vrot.slane %v565, 5
      %v568 = vsel %vm272, %v563, %v567
      %v569 = vshrl.u32 %v233, 16
      %v571 = vrot.slane %v569, 4
      %v572 = vor.u32 %v571, %v567
      %v573 = vrot.slane %v572, 4
      %v575 = vshll.u32 %v234, 16
      %v577 = vrot.slane %v575, 5
      %v578 = vsel %vm272, %v573, %v577
      %v580 = vshrl.u32 %v235, 16
      %v582 = vrot.slane %v580, 4
      %v583 = vshll.u32 %v235, 16
      %v585 = vrot.slane %v583, 5
      %v586 = vor.u32 %v582, %v585
      %v587 = vrot.slane %v586, 4
      %v589 = vshll.u32 %v236, 16
      %v591 = vrot.slane %v589, 5
      %v592 = vsel %vm272, %v587, %v591
      %v593 = vshrl.u32 %v236, 16
      %v595 = vrot.slane %v593, 4
      %v596 = vor.u32 %v595, %v591
      %v597 = vrot.slane %v596, 4
      %v599 = vshll.u32 %v237, 16
      %v601 = vrot.slane %v599, 5
      %v602 = vsel %vm272, %v597, %v601
      %v603 = vshrl.u32 %v237, 16
      %v605 = vrot.slane %v603, 4
      %v606 = vor.u32 %v605, %v601
      %v607 = vrot.slane %v606, 4
      %v609 = vshll.u32 %v238, 16
      %v611 = vrot.slane %v609, 5
      %v612 = vsel %vm272, %v607, %v611
      %v614 = vshrl.u32 %v239, 16
      %v616 = vrot.slane %v614, 4
      %v617 = vshll.u32 %v239, 16
      %v619 = vrot.slane %v617, 5
      %v620 = vor.u32 %v616, %v619
      %v621 = vrot.slane %v620, 4
      %v623 = vshll.u32 %v240, 16
      %v625 = vrot.slane %v623, 5
      %v626 = vsel %vm272, %v621, %v625
      %v627 = vshrl.u32 %v240, 16
      %v629 = vrot.slane %v627, 4
      %v630 = vor.u32 %v629, %v625
      %v631 = vrot.slane %v630, 4
      %v633 = vshll.u32 %v241, 16
      %v635 = vrot.slane %v633, 5
      %v636 = vsel %vm272, %v631, %v635
      %v637 = vshrl.u32 %v241, 16
      %v639 = vrot.slane %v637, 4
      %v640 = vor.u32 %v639, %v635
      %v641 = vrot.slane %v640, 4
      %v643 = vshll.u32 %v242, 16
      %v645 = vrot.slane %v643, 5
      %v646 = vsel %vm272, %v641, %v645
      %v648 = vshrl.u32 %v243, 16
      %v650 = vrot.slane %v648, 4
      %v651 = vshll.u32 %v243, 16
      %v653 = vrot.slane %v651, 5
      %v654 = vor.u32 %v650, %v653
      %v655 = vrot.slane %v654, 4
      %v657 = vshll.u32 %v244, 16
      %v659 = vrot.slane %v657, 5
      %v660 = vsel %vm272, %v655, %v659
      %v661 = vshrl.u32 %v244, 16
      %v663 = vrot.slane %v661, 4
      %v664 = vor.u32 %v663, %v659
      %v665 = vrot.slane %v664, 4
      %v667 = vshll.u32 %v245, 16
      %v669 = vrot.slane %v667, 5
      %v670 = vsel %vm272, %v665, %v669
      %v671 = vshrl.u32 %v245, 16
      %v673 = vrot.slane %v671, 4
      %v674 = vor.u32 %v673, %v669
      %v675 = vrot.slane %v674, 4
      %v677 = vshll.u32 %v246, 16
      %v679 = vrot.slane %v677, 5
      %v680 = vsel %vm272, %v675, %v679
      %v682 = vshrl.u32 %v247, 16
      %v684 = vrot.slane %v682, 4
      %v685 = vshll.u32 %v247, 16
      %v687 = vrot.slane %v685, 5
      %v688 = vor.u32 %v684, %v687
      %v689 = vrot.slane %v688, 4
      %v691 = vshll.u32 %v248, 16
      %v693 = vrot.slane %v691, 5
      %v694 = vsel %vm272, %v689, %v693
      %v695 = vshrl.u32 %v248, 16
      %v697 = vrot.slane %v695, 4
      %v698 = vor.u32 %v697, %v693
      %v699 = vrot.slane %v698, 4
      %v701 = vshll.u32 %v249, 16
      %v703 = vrot.slane %v701, 5
      %v704 = vsel %vm272, %v699, %v703
      %v705 = vshrl.u32 %v249, 16
      %v707 = vrot.slane %v705, 4
      %v708 = vor.u32 %v707, %v703
      %v709 = vrot.slane %v708, 4
      %v711 = vshll.u32 %v250, 16
      %v713 = vrot.slane %v711, 5
      %v714 = vsel %vm272, %v709, %v713
      %v716 = vshrl.u32 %v251, 16
      %v718 = vrot.slane %v716, 4
      %v719 = vshll.u32 %v251, 16
      %v721 = vrot.slane %v719, 5
      %v722 = vor.u32 %v718, %v721
      %v723 = vrot.slane %v722, 4
      %v725 = vshll.u32 %v252, 16
      %v727 = vrot.slane %v725, 5
      %v728 = vsel %vm272, %v723, %v727
      %v729 = vshrl.u32 %v252, 16
      %v731 = vrot.slane %v729, 4
      %v732 = vor.u32 %v731, %v727
      %v733 = vrot.slane %v732, 4
      %v735 = vshll.u32 %v253, 16
      %v737 = vrot.slane %v735, 5
      %v738 = vsel %vm272, %v733, %v737
      %v739 = vshrl.u32 %v253, 16
      %v741 = vrot.slane %v739, 4
      %v742 = vor.u32 %v741, %v737
      %v743 = vrot.slane %v742, 4
      %v745 = vshll.u32 %v254, 16
      %v747 = vrot.slane %v745, 5
      %v748 = vsel %vm272, %v743, %v747
      %v750 = vshrl.u32 %v255, 16
      %v752 = vrot.slane %v750, 4
      %v753 = vshll.u32 %v255, 16
      %v755 = vrot.slane %v753, 5
      %v756 = vor.u32 %v752, %v755
      %v757 = vrot.slane %v756, 4
      %v759 = vshll.u32 %v256, 16
      %v761 = vrot.slane %v759, 5
      %v762 = vsel %vm272, %v757, %v761
      %v763 = vshrl.u32 %v256, 16
      %v765 = vrot.slane %v763, 4
      %v766 = vor.u32 %v765, %v761
      %v767 = vrot.slane %v766, 4
      %v769 = vshll.u32 %v257, 16
      %v771 = vrot.slane %v769, 5
      %v772 = vsel %vm272, %v767, %v771
      %v773 = vshrl.u32 %v257, 16
      %v775 = vrot.slane %v773, 4
      %v776 = vor.u32 %v775, %v771
      %v777 = vrot.slane %v776, 4
      %v779 = vshll.u32 %v258, 16
      %v781 = vrot.slane %v779, 5
      %v782 = vsel %vm272, %v777, %v781
      %v784 = vshrl.u32 %v259, 16
      %v786 = vrot.slane %v784, 4
      %v787 = vshll.u32 %v259, 16
      %v789 = vrot.slane %v787, 5
      %v790 = vor.u32 %v786, %v789
      %v791 = vrot.slane %v790, 4
      %v793 = vshll.u32 %v260, 16
      %v795 = vrot.slane %v793, 5
      %v796 = vsel %vm272, %v791, %v795
      %v797 = vshrl.u32 %v260, 16
      %v799 = vrot.slane %v797, 4
      %v800 = vor.u32 %v799, %v795
      %v801 = vrot.slane %v800, 4
      %v803 = vshll.u32 %v261, 16
      %v805 = vrot.slane %v803, 5
      %v806 = vsel %vm272, %v801, %v805
      %v807 = vshrl.u32 %v261, 16
      %v809 = vrot.slane %v807, 4
      %v810 = vor.u32 %v809, %v805
      %v811 = vrot.slane %v810, 4
      %v813 = vshll.u32 %v262, 16
      %v815 = vrot.slane %v813, 5
      %v816 = vsel %vm272, %v811, %v815
      %v818 = vshrl.u32 %v263, 16
      %v820 = vrot.slane %v818, 4
      %v821 = vshll.u32 %v263, 16
      %v823 = vrot.slane %v821, 5
      %v824 = vor.u32 %v820, %v823
      %v825 = vrot.slane %v824, 4
      %v827 = vshll.u32 %v264, 16
      %v829 = vrot.slane %v827, 5
      %v830 = vsel %vm272, %v825, %v829
      %v831 = vshrl.u32 %v264, 16
      %v833 = vrot.slane %v831, 4
      %v834 = vor.u32 %v833, %v829
      %v835 = vrot.slane %v834, 4
      %v837 = vshll.u32 %v265, 16
      %v839 = vrot.slane %v837, 5
      %v840 = vsel %vm272, %v835, %v839
      %v841 = vshrl.u32 %v265, 16
      %v843 = vrot.slane %v841, 4
      %v844 = vor.u32 %v843, %v839
      %v845 = vrot.slane %v844, 4
      %v847 = vshll.u32 %v266, 16
      %v849 = vrot.slane %v847, 5
      %v850 = vsel %vm272, %v845, %v849
      %s851 = scalar_lea.vmem %s1, 12
      %v852 = vld [vmem:[%s851] sm:$0xf]
      %v853 = vld [vmem:[%s851 + $0x4] sm:$0xf]
      %v854 = vld [vmem:[%s851 + $0x8] sm:$0x3]
      %v855 = vunpack.c.l.b16 %v286
      %v856 = vunpack.c.l.b16 %v296
      %v857 = vunpack.c.l.b16 %v306
      %v858 = vunpack.c.l.b16 %v320
      %v859 = vunpack.c.l.b16 %v330
      %v860 = vunpack.c.l.b16 %v340
      %v861 = vunpack.c.l.b16 %v354
      %v862 = vunpack.c.l.b16 %v364
      %v863 = vunpack.c.l.b16 %v374
      %v864 = vunpack.c.l.b16 %v388
      %v865 = vunpack.c.l.b16 %v398
      %v866 = vunpack.c.l.b16 %v408
      %v867 = vunpack.c.l.b16 %v422
      %v868 = vunpack.c.l.b16 %v432
      %v869 = vunpack.c.l.b16 %v442
      %v870 = vunpack.c.l.b16 %v456
      %v871 = vunpack.c.l.b16 %v466
      %v872 = vunpack.c.l.b16 %v476
      %v873 = vunpack.c.l.b16 %v490
      %v874 = vunpack.c.l.b16 %v500
      %v875 = vunpack.c.l.b16 %v510
      %v876 = vunpack.c.l.b16 %v524
      %v877 = vunpack.c.l.b16 %v534
      %v878 = vunpack.c.l.b16 %v544
      %v879 = vunpack.c.l.b16 %v558
      %v880 = vunpack.c.l.b16 %v568
      %v881 = vunpack.c.l.b16 %v578
      %v882 = vunpack.c.l.b16 %v592
      %v883 = vunpack.c.l.b16 %v602
      %v884 = vunpack.c.l.b16 %v612
      %v885 = vunpack.c.l.b16 %v626
      %v886 = vunpack.c.l.b16 %v636
      %v887 = vunpack.c.l.b16 %v646
      %v888 = vunpack.c.l.b16 %v660
      %v889 = vunpack.c.l.b16 %v670
      %v890 = vunpack.c.l.b16 %v680
      %v891 = vunpack.c.l.b16 %v694
      %v892 = vunpack.c.l.b16 %v704
      %v893 = vunpack.c.l.b16 %v714
      %v894 = vunpack.c.l.b16 %v728
      %v895 = vunpack.c.l.b16 %v738
      %v896 = vunpack.c.l.b16 %v748
      %v897 = vunpack.c.l.b16 %v762
      %v898 = vunpack.c.l.b16 %v772
      %v899 = vunpack.c.l.b16 %v782
      %v900 = vunpack.c.l.b16 %v796
      %v901 = vunpack.c.l.b16 %v806
      %v902 = vunpack.c.l.b16 %v816
      %v903 = vunpack.c.l.b16 %v830
      %v904 = vunpack.c.l.b16 %v840
      %v905 = vunpack.c.l.b16 %v850
      %v906 = vpack.c.b16 %v856, %v855
      %v907 = vpack.c.b16 %v858, %v857
      %v908 = vpack.c.b16 %v860, %v859
      %v909 = vpack.c.b16 %v862, %v861
      %v910 = vpack.c.b16 %v864, %v863
      %v911 = vpack.c.b16 %v866, %v865
      %v912 = vpack.c.b16 %v868, %v867
      %v913 = vpack.c.b16 %v870, %v869
      %v914 = vpack.c.b16 %v872, %v871
      %v915 = vpack.c.b16 %v874, %v873
      %v916 = vpack.c.b16 %v876, %v875
      %v917 = vpack.c.b16 %v878, %v877
      %v918 = vpack.c.b16 %v880, %v879
      %v919 = vpack.c.b16 %v882, %v881
      %v920 = vpack.c.b16 %v884, %v883
      %v921 = vpack.c.b16 %v886, %v885
      %v922 = vpack.c.b16 %v888, %v887
      %v923 = vpack.c.b16 %v890, %v889
      %v924 = vpack.c.b16 %v892, %v891
      %v925 = vpack.c.b16 %v894, %v893
      %v926 = vpack.c.b16 %v896, %v895
      %v927 = vpack.c.b16 %v898, %v897
      %v928 = vpack.c.b16 %v900, %v899
      %v929 = vpack.c.b16 %v902, %v901
      %v930 = vpack.c.b16 %v904, %v903
      %v931 = vpack.c.b16 %v905, %v905
      %v935 = vunpack.c.l.b16 %v852
      %v936 = vunpack.c.l.b16 %v853
      %v937 = vunpack.c.l.b16 %v854
      %v938 = vpack.c.b16 %v936, %v935
      %v939 = vpack.c.b16 %v937, %v937
      %vm941 = vcmask 162816
      %v943 = vsel %vm941, %v906, 0
      %v946 = vsel %vm941, %v907, 0
      %v949 = vsel %vm941, %v908, 0
      %v952 = vsel %vm941, %v909, 0
      %v955 = vsel %vm941, %v910, 0
      %v958 = vsel %vm941, %v911, 0
      %v961 = vsel %vm941, %v912, 0
      %v964 = vsel %vm941, %v913, 0
      %v967 = vsel %vm941, %v914, 0
      %v970 = vsel %vm941, %v915, 0
      %v973 = vsel %vm941, %v916, 0
      %v976 = vsel %vm941, %v917, 0
      %v979 = vsel %vm941, %v918, 0
      %v982 = vsel %vm941, %v919, 0
      %v985 = vsel %vm941, %v920, 0
      %v988 = vsel %vm941, %v921, 0
      %v991 = vsel %vm941, %v922, 0
      %v994 = vsel %vm941, %v923, 0
      %v997 = vsel %vm941, %v924, 0
      %v1000 = vsel %vm941, %v925, 0
      %v1003 = vsel %vm941, %v926, 0
      %v1006 = vsel %vm941, %v927, 0
      %v1009 = vsel %vm941, %v928, 0
      %v1012 = vsel %vm941, %v929, 0
      %v1015 = vsel %vm941, %v930, 0
      %v1018 = vsel %vm941, %v931, 0
      %vm1020 = vcmask 1041408
      %v1022 = vsel %vm1020, %v939, 0
      %1024 = vmatprep.subr.bf16.mxu0 0
      %1025 = vmatpush1.bf16.msra.mxu0 0
      %1026 = vmatprep.subr.bf16.mxu0 0
      %1027 = vmatpush1.bf16.msra.mxu0 0
      %1028 = vmatprep.subr.bf16.mxu0 0
      %1029 = vmatpush1.bf16.msra.mxu0 0
      %1030 = vmatprep.subr.bf16.mxu0 0
      %1031 = vmatpush1.bf16.msra.mxu0 0
      %1032 = vmatprep.subr.bf16.mxu0 0
      %1033 = vmatpush1.bf16.msra.mxu0 0
      %1034 = vmatprep.subr.bf16.mxu0 0
      %1035 = vmatpush1.bf16.msra.mxu0 0
      %1036 = vmatprep.subr.bf16.mxu0 0
      %1037 = vmatpush1.bf16.msra.mxu0 %v1022
      %1038 = vmatprep.subr.bf16.mxu0 0
      %1039 = vmatpush1.bf16.msra.mxu0 %v938
      %1040 = vmatprep.subr.bf16.mxu0 0
      %1041 = vmatpush2.bf16.msra.mxu0 0
      %1042 = vmatprep.subr.bf16.mxu0 0
      %1043 = vmatpush2.bf16.msra.mxu0 0
      %1044 = vmatprep.subr.bf16.mxu0 0
      %1045 = vmatpush2.bf16.msra.mxu0 0
      %1046 = vmatprep.subr.bf16.mxu0 0
      %1047 = vmatpush2.bf16.msra.mxu0 0
      %1048 = vmatprep.subr.bf16.mxu0 0
      %1049 = vmatpush2.bf16.msra.mxu0 0
      %1050 = vmatprep.subr.bf16.mxu0 0
      %1051 = vmatpush2.bf16.msra.mxu0 0
      %1052 = vmatprep.subr.bf16.mxu0 0
      %1053 = vmatpush2.bf16.msra.mxu0 0
      %1054 = vmatprep.subr.bf16.mxu0 0
      %1055 = vmatpush2.bf16.msra.mxu0 0
      %1056 = vmatprep.mubr.bf16.mxu0 0
      %1057 = vmatmul.mubr.bf16.gmra.mxu0 %v943
      %v1058 = vpop.f32.mrf.mxu0
      %v1059 = vadd.f32 0.0, %v1058
      %v1060 = vpop.f32.mrf.mxu0
      %v1061 = vpop.f32.mrf.mxu0
      %v1062 = vadd.f32 0.0, %v1061
      %v1063 = vpop.f32.mrf.mxu0
      %1064 = vmatprep.mubr.bf16.mxu0 0
      %1065 = vmatmul.mubr.bf16.gmra.mxu0 %v946
      %v1066 = vpop.f32.mrf.mxu0
      %v1067 = vadd.f32 0.0, %v1066
      %v1068 = vpop.f32.mrf.mxu0
      %v1069 = vpop.f32.mrf.mxu0
      %v1070 = vadd.f32 0.0, %v1069
      %v1071 = vpop.f32.mrf.mxu0
      %1072 = vmatprep.mubr.bf16.mxu0 0
      %1073 = vmatmul.mubr.bf16.gmra.mxu0 %v949
      %v1074 = vpop.f32.mrf.mxu0
      %v1075 = vadd.f32 0.0, %v1074
      %v1076 = vpop.f32.mrf.mxu0
      %v1077 = vpop.f32.mrf.mxu0
      %v1078 = vadd.f32 0.0, %v1077
      %v1079 = vpop.f32.mrf.mxu0
      %1080 = vmatprep.mubr.bf16.mxu0 0
      %1081 = vmatmul.mubr.bf16.gmra.mxu0 %v952
      %v1082 = vpop.f32.mrf.mxu0
      %v1083 = vadd.f32 0.0, %v1082
      %v1084 = vpop.f32.mrf.mxu0
      %v1085 = vpop.f32.mrf.mxu0
      %v1086 = vadd.f32 0.0, %v1085
      %v1087 = vpop.f32.mrf.mxu0
      %1088 = vmatprep.mubr.bf16.mxu0 0
      %1089 = vmatmul.mubr.bf16.gmra.mxu0 %v955
      %v1090 = vpop.f32.mrf.mxu0
      %v1091 = vadd.f32 0.0, %v1090
      %v1092 = vpop.f32.mrf.mxu0
      %v1093 = vpop.f32.mrf.mxu0
      %v1094 = vadd.f32 0.0, %v1093
      %v1095 = vpop.f32.mrf.mxu0
      %1096 = vmatprep.mubr.bf16.mxu0 0
      %1097 = vmatmul.mubr.bf16.gmra.mxu0 %v958
      %v1098 = vpop.f32.mrf.mxu0
      %v1099 = vadd.f32 0.0, %v1098
      %v1100 = vpop.f32.mrf.mxu0
      %v1101 = vpop.f32.mrf.mxu0
      %v1102 = vadd.f32 0.0, %v1101
      %v1103 = vpop.f32.mrf.mxu0
      %1104 = vmatprep.mubr.bf16.mxu0 0
      %1105 = vmatmul.mubr.bf16.gmra.mxu0 %v961
      %v1106 = vpop.f32.mrf.mxu0
      %v1107 = vadd.f32 0.0, %v1106
      %v1108 = vpop.f32.mrf.mxu0
      %v1109 = vpop.f32.mrf.mxu0
      %v1110 = vadd.f32 0.0, %v1109
      %v1111 = vpop.f32.mrf.mxu0
      %1112 = vmatprep.mubr.bf16.mxu0 0
      %1113 = vmatmul.mubr.bf16.gmra.mxu0 %v964
      %v1114 = vpop.f32.mrf.mxu0
      %v1115 = vadd.f32 0.0, %v1114
      %v1116 = vpop.f32.mrf.mxu0
      %v1117 = vpop.f32.mrf.mxu0
      %v1118 = vadd.f32 0.0, %v1117
      %v1119 = vpop.f32.mrf.mxu0
      %1120 = vmatprep.mubr.bf16.mxu0 0
      %1121 = vmatmul.mubr.bf16.gmra.mxu0 %v967
      %v1122 = vpop.f32.mrf.mxu0
      %v1123 = vadd.f32 0.0, %v1122
      %v1124 = vpop.f32.mrf.mxu0
      %v1125 = vpop.f32.mrf.mxu0
      %v1126 = vadd.f32 0.0, %v1125
      %v1127 = vpop.f32.mrf.mxu0
      %1128 = vmatprep.mubr.bf16.mxu0 0
      %1129 = vmatmul.mubr.bf16.gmra.mxu0 %v970
      %v1130 = vpop.f32.mrf.mxu0
      %v1131 = vadd.f32 0.0, %v1130
      %v1132 = vpop.f32.mrf.mxu0
      %v1133 = vpop.f32.mrf.mxu0
      %v1134 = vadd.f32 0.0, %v1133
      %v1135 = vpop.f32.mrf.mxu0
      %1136 = vmatprep.mubr.bf16.mxu0 0
      %1137 = vmatmul.mubr.bf16.gmra.mxu0 %v973
      %v1138 = vpop.f32.mrf.mxu0
      %v1139 = vadd.f32 0.0, %v1138
      %v1140 = vpop.f32.mrf.mxu0
      %v1141 = vpop.f32.mrf.mxu0
      %v1142 = vadd.f32 0.0, %v1141
      %v1143 = vpop.f32.mrf.mxu0
      %1144 = vmatprep.mubr.bf16.mxu0 0
      %1145 = vmatmul.mubr.bf16.gmra.mxu0 %v976
      %v1146 = vpop.f32.mrf.mxu0
      %v1147 = vadd.f32 0.0, %v1146
      %v1148 = vpop.f32.mrf.mxu0
      %v1149 = vpop.f32.mrf.mxu0
      %v1150 = vadd.f32 0.0, %v1149
      %v1151 = vpop.f32.mrf.mxu0
      %1152 = vmatprep.mubr.bf16.mxu0 0
      %1153 = vmatmul.mubr.bf16.gmra.mxu0 %v979
      %v1154 = vpop.f32.mrf.mxu0
      %v1155 = vadd.f32 0.0, %v1154
      %v1156 = vpop.f32.mrf.mxu0
      %v1157 = vpop.f32.mrf.mxu0
      %v1158 = vadd.f32 0.0, %v1157
      %v1159 = vpop.f32.mrf.mxu0
      %1160 = vmatprep.mubr.bf16.mxu0 0
      %1161 = vmatmul.mubr.bf16.gmra.mxu0 %v982
      %v1162 = vpop.f32.mrf.mxu0
      %v1163 = vadd.f32 0.0, %v1162
      %v1164 = vpop.f32.mrf.mxu0
      %v1165 = vpop.f32.mrf.mxu0
      %v1166 = vadd.f32 0.0, %v1165
      %v1167 = vpop.f32.mrf.mxu0
      %1168 = vmatprep.mubr.bf16.mxu0 0
      %1169 = vmatmul.mubr.bf16.gmra.mxu0 %v985
      %v1170 = vpop.f32.mrf.mxu0
      %v1171 = vadd.f32 0.0, %v1170
      %v1172 = vpop.f32.mrf.mxu0
      %v1173 = vpop.f32.mrf.mxu0
      %v1174 = vadd.f32 0.0, %v1173
      %v1175 = vpop.f32.mrf.mxu0
      %1176 = vmatprep.mubr.bf16.mxu0 0
      %1177 = vmatmul.mubr.bf16.gmra.mxu0 %v988
      %v1178 = vpop.f32.mrf.mxu0
      %v1179 = vadd.f32 0.0, %v1178
      %v1180 = vpop.f32.mrf.mxu0
      %v1181 = vpop.f32.mrf.mxu0
      %v1182 = vadd.f32 0.0, %v1181
      %v1183 = vpop.f32.mrf.mxu0
      %1184 = vmatprep.mubr.bf16.mxu0 0
      %1185 = vmatmul.mubr.bf16.gmra.mxu0 %v991
      %v1186 = vpop.f32.mrf.mxu0
      %v1187 = vadd.f32 0.0, %v1186
      %v1188 = vpop.f32.mrf.mxu0
      %v1189 = vpop.f32.mrf.mxu0
      %v1190 = vadd.f32 0.0, %v1189
      %v1191 = vpop.f32.mrf.mxu0
      %1192 = vmatprep.mubr.bf16.mxu0 0
      %1193 = vmatmul.mubr.bf16.gmra.mxu0 %v994
      %v1194 = vpop.f32.mrf.mxu0
      %v1195 = vadd.f32 0.0, %v1194
      %v1196 = vpop.f32.mrf.mxu0
      %v1197 = vpop.f32.mrf.mxu0
      %v1198 = vadd.f32 0.0, %v1197
      %v1199 = vpop.f32.mrf.mxu0
      %1200 = vmatprep.mubr.bf16.mxu0 0
      %1201 = vmatmul.mubr.bf16.gmra.mxu0 %v997
      %v1202 = vpop.f32.mrf.mxu0
      %v1203 = vadd.f32 0.0, %v1202
      %v1204 = vpop.f32.mrf.mxu0
      %v1205 = vpop.f32.mrf.mxu0
      %v1206 = vadd.f32 0.0, %v1205
      %v1207 = vpop.f32.mrf.mxu0
      %1208 = vmatprep.mubr.bf16.mxu0 0
      %1209 = vmatmul.mubr.bf16.gmra.mxu0 %v1000
      %v1210 = vpop.f32.mrf.mxu0
      %v1211 = vadd.f32 0.0, %v1210
      %v1212 = vpop.f32.mrf.mxu0
      %v1213 = vpop.f32.mrf.mxu0
      %v1214 = vadd.f32 0.0, %v1213
      %v1215 = vpop.f32.mrf.mxu0
      %1216 = vmatprep.mubr.bf16.mxu0 0
      %1217 = vmatmul.mubr.bf16.gmra.mxu0 %v1003
      %v1218 = vpop.f32.mrf.mxu0
      %v1219 = vadd.f32 0.0, %v1218
      %v1220 = vpop.f32.mrf.mxu0
      %v1221 = vpop.f32.mrf.mxu0
      %v1222 = vadd.f32 0.0, %v1221
      %v1223 = vpop.f32.mrf.mxu0
      %1224 = vmatprep.mubr.bf16.mxu0 0
      %1225 = vmatmul.mubr.bf16.gmra.mxu0 %v1006
      %v1226 = vpop.f32.mrf.mxu0
      %v1227 = vadd.f32 0.0, %v1226
      %v1228 = vpop.f32.mrf.mxu0
      %v1229 = vpop.f32.mrf.mxu0
      %v1230 = vadd.f32 0.0, %v1229
      %v1231 = vpop.f32.mrf.mxu0
      %1232 = vmatprep.mubr.bf16.mxu0 0
      %1233 = vmatmul.mubr.bf16.gmra.mxu0 %v1009
      %v1234 = vpop.f32.mrf.mxu0
      %v1235 = vadd.f32 0.0, %v1234
      %v1236 = vpop.f32.mrf.mxu0
      %v1237 = vpop.f32.mrf.mxu0
      %v1238 = vadd.f32 0.0, %v1237
      %v1239 = vpop.f32.mrf.mxu0
      %1240 = vmatprep.mubr.bf16.mxu0 0
      %1241 = vmatmul.mubr.bf16.gmra.mxu0 %v1012
      %v1242 = vpop.f32.mrf.mxu0
      %v1243 = vadd.f32 0.0, %v1242
      %v1244 = vpop.f32.mrf.mxu0
      %v1245 = vpop.f32.mrf.mxu0
      %v1246 = vadd.f32 0.0, %v1245
      %v1247 = vpop.f32.mrf.mxu0
      %1248 = vmatprep.mubr.bf16.mxu0 0
      %1249 = vmatmul.mubr.bf16.gmra.mxu0 %v1015
      %v1250 = vpop.f32.mrf.mxu0
      %v1251 = vadd.f32 0.0, %v1250
      %v1252 = vpop.f32.mrf.mxu0
      %v1253 = vpop.f32.mrf.mxu0
      %v1254 = vadd.f32 0.0, %v1253
      %v1255 = vpop.f32.mrf.mxu0
      %1256 = vmatprep.mubr.bf16.mxu0 0
      %1257 = vmatmul.mubr.bf16.gmra.mxu0 %v1018
      %v1258 = vpop.f32.mrf.mxu0
      %v1259 = vadd.f32 0.0, %v1258
      %v1260 = vpop.f32.mrf.mxu0
      %v1261 = vpop.f32.mrf.mxu0
      %v1262 = vpop.f32.mrf.mxu0
      %1263 = vdwg.mxu0
      %v1315 = vunpack.c.l.b16 %v199
      %v1316 = vunpack.c.l.b16 %v200
      %v1317 = vunpack.c.l.b16 %v201
      %v1318 = vunpack.c.l.b16 %v203
      %v1319 = vunpack.c.l.b16 %v204
      %v1320 = vunpack.c.l.b16 %v205
      %v1321 = vunpack.c.l.b16 %v207
      %v1322 = vunpack.c.l.b16 %v208
      %v1323 = vunpack.c.l.b16 %v209
      %v1324 = vunpack.c.l.b16 %v211
      %v1325 = vunpack.c.l.b16 %v212
      %v1326 = vunpack.c.l.b16 %v213
      %v1327 = vunpack.c.l.b16 %v215
      %v1328 = vunpack.c.l.b16 %v216
      %v1329 = vunpack.c.l.b16 %v217
      %v1330 = vunpack.c.l.b16 %v219
      %v1331 = vunpack.c.l.b16 %v220
      %v1332 = vunpack.c.l.b16 %v221
      %v1333 = vunpack.c.l.b16 %v223
      %v1334 = vunpack.c.l.b16 %v224
      %v1335 = vunpack.c.l.b16 %v225
      %v1336 = vunpack.c.l.b16 %v227
      %v1337 = vunpack.c.l.b16 %v228
      %v1338 = vunpack.c.l.b16 %v229
      %v1339 = vunpack.c.l.b16 %v231
      %v1340 = vunpack.c.l.b16 %v232
      %v1341 = vunpack.c.l.b16 %v233
      %v1342 = vunpack.c.l.b16 %v235
      %v1343 = vunpack.c.l.b16 %v236
      %v1344 = vunpack.c.l.b16 %v237
      %v1345 = vunpack.c.l.b16 %v239
      %v1346 = vunpack.c.l.b16 %v240
      %v1347 = vunpack.c.l.b16 %v241
      %v1348 = vunpack.c.l.b16 %v243
      %v1349 = vunpack.c.l.b16 %v244
      %v1350 = vunpack.c.l.b16 %v245
      %v1351 = vunpack.c.l.b16 %v247
      %v1352 = vunpack.c.l.b16 %v248
      %v1353 = vunpack.c.l.b16 %v249
      %v1354 = vunpack.c.l.b16 %v251
      %v1355 = vunpack.c.l.b16 %v252
      %v1356 = vunpack.c.l.b16 %v253
      %v1357 = vunpack.c.l.b16 %v255
      %v1358 = vunpack.c.l.b16 %v256
      %v1359 = vunpack.c.l.b16 %v257
      %v1360 = vunpack.c.l.b16 %v259
      %v1361 = vunpack.c.l.b16 %v260
      %v1362 = vunpack.c.l.b16 %v261
      %v1363 = vunpack.c.l.b16 %v263
      %v1364 = vunpack.c.l.b16 %v264
      %v1365 = vunpack.c.l.b16 %v265
      %v1366 = vpack.c.b16 %v1316, %v1315
      %v1367 = vpack.c.b16 %v1318, %v1317
      %v1368 = vpack.c.b16 %v1320, %v1319
      %v1369 = vpack.c.b16 %v1322, %v1321
      %v1370 = vpack.c.b16 %v1324, %v1323
      %v1371 = vpack.c.b16 %v1326, %v1325
      %v1372 = vpack.c.b16 %v1328, %v1327
      %v1373 = vpack.c.b16 %v1330, %v1329
      %v1374 = vpack.c.b16 %v1332, %v1331
      %v1375 = vpack.c.b16 %v1334, %v1333
      %v1376 = vpack.c.b16 %v1336, %v1335
      %v1377 = vpack.c.b16 %v1338, %v1337
      %v1378 = vpack.c.b16 %v1340, %v1339
      %v1379 = vpack.c.b16 %v1342, %v1341
      %v1380 = vpack.c.b16 %v1344, %v1343
      %v1381 = vpack.c.b16 %v1346, %v1345
      %v1382 = vpack.c.b16 %v1348, %v1347
      %v1383 = vpack.c.b16 %v1350, %v1349
      %v1384 = vpack.c.b16 %v1352, %v1351
      %v1385 = vpack.c.b16 %v1354, %v1353
      %v1386 = vpack.c.b16 %v1356, %v1355
      %v1387 = vpack.c.b16 %v1358, %v1357
      %v1388 = vpack.c.b16 %v1360, %v1359
      %v1389 = vpack.c.b16 %v1362, %v1361
      %v1390 = vpack.c.b16 %v1364, %v1363
      %v1391 = vpack.c.b16 %v1365, %v1365
      %v1395 = vunpack.c.l.b16 %v267
      %v1396 = vunpack.c.l.b16 %v268
      %v1397 = vunpack.c.l.b16 %v269
      %v1398 = vpack.c.b16 %v1396, %v1395
      %v1399 = vpack.c.b16 %v1397, %v1397
      %v1402 = vsel %vm941, %v1366, 0
      %v1405 = vsel %vm941, %v1367, 0
      %v1408 = vsel %vm941, %v1368, 0
      %v1411 = vsel %vm941, %v1369, 0
      %v1414 = vsel %vm941, %v1370, 0
      %v1417 = vsel %vm941, %v1371, 0
      %v1420 = vsel %vm941, %v1372, 0
      %v1423 = vsel %vm941, %v1373, 0
      %v1426 = vsel %vm941, %v1374, 0
      %v1429 = vsel %vm941, %v1375, 0
      %v1432 = vsel %vm941, %v1376, 0
      %v1435 = vsel %vm941, %v1377, 0
      %v1438 = vsel %vm941, %v1378, 0
      %v1441 = vsel %vm941, %v1379, 0
      %v1444 = vsel %vm941, %v1380, 0
      %v1447 = vsel %vm941, %v1381, 0
      %v1450 = vsel %vm941, %v1382, 0
      %v1453 = vsel %vm941, %v1383, 0
      %v1456 = vsel %vm941, %v1384, 0
      %v1459 = vsel %vm941, %v1385, 0
      %v1462 = vsel %vm941, %v1386, 0
      %v1465 = vsel %vm941, %v1387, 0
      %v1468 = vsel %vm941, %v1388, 0
      %v1471 = vsel %vm941, %v1389, 0
      %v1474 = vsel %vm941, %v1390, 0
      %v1477 = vsel %vm941, %v1391, 0
      %v1480 = vsel %vm1020, %v1399, 0
      %1482 = vmatprep.subr.bf16.mxu0 0
      %1483 = vmatpush1.bf16.msra.mxu0 0
      %1484 = vmatprep.subr.bf16.mxu0 0
      %1485 = vmatpush1.bf16.msra.mxu0 0
      %1486 = vmatprep.subr.bf16.mxu0 0
      %1487 = vmatpush1.bf16.msra.mxu0 0
      %1488 = vmatprep.subr.bf16.mxu0 0
      %1489 = vmatpush1.bf16.msra.mxu0 0
      %1490 = vmatprep.subr.bf16.mxu0 0
      %1491 = vmatpush1.bf16.msra.mxu0 0
      %1492 = vmatprep.subr.bf16.mxu0 0
      %1493 = vmatpush1.bf16.msra.mxu0 0
      %1494 = vmatprep.subr.bf16.mxu0 0
      %1495 = vmatpush1.bf16.msra.mxu0 %v1480
      %1496 = vmatprep.subr.bf16.mxu0 0
      %1497 = vmatpush1.bf16.msra.mxu0 %v1398
      %1498 = vmatprep.subr.bf16.mxu0 0
      %1499 = vmatpush2.bf16.msra.mxu0 0
      %1500 = vmatprep.subr.bf16.mxu0 0
      %1501 = vmatpush2.bf16.msra.mxu0 0
      %1502 = vmatprep.subr.bf16.mxu0 0
      %1503 = vmatpush2.bf16.msra.mxu0 0
      %1504 = vmatprep.subr.bf16.mxu0 0
      %1505 = vmatpush2.bf16.msra.mxu0 0
      %1506 = vmatprep.subr.bf16.mxu0 0
      %1507 = vmatpush2.bf16.msra.mxu0 0
      %1508 = vmatprep.subr.bf16.mxu0 0
      %1509 = vmatpush2.bf16.msra.mxu0 0
      %1510 = vmatprep.subr.bf16.mxu0 0
      %1511 = vmatpush2.bf16.msra.mxu0 0
      %1512 = vmatprep.subr.bf16.mxu0 0
      %1513 = vmatpush2.bf16.msra.mxu0 0
      %1514 = vmatprep.mubr.bf16.mxu0 0
      %1515 = vmatmul.mubr.bf16.gmra.mxu0 %v1402
      %v1516 = vpop.f32.mrf.mxu0
      %v1517 = vadd.f32 %v1059, %v1516
      %v1518 = vpop.f32.mrf.mxu0
      %v1519 = vpop.f32.mrf.mxu0
      %v1520 = vadd.f32 %v1062, %v1519
      %v1521 = vpop.f32.mrf.mxu0
      %1522 = vmatprep.mubr.bf16.mxu0 0
      %1523 = vmatmul.mubr.bf16.gmra.mxu0 %v1405
      %v1524 = vpop.f32.mrf.mxu0
      %v1525 = vadd.f32 %v1067, %v1524
      %v1526 = vpop.f32.mrf.mxu0
      %v1527 = vpop.f32.mrf.mxu0
      %v1528 = vadd.f32 %v1070, %v1527
      %v1529 = vpop.f32.mrf.mxu0
      %1530 = vmatprep.mubr.bf16.mxu0 0
      %1531 = vmatmul.mubr.bf16.gmra.mxu0 %v1408
      %v1532 = vpop.f32.mrf.mxu0
      %v1533 = vadd.f32 %v1075, %v1532
      %v1534 = vpop.f32.mrf.mxu0
      %v1535 = vpop.f32.mrf.mxu0
      %v1536 = vadd.f32 %v1078, %v1535
      %v1537 = vpop.f32.mrf.mxu0
      %1538 = vmatprep.mubr.bf16.mxu0 0
      %1539 = vmatmul.mubr.bf16.gmra.mxu0 %v1411
      %v1540 = vpop.f32.mrf.mxu0
      %v1541 = vadd.f32 %v1083, %v1540
      %v1542 = vpop.f32.mrf.mxu0
      %v1543 = vpop.f32.mrf.mxu0
      %v1544 = vadd.f32 %v1086, %v1543
      %v1545 = vpop.f32.mrf.mxu0
      %1546 = vmatprep.mubr.bf16.mxu0 0
      %1547 = vmatmul.mubr.bf16.gmra.mxu0 %v1414
      %v1548 = vpop.f32.mrf.mxu0
      %v1549 = vadd.f32 %v1091, %v1548
      %v1550 = vpop.f32.mrf.mxu0
      %v1551 = vpop.f32.mrf.mxu0
      %v1552 = vadd.f32 %v1094, %v1551
      %v1553 = vpop.f32.mrf.mxu0
      %1554 = vmatprep.mubr.bf16.mxu0 0
      %1555 = vmatmul.mubr.bf16.gmra.mxu0 %v1417
      %v1556 = vpop.f32.mrf.mxu0
      %v1557 = vadd.f32 %v1099, %v1556
      %v1558 = vpop.f32.mrf.mxu0
      %v1559 = vpop.f32.mrf.mxu0
      %v1560 = vadd.f32 %v1102, %v1559
      %v1561 = vpop.f32.mrf.mxu0
      %1562 = vmatprep.mubr.bf16.mxu0 0
      %1563 = vmatmul.mubr.bf16.gmra.mxu0 %v1420
      %v1564 = vpop.f32.mrf.mxu0
      %v1565 = vadd.f32 %v1107, %v1564
      %v1566 = vpop.f32.mrf.mxu0
      %v1567 = vpop.f32.mrf.mxu0
      %v1568 = vadd.f32 %v1110, %v1567
      %v1569 = vpop.f32.mrf.mxu0
      %1570 = vmatprep.mubr.bf16.mxu0 0
      %1571 = vmatmul.mubr.bf16.gmra.mxu0 %v1423
      %v1572 = vpop.f32.mrf.mxu0
      %v1573 = vadd.f32 %v1115, %v1572
      %v1574 = vpop.f32.mrf.mxu0
      %v1575 = vpop.f32.mrf.mxu0
      %v1576 = vadd.f32 %v1118, %v1575
      %v1577 = vpop.f32.mrf.mxu0
      %1578 = vmatprep.mubr.bf16.mxu0 0
      %1579 = vmatmul.mubr.bf16.gmra.mxu0 %v1426
      %v1580 = vpop.f32.mrf.mxu0
      %v1581 = vadd.f32 %v1123, %v1580
      %v1582 = vpop.f32.mrf.mxu0
      %v1583 = vpop.f32.mrf.mxu0
      %v1584 = vadd.f32 %v1126, %v1583
      %v1585 = vpop.f32.mrf.mxu0
      %1586 = vmatprep.mubr.bf16.mxu0 0
      %1587 = vmatmul.mubr.bf16.gmra.mxu0 %v1429
      %v1588 = vpop.f32.mrf.mxu0
      %v1589 = vadd.f32 %v1131, %v1588
      %v1590 = vpop.f32.mrf.mxu0
      %v1591 = vpop.f32.mrf.mxu0
      %v1592 = vadd.f32 %v1134, %v1591
      %v1593 = vpop.f32.mrf.mxu0
      %1594 = vmatprep.mubr.bf16.mxu0 0
      %1595 = vmatmul.mubr.bf16.gmra.mxu0 %v1432
      %v1596 = vpop.f32.mrf.mxu0
      %v1597 = vadd.f32 %v1139, %v1596
      %v1598 = vpop.f32.mrf.mxu0
      %v1599 = vpop.f32.mrf.mxu0
      %v1600 = vadd.f32 %v1142, %v1599
      %v1601 = vpop.f32.mrf.mxu0
      %1602 = vmatprep.mubr.bf16.mxu0 0
      %1603 = vmatmul.mubr.bf16.gmra.mxu0 %v1435
      %v1604 = vpop.f32.mrf.mxu0
      %v1605 = vadd.f32 %v1147, %v1604
      %v1606 = vpop.f32.mrf.mxu0
      %v1607 = vpop.f32.mrf.mxu0
      %v1608 = vadd.f32 %v1150, %v1607
      %v1609 = vpop.f32.mrf.mxu0
      %1610 = vmatprep.mubr.bf16.mxu0 0
      %1611 = vmatmul.mubr.bf16.gmra.mxu0 %v1438
      %v1612 = vpop.f32.mrf.mxu0
      %v1613 = vadd.f32 %v1155, %v1612
      %v1614 = vpop.f32.mrf.mxu0
      %v1615 = vpop.f32.mrf.mxu0
      %v1616 = vadd.f32 %v1158, %v1615
      %v1617 = vpop.f32.mrf.mxu0
      %1618 = vmatprep.mubr.bf16.mxu0 0
      %1619 = vmatmul.mubr.bf16.gmra.mxu0 %v1441
      %v1620 = vpop.f32.mrf.mxu0
      %v1621 = vadd.f32 %v1163, %v1620
      %v1622 = vpop.f32.mrf.mxu0
      %v1623 = vpop.f32.mrf.mxu0
      %v1624 = vadd.f32 %v1166, %v1623
      %v1625 = vpop.f32.mrf.mxu0
      %1626 = vmatprep.mubr.bf16.mxu0 0
      %1627 = vmatmul.mubr.bf16.gmra.mxu0 %v1444
      %v1628 = vpop.f32.mrf.mxu0
      %v1629 = vadd.f32 %v1171, %v1628
      %v1630 = vpop.f32.mrf.mxu0
      %v1631 = vpop.f32.mrf.mxu0
      %v1632 = vadd.f32 %v1174, %v1631
      %v1633 = vpop.f32.mrf.mxu0
      %1634 = vmatprep.mubr.bf16.mxu0 0
      %1635 = vmatmul.mubr.bf16.gmra.mxu0 %v1447
      %v1636 = vpop.f32.mrf.mxu0
      %v1637 = vadd.f32 %v1179, %v1636
      %v1638 = vpop.f32.mrf.mxu0
      %v1639 = vpop.f32.mrf.mxu0
      %v1640 = vadd.f32 %v1182, %v1639
      %v1641 = vpop.f32.mrf.mxu0
      %1642 = vmatprep.mubr.bf16.mxu0 0
      %1643 = vmatmul.mubr.bf16.gmra.mxu0 %v1450
      %v1644 = vpop.f32.mrf.mxu0
      %v1645 = vadd.f32 %v1187, %v1644
      %v1646 = vpop.f32.mrf.mxu0
      %v1647 = vpop.f32.mrf.mxu0
      %v1648 = vadd.f32 %v1190, %v1647
      %v1649 = vpop.f32.mrf.mxu0
      %1650 = vmatprep.mubr.bf16.mxu0 0
      %1651 = vmatmul.mubr.bf16.gmra.mxu0 %v1453
      %v1652 = vpop.f32.mrf.mxu0
      %v1653 = vadd.f32 %v1195, %v1652
      %v1654 = vpop.f32.mrf.mxu0
      %v1655 = vpop.f32.mrf.mxu0
      %v1656 = vadd.f32 %v1198, %v1655
      %v1657 = vpop.f32.mrf.mxu0
      %1658 = vmatprep.mubr.bf16.mxu0 0
      %1659 = vmatmul.mubr.bf16.gmra.mxu0 %v1456
      %v1660 = vpop.f32.mrf.mxu0
      %v1661 = vadd.f32 %v1203, %v1660
      %v1662 = vpop.f32.mrf.mxu0
      %v1663 = vpop.f32.mrf.mxu0
      %v1664 = vadd.f32 %v1206, %v1663
      %v1665 = vpop.f32.mrf.mxu0
      %1666 = vmatprep.mubr.bf16.mxu0 0
      %1667 = vmatmul.mubr.bf16.gmra.mxu0 %v1459
      %v1668 = vpop.f32.mrf.mxu0
      %v1669 = vadd.f32 %v1211, %v1668
      %v1670 = vpop.f32.mrf.mxu0
      %v1671 = vpop.f32.mrf.mxu0
      %v1672 = vadd.f32 %v1214, %v1671
      %v1673 = vpop.f32.mrf.mxu0
      %1674 = vmatprep.mubr.bf16.mxu0 0
      %1675 = vmatmul.mubr.bf16.gmra.mxu0 %v1462
      %v1676 = vpop.f32.mrf.mxu0
      %v1677 = vadd.f32 %v1219, %v1676
      %v1678 = vpop.f32.mrf.mxu0
      %v1679 = vpop.f32.mrf.mxu0
      %v1680 = vadd.f32 %v1222, %v1679
      %v1681 = vpop.f32.mrf.mxu0
      %1682 = vmatprep.mubr.bf16.mxu0 0
      %1683 = vmatmul.mubr.bf16.gmra.mxu0 %v1465
      %v1684 = vpop.f32.mrf.mxu0
      %v1685 = vadd.f32 %v1227, %v1684
      %v1686 = vpop.f32.mrf.mxu0
      %v1687 = vpop.f32.mrf.mxu0
      %v1688 = vadd.f32 %v1230, %v1687
      %v1689 = vpop.f32.mrf.mxu0
      %1690 = vmatprep.mubr.bf16.mxu0 0
      %1691 = vmatmul.mubr.bf16.gmra.mxu0 %v1468
      %v1692 = vpop.f32.mrf.mxu0
      %v1693 = vadd.f32 %v1235, %v1692
      %v1694 = vpop.f32.mrf.mxu0
      %v1695 = vpop.f32.mrf.mxu0
      %v1696 = vadd.f32 %v1238, %v1695
      %v1697 = vpop.f32.mrf.mxu0
      %1698 = vmatprep.mubr.bf16.mxu0 0
      %1699 = vmatmul.mubr.bf16.gmra.mxu0 %v1471
      %v1700 = vpop.f32.mrf.mxu0
      %v1701 = vadd.f32 %v1243, %v1700
      %v1702 = vpop.f32.mrf.mxu0
      %v1703 = vpop.f32.mrf.mxu0
      %v1704 = vadd.f32 %v1246, %v1703
      %v1705 = vpop.f32.mrf.mxu0
      %1706 = vmatprep.mubr.bf16.mxu0 0
      %1707 = vmatmul.mubr.bf16.gmra.mxu0 %v1474
      %v1708 = vpop.f32.mrf.mxu0
      %v1709 = vadd.f32 %v1251, %v1708
      %v1710 = vpop.f32.mrf.mxu0
      %v1711 = vpop.f32.mrf.mxu0
      %v1712 = vadd.f32 %v1254, %v1711
      %v1713 = vpop.f32.mrf.mxu0
      %1714 = vmatprep.mubr.bf16.mxu0 0
      %1715 = vmatmul.mubr.bf16.gmra.mxu0 %v1477
      %v1716 = vpop.f32.mrf.mxu0
      %v1717 = vadd.f32 %v1259, %v1716
      %v1718 = vpop.f32.mrf.mxu0
      %v1719 = vpop.f32.mrf.mxu0
      %v1720 = vpop.f32.mrf.mxu0
      %1721 = vdwg.mxu0
      %vm1739 = vcmask 1042432
      %vm1740 = vcmask 1046532
      %vm1741 = vmor %vm1739, %vm1740
      %v1742 = vrot.slane %v199, 5
      %v1743 = vrot.slane %v1742, 4
      %v1744 = vrot.slane %v200, 5
      %v1745 = vsel %vm1741, %v1743, %v1744
      %v1746 = vrot.slane %v1744, 4
      %v1747 = vrot.slane %v201, 5
      %v1748 = vsel %vm1741, %v1746, %v1747
      %v1749 = vrot.slane %v1747, 4
      %v1750 = vrot.slane %v202, 5
      %v1751 = vsel %vm1741, %v1749, %v1750
      %v1752 = vrot.slane %v203, 5
      %v1753 = vrot.slane %v1752, 4
      %v1754 = vrot.slane %v204, 5
      %v1755 = vsel %vm1741, %v1753, %v1754
      %v1756 = vrot.slane %v1754, 4
      %v1757 = vrot.slane %v205, 5
      %v1758 = vsel %vm1741, %v1756, %v1757
      %v1759 = vrot.slane %v1757, 4
      %v1760 = vrot.slane %v206, 5
      %v1761 = vsel %vm1741, %v1759, %v1760
      %v1762 = vrot.slane %v207, 5
      %v1763 = vrot.slane %v1762, 4
      %v1764 = vrot.slane %v208, 5
      %v1765 = vsel %vm1741, %v1763, %v1764
      %v1766 = vrot.slane %v1764, 4
      %v1767 = vrot.slane %v209, 5
      %v1768 = vsel %vm1741, %v1766, %v1767
      %v1769 = vrot.slane %v1767, 4
      %v1770 = vrot.slane %v210, 5
      %v1771 = vsel %vm1741, %v1769, %v1770
      %v1772 = vrot.slane %v211, 5
      %v1773 = vrot.slane %v1772, 4
      %v1774 = vrot.slane %v212, 5
      %v1775 = vsel %vm1741, %v1773, %v1774
      %v1776 = vrot.slane %v1774, 4
      %v1777 = vrot.slane %v213, 5
      %v1778 = vsel %vm1741, %v1776, %v1777
      %v1779 = vrot.slane %v1777, 4
      %v1780 = vrot.slane %v214, 5
      %v1781 = vsel %vm1741, %v1779, %v1780
      %v1782 = vrot.slane %v215, 5
      %v1783 = vrot.slane %v1782, 4
      %v1784 = vrot.slane %v216, 5
      %v1785 = vsel %vm1741, %v1783, %v1784
      %v1786 = vrot.slane %v1784, 4
      %v1787 = vrot.slane %v217, 5
      %v1788 = vsel %vm1741, %v1786, %v1787
      %v1789 = vrot.slane %v1787, 4
      %v1790 = vrot.slane %v218, 5
      %v1791 = vsel %vm1741, %v1789, %v1790
      %v1792 = vrot.slane %v219, 5
      %v1793 = vrot.slane %v1792, 4
      %v1794 = vrot.slane %v220, 5
      %v1795 = vsel %vm1741, %v1793, %v1794
      %v1796 = vrot.slane %v1794, 4
      %v1797 = vrot.slane %v221, 5
      %v1798 = vsel %vm1741, %v1796, %v1797
      %v1799 = vrot.slane %v1797, 4
      %v1800 = vrot.slane %v222, 5
      %v1801 = vsel %vm1741, %v1799, %v1800
      %v1802 = vrot.slane %v223, 5
      %v1803 = vrot.slane %v1802, 4
      %v1804 = vrot.slane %v224, 5
      %v1805 = vsel %vm1741, %v1803, %v1804
      %v1806 = vrot.slane %v1804, 4
      %v1807 = vrot.slane %v225, 5
      %v1808 = vsel %vm1741, %v1806, %v1807
      %v1809 = vrot.slane %v1807, 4
      %v1810 = vrot.slane %v226, 5
      %v1811 = vsel %vm1741, %v1809, %v1810
      %v1812 = vrot.slane %v227, 5
      %v1813 = vrot.slane %v1812, 4
      %v1814 = vrot.slane %v228, 5
      %v1815 = vsel %vm1741, %v1813, %v1814
      %v1816 = vrot.slane %v1814, 4
      %v1817 = vrot.slane %v229, 5
      %v1818 = vsel %vm1741, %v1816, %v1817
      %v1819 = vrot.slane %v1817, 4
      %v1820 = vrot.slane %v230, 5
      %v1821 = vsel %vm1741, %v1819, %v1820
      %v1822 = vrot.slane %v231, 5
      %v1823 = vrot.slane %v1822, 4
      %v1824 = vrot.slane %v232, 5
      %v1825 = vsel %vm1741, %v1823, %v1824
      %v1826 = vrot.slane %v1824, 4
      %v1827 = vrot.slane %v233, 5
      %v1828 = vsel %vm1741, %v1826, %v1827
      %v1829 = vrot.slane %v1827, 4
      %v1830 = vrot.slane %v234, 5
      %v1831 = vsel %vm1741, %v1829, %v1830
      %v1832 = vrot.slane %v235, 5
      %v1833 = vrot.slane %v1832, 4
      %v1834 = vrot.slane %v236, 5
      %v1835 = vsel %vm1741, %v1833, %v1834
      %v1836 = vrot.slane %v1834, 4
      %v1837 = vrot.slane %v237, 5
      %v1838 = vsel %vm1741, %v1836, %v1837
      %v1839 = vrot.slane %v1837, 4
      %v1840 = vrot.slane %v238, 5
      %v1841 = vsel %vm1741, %v1839, %v1840
      %v1842 = vrot.slane %v239, 5
      %v1843 = vrot.slane %v1842, 4
      %v1844 = vrot.slane %v240, 5
      %v1845 = vsel %vm1741, %v1843, %v1844
      %v1846 = vrot.slane %v1844, 4
      %v1847 = vrot.slane %v241, 5
      %v1848 = vsel %vm1741, %v1846, %v1847
      %v1849 = vrot.slane %v1847, 4
      %v1850 = vrot.slane %v242, 5
      %v1851 = vsel %vm1741, %v1849, %v1850
      %v1852 = vrot.slane %v243, 5
      %v1853 = vrot.slane %v1852, 4
      %v1854 = vrot.slane %v244, 5
      %v1855 = vsel %vm1741, %v1853, %v1854
      %v1856 = vrot.slane %v1854, 4
      %v1857 = vrot.slane %v245, 5
      %v1858 = vsel %vm1741, %v1856, %v1857
      %v1859 = vrot.slane %v1857, 4
      %v1860 = vrot.slane %v246, 5
      %v1861 = vsel %vm1741, %v1859, %v1860
      %v1862 = vrot.slane %v247, 5
      %v1863 = vrot.slane %v1862, 4
      %v1864 = vrot.slane %v248, 5
      %v1865 = vsel %vm1741, %v1863, %v1864
      %v1866 = vrot.slane %v1864, 4
      %v1867 = vrot.slane %v249, 5
      %v1868 = vsel %vm1741, %v1866, %v1867
      %v1869 = vrot.slane %v1867, 4
      %v1870 = vrot.slane %v250, 5
      %v1871 = vsel %vm1741, %v1869, %v1870
      %v1872 = vrot.slane %v251, 5
      %v1873 = vrot.slane %v1872, 4
      %v1874 = vrot.slane %v252, 5
      %v1875 = vsel %vm1741, %v1873, %v1874
      %v1876 = vrot.slane %v1874, 4
      %v1877 = vrot.slane %v253, 5
      %v1878 = vsel %vm1741, %v1876, %v1877
      %v1879 = vrot.slane %v1877, 4
      %v1880 = vrot.slane %v254, 5
      %v1881 = vsel %vm1741, %v1879, %v1880
      %v1882 = vrot.slane %v255, 5
      %v1883 = vrot.slane %v1882, 4
      %v1884 = vrot.slane %v256, 5
      %v1885 = vsel %vm1741, %v1883, %v1884
      %v1886 = vrot.slane %v1884, 4
      %v1887 = vrot.slane %v257, 5
      %v1888 = vsel %vm1741, %v1886, %v1887
      %v1889 = vrot.slane %v1887, 4
      %v1890 = vrot.slane %v258, 5
      %v1891 = vsel %vm1741, %v1889, %v1890
      %v1892 = vrot.slane %v259, 5
      %v1893 = vrot.slane %v1892, 4
      %v1894 = vrot.slane %v260, 5
      %v1895 = vsel %vm1741, %v1893, %v1894
      %v1896 = vrot.slane %v1894, 4
      %v1897 = vrot.slane %v261, 5
      %v1898 = vsel %vm1741, %v1896, %v1897
      %v1899 = vrot.slane %v1897, 4
      %v1900 = vrot.slane %v262, 5
      %v1901 = vsel %vm1741, %v1899, %v1900
      %v1902 = vrot.slane %v263, 5
      %v1903 = vrot.slane %v1902, 4
      %v1904 = vrot.slane %v264, 5
      %v1905 = vsel %vm1741, %v1903, %v1904
      %v1906 = vrot.slane %v1904, 4
      %v1907 = vrot.slane %v265, 5
      %v1908 = vsel %vm1741, %v1906, %v1907
      %v1909 = vrot.slane %v1907, 4
      %v1910 = vrot.slane %v266, 5
      %v1911 = vsel %vm1741, %v1909, %v1910
      %s1912 = scalar_lea.vmem %s1, 24
      %v1913 = vld [vmem:[%s1912] sm:$0xf]
      %v1914 = vld [vmem:[%s1912 + $0x4] sm:$0xf]
      %v1915 = vld [vmem:[%s1912 + $0x8] sm:$0x3]
      %v1916 = vunpack.c.l.b16 %v1745
      %v1917 = vunpack.c.l.b16 %v1748
      %v1918 = vunpack.c.l.b16 %v1751
      %v1919 = vunpack.c.l.b16 %v1755
      %v1920 = vunpack.c.l.b16 %v1758
      %v1921 = vunpack.c.l.b16 %v1761
      %v1922 = vunpack.c.l.b16 %v1765
      %v1923 = vunpack.c.l.b16 %v1768
      %v1924 = vunpack.c.l.b16 %v1771
      %v1925 = vunpack.c.l.b16 %v1775
      %v1926 = vunpack.c.l.b16 %v1778
      %v1927 = vunpack.c.l.b16 %v1781
      %v1928 = vunpack.c.l.b16 %v1785
      %v1929 = vunpack.c.l.b16 %v1788
      %v1930 = vunpack.c.l.b16 %v1791
      %v1931 = vunpack.c.l.b16 %v1795
      %v1932 = vunpack.c.l.b16 %v1798
      %v1933 = vunpack.c.l.b16 %v1801
      %v1934 = vunpack.c.l.b16 %v1805
      %v1935 = vunpack.c.l.b16 %v1808
      %v1936 = vunpack.c.l.b16 %v1811
      %v1937 = vunpack.c.l.b16 %v1815
      %v1938 = vunpack.c.l.b16 %v1818
      %v1939 = vunpack.c.l.b16 %v1821
      %v1940 = vunpack.c.l.b16 %v1825
      %v1941 = vunpack.c.l.b16 %v1828
      %v1942 = vunpack.c.l.b16 %v1831
      %v1943 = vunpack.c.l.b16 %v1835
      %v1944 = vunpack.c.l.b16 %v1838
      %v1945 = vunpack.c.l.b16 %v1841
      %v1946 = vunpack.c.l.b16 %v1845
      %v1947 = vunpack.c.l.b16 %v1848
      %v1948 = vunpack.c.l.b16 %v1851
      %v1949 = vunpack.c.l.b16 %v1855
      %v1950 = vunpack.c.l.b16 %v1858
      %v1951 = vunpack.c.l.b16 %v1861
      %v1952 = vunpack.c.l.b16 %v1865
      %v1953 = vunpack.c.l.b16 %v1868
      %v1954 = vunpack.c.l.b16 %v1871
      %v1955 = vunpack.c.l.b16 %v1875
      %v1956 = vunpack.c.l.b16 %v1878
      %v1957 = vunpack.c.l.b16 %v1881
      %v1958 = vunpack.c.l.b16 %v1885
      %v1959 = vunpack.c.l.b16 %v1888
      %v1960 = vunpack.c.l.b16 %v1891
      %v1961 = vunpack.c.l.b16 %v1895
      %v1962 = vunpack.c.l.b16 %v1898
      %v1963 = vunpack.c.l.b16 %v1901
      %v1964 = vunpack.c.l.b16 %v1905
      %v1965 = vunpack.c.l.b16 %v1908
      %v1966 = vunpack.c.l.b16 %v1911
      %v1967 = vpack.c.b16 %v1917, %v1916
      %v1968 = vpack.c.b16 %v1919, %v1918
      %v1969 = vpack.c.b16 %v1921, %v1920
      %v1970 = vpack.c.b16 %v1923, %v1922
      %v1971 = vpack.c.b16 %v1925, %v1924
      %v1972 = vpack.c.b16 %v1927, %v1926
      %v1973 = vpack.c.b16 %v1929, %v1928
      %v1974 = vpack.c.b16 %v1931, %v1930
      %v1975 = vpack.c.b16 %v1933, %v1932
      %v1976 = vpack.c.b16 %v1935, %v1934
      %v1977 = vpack.c.b16 %v1937, %v1936
      %v1978 = vpack.c.b16 %v1939, %v1938
      %v1979 = vpack.c.b16 %v1941, %v1940
      %v1980 = vpack.c.b16 %v1943, %v1942
      %v1981 = vpack.c.b16 %v1945, %v1944
      %v1982 = vpack.c.b16 %v1947, %v1946
      %v1983 = vpack.c.b16 %v1949, %v1948
      %v1984 = vpack.c.b16 %v1951, %v1950
      %v1985 = vpack.c.b16 %v1953, %v1952
      %v1986 = vpack.c.b16 %v1955, %v1954
      %v1987 = vpack.c.b16 %v1957, %v1956
      %v1988 = vpack.c.b16 %v1959, %v1958
      %v1989 = vpack.c.b16 %v1961, %v1960
      %v1990 = vpack.c.b16 %v1963, %v1962
      %v1991 = vpack.c.b16 %v1965, %v1964
      %v1992 = vpack.c.b16 %v1966, %v1966
      %v1996 = vunpack.c.l.b16 %v1913
      %v1997 = vunpack.c.l.b16 %v1914
      %v1998 = vunpack.c.l.b16 %v1915
      %v1999 = vpack.c.b16 %v1997, %v1996
      %v2000 = vpack.c.b16 %v1998, %v1998
      %v2003 = vsel %vm941, %v1967, 0
      %v2006 = vsel %vm941, %v1968, 0
      %v2009 = vsel %vm941, %v1969, 0
      %v2012 = vsel %vm941, %v1970, 0
      %v2015 = vsel %vm941, %v1971, 0
      %v2018 = vsel %vm941, %v1972, 0
      %v2021 = vsel %vm941, %v1973, 0
      %v2024 = vsel %vm941, %v1974, 0
      %v2027 = vsel %vm941, %v1975, 0
      %v2030 = vsel %vm941, %v1976, 0
      %v2033 = vsel %vm941, %v1977, 0
      %v2036 = vsel %vm941, %v1978, 0
      %v2039 = vsel %vm941, %v1979, 0
      %v2042 = vsel %vm941, %v1980, 0
      %v2045 = vsel %vm941, %v1981, 0
      %v2048 = vsel %vm941, %v1982, 0
      %v2051 = vsel %vm941, %v1983, 0
      %v2054 = vsel %vm941, %v1984, 0
      %v2057 = vsel %vm941, %v1985, 0
      %v2060 = vsel %vm941, %v1986, 0
      %v2063 = vsel %vm941, %v1987, 0
      %v2066 = vsel %vm941, %v1988, 0
      %v2069 = vsel %vm941, %v1989, 0
      %v2072 = vsel %vm941, %v1990, 0
      %v2075 = vsel %vm941, %v1991, 0
      %v2078 = vsel %vm941, %v1992, 0
      %v2081 = vsel %vm1020, %v2000, 0
      %2083 = vmatprep.subr.bf16.mxu0 0
      %2084 = vmatpush1.bf16.msra.mxu0 0
      %2085 = vmatprep.subr.bf16.mxu0 0
      %2086 = vmatpush1.bf16.msra.mxu0 0
      %2087 = vmatprep.subr.bf16.mxu0 0
      %2088 = vmatpush1.bf16.msra.mxu0 0
      %2089 = vmatprep.subr.bf16.mxu0 0
      %2090 = vmatpush1.bf16.msra.mxu0 0
      %2091 = vmatprep.subr.bf16.mxu0 0
      %2092 = vmatpush1.bf16.msra.mxu0 0
      %2093 = vmatprep.subr.bf16.mxu0 0
      %2094 = vmatpush1.bf16.msra.mxu0 0
      %2095 = vmatprep.subr.bf16.mxu0 0
      %2096 = vmatpush1.bf16.msra.mxu0 %v2081
      %2097 = vmatprep.subr.bf16.mxu0 0
      %2098 = vmatpush1.bf16.msra.mxu0 %v1999
      %2099 = vmatprep.subr.bf16.mxu0 0
      %2100 = vmatpush2.bf16.msra.mxu0 0
      %2101 = vmatprep.subr.bf16.mxu0 0
      %2102 = vmatpush2.bf16.msra.mxu0 0
      %2103 = vmatprep.subr.bf16.mxu0 0
      %2104 = vmatpush2.bf16.msra.mxu0 0
      %2105 = vmatprep.subr.bf16.mxu0 0
      %2106 = vmatpush2.bf16.msra.mxu0 0
      %2107 = vmatprep.subr.bf16.mxu0 0
      %2108 = vmatpush2.bf16.msra.mxu0 0
      %2109 = vmatprep.subr.bf16.mxu0 0
      %2110 = vmatpush2.bf16.msra.mxu0 0
      %2111 = vmatprep.subr.bf16.mxu0 0
      %2112 = vmatpush2.bf16.msra.mxu0 0
      %2113 = vmatprep.subr.bf16.mxu0 0
      %2114 = vmatpush2.bf16.msra.mxu0 0
      %2115 = vmatprep.mubr.bf16.mxu0 0
      %2116 = vmatmul.mubr.bf16.gmra.mxu0 %v2003
      %v2117 = vpop.f32.mrf.mxu0
      %v2118 = vadd.f32 0.0, %v2117
      %v2119 = vpop.f32.mrf.mxu0
      %v2120 = vpop.f32.mrf.mxu0
      %v2121 = vadd.f32 0.0, %v2120
      %v2122 = vpop.f32.mrf.mxu0
      %2123 = vmatprep.mubr.bf16.mxu0 0
      %2124 = vmatmul.mubr.bf16.gmra.mxu0 %v2006
      %v2125 = vpop.f32.mrf.mxu0
      %v2126 = vadd.f32 0.0, %v2125
      %v2127 = vpop.f32.mrf.mxu0
      %v2128 = vpop.f32.mrf.mxu0
      %v2129 = vadd.f32 0.0, %v2128
      %v2130 = vpop.f32.mrf.mxu0
      %2131 = vmatprep.mubr.bf16.mxu0 0
      %2132 = vmatmul.mubr.bf16.gmra.mxu0 %v2009
      %v2133 = vpop.f32.mrf.mxu0
      %v2134 = vadd.f32 0.0, %v2133
      %v2135 = vpop.f32.mrf.mxu0
      %v2136 = vpop.f32.mrf.mxu0
      %v2137 = vadd.f32 0.0, %v2136
      %v2138 = vpop.f32.mrf.mxu0
      %2139 = vmatprep.mubr.bf16.mxu0 0
      %2140 = vmatmul.mubr.bf16.gmra.mxu0 %v2012
      %v2141 = vpop.f32.mrf.mxu0
      %v2142 = vadd.f32 0.0, %v2141
      %v2143 = vpop.f32.mrf.mxu0
      %v2144 = vpop.f32.mrf.mxu0
      %v2145 = vadd.f32 0.0, %v2144
      %v2146 = vpop.f32.mrf.mxu0
      %2147 = vmatprep.mubr.bf16.mxu0 0
      %2148 = vmatmul.mubr.bf16.gmra.mxu0 %v2015
      %v2149 = vpop.f32.mrf.mxu0
      %v2150 = vadd.f32 0.0, %v2149
      %v2151 = vpop.f32.mrf.mxu0
      %v2152 = vpop.f32.mrf.mxu0
      %v2153 = vadd.f32 0.0, %v2152
      %v2154 = vpop.f32.mrf.mxu0
      %2155 = vmatprep.mubr.bf16.mxu0 0
      %2156 = vmatmul.mubr.bf16.gmra.mxu0 %v2018
      %v2157 = vpop.f32.mrf.mxu0
      %v2158 = vadd.f32 0.0, %v2157
      %v2159 = vpop.f32.mrf.mxu0
      %v2160 = vpop.f32.mrf.mxu0
      %v2161 = vadd.f32 0.0, %v2160
      %v2162 = vpop.f32.mrf.mxu0
      %2163 = vmatprep.mubr.bf16.mxu0 0
      %2164 = vmatmul.mubr.bf16.gmra.mxu0 %v2021
      %v2165 = vpop.f32.mrf.mxu0
      %v2166 = vadd.f32 0.0, %v2165
      %v2167 = vpop.f32.mrf.mxu0
      %v2168 = vpop.f32.mrf.mxu0
      %v2169 = vadd.f32 0.0, %v2168
      %v2170 = vpop.f32.mrf.mxu0
      %2171 = vmatprep.mubr.bf16.mxu0 0
      %2172 = vmatmul.mubr.bf16.gmra.mxu0 %v2024
      %v2173 = vpop.f32.mrf.mxu0
      %v2174 = vadd.f32 0.0, %v2173
      %v2175 = vpop.f32.mrf.mxu0
      %v2176 = vpop.f32.mrf.mxu0
      %v2177 = vadd.f32 0.0, %v2176
      %v2178 = vpop.f32.mrf.mxu0
      %2179 = vmatprep.mubr.bf16.mxu0 0
      %2180 = vmatmul.mubr.bf16.gmra.mxu0 %v2027
      %v2181 = vpop.f32.mrf.mxu0
      %v2182 = vadd.f32 0.0, %v2181
      %v2183 = vpop.f32.mrf.mxu0
      %v2184 = vpop.f32.mrf.mxu0
      %v2185 = vadd.f32 0.0, %v2184
      %v2186 = vpop.f32.mrf.mxu0
      %2187 = vmatprep.mubr.bf16.mxu0 0
      %2188 = vmatmul.mubr.bf16.gmra.mxu0 %v2030
      %v2189 = vpop.f32.mrf.mxu0
      %v2190 = vadd.f32 0.0, %v2189
      %v2191 = vpop.f32.mrf.mxu0
      %v2192 = vpop.f32.mrf.mxu0
      %v2193 = vadd.f32 0.0, %v2192
      %v2194 = vpop.f32.mrf.mxu0
      %2195 = vmatprep.mubr.bf16.mxu0 0
      %2196 = vmatmul.mubr.bf16.gmra.mxu0 %v2033
      %v2197 = vpop.f32.mrf.mxu0
      %v2198 = vadd.f32 0.0, %v2197
      %v2199 = vpop.f32.mrf.mxu0
      %v2200 = vpop.f32.mrf.mxu0
      %v2201 = vadd.f32 0.0, %v2200
      %v2202 = vpop.f32.mrf.mxu0
      %2203 = vmatprep.mubr.bf16.mxu0 0
      %2204 = vmatmul.mubr.bf16.gmra.mxu0 %v2036
      %v2205 = vpop.f32.mrf.mxu0
      %v2206 = vadd.f32 0.0, %v2205
      %v2207 = vpop.f32.mrf.mxu0
      %v2208 = vpop.f32.mrf.mxu0
      %v2209 = vadd.f32 0.0, %v2208
      %v2210 = vpop.f32.mrf.mxu0
      %2211 = vmatprep.mubr.bf16.mxu0 0
      %2212 = vmatmul.mubr.bf16.gmra.mxu0 %v2039
      %v2213 = vpop.f32.mrf.mxu0
      %v2214 = vadd.f32 0.0, %v2213
      %v2215 = vpop.f32.mrf.mxu0
      %v2216 = vpop.f32.mrf.mxu0
      %v2217 = vadd.f32 0.0, %v2216
      %v2218 = vpop.f32.mrf.mxu0
      %2219 = vmatprep.mubr.bf16.mxu0 0
      %2220 = vmatmul.mubr.bf16.gmra.mxu0 %v2042
      %v2221 = vpop.f32.mrf.mxu0
      %v2222 = vadd.f32 0.0, %v2221
      %v2223 = vpop.f32.mrf.mxu0
      %v2224 = vpop.f32.mrf.mxu0
      %v2225 = vadd.f32 0.0, %v2224
      %v2226 = vpop.f32.mrf.mxu0
      %2227 = vmatprep.mubr.bf16.mxu0 0
      %2228 = vmatmul.mubr.bf16.gmra.mxu0 %v2045
      %v2229 = vpop.f32.mrf.mxu0
      %v2230 = vadd.f32 0.0, %v2229
      %v2231 = vpop.f32.mrf.mxu0
      %v2232 = vpop.f32.mrf.mxu0
      %v2233 = vadd.f32 0.0, %v2232
      %v2234 = vpop.f32.mrf.mxu0
      %2235 = vmatprep.mubr.bf16.mxu0 0
      %2236 = vmatmul.mubr.bf16.gmra.mxu0 %v2048
      %v2237 = vpop.f32.mrf.mxu0
      %v2238 = vadd.f32 0.0, %v2237
      %v2239 = vpop.f32.mrf.mxu0
      %v2240 = vpop.f32.mrf.mxu0
      %v2241 = vadd.f32 0.0, %v2240
      %v2242 = vpop.f32.mrf.mxu0
      %2243 = vmatprep.mubr.bf16.mxu0 0
      %2244 = vmatmul.mubr.bf16.gmra.mxu0 %v2051
      %v2245 = vpop.f32.mrf.mxu0
      %v2246 = vadd.f32 0.0, %v2245
      %v2247 = vpop.f32.mrf.mxu0
      %v2248 = vpop.f32.mrf.mxu0
      %v2249 = vadd.f32 0.0, %v2248
      %v2250 = vpop.f32.mrf.mxu0
      %2251 = vmatprep.mubr.bf16.mxu0 0
      %2252 = vmatmul.mubr.bf16.gmra.mxu0 %v2054
      %v2253 = vpop.f32.mrf.mxu0
      %v2254 = vadd.f32 0.0, %v2253
      %v2255 = vpop.f32.mrf.mxu0
      %v2256 = vpop.f32.mrf.mxu0
      %v2257 = vadd.f32 0.0, %v2256
      %v2258 = vpop.f32.mrf.mxu0
      %2259 = vmatprep.mubr.bf16.mxu0 0
      %2260 = vmatmul.mubr.bf16.gmra.mxu0 %v2057
      %v2261 = vpop.f32.mrf.mxu0
      %v2262 = vadd.f32 0.0, %v2261
      %v2263 = vpop.f32.mrf.mxu0
      %v2264 = vpop.f32.mrf.mxu0
      %v2265 = vadd.f32 0.0, %v2264
      %v2266 = vpop.f32.mrf.mxu0
      %2267 = vmatprep.mubr.bf16.mxu0 0
      %2268 = vmatmul.mubr.bf16.gmra.mxu0 %v2060
      %v2269 = vpop.f32.mrf.mxu0
      %v2270 = vadd.f32 0.0, %v2269
      %v2271 = vpop.f32.mrf.mxu0
      %v2272 = vpop.f32.mrf.mxu0
      %v2273 = vadd.f32 0.0, %v2272
      %v2274 = vpop.f32.mrf.mxu0
      %2275 = vmatprep.mubr.bf16.mxu0 0
      %2276 = vmatmul.mubr.bf16.gmra.mxu0 %v2063
      %v2277 = vpop.f32.mrf.mxu0
      %v2278 = vadd.f32 0.0, %v2277
      %v2279 = vpop.f32.mrf.mxu0
      %v2280 = vpop.f32.mrf.mxu0
      %v2281 = vadd.f32 0.0, %v2280
      %v2282 = vpop.f32.mrf.mxu0
      %2283 = vmatprep.mubr.bf16.mxu0 0
      %2284 = vmatmul.mubr.bf16.gmra.mxu0 %v2066
      %v2285 = vpop.f32.mrf.mxu0
      %v2286 = vadd.f32 0.0, %v2285
      %v2287 = vpop.f32.mrf.mxu0
      %v2288 = vpop.f32.mrf.mxu0
      %v2289 = vadd.f32 0.0, %v2288
      %v2290 = vpop.f32.mrf.mxu0
      %2291 = vmatprep.mubr.bf16.mxu0 0
      %2292 = vmatmul.mubr.bf16.gmra.mxu0 %v2069
      %v2293 = vpop.f32.mrf.mxu0
      %v2294 = vadd.f32 0.0, %v2293
      %v2295 = vpop.f32.mrf.mxu0
      %v2296 = vpop.f32.mrf.mxu0
      %v2297 = vadd.f32 0.0, %v2296
      %v2298 = vpop.f32.mrf.mxu0
      %2299 = vmatprep.mubr.bf16.mxu0 0
      %2300 = vmatmul.mubr.bf16.gmra.mxu0 %v2072
      %v2301 = vpop.f32.mrf.mxu0
      %v2302 = vadd.f32 0.0, %v2301
      %v2303 = vpop.f32.mrf.mxu0
      %v2304 = vpop.f32.mrf.mxu0
      %v2305 = vadd.f32 0.0, %v2304
      %v2306 = vpop.f32.mrf.mxu0
      %2307 = vmatprep.mubr.bf16.mxu0 0
      %2308 = vmatmul.mubr.bf16.gmra.mxu0 %v2075
      %v2309 = vpop.f32.mrf.mxu0
      %v2310 = vadd.f32 0.0, %v2309
      %v2311 = vpop.f32.mrf.mxu0
      %v2312 = vpop.f32.mrf.mxu0
      %v2313 = vadd.f32 0.0, %v2312
      %v2314 = vpop.f32.mrf.mxu0
      %2315 = vmatprep.mubr.bf16.mxu0 0
      %2316 = vmatmul.mubr.bf16.gmra.mxu0 %v2078
      %v2317 = vpop.f32.mrf.mxu0
      %v2318 = vadd.f32 0.0, %v2317
      %v2319 = vpop.f32.mrf.mxu0
      %v2320 = vpop.f32.mrf.mxu0
      %v2321 = vpop.f32.mrf.mxu0
      %2322 = vdwg.mxu0
      %v2323 = vadd.f32 %v1517, %v2118
      %v2324 = vadd.f32 %v1520, %v2121
      %v2325 = vadd.f32 %v1525, %v2126
      %v2326 = vadd.f32 %v1528, %v2129
      %v2327 = vadd.f32 %v1533, %v2134
      %v2328 = vadd.f32 %v1536, %v2137
      %v2329 = vadd.f32 %v1541, %v2142
      %v2330 = vadd.f32 %v1544, %v2145
      %v2331 = vadd.f32 %v1549, %v2150
      %v2332 = vadd.f32 %v1552, %v2153
      %v2333 = vadd.f32 %v1557, %v2158
      %v2334 = vadd.f32 %v1560, %v2161
      %v2335 = vadd.f32 %v1565, %v2166
      %v2336 = vadd.f32 %v1568, %v2169
      %v2337 = vadd.f32 %v1573, %v2174
      %v2338 = vadd.f32 %v1576, %v2177
      %v2339 = vadd.f32 %v1581, %v2182
      %v2340 = vadd.f32 %v1584, %v2185
      %v2341 = vadd.f32 %v1589, %v2190
      %v2342 = vadd.f32 %v1592, %v2193
      %v2343 = vadd.f32 %v1597, %v2198
      %v2344 = vadd.f32 %v1600, %v2201
      %v2345 = vadd.f32 %v1605, %v2206
      %v2346 = vadd.f32 %v1608, %v2209
      %v2347 = vadd.f32 %v1613, %v2214
      %v2348 = vadd.f32 %v1616, %v2217
      %v2349 = vadd.f32 %v1621, %v2222
      %v2350 = vadd.f32 %v1624, %v2225
      %v2351 = vadd.f32 %v1629, %v2230
      %v2352 = vadd.f32 %v1632, %v2233
      %v2353 = vadd.f32 %v1637, %v2238
      %v2354 = vadd.f32 %v1640, %v2241
      %v2355 = vadd.f32 %v1645, %v2246
      %v2356 = vadd.f32 %v1648, %v2249
      %v2357 = vadd.f32 %v1653, %v2254
      %v2358 = vadd.f32 %v1656, %v2257
      %v2359 = vadd.f32 %v1661, %v2262
      %v2360 = vadd.f32 %v1664, %v2265
      %v2361 = vadd.f32 %v1669, %v2270
      %v2362 = vadd.f32 %v1672, %v2273
      %v2363 = vadd.f32 %v1677, %v2278
      %v2364 = vadd.f32 %v1680, %v2281
      %v2365 = vadd.f32 %v1685, %v2286
      %v2366 = vadd.f32 %v1688, %v2289
      %v2367 = vadd.f32 %v1693, %v2294
      %v2368 = vadd.f32 %v1696, %v2297
      %v2369 = vadd.f32 %v1701, %v2302
      %v2370 = vadd.f32 %v1704, %v2305
      %v2371 = vadd.f32 %v1709, %v2310
      %v2372 = vadd.f32 %v1712, %v2313
      %v2373 = vadd.f32 %v1717, %v2318
      %s2374 = sadd.s32 4, %s196
      %s2375 = smul.addr %s2374, 4
      %s2376 = scalar_lea.vmem %s184, %s2375
      %v2377 = vld [vmem:[%s2376] sm:$0xf]
      %v2378 = vld [vmem:[%s2376 + $0x4] sm:$0xf]
      %v2379 = vld [vmem:[%s2376 + $0x8] sm:$0xf]
      %v2380 = vld [vmem:[%s2376 + $0xc] sm:$0x1]
      %v2381 = vld [vmem:[%s2376 + $0x20] sm:$0xf]
      %v2382 = vld [vmem:[%s2376 + $0x24] sm:$0xf]
      %v2383 = vld [vmem:[%s2376 + $0x28] sm:$0xf]
      %v2384 = vld [vmem:[%s2376 + $0x2c] sm:$0x1]
      %v2385 = vld [vmem:[%s2376 + $0x40] sm:$0xf]
      %v2386 = vld [vmem:[%s2376 + $0x44] sm:$0xf]
      %v2387 = vld [vmem:[%s2376 + $0x48] sm:$0xf]
      %v2388 = vld [vmem:[%s2376 + $0x4c] sm:$0x1]
      %v2389 = vld [vmem:[%s2376 + $0x60] sm:$0xf]
      %v2390 = vld [vmem:[%s2376 + $0x64] sm:$0xf]
      %v2391 = vld [vmem:[%s2376 + $0x68] sm:$0xf]
      %v2392 = vld [vmem:[%s2376 + $0x6c] sm:$0x1]
      %v2393 = vld [vmem:[%s2376 + $0x80] sm:$0xf]
      %v2394 = vld [vmem:[%s2376 + $0x84] sm:$0xf]
      %v2395 = vld [vmem:[%s2376 + $0x88] sm:$0xf]
      %v2396 = vld [vmem:[%s2376 + $0x8c] sm:$0x1]
      %v2397 = vld [vmem:[%s2376 + $0xa0] sm:$0xf]
      %v2398 = vld [vmem:[%s2376 + $0xa4] sm:$0xf]
      %v2399 = vld [vmem:[%s2376 + $0xa8] sm:$0xf]
      %v2400 = vld [vmem:[%s2376 + $0xac] sm:$0x1]
      %v2401 = vld [vmem:[%s2376 + $0xc0] sm:$0xf]
      %v2402 = vld [vmem:[%s2376 + $0xc4] sm:$0xf]
      %v2403 = vld [vmem:[%s2376 + $0xc8] sm:$0xf]
      %v2404 = vld [vmem:[%s2376 + $0xcc] sm:$0x1]
      %v2405 = vld [vmem:[%s2376 + $0xe0] sm:$0xf]
      %v2406 = vld [vmem:[%s2376 + $0xe4] sm:$0xf]
      %v2407 = vld [vmem:[%s2376 + $0xe8] sm:$0xf]
      %v2408 = vld [vmem:[%s2376 + $0xec] sm:$0x1]
      %v2409 = vld [vmem:[%s2376 + $0x100] sm:$0xf]
      %v2410 = vld [vmem:[%s2376 + $0x104] sm:$0xf]
      %v2411 = vld [vmem:[%s2376 + $0x108] sm:$0xf]
      %v2412 = vld [vmem:[%s2376 + $0x10c] sm:$0x1]
      %v2413 = vld [vmem:[%s2376 + $0x120] sm:$0xf]
      %v2414 = vld [vmem:[%s2376 + $0x124] sm:$0xf]
      %v2415 = vld [vmem:[%s2376 + $0x128] sm:$0xf]
      %v2416 = vld [vmem:[%s2376 + $0x12c] sm:$0x1]
      %v2417 = vld [vmem:[%s2376 + $0x140] sm:$0xf]
      %v2418 = vld [vmem:[%s2376 + $0x144] sm:$0xf]
      %v2419 = vld [vmem:[%s2376 + $0x148] sm:$0xf]
      %v2420 = vld [vmem:[%s2376 + $0x14c] sm:$0x1]
      %v2421 = vld [vmem:[%s2376 + $0x160] sm:$0xf]
      %v2422 = vld [vmem:[%s2376 + $0x164] sm:$0xf]
      %v2423 = vld [vmem:[%s2376 + $0x168] sm:$0xf]
      %v2424 = vld [vmem:[%s2376 + $0x16c] sm:$0x1]
      %v2425 = vld [vmem:[%s2376 + $0x180] sm:$0xf]
      %v2426 = vld [vmem:[%s2376 + $0x184] sm:$0xf]
      %v2427 = vld [vmem:[%s2376 + $0x188] sm:$0xf]
      %v2428 = vld [vmem:[%s2376 + $0x18c] sm:$0x1]
      %v2429 = vld [vmem:[%s2376 + $0x1a0] sm:$0xf]
      %v2430 = vld [vmem:[%s2376 + $0x1a4] sm:$0xf]
      %v2431 = vld [vmem:[%s2376 + $0x1a8] sm:$0xf]
      %v2432 = vld [vmem:[%s2376 + $0x1ac] sm:$0x1]
      %v2433 = vld [vmem:[%s2376 + $0x1c0] sm:$0xf]
      %v2434 = vld [vmem:[%s2376 + $0x1c4] sm:$0xf]
      %v2435 = vld [vmem:[%s2376 + $0x1c8] sm:$0xf]
      %v2436 = vld [vmem:[%s2376 + $0x1cc] sm:$0x1]
      %v2437 = vld [vmem:[%s2376 + $0x1e0] sm:$0xf]
      %v2438 = vld [vmem:[%s2376 + $0x1e4] sm:$0xf]
      %v2439 = vld [vmem:[%s2376 + $0x1e8] sm:$0xf]
      %v2440 = vld [vmem:[%s2376 + $0x1ec] sm:$0x1]
      %v2441 = vld [vmem:[%s2376 + $0x200] sm:$0xf]
      %v2442 = vld [vmem:[%s2376 + $0x204] sm:$0xf]
      %v2443 = vld [vmem:[%s2376 + $0x208] sm:$0xf]
      %v2444 = vld [vmem:[%s2376 + $0x20c] sm:$0x1]
      %s2445 = scalar_lea.vmem %s1, 36
      %v2446 = vld [vmem:[%s2445] sm:$0xf]
      %v2447 = vld [vmem:[%s2445 + $0x4] sm:$0xf]
      %v2448 = vld [vmem:[%s2445 + $0x8] sm:$0x3]
      %v2500 = vunpack.c.l.b16 %v2377
      %v2501 = vunpack.c.l.b16 %v2378
      %v2502 = vunpack.c.l.b16 %v2379
      %v2503 = vunpack.c.l.b16 %v2381
      %v2504 = vunpack.c.l.b16 %v2382
      %v2505 = vunpack.c.l.b16 %v2383
      %v2506 = vunpack.c.l.b16 %v2385
      %v2507 = vunpack.c.l.b16 %v2386
      %v2508 = vunpack.c.l.b16 %v2387
      %v2509 = vunpack.c.l.b16 %v2389
      %v2510 = vunpack.c.l.b16 %v2390
      %v2511 = vunpack.c.l.b16 %v2391
      %v2512 = vunpack.c.l.b16 %v2393
      %v2513 = vunpack.c.l.b16 %v2394
      %v2514 = vunpack.c.l.b16 %v2395
      %v2515 = vunpack.c.l.b16 %v2397
      %v2516 = vunpack.c.l.b16 %v2398
      %v2517 = vunpack.c.l.b16 %v2399
      %v2518 = vunpack.c.l.b16 %v2401
      %v2519 = vunpack.c.l.b16 %v2402
      %v2520 = vunpack.c.l.b16 %v2403
      %v2521 = vunpack.c.l.b16 %v2405
      %v2522 = vunpack.c.l.b16 %v2406
      %v2523 = vunpack.c.l.b16 %v2407
      %v2524 = vunpack.c.l.b16 %v2409
      %v2525 = vunpack.c.l.b16 %v2410
      %v2526 = vunpack.c.l.b16 %v2411
      %v2527 = vunpack.c.l.b16 %v2413
      %v2528 = vunpack.c.l.b16 %v2414
      %v2529 = vunpack.c.l.b16 %v2415
      %v2530 = vunpack.c.l.b16 %v2417
      %v2531 = vunpack.c.l.b16 %v2418
      %v2532 = vunpack.c.l.b16 %v2419
      %v2533 = vunpack.c.l.b16 %v2421
      %v2534 = vunpack.c.l.b16 %v2422
      %v2535 = vunpack.c.l.b16 %v2423
      %v2536 = vunpack.c.l.b16 %v2425
      %v2537 = vunpack.c.l.b16 %v2426
      %v2538 = vunpack.c.l.b16 %v2427
      %v2539 = vunpack.c.l.b16 %v2429
      %v2540 = vunpack.c.l.b16 %v2430
      %v2541 = vunpack.c.l.b16 %v2431
      %v2542 = vunpack.c.l.b16 %v2433
      %v2543 = vunpack.c.l.b16 %v2434
      %v2544 = vunpack.c.l.b16 %v2435
      %v2545 = vunpack.c.l.b16 %v2437
      %v2546 = vunpack.c.l.b16 %v2438
      %v2547 = vunpack.c.l.b16 %v2439
      %v2548 = vunpack.c.l.b16 %v2441
      %v2549 = vunpack.c.l.b16 %v2442
      %v2550 = vunpack.c.l.b16 %v2443
      %v2551 = vpack.c.b16 %v2501, %v2500
      %v2552 = vpack.c.b16 %v2503, %v2502
      %v2553 = vpack.c.b16 %v2505, %v2504
      %v2554 = vpack.c.b16 %v2507, %v2506
      %v2555 = vpack.c.b16 %v2509, %v2508
      %v2556 = vpack.c.b16 %v2511, %v2510
      %v2557 = vpack.c.b16 %v2513, %v2512
      %v2558 = vpack.c.b16 %v2515, %v2514
      %v2559 = vpack.c.b16 %v2517, %v2516
      %v2560 = vpack.c.b16 %v2519, %v2518
      %v2561 = vpack.c.b16 %v2521, %v2520
      %v2562 = vpack.c.b16 %v2523, %v2522
      %v2563 = vpack.c.b16 %v2525, %v2524
      %v2564 = vpack.c.b16 %v2527, %v2526
      %v2565 = vpack.c.b16 %v2529, %v2528
      %v2566 = vpack.c.b16 %v2531, %v2530
      %v2567 = vpack.c.b16 %v2533, %v2532
      %v2568 = vpack.c.b16 %v2535, %v2534
      %v2569 = vpack.c.b16 %v2537, %v2536
      %v2570 = vpack.c.b16 %v2539, %v2538
      %v2571 = vpack.c.b16 %v2541, %v2540
      %v2572 = vpack.c.b16 %v2543, %v2542
      %v2573 = vpack.c.b16 %v2545, %v2544
      %v2574 = vpack.c.b16 %v2547, %v2546
      %v2575 = vpack.c.b16 %v2549, %v2548
      %v2576 = vpack.c.b16 %v2550, %v2550
      %v2580 = vunpack.c.l.b16 %v2446
      %v2581 = vunpack.c.l.b16 %v2447
      %v2582 = vunpack.c.l.b16 %v2448
      %v2583 = vpack.c.b16 %v2581, %v2580
      %v2584 = vpack.c.b16 %v2582, %v2582
      %v2587 = vsel %vm941, %v2551, 0
      %v2590 = vsel %vm941, %v2552, 0
      %v2593 = vsel %vm941, %v2553, 0
      %v2596 = vsel %vm941, %v2554, 0
      %v2599 = vsel %vm941, %v2555, 0
      %v2602 = vsel %vm941, %v2556, 0
      %v2605 = vsel %vm941, %v2557, 0
      %v2608 = vsel %vm941, %v2558, 0
      %v2611 = vsel %vm941, %v2559, 0
      %v2614 = vsel %vm941, %v2560, 0
      %v2617 = vsel %vm941, %v2561, 0
      %v2620 = vsel %vm941, %v2562, 0
      %v2623 = vsel %vm941, %v2563, 0
      %v2626 = vsel %vm941, %v2564, 0
      %v2629 = vsel %vm941, %v2565, 0
      %v2632 = vsel %vm941, %v2566, 0
      %v2635 = vsel %vm941, %v2567, 0
      %v2638 = vsel %vm941, %v2568, 0
      %v2641 = vsel %vm941, %v2569, 0
      %v2644 = vsel %vm941, %v2570, 0
      %v2647 = vsel %vm941, %v2571, 0
      %v2650 = vsel %vm941, %v2572, 0
      %v2653 = vsel %vm941, %v2573, 0
      %v2656 = vsel %vm941, %v2574, 0
      %v2659 = vsel %vm941, %v2575, 0
      %v2662 = vsel %vm941, %v2576, 0
      %v2665 = vsel %vm1020, %v2584, 0
      %2667 = vmatprep.subr.bf16.mxu0 0
      %2668 = vmatpush1.bf16.msra.mxu0 0
      %2669 = vmatprep.subr.bf16.mxu0 0
      %2670 = vmatpush1.bf16.msra.mxu0 0
      %2671 = vmatprep.subr.bf16.mxu0 0
      %2672 = vmatpush1.bf16.msra.mxu0 0
      %2673 = vmatprep.subr.bf16.mxu0 0
      %2674 = vmatpush1.bf16.msra.mxu0 0
      %2675 = vmatprep.subr.bf16.mxu0 0
      %2676 = vmatpush1.bf16.msra.mxu0 0
      %2677 = vmatprep.subr.bf16.mxu0 0
      %2678 = vmatpush1.bf16.msra.mxu0 0
      %2679 = vmatprep.subr.bf16.mxu0 0
      %2680 = vmatpush1.bf16.msra.mxu0 %v2665
      %2681 = vmatprep.subr.bf16.mxu0 0
      %2682 = vmatpush1.bf16.msra.mxu0 %v2583
      %2683 = vmatprep.subr.bf16.mxu0 0
      %2684 = vmatpush2.bf16.msra.mxu0 0
      %2685 = vmatprep.subr.bf16.mxu0 0
      %2686 = vmatpush2.bf16.msra.mxu0 0
      %2687 = vmatprep.subr.bf16.mxu0 0
      %2688 = vmatpush2.bf16.msra.mxu0 0
      %2689 = vmatprep.subr.bf16.mxu0 0
      %2690 = vmatpush2.bf16.msra.mxu0 0
      %2691 = vmatprep.subr.bf16.mxu0 0
      %2692 = vmatpush2.bf16.msra.mxu0 0
      %2693 = vmatprep.subr.bf16.mxu0 0
      %2694 = vmatpush2.bf16.msra.mxu0 0
      %2695 = vmatprep.subr.bf16.mxu0 0
      %2696 = vmatpush2.bf16.msra.mxu0 0
      %2697 = vmatprep.subr.bf16.mxu0 0
      %2698 = vmatpush2.bf16.msra.mxu0 0
      %2699 = vmatprep.mubr.bf16.mxu0 0
      %2700 = vmatmul.mubr.bf16.gmra.mxu0 %v2587
      %v2701 = vpop.f32.mrf.mxu0
      %v2702 = vadd.f32 0.0, %v2701
      %v2703 = vpop.f32.mrf.mxu0
      %v2704 = vpop.f32.mrf.mxu0
      %v2705 = vadd.f32 0.0, %v2704
      %v2706 = vpop.f32.mrf.mxu0
      %2707 = vmatprep.mubr.bf16.mxu0 0
      %2708 = vmatmul.mubr.bf16.gmra.mxu0 %v2590
      %v2709 = vpop.f32.mrf.mxu0
      %v2710 = vadd.f32 0.0, %v2709
      %v2711 = vpop.f32.mrf.mxu0
      %v2712 = vpop.f32.mrf.mxu0
      %v2713 = vadd.f32 0.0, %v2712
      %v2714 = vpop.f32.mrf.mxu0
      %2715 = vmatprep.mubr.bf16.mxu0 0
      %2716 = vmatmul.mubr.bf16.gmra.mxu0 %v2593
      %v2717 = vpop.f32.mrf.mxu0
      %v2718 = vadd.f32 0.0, %v2717
      %v2719 = vpop.f32.mrf.mxu0
      %v2720 = vpop.f32.mrf.mxu0
      %v2721 = vadd.f32 0.0, %v2720
      %v2722 = vpop.f32.mrf.mxu0
      %2723 = vmatprep.mubr.bf16.mxu0 0
      %2724 = vmatmul.mubr.bf16.gmra.mxu0 %v2596
      %v2725 = vpop.f32.mrf.mxu0
      %v2726 = vadd.f32 0.0, %v2725
      %v2727 = vpop.f32.mrf.mxu0
      %v2728 = vpop.f32.mrf.mxu0
      %v2729 = vadd.f32 0.0, %v2728
      %v2730 = vpop.f32.mrf.mxu0
      %2731 = vmatprep.mubr.bf16.mxu0 0
      %2732 = vmatmul.mubr.bf16.gmra.mxu0 %v2599
      %v2733 = vpop.f32.mrf.mxu0
      %v2734 = vadd.f32 0.0, %v2733
      %v2735 = vpop.f32.mrf.mxu0
      %v2736 = vpop.f32.mrf.mxu0
      %v2737 = vadd.f32 0.0, %v2736
      %v2738 = vpop.f32.mrf.mxu0
      %2739 = vmatprep.mubr.bf16.mxu0 0
      %2740 = vmatmul.mubr.bf16.gmra.mxu0 %v2602
      %v2741 = vpop.f32.mrf.mxu0
      %v2742 = vadd.f32 0.0, %v2741
      %v2743 = vpop.f32.mrf.mxu0
      %v2744 = vpop.f32.mrf.mxu0
      %v2745 = vadd.f32 0.0, %v2744
      %v2746 = vpop.f32.mrf.mxu0
      %2747 = vmatprep.mubr.bf16.mxu0 0
      %2748 = vmatmul.mubr.bf16.gmra.mxu0 %v2605
      %v2749 = vpop.f32.mrf.mxu0
      %v2750 = vadd.f32 0.0, %v2749
      %v2751 = vpop.f32.mrf.mxu0
      %v2752 = vpop.f32.mrf.mxu0
      %v2753 = vadd.f32 0.0, %v2752
      %v2754 = vpop.f32.mrf.mxu0
      %2755 = vmatprep.mubr.bf16.mxu0 0
      %2756 = vmatmul.mubr.bf16.gmra.mxu0 %v2608
      %v2757 = vpop.f32.mrf.mxu0
      %v2758 = vadd.f32 0.0, %v2757
      %v2759 = vpop.f32.mrf.mxu0
      %v2760 = vpop.f32.mrf.mxu0
      %v2761 = vadd.f32 0.0, %v2760
      %v2762 = vpop.f32.mrf.mxu0
      %2763 = vmatprep.mubr.bf16.mxu0 0
      %2764 = vmatmul.mubr.bf16.gmra.mxu0 %v2611
      %v2765 = vpop.f32.mrf.mxu0
      %v2766 = vadd.f32 0.0, %v2765
      %v2767 = vpop.f32.mrf.mxu0
      %v2768 = vpop.f32.mrf.mxu0
      %v2769 = vadd.f32 0.0, %v2768
      %v2770 = vpop.f32.mrf.mxu0
      %2771 = vmatprep.mubr.bf16.mxu0 0
      %2772 = vmatmul.mubr.bf16.gmra.mxu0 %v2614
      %v2773 = vpop.f32.mrf.mxu0
      %v2774 = vadd.f32 0.0, %v2773
      %v2775 = vpop.f32.mrf.mxu0
      %v2776 = vpop.f32.mrf.mxu0
      %v2777 = vadd.f32 0.0, %v2776
      %v2778 = vpop.f32.mrf.mxu0
      %2779 = vmatprep.mubr.bf16.mxu0 0
      %2780 = vmatmul.mubr.bf16.gmra.mxu0 %v2617
      %v2781 = vpop.f32.mrf.mxu0
      %v2782 = vadd.f32 0.0, %v2781
      %v2783 = vpop.f32.mrf.mxu0
      %v2784 = vpop.f32.mrf.mxu0
      %v2785 = vadd.f32 0.0, %v2784
      %v2786 = vpop.f32.mrf.mxu0
      %2787 = vmatprep.mubr.bf16.mxu0 0
      %2788 = vmatmul.mubr.bf16.gmra.mxu0 %v2620
      %v2789 = vpop.f32.mrf.mxu0
      %v2790 = vadd.f32 0.0, %v2789
      %v2791 = vpop.f32.mrf.mxu0
      %v2792 = vpop.f32.mrf.mxu0
      %v2793 = vadd.f32 0.0, %v2792
      %v2794 = vpop.f32.mrf.mxu0
      %2795 = vmatprep.mubr.bf16.mxu0 0
      %2796 = vmatmul.mubr.bf16.gmra.mxu0 %v2623
      %v2797 = vpop.f32.mrf.mxu0
      %v2798 = vadd.f32 0.0, %v2797
      %v2799 = vpop.f32.mrf.mxu0
      %v2800 = vpop.f32.mrf.mxu0
      %v2801 = vadd.f32 0.0, %v2800
      %v2802 = vpop.f32.mrf.mxu0
      %2803 = vmatprep.mubr.bf16.mxu0 0
      %2804 = vmatmul.mubr.bf16.gmra.mxu0 %v2626
      %v2805 = vpop.f32.mrf.mxu0
      %v2806 = vadd.f32 0.0, %v2805
      %v2807 = vpop.f32.mrf.mxu0
      %v2808 = vpop.f32.mrf.mxu0
      %v2809 = vadd.f32 0.0, %v2808
      %v2810 = vpop.f32.mrf.mxu0
      %2811 = vmatprep.mubr.bf16.mxu0 0
      %2812 = vmatmul.mubr.bf16.gmra.mxu0 %v2629
      %v2813 = vpop.f32.mrf.mxu0
      %v2814 = vadd.f32 0.0, %v2813
      %v2815 = vpop.f32.mrf.mxu0
      %v2816 = vpop.f32.mrf.mxu0
      %v2817 = vadd.f32 0.0, %v2816
      %v2818 = vpop.f32.mrf.mxu0
      %2819 = vmatprep.mubr.bf16.mxu0 0
      %2820 = vmatmul.mubr.bf16.gmra.mxu0 %v2632
      %v2821 = vpop.f32.mrf.mxu0
      %v2822 = vadd.f32 0.0, %v2821
      %v2823 = vpop.f32.mrf.mxu0
      %v2824 = vpop.f32.mrf.mxu0
      %v2825 = vadd.f32 0.0, %v2824
      %v2826 = vpop.f32.mrf.mxu0
      %2827 = vmatprep.mubr.bf16.mxu0 0
      %2828 = vmatmul.mubr.bf16.gmra.mxu0 %v2635
      %v2829 = vpop.f32.mrf.mxu0
      %v2830 = vadd.f32 0.0, %v2829
      %v2831 = vpop.f32.mrf.mxu0
      %v2832 = vpop.f32.mrf.mxu0
      %v2833 = vadd.f32 0.0, %v2832
      %v2834 = vpop.f32.mrf.mxu0
      %2835 = vmatprep.mubr.bf16.mxu0 0
      %2836 = vmatmul.mubr.bf16.gmra.mxu0 %v2638
      %v2837 = vpop.f32.mrf.mxu0
      %v2838 = vadd.f32 0.0, %v2837
      %v2839 = vpop.f32.mrf.mxu0
      %v2840 = vpop.f32.mrf.mxu0
      %v2841 = vadd.f32 0.0, %v2840
      %v2842 = vpop.f32.mrf.mxu0
      %2843 = vmatprep.mubr.bf16.mxu0 0
      %2844 = vmatmul.mubr.bf16.gmra.mxu0 %v2641
      %v2845 = vpop.f32.mrf.mxu0
      %v2846 = vadd.f32 0.0, %v2845
      %v2847 = vpop.f32.mrf.mxu0
      %v2848 = vpop.f32.mrf.mxu0
      %v2849 = vadd.f32 0.0, %v2848
      %v2850 = vpop.f32.mrf.mxu0
      %2851 = vmatprep.mubr.bf16.mxu0 0
      %2852 = vmatmul.mubr.bf16.gmra.mxu0 %v2644
      %v2853 = vpop.f32.mrf.mxu0
      %v2854 = vadd.f32 0.0, %v2853
      %v2855 = vpop.f32.mrf.mxu0
      %v2856 = vpop.f32.mrf.mxu0
      %v2857 = vadd.f32 0.0, %v2856
      %v2858 = vpop.f32.mrf.mxu0
      %2859 = vmatprep.mubr.bf16.mxu0 0
      %2860 = vmatmul.mubr.bf16.gmra.mxu0 %v2647
      %v2861 = vpop.f32.mrf.mxu0
      %v2862 = vadd.f32 0.0, %v2861
      %v2863 = vpop.f32.mrf.mxu0
      %v2864 = vpop.f32.mrf.mxu0
      %v2865 = vadd.f32 0.0, %v2864
      %v2866 = vpop.f32.mrf.mxu0
      %2867 = vmatprep.mubr.bf16.mxu0 0
      %2868 = vmatmul.mubr.bf16.gmra.mxu0 %v2650
      %v2869 = vpop.f32.mrf.mxu0
      %v2870 = vadd.f32 0.0, %v2869
      %v2871 = vpop.f32.mrf.mxu0
      %v2872 = vpop.f32.mrf.mxu0
      %v2873 = vadd.f32 0.0, %v2872
      %v2874 = vpop.f32.mrf.mxu0
      %2875 = vmatprep.mubr.bf16.mxu0 0
      %2876 = vmatmul.mubr.bf16.gmra.mxu0 %v2653
      %v2877 = vpop.f32.mrf.mxu0
      %v2878 = vadd.f32 0.0, %v2877
      %v2879 = vpop.f32.mrf.mxu0
      %v2880 = vpop.f32.mrf.mxu0
      %v2881 = vadd.f32 0.0, %v2880
      %v2882 = vpop.f32.mrf.mxu0
      %2883 = vmatprep.mubr.bf16.mxu0 0
      %2884 = vmatmul.mubr.bf16.gmra.mxu0 %v2656
      %v2885 = vpop.f32.mrf.mxu0
      %v2886 = vadd.f32 0.0, %v2885
      %v2887 = vpop.f32.mrf.mxu0
      %v2888 = vpop.f32.mrf.mxu0
      %v2889 = vadd.f32 0.0, %v2888
      %v2890 = vpop.f32.mrf.mxu0
      %2891 = vmatprep.mubr.bf16.mxu0 0
      %2892 = vmatmul.mubr.bf16.gmra.mxu0 %v2659
      %v2893 = vpop.f32.mrf.mxu0
      %v2894 = vadd.f32 0.0, %v2893
      %v2895 = vpop.f32.mrf.mxu0
      %v2896 = vpop.f32.mrf.mxu0
      %v2897 = vadd.f32 0.0, %v2896
      %v2898 = vpop.f32.mrf.mxu0
      %2899 = vmatprep.mubr.bf16.mxu0 0
      %2900 = vmatmul.mubr.bf16.gmra.mxu0 %v2662
      %v2901 = vpop.f32.mrf.mxu0
      %v2902 = vadd.f32 0.0, %v2901
      %v2903 = vpop.f32.mrf.mxu0
      %v2904 = vpop.f32.mrf.mxu0
      %v2905 = vpop.f32.mrf.mxu0
      %2906 = vdwg.mxu0
      %v2907 = vadd.f32 %v2323, %v2702
      %v2908 = vadd.f32 %v2324, %v2705
      %v2909 = vadd.f32 %v2325, %v2710
      %v2910 = vadd.f32 %v2326, %v2713
      %v2911 = vadd.f32 %v2327, %v2718
      %v2912 = vadd.f32 %v2328, %v2721
      %v2913 = vadd.f32 %v2329, %v2726
      %v2914 = vadd.f32 %v2330, %v2729
      %v2915 = vadd.f32 %v2331, %v2734
      %v2916 = vadd.f32 %v2332, %v2737
      %v2917 = vadd.f32 %v2333, %v2742
      %v2918 = vadd.f32 %v2334, %v2745
      %v2919 = vadd.f32 %v2335, %v2750
      %v2920 = vadd.f32 %v2336, %v2753
      %v2921 = vadd.f32 %v2337, %v2758
      %v2922 = vadd.f32 %v2338, %v2761
      %v2923 = vadd.f32 %v2339, %v2766
      %v2924 = vadd.f32 %v2340, %v2769
      %v2925 = vadd.f32 %v2341, %v2774
      %v2926 = vadd.f32 %v2342, %v2777
      %v2927 = vadd.f32 %v2343, %v2782
      %v2928 = vadd.f32 %v2344, %v2785
      %v2929 = vadd.f32 %v2345, %v2790
      %v2930 = vadd.f32 %v2346, %v2793
      %v2931 = vadd.f32 %v2347, %v2798
      %v2932 = vadd.f32 %v2348, %v2801
      %v2933 = vadd.f32 %v2349, %v2806
      %v2934 = vadd.f32 %v2350, %v2809
      %v2935 = vadd.f32 %v2351, %v2814
      %v2936 = vadd.f32 %v2352, %v2817
      %v2937 = vadd.f32 %v2353, %v2822
      %v2938 = vadd.f32 %v2354, %v2825
      %v2939 = vadd.f32 %v2355, %v2830
      %v2940 = vadd.f32 %v2356, %v2833
      %v2941 = vadd.f32 %v2357, %v2838
      %v2942 = vadd.f32 %v2358, %v2841
      %v2943 = vadd.f32 %v2359, %v2846
      %v2944 = vadd.f32 %v2360, %v2849
      %v2945 = vadd.f32 %v2361, %v2854
      %v2946 = vadd.f32 %v2362, %v2857
      %v2947 = vadd.f32 %v2363, %v2862
      %v2948 = vadd.f32 %v2364, %v2865
      %v2949 = vadd.f32 %v2365, %v2870
      %v2950 = vadd.f32 %v2366, %v2873
      %v2951 = vadd.f32 %v2367, %v2878
      %v2952 = vadd.f32 %v2368, %v2881
      %v2953 = vadd.f32 %v2369, %v2886
      %v2954 = vadd.f32 %v2370, %v2889
      %v2955 = vadd.f32 %v2371, %v2894
      %v2956 = vadd.f32 %v2372, %v2897
      %v2957 = vadd.f32 %v2373, %v2902
      %v2959 = vshrl.u32 %v2377, 16
      %v2961 = vrot.slane %v2959, 4
      %v2962 = vshll.u32 %v2377, 16
      %v2964 = vrot.slane %v2962, 5
      %v2965 = vor.u32 %v2961, %v2964
      %v2966 = vrot.slane %v2965, 4
      %v2968 = vshll.u32 %v2378, 16
      %v2970 = vrot.slane %v2968, 5
      %v2971 = vsel %vm272, %v2966, %v2970
      %v2972 = vshrl.u32 %v2378, 16
      %v2974 = vrot.slane %v2972, 4
      %v2975 = vor.u32 %v2974, %v2970
      %v2976 = vrot.slane %v2975, 4
      %v2978 = vshll.u32 %v2379, 16
      %v2980 = vrot.slane %v2978, 5
      %v2981 = vsel %vm272, %v2976, %v2980
      %v2982 = vshrl.u32 %v2379, 16
      %v2984 = vrot.slane %v2982, 4
      %v2985 = vor.u32 %v2984, %v2980
      %v2986 = vrot.slane %v2985, 4
      %v2988 = vshll.u32 %v2380, 16
      %v2990 = vrot.slane %v2988, 5
      %v2991 = vsel %vm272, %v2986, %v2990
      %v2993 = vshrl.u32 %v2381, 16
      %v2995 = vrot.slane %v2993, 4
      %v2996 = vshll.u32 %v2381, 16
      %v2998 = vrot.slane %v2996, 5
      %v2999 = vor.u32 %v2995, %v2998
      %v3000 = vrot.slane %v2999, 4
      %v3002 = vshll.u32 %v2382, 16
      %v3004 = vrot.slane %v3002, 5
      %v3005 = vsel %vm272, %v3000, %v3004
      %v3006 = vshrl.u32 %v2382, 16
      %v3008 = vrot.slane %v3006, 4
      %v3009 = vor.u32 %v3008, %v3004
      %v3010 = vrot.slane %v3009, 4
      %v3012 = vshll.u32 %v2383, 16
      %v3014 = vrot.slane %v3012, 5
      %v3015 = vsel %vm272, %v3010, %v3014
      %v3016 = vshrl.u32 %v2383, 16
      %v3018 = vrot.slane %v3016, 4
      %v3019 = vor.u32 %v3018, %v3014
      %v3020 = vrot.slane %v3019, 4
      %v3022 = vshll.u32 %v2384, 16
      %v3024 = vrot.slane %v3022, 5
      %v3025 = vsel %vm272, %v3020, %v3024
      %v3027 = vshrl.u32 %v2385, 16
      %v3029 = vrot.slane %v3027, 4
      %v3030 = vshll.u32 %v2385, 16
      %v3032 = vrot.slane %v3030, 5
      %v3033 = vor.u32 %v3029, %v3032
      %v3034 = vrot.slane %v3033, 4
      %v3036 = vshll.u32 %v2386, 16
      %v3038 = vrot.slane %v3036, 5
      %v3039 = vsel %vm272, %v3034, %v3038
      %v3040 = vshrl.u32 %v2386, 16
      %v3042 = vrot.slane %v3040, 4
      %v3043 = vor.u32 %v3042, %v3038
      %v3044 = vrot.slane %v3043, 4
      %v3046 = vshll.u32 %v2387, 16
      %v3048 = vrot.slane %v3046, 5
      %v3049 = vsel %vm272, %v3044, %v3048
      %v3050 = vshrl.u32 %v2387, 16
      %v3052 = vrot.slane %v3050, 4
      %v3053 = vor.u32 %v3052, %v3048
      %v3054 = vrot.slane %v3053, 4
      %v3056 = vshll.u32 %v2388, 16
      %v3058 = vrot.slane %v3056, 5
      %v3059 = vsel %vm272, %v3054, %v3058
      %v3061 = vshrl.u32 %v2389, 16
      %v3063 = vrot.slane %v3061, 4
      %v3064 = vshll.u32 %v2389, 16
      %v3066 = vrot.slane %v3064, 5
      %v3067 = vor.u32 %v3063, %v3066
      %v3068 = vrot.slane %v3067, 4
      %v3070 = vshll.u32 %v2390, 16
      %v3072 = vrot.slane %v3070, 5
      %v3073 = vsel %vm272, %v3068, %v3072
      %v3074 = vshrl.u32 %v2390, 16
      %v3076 = vrot.slane %v3074, 4
      %v3077 = vor.u32 %v3076, %v3072
      %v3078 = vrot.slane %v3077, 4
      %v3080 = vshll.u32 %v2391, 16
      %v3082 = vrot.slane %v3080, 5
      %v3083 = vsel %vm272, %v3078, %v3082
      %v3084 = vshrl.u32 %v2391, 16
      %v3086 = vrot.slane %v3084, 4
      %v3087 = vor.u32 %v3086, %v3082
      %v3088 = vrot.slane %v3087, 4
      %v3090 = vshll.u32 %v2392, 16
      %v3092 = vrot.slane %v3090, 5
      %v3093 = vsel %vm272, %v3088, %v3092
      %v3095 = vshrl.u32 %v2393, 16
      %v3097 = vrot.slane %v3095, 4
      %v3098 = vshll.u32 %v2393, 16
      %v3100 = vrot.slane %v3098, 5
      %v3101 = vor.u32 %v3097, %v3100
      %v3102 = vrot.slane %v3101, 4
      %v3104 = vshll.u32 %v2394, 16
      %v3106 = vrot.slane %v3104, 5
      %v3107 = vsel %vm272, %v3102, %v3106
      %v3108 = vshrl.u32 %v2394, 16
      %v3110 = vrot.slane %v3108, 4
      %v3111 = vor.u32 %v3110, %v3106
      %v3112 = vrot.slane %v3111, 4
      %v3114 = vshll.u32 %v2395, 16
      %v3116 = vrot.slane %v3114, 5
      %v3117 = vsel %vm272, %v3112, %v3116
      %v3118 = vshrl.u32 %v2395, 16
      %v3120 = vrot.slane %v3118, 4
      %v3121 = vor.u32 %v3120, %v3116
      %v3122 = vrot.slane %v3121, 4
      %v3124 = vshll.u32 %v2396, 16
      %v3126 = vrot.slane %v3124, 5
      %v3127 = vsel %vm272, %v3122, %v3126
      %v3129 = vshrl.u32 %v2397, 16
      %v3131 = vrot.slane %v3129, 4
      %v3132 = vshll.u32 %v2397, 16
      %v3134 = vrot.slane %v3132, 5
      %v3135 = vor.u32 %v3131, %v3134
      %v3136 = vrot.slane %v3135, 4
      %v3138 = vshll.u32 %v2398, 16
      %v3140 = vrot.slane %v3138, 5
      %v3141 = vsel %vm272, %v3136, %v3140
      %v3142 = vshrl.u32 %v2398, 16
      %v3144 = vrot.slane %v3142, 4
      %v3145 = vor.u32 %v3144, %v3140
      %v3146 = vrot.slane %v3145, 4
      %v3148 = vshll.u32 %v2399, 16
      %v3150 = vrot.slane %v3148, 5
      %v3151 = vsel %vm272, %v3146, %v3150
      %v3152 = vshrl.u32 %v2399, 16
      %v3154 = vrot.slane %v3152, 4
      %v3155 = vor.u32 %v3154, %v3150
      %v3156 = vrot.slane %v3155, 4
      %v3158 = vshll.u32 %v2400, 16
      %v3160 = vrot.slane %v3158, 5
      %v3161 = vsel %vm272, %v3156, %v3160
      %v3163 = vshrl.u32 %v2401, 16
      %v3165 = vrot.slane %v3163, 4
      %v3166 = vshll.u32 %v2401, 16
      %v3168 = vrot.slane %v3166, 5
      %v3169 = vor.u32 %v3165, %v3168
      %v3170 = vrot.slane %v3169, 4
      %v3172 = vshll.u32 %v2402, 16
      %v3174 = vrot.slane %v3172, 5
      %v3175 = vsel %vm272, %v3170, %v3174
      %v3176 = vshrl.u32 %v2402, 16
      %v3178 = vrot.slane %v3176, 4
      %v3179 = vor.u32 %v3178, %v3174
      %v3180 = vrot.slane %v3179, 4
      %v3182 = vshll.u32 %v2403, 16
      %v3184 = vrot.slane %v3182, 5
      %v3185 = vsel %vm272, %v3180, %v3184
      %v3186 = vshrl.u32 %v2403, 16
      %v3188 = vrot.slane %v3186, 4
      %v3189 = vor.u32 %v3188, %v3184
      %v3190 = vrot.slane %v3189, 4
      %v3192 = vshll.u32 %v2404, 16
      %v3194 = vrot.slane %v3192, 5
      %v3195 = vsel %vm272, %v3190, %v3194
      %v3197 = vshrl.u32 %v2405, 16
      %v3199 = vrot.slane %v3197, 4
      %v3200 = vshll.u32 %v2405, 16
      %v3202 = vrot.slane %v3200, 5
      %v3203 = vor.u32 %v3199, %v3202
      %v3204 = vrot.slane %v3203, 4
      %v3206 = vshll.u32 %v2406, 16
      %v3208 = vrot.slane %v3206, 5
      %v3209 = vsel %vm272, %v3204, %v3208
      %v3210 = vshrl.u32 %v2406, 16
      %v3212 = vrot.slane %v3210, 4
      %v3213 = vor.u32 %v3212, %v3208
      %v3214 = vrot.slane %v3213, 4
      %v3216 = vshll.u32 %v2407, 16
      %v3218 = vrot.slane %v3216, 5
      %v3219 = vsel %vm272, %v3214, %v3218
      %v3220 = vshrl.u32 %v2407, 16
      %v3222 = vrot.slane %v3220, 4
      %v3223 = vor.u32 %v3222, %v3218
      %v3224 = vrot.slane %v3223, 4
      %v3226 = vshll.u32 %v2408, 16
      %v3228 = vrot.slane %v3226, 5
      %v3229 = vsel %vm272, %v3224, %v3228
      %v3231 = vshrl.u32 %v2409, 16
      %v3233 = vrot.slane %v3231, 4
      %v3234 = vshll.u32 %v2409, 16
      %v3236 = vrot.slane %v3234, 5
      %v3237 = vor.u32 %v3233, %v3236
      %v3238 = vrot.slane %v3237, 4
      %v3240 = vshll.u32 %v2410, 16
      %v3242 = vrot.slane %v3240, 5
      %v3243 = vsel %vm272, %v3238, %v3242
      %v3244 = vshrl.u32 %v2410, 16
      %v3246 = vrot.slane %v3244, 4
      %v3247 = vor.u32 %v3246, %v3242
      %v3248 = vrot.slane %v3247, 4
      %v3250 = vshll.u32 %v2411, 16
      %v3252 = vrot.slane %v3250, 5
      %v3253 = vsel %vm272, %v3248, %v3252
      %v3254 = vshrl.u32 %v2411, 16
      %v3256 = vrot.slane %v3254, 4
      %v3257 = vor.u32 %v3256, %v3252
      %v3258 = vrot.slane %v3257, 4
      %v3260 = vshll.u32 %v2412, 16
      %v3262 = vrot.slane %v3260, 5
      %v3263 = vsel %vm272, %v3258, %v3262
      %v3265 = vshrl.u32 %v2413, 16
      %v3267 = vrot.slane %v3265, 4
      %v3268 = vshll.u32 %v2413, 16
      %v3270 = vrot.slane %v3268, 5
      %v3271 = vor.u32 %v3267, %v3270
      %v3272 = vrot.slane %v3271, 4
      %v3274 = vshll.u32 %v2414, 16
      %v3276 = vrot.slane %v3274, 5
      %v3277 = vsel %vm272, %v3272, %v3276
      %v3278 = vshrl.u32 %v2414, 16
      %v3280 = vrot.slane %v3278, 4
      %v3281 = vor.u32 %v3280, %v3276
      %v3282 = vrot.slane %v3281, 4
      %v3284 = vshll.u32 %v2415, 16
      %v3286 = vrot.slane %v3284, 5
      %v3287 = vsel %vm272, %v3282, %v3286
      %v3288 = vshrl.u32 %v2415, 16
      %v3290 = vrot.slane %v3288, 4
      %v3291 = vor.u32 %v3290, %v3286
      %v3292 = vrot.slane %v3291, 4
      %v3294 = vshll.u32 %v2416, 16
      %v3296 = vrot.slane %v3294, 5
      %v3297 = vsel %vm272, %v3292, %v3296
      %v3299 = vshrl.u32 %v2417, 16
      %v3301 = vrot.slane %v3299, 4
      %v3302 = vshll.u32 %v2417, 16
      %v3304 = vrot.slane %v3302, 5
      %v3305 = vor.u32 %v3301, %v3304
      %v3306 = vrot.slane %v3305, 4
      %v3308 = vshll.u32 %v2418, 16
      %v3310 = vrot.slane %v3308, 5
      %v3311 = vsel %vm272, %v3306, %v3310
      %v3312 = vshrl.u32 %v2418, 16
      %v3314 = vrot.slane %v3312, 4
      %v3315 = vor.u32 %v3314, %v3310
      %v3316 = vrot.slane %v3315, 4
      %v3318 = vshll.u32 %v2419, 16
      %v3320 = vrot.slane %v3318, 5
      %v3321 = vsel %vm272, %v3316, %v3320
      %v3322 = vshrl.u32 %v2419, 16
      %v3324 = vrot.slane %v3322, 4
      %v3325 = vor.u32 %v3324, %v3320
      %v3326 = vrot.slane %v3325, 4
      %v3328 = vshll.u32 %v2420, 16
      %v3330 = vrot.slane %v3328, 5
      %v3331 = vsel %vm272, %v3326, %v3330
      %v3333 = vshrl.u32 %v2421, 16
      %v3335 = vrot.slane %v3333, 4
      %v3336 = vshll.u32 %v2421, 16
      %v3338 = vrot.slane %v3336, 5
      %v3339 = vor.u32 %v3335, %v3338
      %v3340 = vrot.slane %v3339, 4
      %v3342 = vshll.u32 %v2422, 16
      %v3344 = vrot.slane %v3342, 5
      %v3345 = vsel %vm272, %v3340, %v3344
      %v3346 = vshrl.u32 %v2422, 16
      %v3348 = vrot.slane %v3346, 4
      %v3349 = vor.u32 %v3348, %v3344
      %v3350 = vrot.slane %v3349, 4
      %v3352 = vshll.u32 %v2423, 16
      %v3354 = vrot.slane %v3352, 5
      %v3355 = vsel %vm272, %v3350, %v3354
      %v3356 = vshrl.u32 %v2423, 16
      %v3358 = vrot.slane %v3356, 4
      %v3359 = vor.u32 %v3358, %v3354
      %v3360 = vrot.slane %v3359, 4
      %v3362 = vshll.u32 %v2424, 16
      %v3364 = vrot.slane %v3362, 5
      %v3365 = vsel %vm272, %v3360, %v3364
      %v3367 = vshrl.u32 %v2425, 16
      %v3369 = vrot.slane %v3367, 4
      %v3370 = vshll.u32 %v2425, 16
      %v3372 = vrot.slane %v3370, 5
      %v3373 = vor.u32 %v3369, %v3372
      %v3374 = vrot.slane %v3373, 4
      %v3376 = vshll.u32 %v2426, 16
      %v3378 = vrot.slane %v3376, 5
      %v3379 = vsel %vm272, %v3374, %v3378
      %v3380 = vshrl.u32 %v2426, 16
      %v3382 = vrot.slane %v3380, 4
      %v3383 = vor.u32 %v3382, %v3378
      %v3384 = vrot.slane %v3383, 4
      %v3386 = vshll.u32 %v2427, 16
      %v3388 = vrot.slane %v3386, 5
      %v3389 = vsel %vm272, %v3384, %v3388
      %v3390 = vshrl.u32 %v2427, 16
      %v3392 = vrot.slane %v3390, 4
      %v3393 = vor.u32 %v3392, %v3388
      %v3394 = vrot.slane %v3393, 4
      %v3396 = vshll.u32 %v2428, 16
      %v3398 = vrot.slane %v3396, 5
      %v3399 = vsel %vm272, %v3394, %v3398
      %v3401 = vshrl.u32 %v2429, 16
      %v3403 = vrot.slane %v3401, 4
      %v3404 = vshll.u32 %v2429, 16
      %v3406 = vrot.slane %v3404, 5
      %v3407 = vor.u32 %v3403, %v3406
      %v3408 = vrot.slane %v3407, 4
      %v3410 = vshll.u32 %v2430, 16
      %v3412 = vrot.slane %v3410, 5
      %v3413 = vsel %vm272, %v3408, %v3412
      %v3414 = vshrl.u32 %v2430, 16
      %v3416 = vrot.slane %v3414, 4
      %v3417 = vor.u32 %v3416, %v3412
      %v3418 = vrot.slane %v3417, 4
      %v3420 = vshll.u32 %v2431, 16
      %v3422 = vrot.slane %v3420, 5
      %v3423 = vsel %vm272, %v3418, %v3422
      %v3424 = vshrl.u32 %v2431, 16
      %v3426 = vrot.slane %v3424, 4
      %v3427 = vor.u32 %v3426, %v3422
      %v3428 = vrot.slane %v3427, 4
      %v3430 = vshll.u32 %v2432, 16
      %v3432 = vrot.slane %v3430, 5
      %v3433 = vsel %vm272, %v3428, %v3432
      %v3435 = vshrl.u32 %v2433, 16
      %v3437 = vrot.slane %v3435, 4
      %v3438 = vshll.u32 %v2433, 16
      %v3440 = vrot.slane %v3438, 5
      %v3441 = vor.u32 %v3437, %v3440
      %v3442 = vrot.slane %v3441, 4
      %v3444 = vshll.u32 %v2434, 16
      %v3446 = vrot.slane %v3444, 5
      %v3447 = vsel %vm272, %v3442, %v3446
      %v3448 = vshrl.u32 %v2434, 16
      %v3450 = vrot.slane %v3448, 4
      %v3451 = vor.u32 %v3450, %v3446
      %v3452 = vrot.slane %v3451, 4
      %v3454 = vshll.u32 %v2435, 16
      %v3456 = vrot.slane %v3454, 5
      %v3457 = vsel %vm272, %v3452, %v3456
      %v3458 = vshrl.u32 %v2435, 16
      %v3460 = vrot.slane %v3458, 4
      %v3461 = vor.u32 %v3460, %v3456
      %v3462 = vrot.slane %v3461, 4
      %v3464 = vshll.u32 %v2436, 16
      %v3466 = vrot.slane %v3464, 5
      %v3467 = vsel %vm272, %v3462, %v3466
      %v3469 = vshrl.u32 %v2437, 16
      %v3471 = vrot.slane %v3469, 4
      %v3472 = vshll.u32 %v2437, 16
      %v3474 = vrot.slane %v3472, 5
      %v3475 = vor.u32 %v3471, %v3474
      %v3476 = vrot.slane %v3475, 4
      %v3478 = vshll.u32 %v2438, 16
      %v3480 = vrot.slane %v3478, 5
      %v3481 = vsel %vm272, %v3476, %v3480
      %v3482 = vshrl.u32 %v2438, 16
      %v3484 = vrot.slane %v3482, 4
      %v3485 = vor.u32 %v3484, %v3480
      %v3486 = vrot.slane %v3485, 4
      %v3488 = vshll.u32 %v2439, 16
      %v3490 = vrot.slane %v3488, 5
      %v3491 = vsel %vm272, %v3486, %v3490
      %v3492 = vshrl.u32 %v2439, 16
      %v3494 = vrot.slane %v3492, 4
      %v3495 = vor.u32 %v3494, %v3490
      %v3496 = vrot.slane %v3495, 4
      %v3498 = vshll.u32 %v2440, 16
      %v3500 = vrot.slane %v3498, 5
      %v3501 = vsel %vm272, %v3496, %v3500
      %v3503 = vshrl.u32 %v2441, 16
      %v3505 = vrot.slane %v3503, 4
      %v3506 = vshll.u32 %v2441, 16
      %v3508 = vrot.slane %v3506, 5
      %v3509 = vor.u32 %v3505, %v3508
      %v3510 = vrot.slane %v3509, 4
      %v3512 = vshll.u32 %v2442, 16
      %v3514 = vrot.slane %v3512, 5
      %v3515 = vsel %vm272, %v3510, %v3514
      %v3516 = vshrl.u32 %v2442, 16
      %v3518 = vrot.slane %v3516, 4
      %v3519 = vor.u32 %v3518, %v3514
      %v3520 = vrot.slane %v3519, 4
      %v3522 = vshll.u32 %v2443, 16
      %v3524 = vrot.slane %v3522, 5
      %v3525 = vsel %vm272, %v3520, %v3524
      %v3526 = vshrl.u32 %v2443, 16
      %v3528 = vrot.slane %v3526, 4
      %v3529 = vor.u32 %v3528, %v3524
      %v3530 = vrot.slane %v3529, 4
      %v3532 = vshll.u32 %v2444, 16
      %v3534 = vrot.slane %v3532, 5
      %v3535 = vsel %vm272, %v3530, %v3534
      %s3536 = scalar_lea.vmem %s1, 48
      %v3537 = vld [vmem:[%s3536] sm:$0xf]
      %v3538 = vld [vmem:[%s3536 + $0x4] sm:$0xf]
      %v3539 = vld [vmem:[%s3536 + $0x8] sm:$0x3]
      %v3540 = vunpack.c.l.b16 %v2971
      %v3541 = vunpack.c.l.b16 %v2981
      %v3542 = vunpack.c.l.b16 %v2991
      %v3543 = vunpack.c.l.b16 %v3005
      %v3544 = vunpack.c.l.b16 %v3015
      %v3545 = vunpack.c.l.b16 %v3025
      %v3546 = vunpack.c.l.b16 %v3039
      %v3547 = vunpack.c.l.b16 %v3049
      %v3548 = vunpack.c.l.b16 %v3059
      %v3549 = vunpack.c.l.b16 %v3073
      %v3550 = vunpack.c.l.b16 %v3083
      %v3551 = vunpack.c.l.b16 %v3093
      %v3552 = vunpack.c.l.b16 %v3107
      %v3553 = vunpack.c.l.b16 %v3117
      %v3554 = vunpack.c.l.b16 %v3127
      %v3555 = vunpack.c.l.b16 %v3141
      %v3556 = vunpack.c.l.b16 %v3151
      %v3557 = vunpack.c.l.b16 %v3161
      %v3558 = vunpack.c.l.b16 %v3175
      %v3559 = vunpack.c.l.b16 %v3185
      %v3560 = vunpack.c.l.b16 %v3195
      %v3561 = vunpack.c.l.b16 %v3209
      %v3562 = vunpack.c.l.b16 %v3219
      %v3563 = vunpack.c.l.b16 %v3229
      %v3564 = vunpack.c.l.b16 %v3243
      %v3565 = vunpack.c.l.b16 %v3253
      %v3566 = vunpack.c.l.b16 %v3263
      %v3567 = vunpack.c.l.b16 %v3277
      %v3568 = vunpack.c.l.b16 %v3287
      %v3569 = vunpack.c.l.b16 %v3297
      %v3570 = vunpack.c.l.b16 %v3311
      %v3571 = vunpack.c.l.b16 %v3321
      %v3572 = vunpack.c.l.b16 %v3331
      %v3573 = vunpack.c.l.b16 %v3345
      %v3574 = vunpack.c.l.b16 %v3355
      %v3575 = vunpack.c.l.b16 %v3365
      %v3576 = vunpack.c.l.b16 %v3379
      %v3577 = vunpack.c.l.b16 %v3389
      %v3578 = vunpack.c.l.b16 %v3399
      %v3579 = vunpack.c.l.b16 %v3413
      %v3580 = vunpack.c.l.b16 %v3423
      %v3581 = vunpack.c.l.b16 %v3433
      %v3582 = vunpack.c.l.b16 %v3447
      %v3583 = vunpack.c.l.b16 %v3457
      %v3584 = vunpack.c.l.b16 %v3467
      %v3585 = vunpack.c.l.b16 %v3481
      %v3586 = vunpack.c.l.b16 %v3491
      %v3587 = vunpack.c.l.b16 %v3501
      %v3588 = vunpack.c.l.b16 %v3515
      %v3589 = vunpack.c.l.b16 %v3525
      %v3590 = vunpack.c.l.b16 %v3535
      %v3591 = vpack.c.b16 %v3541, %v3540
      %v3592 = vpack.c.b16 %v3543, %v3542
      %v3593 = vpack.c.b16 %v3545, %v3544
      %v3594 = vpack.c.b16 %v3547, %v3546
      %v3595 = vpack.c.b16 %v3549, %v3548
      %v3596 = vpack.c.b16 %v3551, %v3550
      %v3597 = vpack.c.b16 %v3553, %v3552
      %v3598 = vpack.c.b16 %v3555, %v3554
      %v3599 = vpack.c.b16 %v3557, %v3556
      %v3600 = vpack.c.b16 %v3559, %v3558
      %v3601 = vpack.c.b16 %v3561, %v3560
      %v3602 = vpack.c.b16 %v3563, %v3562
      %v3603 = vpack.c.b16 %v3565, %v3564
      %v3604 = vpack.c.b16 %v3567, %v3566
      %v3605 = vpack.c.b16 %v3569, %v3568
      %v3606 = vpack.c.b16 %v3571, %v3570
      %v3607 = vpack.c.b16 %v3573, %v3572
      %v3608 = vpack.c.b16 %v3575, %v3574
      %v3609 = vpack.c.b16 %v3577, %v3576
      %v3610 = vpack.c.b16 %v3579, %v3578
      %v3611 = vpack.c.b16 %v3581, %v3580
      %v3612 = vpack.c.b16 %v3583, %v3582
      %v3613 = vpack.c.b16 %v3585, %v3584
      %v3614 = vpack.c.b16 %v3587, %v3586
      %v3615 = vpack.c.b16 %v3589, %v3588
      %v3616 = vpack.c.b16 %v3590, %v3590
      %v3620 = vunpack.c.l.b16 %v3537
      %v3621 = vunpack.c.l.b16 %v3538
      %v3622 = vunpack.c.l.b16 %v3539
      %v3623 = vpack.c.b16 %v3621, %v3620
      %v3624 = vpack.c.b16 %v3622, %v3622
      %v3627 = vsel %vm941, %v3591, 0
      %v3630 = vsel %vm941, %v3592, 0
      %v3633 = vsel %vm941, %v3593, 0
      %v3636 = vsel %vm941, %v3594, 0
      %v3639 = vsel %vm941, %v3595, 0
      %v3642 = vsel %vm941, %v3596, 0
      %v3645 = vsel %vm941, %v3597, 0
      %v3648 = vsel %vm941, %v3598, 0
      %v3651 = vsel %vm941, %v3599, 0
      %v3654 = vsel %vm941, %v3600, 0
      %v3657 = vsel %vm941, %v3601, 0
      %v3660 = vsel %vm941, %v3602, 0
      %v3663 = vsel %vm941, %v3603, 0
      %v3666 = vsel %vm941, %v3604, 0
      %v3669 = vsel %vm941, %v3605, 0
      %v3672 = vsel %vm941, %v3606, 0
      %v3675 = vsel %vm941, %v3607, 0
      %v3678 = vsel %vm941, %v3608, 0
      %v3681 = vsel %vm941, %v3609, 0
      %v3684 = vsel %vm941, %v3610, 0
      %v3687 = vsel %vm941, %v3611, 0
      %v3690 = vsel %vm941, %v3612, 0
      %v3693 = vsel %vm941, %v3613, 0
      %v3696 = vsel %vm941, %v3614, 0
      %v3699 = vsel %vm941, %v3615, 0
      %v3702 = vsel %vm941, %v3616, 0
      %v3705 = vsel %vm1020, %v3624, 0
      %3707 = vmatprep.subr.bf16.mxu0 0
      %3708 = vmatpush1.bf16.msra.mxu0 0
      %3709 = vmatprep.subr.bf16.mxu0 0
      %3710 = vmatpush1.bf16.msra.mxu0 0
      %3711 = vmatprep.subr.bf16.mxu0 0
      %3712 = vmatpush1.bf16.msra.mxu0 0
      %3713 = vmatprep.subr.bf16.mxu0 0
      %3714 = vmatpush1.bf16.msra.mxu0 0
      %3715 = vmatprep.subr.bf16.mxu0 0
      %3716 = vmatpush1.bf16.msra.mxu0 0
      %3717 = vmatprep.subr.bf16.mxu0 0
      %3718 = vmatpush1.bf16.msra.mxu0 0
      %3719 = vmatprep.subr.bf16.mxu0 0
      %3720 = vmatpush1.bf16.msra.mxu0 %v3705
      %3721 = vmatprep.subr.bf16.mxu0 0
      %3722 = vmatpush1.bf16.msra.mxu0 %v3623
      %3723 = vmatprep.subr.bf16.mxu0 0
      %3724 = vmatpush2.bf16.msra.mxu0 0
      %3725 = vmatprep.subr.bf16.mxu0 0
      %3726 = vmatpush2.bf16.msra.mxu0 0
      %3727 = vmatprep.subr.bf16.mxu0 0
      %3728 = vmatpush2.bf16.msra.mxu0 0
      %3729 = vmatprep.subr.bf16.mxu0 0
      %3730 = vmatpush2.bf16.msra.mxu0 0
      %3731 = vmatprep.subr.bf16.mxu0 0
      %3732 = vmatpush2.bf16.msra.mxu0 0
      %3733 = vmatprep.subr.bf16.mxu0 0
      %3734 = vmatpush2.bf16.msra.mxu0 0
      %3735 = vmatprep.subr.bf16.mxu0 0
      %3736 = vmatpush2.bf16.msra.mxu0 0
      %3737 = vmatprep.subr.bf16.mxu0 0
      %3738 = vmatpush2.bf16.msra.mxu0 0
      %3739 = vmatprep.mubr.bf16.mxu0 0
      %3740 = vmatmul.mubr.bf16.gmra.mxu0 %v3627
      %v3741 = vpop.f32.mrf.mxu0
      %v3742 = vadd.f32 0.0, %v3741
      %v3743 = vpop.f32.mrf.mxu0
      %v3744 = vpop.f32.mrf.mxu0
      %v3745 = vadd.f32 0.0, %v3744
      %v3746 = vpop.f32.mrf.mxu0
      %3747 = vmatprep.mubr.bf16.mxu0 0
      %3748 = vmatmul.mubr.bf16.gmra.mxu0 %v3630
      %v3749 = vpop.f32.mrf.mxu0
      %v3750 = vadd.f32 0.0, %v3749
      %v3751 = vpop.f32.mrf.mxu0
      %v3752 = vpop.f32.mrf.mxu0
      %v3753 = vadd.f32 0.0, %v3752
      %v3754 = vpop.f32.mrf.mxu0
      %3755 = vmatprep.mubr.bf16.mxu0 0
      %3756 = vmatmul.mubr.bf16.gmra.mxu0 %v3633
      %v3757 = vpop.f32.mrf.mxu0
      %v3758 = vadd.f32 0.0, %v3757
      %v3759 = vpop.f32.mrf.mxu0
      %v3760 = vpop.f32.mrf.mxu0
      %v3761 = vadd.f32 0.0, %v3760
      %v3762 = vpop.f32.mrf.mxu0
      %3763 = vmatprep.mubr.bf16.mxu0 0
      %3764 = vmatmul.mubr.bf16.gmra.mxu0 %v3636
      %v3765 = vpop.f32.mrf.mxu0
      %v3766 = vadd.f32 0.0, %v3765
      %v3767 = vpop.f32.mrf.mxu0
      %v3768 = vpop.f32.mrf.mxu0
      %v3769 = vadd.f32 0.0, %v3768
      %v3770 = vpop.f32.mrf.mxu0
      %3771 = vmatprep.mubr.bf16.mxu0 0
      %3772 = vmatmul.mubr.bf16.gmra.mxu0 %v3639
      %v3773 = vpop.f32.mrf.mxu0
      %v3774 = vadd.f32 0.0, %v3773
      %v3775 = vpop.f32.mrf.mxu0
      %v3776 = vpop.f32.mrf.mxu0
      %v3777 = vadd.f32 0.0, %v3776
      %v3778 = vpop.f32.mrf.mxu0
      %3779 = vmatprep.mubr.bf16.mxu0 0
      %3780 = vmatmul.mubr.bf16.gmra.mxu0 %v3642
      %v3781 = vpop.f32.mrf.mxu0
      %v3782 = vadd.f32 0.0, %v3781
      %v3783 = vpop.f32.mrf.mxu0
      %v3784 = vpop.f32.mrf.mxu0
      %v3785 = vadd.f32 0.0, %v3784
      %v3786 = vpop.f32.mrf.mxu0
      %3787 = vmatprep.mubr.bf16.mxu0 0
      %3788 = vmatmul.mubr.bf16.gmra.mxu0 %v3645
      %v3789 = vpop.f32.mrf.mxu0
      %v3790 = vadd.f32 0.0, %v3789
      %v3791 = vpop.f32.mrf.mxu0
      %v3792 = vpop.f32.mrf.mxu0
      %v3793 = vadd.f32 0.0, %v3792
      %v3794 = vpop.f32.mrf.mxu0
      %3795 = vmatprep.mubr.bf16.mxu0 0
      %3796 = vmatmul.mubr.bf16.gmra.mxu0 %v3648
      %v3797 = vpop.f32.mrf.mxu0
      %v3798 = vadd.f32 0.0, %v3797
      %v3799 = vpop.f32.mrf.mxu0
      %v3800 = vpop.f32.mrf.mxu0
      %v3801 = vadd.f32 0.0, %v3800
      %v3802 = vpop.f32.mrf.mxu0
      %3803 = vmatprep.mubr.bf16.mxu0 0
      %3804 = vmatmul.mubr.bf16.gmra.mxu0 %v3651
      %v3805 = vpop.f32.mrf.mxu0
      %v3806 = vadd.f32 0.0, %v3805
      %v3807 = vpop.f32.mrf.mxu0
      %v3808 = vpop.f32.mrf.mxu0
      %v3809 = vadd.f32 0.0, %v3808
      %v3810 = vpop.f32.mrf.mxu0
      %3811 = vmatprep.mubr.bf16.mxu0 0
      %3812 = vmatmul.mubr.bf16.gmra.mxu0 %v3654
      %v3813 = vpop.f32.mrf.mxu0
      %v3814 = vadd.f32 0.0, %v3813
      %v3815 = vpop.f32.mrf.mxu0
      %v3816 = vpop.f32.mrf.mxu0
      %v3817 = vadd.f32 0.0, %v3816
      %v3818 = vpop.f32.mrf.mxu0
      %3819 = vmatprep.mubr.bf16.mxu0 0
      %3820 = vmatmul.mubr.bf16.gmra.mxu0 %v3657
      %v3821 = vpop.f32.mrf.mxu0
      %v3822 = vadd.f32 0.0, %v3821
      %v3823 = vpop.f32.mrf.mxu0
      %v3824 = vpop.f32.mrf.mxu0
      %v3825 = vadd.f32 0.0, %v3824
      %v3826 = vpop.f32.mrf.mxu0
      %3827 = vmatprep.mubr.bf16.mxu0 0
      %3828 = vmatmul.mubr.bf16.gmra.mxu0 %v3660
      %v3829 = vpop.f32.mrf.mxu0
      %v3830 = vadd.f32 0.0, %v3829
      %v3831 = vpop.f32.mrf.mxu0
      %v3832 = vpop.f32.mrf.mxu0
      %v3833 = vadd.f32 0.0, %v3832
      %v3834 = vpop.f32.mrf.mxu0
      %3835 = vmatprep.mubr.bf16.mxu0 0
      %3836 = vmatmul.mubr.bf16.gmra.mxu0 %v3663
      %v3837 = vpop.f32.mrf.mxu0
      %v3838 = vadd.f32 0.0, %v3837
      %v3839 = vpop.f32.mrf.mxu0
      %v3840 = vpop.f32.mrf.mxu0
      %v3841 = vadd.f32 0.0, %v3840
      %v3842 = vpop.f32.mrf.mxu0
      %3843 = vmatprep.mubr.bf16.mxu0 0
      %3844 = vmatmul.mubr.bf16.gmra.mxu0 %v3666
      %v3845 = vpop.f32.mrf.mxu0
      %v3846 = vadd.f32 0.0, %v3845
      %v3847 = vpop.f32.mrf.mxu0
      %v3848 = vpop.f32.mrf.mxu0
      %v3849 = vadd.f32 0.0, %v3848
      %v3850 = vpop.f32.mrf.mxu0
      %3851 = vmatprep.mubr.bf16.mxu0 0
      %3852 = vmatmul.mubr.bf16.gmra.mxu0 %v3669
      %v3853 = vpop.f32.mrf.mxu0
      %v3854 = vadd.f32 0.0, %v3853
      %v3855 = vpop.f32.mrf.mxu0
      %v3856 = vpop.f32.mrf.mxu0
      %v3857 = vadd.f32 0.0, %v3856
      %v3858 = vpop.f32.mrf.mxu0
      %3859 = vmatprep.mubr.bf16.mxu0 0
      %3860 = vmatmul.mubr.bf16.gmra.mxu0 %v3672
      %v3861 = vpop.f32.mrf.mxu0
      %v3862 = vadd.f32 0.0, %v3861
      %v3863 = vpop.f32.mrf.mxu0
      %v3864 = vpop.f32.mrf.mxu0
      %v3865 = vadd.f32 0.0, %v3864
      %v3866 = vpop.f32.mrf.mxu0
      %3867 = vmatprep.mubr.bf16.mxu0 0
      %3868 = vmatmul.mubr.bf16.gmra.mxu0 %v3675
      %v3869 = vpop.f32.mrf.mxu0
      %v3870 = vadd.f32 0.0, %v3869
      %v3871 = vpop.f32.mrf.mxu0
      %v3872 = vpop.f32.mrf.mxu0
      %v3873 = vadd.f32 0.0, %v3872
      %v3874 = vpop.f32.mrf.mxu0
      %3875 = vmatprep.mubr.bf16.mxu0 0
      %3876 = vmatmul.mubr.bf16.gmra.mxu0 %v3678
      %v3877 = vpop.f32.mrf.mxu0
      %v3878 = vadd.f32 0.0, %v3877
      %v3879 = vpop.f32.mrf.mxu0
      %v3880 = vpop.f32.mrf.mxu0
      %v3881 = vadd.f32 0.0, %v3880
      %v3882 = vpop.f32.mrf.mxu0
      %3883 = vmatprep.mubr.bf16.mxu0 0
      %3884 = vmatmul.mubr.bf16.gmra.mxu0 %v3681
      %v3885 = vpop.f32.mrf.mxu0
      %v3886 = vadd.f32 0.0, %v3885
      %v3887 = vpop.f32.mrf.mxu0
      %v3888 = vpop.f32.mrf.mxu0
      %v3889 = vadd.f32 0.0, %v3888
      %v3890 = vpop.f32.mrf.mxu0
      %3891 = vmatprep.mubr.bf16.mxu0 0
      %3892 = vmatmul.mubr.bf16.gmra.mxu0 %v3684
      %v3893 = vpop.f32.mrf.mxu0
      %v3894 = vadd.f32 0.0, %v3893
      %v3895 = vpop.f32.mrf.mxu0
      %v3896 = vpop.f32.mrf.mxu0
      %v3897 = vadd.f32 0.0, %v3896
      %v3898 = vpop.f32.mrf.mxu0
      %3899 = vmatprep.mubr.bf16.mxu0 0
      %3900 = vmatmul.mubr.bf16.gmra.mxu0 %v3687
      %v3901 = vpop.f32.mrf.mxu0
      %v3902 = vadd.f32 0.0, %v3901
      %v3903 = vpop.f32.mrf.mxu0
      %v3904 = vpop.f32.mrf.mxu0
      %v3905 = vadd.f32 0.0, %v3904
      %v3906 = vpop.f32.mrf.mxu0
      %3907 = vmatprep.mubr.bf16.mxu0 0
      %3908 = vmatmul.mubr.bf16.gmra.mxu0 %v3690
      %v3909 = vpop.f32.mrf.mxu0
      %v3910 = vadd.f32 0.0, %v3909
      %v3911 = vpop.f32.mrf.mxu0
      %v3912 = vpop.f32.mrf.mxu0
      %v3913 = vadd.f32 0.0, %v3912
      %v3914 = vpop.f32.mrf.mxu0
      %3915 = vmatprep.mubr.bf16.mxu0 0
      %3916 = vmatmul.mubr.bf16.gmra.mxu0 %v3693
      %v3917 = vpop.f32.mrf.mxu0
      %v3918 = vadd.f32 0.0, %v3917
      %v3919 = vpop.f32.mrf.mxu0
      %v3920 = vpop.f32.mrf.mxu0
      %v3921 = vadd.f32 0.0, %v3920
      %v3922 = vpop.f32.mrf.mxu0
      %3923 = vmatprep.mubr.bf16.mxu0 0
      %3924 = vmatmul.mubr.bf16.gmra.mxu0 %v3696
      %v3925 = vpop.f32.mrf.mxu0
      %v3926 = vadd.f32 0.0, %v3925
      %v3927 = vpop.f32.mrf.mxu0
      %v3928 = vpop.f32.mrf.mxu0
      %v3929 = vadd.f32 0.0, %v3928
      %v3930 = vpop.f32.mrf.mxu0
      %3931 = vmatprep.mubr.bf16.mxu0 0
      %3932 = vmatmul.mubr.bf16.gmra.mxu0 %v3699
      %v3933 = vpop.f32.mrf.mxu0
      %v3934 = vadd.f32 0.0, %v3933
      %v3935 = vpop.f32.mrf.mxu0
      %v3936 = vpop.f32.mrf.mxu0
      %v3937 = vadd.f32 0.0, %v3936
      %v3938 = vpop.f32.mrf.mxu0
      %3939 = vmatprep.mubr.bf16.mxu0 0
      %3940 = vmatmul.mubr.bf16.gmra.mxu0 %v3702
      %v3941 = vpop.f32.mrf.mxu0
      %v3942 = vadd.f32 0.0, %v3941
      %v3943 = vpop.f32.mrf.mxu0
      %v3944 = vpop.f32.mrf.mxu0
      %v3945 = vpop.f32.mrf.mxu0
      %3946 = vdwg.mxu0
      %v3947 = vadd.f32 %v2907, %v3742
      %v3948 = vadd.f32 %v2908, %v3745
      %v3949 = vadd.f32 %v2909, %v3750
      %v3950 = vadd.f32 %v2910, %v3753
      %v3951 = vadd.f32 %v2911, %v3758
      %v3952 = vadd.f32 %v2912, %v3761
      %v3953 = vadd.f32 %v2913, %v3766
      %v3954 = vadd.f32 %v2914, %v3769
      %v3955 = vadd.f32 %v2915, %v3774
      %v3956 = vadd.f32 %v2916, %v3777
      %v3957 = vadd.f32 %v2917, %v3782
      %v3958 = vadd.f32 %v2918, %v3785
      %v3959 = vadd.f32 %v2919, %v3790
      %v3960 = vadd.f32 %v2920, %v3793
      %v3961 = vadd.f32 %v2921, %v3798
      %v3962 = vadd.f32 %v2922, %v3801
      %v3963 = vadd.f32 %v2923, %v3806
      %v3964 = vadd.f32 %v2924, %v3809
      %v3965 = vadd.f32 %v2925, %v3814
      %v3966 = vadd.f32 %v2926, %v3817
      %v3967 = vadd.f32 %v2927, %v3822
      %v3968 = vadd.f32 %v2928, %v3825
      %v3969 = vadd.f32 %v2929, %v3830
      %v3970 = vadd.f32 %v2930, %v3833
      %v3971 = vadd.f32 %v2931, %v3838
      %v3972 = vadd.f32 %v2932, %v3841
      %v3973 = vadd.f32 %v2933, %v3846
      %v3974 = vadd.f32 %v2934, %v3849
      %v3975 = vadd.f32 %v2935, %v3854
      %v3976 = vadd.f32 %v2936, %v3857
      %v3977 = vadd.f32 %v2937, %v3862
      %v3978 = vadd.f32 %v2938, %v3865
      %v3979 = vadd.f32 %v2939, %v3870
      %v3980 = vadd.f32 %v2940, %v3873
      %v3981 = vadd.f32 %v2941, %v3878
      %v3982 = vadd.f32 %v2942, %v3881
      %v3983 = vadd.f32 %v2943, %v3886
      %v3984 = vadd.f32 %v2944, %v3889
      %v3985 = vadd.f32 %v2945, %v3894
      %v3986 = vadd.f32 %v2946, %v3897
      %v3987 = vadd.f32 %v2947, %v3902
      %v3988 = vadd.f32 %v2948, %v3905
      %v3989 = vadd.f32 %v2949, %v3910
      %v3990 = vadd.f32 %v2950, %v3913
      %v3991 = vadd.f32 %v2951, %v3918
      %v3992 = vadd.f32 %v2952, %v3921
      %v3993 = vadd.f32 %v2953, %v3926
      %v3994 = vadd.f32 %v2954, %v3929
      %v3995 = vadd.f32 %v2955, %v3934
      %v3996 = vadd.f32 %v2956, %v3937
      %v3997 = vadd.f32 %v2957, %v3942
      %v4015 = vrot.slane %v2377, 5
      %v4016 = vrot.slane %v4015, 4
      %v4017 = vrot.slane %v2378, 5
      %v4018 = vsel %vm1741, %v4016, %v4017
      %v4019 = vrot.slane %v4017, 4
      %v4020 = vrot.slane %v2379, 5
      %v4021 = vsel %vm1741, %v4019, %v4020
      %v4022 = vrot.slane %v4020, 4
      %v4023 = vrot.slane %v2380, 5
      %v4024 = vsel %vm1741, %v4022, %v4023
      %v4025 = vrot.slane %v2381, 5
      %v4026 = vrot.slane %v4025, 4
      %v4027 = vrot.slane %v2382, 5
      %v4028 = vsel %vm1741, %v4026, %v4027
      %v4029 = vrot.slane %v4027, 4
      %v4030 = vrot.slane %v2383, 5
      %v4031 = vsel %vm1741, %v4029, %v4030
      %v4032 = vrot.slane %v4030, 4
      %v4033 = vrot.slane %v2384, 5
      %v4034 = vsel %vm1741, %v4032, %v4033
      %v4035 = vrot.slane %v2385, 5
      %v4036 = vrot.slane %v4035, 4
      %v4037 = vrot.slane %v2386, 5
      %v4038 = vsel %vm1741, %v4036, %v4037
      %v4039 = vrot.slane %v4037, 4
      %v4040 = vrot.slane %v2387, 5
      %v4041 = vsel %vm1741, %v4039, %v4040
      %v4042 = vrot.slane %v4040, 4
      %v4043 = vrot.slane %v2388, 5
      %v4044 = vsel %vm1741, %v4042, %v4043
      %v4045 = vrot.slane %v2389, 5
      %v4046 = vrot.slane %v4045, 4
      %v4047 = vrot.slane %v2390, 5
      %v4048 = vsel %vm1741, %v4046, %v4047
      %v4049 = vrot.slane %v4047, 4
      %v4050 = vrot.slane %v2391, 5
      %v4051 = vsel %vm1741, %v4049, %v4050
      %v4052 = vrot.slane %v4050, 4
      %v4053 = vrot.slane %v2392, 5
      %v4054 = vsel %vm1741, %v4052, %v4053
      %v4055 = vrot.slane %v2393, 5
      %v4056 = vrot.slane %v4055, 4
      %v4057 = vrot.slane %v2394, 5
      %v4058 = vsel %vm1741, %v4056, %v4057
      %v4059 = vrot.slane %v4057, 4
      %v4060 = vrot.slane %v2395, 5
      %v4061 = vsel %vm1741, %v4059, %v4060
      %v4062 = vrot.slane %v4060, 4
      %v4063 = vrot.slane %v2396, 5
      %v4064 = vsel %vm1741, %v4062, %v4063
      %v4065 = vrot.slane %v2397, 5
      %v4066 = vrot.slane %v4065, 4
      %v4067 = vrot.slane %v2398, 5
      %v4068 = vsel %vm1741, %v4066, %v4067
      %v4069 = vrot.slane %v4067, 4
      %v4070 = vrot.slane %v2399, 5
      %v4071 = vsel %vm1741, %v4069, %v4070
      %v4072 = vrot.slane %v4070, 4
      %v4073 = vrot.slane %v2400, 5
      %v4074 = vsel %vm1741, %v4072, %v4073
      %v4075 = vrot.slane %v2401, 5
      %v4076 = vrot.slane %v4075, 4
      %v4077 = vrot.slane %v2402, 5
      %v4078 = vsel %vm1741, %v4076, %v4077
      %v4079 = vrot.slane %v4077, 4
      %v4080 = vrot.slane %v2403, 5
      %v4081 = vsel %vm1741, %v4079, %v4080
      %v4082 = vrot.slane %v4080, 4
      %v4083 = vrot.slane %v2404, 5
      %v4084 = vsel %vm1741, %v4082, %v4083
      %v4085 = vrot.slane %v2405, 5
      %v4086 = vrot.slane %v4085, 4
      %v4087 = vrot.slane %v2406, 5
      %v4088 = vsel %vm1741, %v4086, %v4087
      %v4089 = vrot.slane %v4087, 4
      %v4090 = vrot.slane %v2407, 5
      %v4091 = vsel %vm1741, %v4089, %v4090
      %v4092 = vrot.slane %v4090, 4
      %v4093 = vrot.slane %v2408, 5
      %v4094 = vsel %vm1741, %v4092, %v4093
      %v4095 = vrot.slane %v2409, 5
      %v4096 = vrot.slane %v4095, 4
      %v4097 = vrot.slane %v2410, 5
      %v4098 = vsel %vm1741, %v4096, %v4097
      %v4099 = vrot.slane %v4097, 4
      %v4100 = vrot.slane %v2411, 5
      %v4101 = vsel %vm1741, %v4099, %v4100
      %v4102 = vrot.slane %v4100, 4
      %v4103 = vrot.slane %v2412, 5
      %v4104 = vsel %vm1741, %v4102, %v4103
      %v4105 = vrot.slane %v2413, 5
      %v4106 = vrot.slane %v4105, 4
      %v4107 = vrot.slane %v2414, 5
      %v4108 = vsel %vm1741, %v4106, %v4107
      %v4109 = vrot.slane %v4107, 4
      %v4110 = vrot.slane %v2415, 5
      %v4111 = vsel %vm1741, %v4109, %v4110
      %v4112 = vrot.slane %v4110, 4
      %v4113 = vrot.slane %v2416, 5
      %v4114 = vsel %vm1741, %v4112, %v4113
      %v4115 = vrot.slane %v2417, 5
      %v4116 = vrot.slane %v4115, 4
      %v4117 = vrot.slane %v2418, 5
      %v4118 = vsel %vm1741, %v4116, %v4117
      %v4119 = vrot.slane %v4117, 4
      %v4120 = vrot.slane %v2419, 5
      %v4121 = vsel %vm1741, %v4119, %v4120
      %v4122 = vrot.slane %v4120, 4
      %v4123 = vrot.slane %v2420, 5
      %v4124 = vsel %vm1741, %v4122, %v4123
      %v4125 = vrot.slane %v2421, 5
      %v4126 = vrot.slane %v4125, 4
      %v4127 = vrot.slane %v2422, 5
      %v4128 = vsel %vm1741, %v4126, %v4127
      %v4129 = vrot.slane %v4127, 4
      %v4130 = vrot.slane %v2423, 5
      %v4131 = vsel %vm1741, %v4129, %v4130
      %v4132 = vrot.slane %v4130, 4
      %v4133 = vrot.slane %v2424, 5
      %v4134 = vsel %vm1741, %v4132, %v4133
      %v4135 = vrot.slane %v2425, 5
      %v4136 = vrot.slane %v4135, 4
      %v4137 = vrot.slane %v2426, 5
      %v4138 = vsel %vm1741, %v4136, %v4137
      %v4139 = vrot.slane %v4137, 4
      %v4140 = vrot.slane %v2427, 5
      %v4141 = vsel %vm1741, %v4139, %v4140
      %v4142 = vrot.slane %v4140, 4
      %v4143 = vrot.slane %v2428, 5
      %v4144 = vsel %vm1741, %v4142, %v4143
      %v4145 = vrot.slane %v2429, 5
      %v4146 = vrot.slane %v4145, 4
      %v4147 = vrot.slane %v2430, 5
      %v4148 = vsel %vm1741, %v4146, %v4147
      %v4149 = vrot.slane %v4147, 4
      %v4150 = vrot.slane %v2431, 5
      %v4151 = vsel %vm1741, %v4149, %v4150
      %v4152 = vrot.slane %v4150, 4
      %v4153 = vrot.slane %v2432, 5
      %v4154 = vsel %vm1741, %v4152, %v4153
      %v4155 = vrot.slane %v2433, 5
      %v4156 = vrot.slane %v4155, 4
      %v4157 = vrot.slane %v2434, 5
      %v4158 = vsel %vm1741, %v4156, %v4157
      %v4159 = vrot.slane %v4157, 4
      %v4160 = vrot.slane %v2435, 5
      %v4161 = vsel %vm1741, %v4159, %v4160
      %v4162 = vrot.slane %v4160, 4
      %v4163 = vrot.slane %v2436, 5
      %v4164 = vsel %vm1741, %v4162, %v4163
      %v4165 = vrot.slane %v2437, 5
      %v4166 = vrot.slane %v4165, 4
      %v4167 = vrot.slane %v2438, 5
      %v4168 = vsel %vm1741, %v4166, %v4167
      %v4169 = vrot.slane %v4167, 4
      %v4170 = vrot.slane %v2439, 5
      %v4171 = vsel %vm1741, %v4169, %v4170
      %v4172 = vrot.slane %v4170, 4
      %v4173 = vrot.slane %v2440, 5
      %v4174 = vsel %vm1741, %v4172, %v4173
      %v4175 = vrot.slane %v2441, 5
      %v4176 = vrot.slane %v4175, 4
      %v4177 = vrot.slane %v2442, 5
      %v4178 = vsel %vm1741, %v4176, %v4177
      %v4179 = vrot.slane %v4177, 4
      %v4180 = vrot.slane %v2443, 5
      %v4181 = vsel %vm1741, %v4179, %v4180
      %v4182 = vrot.slane %v4180, 4
      %v4183 = vrot.slane %v2444, 5
      %v4184 = vsel %vm1741, %v4182, %v4183
      %s4185 = scalar_lea.vmem %s1, 60
      %v4186 = vld [vmem:[%s4185] sm:$0xf]
      %v4187 = vld [vmem:[%s4185 + $0x4] sm:$0xf]
      %v4188 = vld [vmem:[%s4185 + $0x8] sm:$0x3]
      %v4189 = vunpack.c.l.b16 %v4018
      %v4190 = vunpack.c.l.b16 %v4021
      %v4191 = vunpack.c.l.b16 %v4024
      %v4192 = vunpack.c.l.b16 %v4028
      %v4193 = vunpack.c.l.b16 %v4031
      %v4194 = vunpack.c.l.b16 %v4034
      %v4195 = vunpack.c.l.b16 %v4038
      %v4196 = vunpack.c.l.b16 %v4041
      %v4197 = vunpack.c.l.b16 %v4044
      %v4198 = vunpack.c.l.b16 %v4048
      %v4199 = vunpack.c.l.b16 %v4051
      %v4200 = vunpack.c.l.b16 %v4054
      %v4201 = vunpack.c.l.b16 %v4058
      %v4202 = vunpack.c.l.b16 %v4061
      %v4203 = vunpack.c.l.b16 %v4064
      %v4204 = vunpack.c.l.b16 %v4068
      %v4205 = vunpack.c.l.b16 %v4071
      %v4206 = vunpack.c.l.b16 %v4074
      %v4207 = vunpack.c.l.b16 %v4078
      %v4208 = vunpack.c.l.b16 %v4081
      %v4209 = vunpack.c.l.b16 %v4084
      %v4210 = vunpack.c.l.b16 %v4088
      %v4211 = vunpack.c.l.b16 %v4091
      %v4212 = vunpack.c.l.b16 %v4094
      %v4213 = vunpack.c.l.b16 %v4098
      %v4214 = vunpack.c.l.b16 %v4101
      %v4215 = vunpack.c.l.b16 %v4104
      %v4216 = vunpack.c.l.b16 %v4108
      %v4217 = vunpack.c.l.b16 %v4111
      %v4218 = vunpack.c.l.b16 %v4114
      %v4219 = vunpack.c.l.b16 %v4118
      %v4220 = vunpack.c.l.b16 %v4121
      %v4221 = vunpack.c.l.b16 %v4124
      %v4222 = vunpack.c.l.b16 %v4128
      %v4223 = vunpack.c.l.b16 %v4131
      %v4224 = vunpack.c.l.b16 %v4134
      %v4225 = vunpack.c.l.b16 %v4138
      %v4226 = vunpack.c.l.b16 %v4141
      %v4227 = vunpack.c.l.b16 %v4144
      %v4228 = vunpack.c.l.b16 %v4148
      %v4229 = vunpack.c.l.b16 %v4151
      %v4230 = vunpack.c.l.b16 %v4154
      %v4231 = vunpack.c.l.b16 %v4158
      %v4232 = vunpack.c.l.b16 %v4161
      %v4233 = vunpack.c.l.b16 %v4164
      %v4234 = vunpack.c.l.b16 %v4168
      %v4235 = vunpack.c.l.b16 %v4171
      %v4236 = vunpack.c.l.b16 %v4174
      %v4237 = vunpack.c.l.b16 %v4178
      %v4238 = vunpack.c.l.b16 %v4181
      %v4239 = vunpack.c.l.b16 %v4184
      %v4240 = vpack.c.b16 %v4190, %v4189
      %v4241 = vpack.c.b16 %v4192, %v4191
      %v4242 = vpack.c.b16 %v4194, %v4193
      %v4243 = vpack.c.b16 %v4196, %v4195
      %v4244 = vpack.c.b16 %v4198, %v4197
      %v4245 = vpack.c.b16 %v4200, %v4199
      %v4246 = vpack.c.b16 %v4202, %v4201
      %v4247 = vpack.c.b16 %v4204, %v4203
      %v4248 = vpack.c.b16 %v4206, %v4205
      %v4249 = vpack.c.b16 %v4208, %v4207
      %v4250 = vpack.c.b16 %v4210, %v4209
      %v4251 = vpack.c.b16 %v4212, %v4211
      %v4252 = vpack.c.b16 %v4214, %v4213
      %v4253 = vpack.c.b16 %v4216, %v4215
      %v4254 = vpack.c.b16 %v4218, %v4217
      %v4255 = vpack.c.b16 %v4220, %v4219
      %v4256 = vpack.c.b16 %v4222, %v4221
      %v4257 = vpack.c.b16 %v4224, %v4223
      %v4258 = vpack.c.b16 %v4226, %v4225
      %v4259 = vpack.c.b16 %v4228, %v4227
      %v4260 = vpack.c.b16 %v4230, %v4229
      %v4261 = vpack.c.b16 %v4232, %v4231
      %v4262 = vpack.c.b16 %v4234, %v4233
      %v4263 = vpack.c.b16 %v4236, %v4235
      %v4264 = vpack.c.b16 %v4238, %v4237
      %v4265 = vpack.c.b16 %v4239, %v4239
      %v4269 = vunpack.c.l.b16 %v4186
      %v4270 = vunpack.c.l.b16 %v4187
      %v4271 = vunpack.c.l.b16 %v4188
      %v4272 = vpack.c.b16 %v4270, %v4269
      %v4273 = vpack.c.b16 %v4271, %v4271
      %v4276 = vsel %vm941, %v4240, 0
      %v4279 = vsel %vm941, %v4241, 0
      %v4282 = vsel %vm941, %v4242, 0
      %v4285 = vsel %vm941, %v4243, 0
      %v4288 = vsel %vm941, %v4244, 0
      %v4291 = vsel %vm941, %v4245, 0
      %v4294 = vsel %vm941, %v4246, 0
      %v4297 = vsel %vm941, %v4247, 0
      %v4300 = vsel %vm941, %v4248, 0
      %v4303 = vsel %vm941, %v4249, 0
      %v4306 = vsel %vm941, %v4250, 0
      %v4309 = vsel %vm941, %v4251, 0
      %v4312 = vsel %vm941, %v4252, 0
      %v4315 = vsel %vm941, %v4253, 0
      %v4318 = vsel %vm941, %v4254, 0
      %v4321 = vsel %vm941, %v4255, 0
      %v4324 = vsel %vm941, %v4256, 0
      %v4327 = vsel %vm941, %v4257, 0
      %v4330 = vsel %vm941, %v4258, 0
      %v4333 = vsel %vm941, %v4259, 0
      %v4336 = vsel %vm941, %v4260, 0
      %v4339 = vsel %vm941, %v4261, 0
      %v4342 = vsel %vm941, %v4262, 0
      %v4345 = vsel %vm941, %v4263, 0
      %v4348 = vsel %vm941, %v4264, 0
      %v4351 = vsel %vm941, %v4265, 0
      %v4354 = vsel %vm1020, %v4273, 0
      %4356 = vmatprep.subr.bf16.mxu0 0
      %4357 = vmatpush1.bf16.msra.mxu0 0
      %4358 = vmatprep.subr.bf16.mxu0 0
      %4359 = vmatpush1.bf16.msra.mxu0 0
      %4360 = vmatprep.subr.bf16.mxu0 0
      %4361 = vmatpush1.bf16.msra.mxu0 0
      %4362 = vmatprep.subr.bf16.mxu0 0
      %4363 = vmatpush1.bf16.msra.mxu0 0
      %4364 = vmatprep.subr.bf16.mxu0 0
      %4365 = vmatpush1.bf16.msra.mxu0 0
      %4366 = vmatprep.subr.bf16.mxu0 0
      %4367 = vmatpush1.bf16.msra.mxu0 0
      %4368 = vmatprep.subr.bf16.mxu0 0
      %4369 = vmatpush1.bf16.msra.mxu0 %v4354
      %4370 = vmatprep.subr.bf16.mxu0 0
      %4371 = vmatpush1.bf16.msra.mxu0 %v4272
      %4372 = vmatprep.subr.bf16.mxu0 0
      %4373 = vmatpush2.bf16.msra.mxu0 0
      %4374 = vmatprep.subr.bf16.mxu0 0
      %4375 = vmatpush2.bf16.msra.mxu0 0
      %4376 = vmatprep.subr.bf16.mxu0 0
      %4377 = vmatpush2.bf16.msra.mxu0 0
      %4378 = vmatprep.subr.bf16.mxu0 0
      %4379 = vmatpush2.bf16.msra.mxu0 0
      %4380 = vmatprep.subr.bf16.mxu0 0
      %4381 = vmatpush2.bf16.msra.mxu0 0
      %4382 = vmatprep.subr.bf16.mxu0 0
      %4383 = vmatpush2.bf16.msra.mxu0 0
      %4384 = vmatprep.subr.bf16.mxu0 0
      %4385 = vmatpush2.bf16.msra.mxu0 0
      %4386 = vmatprep.subr.bf16.mxu0 0
      %4387 = vmatpush2.bf16.msra.mxu0 0
      %4388 = vmatprep.mubr.bf16.mxu0 0
      %4389 = vmatmul.mubr.bf16.gmra.mxu0 %v4276
      %v4390 = vpop.f32.mrf.mxu0
      %v4391 = vadd.f32 0.0, %v4390
      %v4392 = vpop.f32.mrf.mxu0
      %v4393 = vpop.f32.mrf.mxu0
      %v4394 = vadd.f32 0.0, %v4393
      %v4395 = vpop.f32.mrf.mxu0
      %4396 = vmatprep.mubr.bf16.mxu0 0
      %4397 = vmatmul.mubr.bf16.gmra.mxu0 %v4279
      %v4398 = vpop.f32.mrf.mxu0
      %v4399 = vadd.f32 0.0, %v4398
      %v4400 = vpop.f32.mrf.mxu0
      %v4401 = vpop.f32.mrf.mxu0
      %v4402 = vadd.f32 0.0, %v4401
      %v4403 = vpop.f32.mrf.mxu0
      %4404 = vmatprep.mubr.bf16.mxu0 0
      %4405 = vmatmul.mubr.bf16.gmra.mxu0 %v4282
      %v4406 = vpop.f32.mrf.mxu0
      %v4407 = vadd.f32 0.0, %v4406
      %v4408 = vpop.f32.mrf.mxu0
      %v4409 = vpop.f32.mrf.mxu0
      %v4410 = vadd.f32 0.0, %v4409
      %v4411 = vpop.f32.mrf.mxu0
      %4412 = vmatprep.mubr.bf16.mxu0 0
      %4413 = vmatmul.mubr.bf16.gmra.mxu0 %v4285
      %v4414 = vpop.f32.mrf.mxu0
      %v4415 = vadd.f32 0.0, %v4414
      %v4416 = vpop.f32.mrf.mxu0
      %v4417 = vpop.f32.mrf.mxu0
      %v4418 = vadd.f32 0.0, %v4417
      %v4419 = vpop.f32.mrf.mxu0
      %4420 = vmatprep.mubr.bf16.mxu0 0
      %4421 = vmatmul.mubr.bf16.gmra.mxu0 %v4288
      %v4422 = vpop.f32.mrf.mxu0
      %v4423 = vadd.f32 0.0, %v4422
      %v4424 = vpop.f32.mrf.mxu0
      %v4425 = vpop.f32.mrf.mxu0
      %v4426 = vadd.f32 0.0, %v4425
      %v4427 = vpop.f32.mrf.mxu0
      %4428 = vmatprep.mubr.bf16.mxu0 0
      %4429 = vmatmul.mubr.bf16.gmra.mxu0 %v4291
      %v4430 = vpop.f32.mrf.mxu0
      %v4431 = vadd.f32 0.0, %v4430
      %v4432 = vpop.f32.mrf.mxu0
      %v4433 = vpop.f32.mrf.mxu0
      %v4434 = vadd.f32 0.0, %v4433
      %v4435 = vpop.f32.mrf.mxu0
      %4436 = vmatprep.mubr.bf16.mxu0 0
      %4437 = vmatmul.mubr.bf16.gmra.mxu0 %v4294
      %v4438 = vpop.f32.mrf.mxu0
      %v4439 = vadd.f32 0.0, %v4438
      %v4440 = vpop.f32.mrf.mxu0
      %v4441 = vpop.f32.mrf.mxu0
      %v4442 = vadd.f32 0.0, %v4441
      %v4443 = vpop.f32.mrf.mxu0
      %4444 = vmatprep.mubr.bf16.mxu0 0
      %4445 = vmatmul.mubr.bf16.gmra.mxu0 %v4297
      %v4446 = vpop.f32.mrf.mxu0
      %v4447 = vadd.f32 0.0, %v4446
      %v4448 = vpop.f32.mrf.mxu0
      %v4449 = vpop.f32.mrf.mxu0
      %v4450 = vadd.f32 0.0, %v4449
      %v4451 = vpop.f32.mrf.mxu0
      %4452 = vmatprep.mubr.bf16.mxu0 0
      %4453 = vmatmul.mubr.bf16.gmra.mxu0 %v4300
      %v4454 = vpop.f32.mrf.mxu0
      %v4455 = vadd.f32 0.0, %v4454
      %v4456 = vpop.f32.mrf.mxu0
      %v4457 = vpop.f32.mrf.mxu0
      %v4458 = vadd.f32 0.0, %v4457
      %v4459 = vpop.f32.mrf.mxu0
      %4460 = vmatprep.mubr.bf16.mxu0 0
      %4461 = vmatmul.mubr.bf16.gmra.mxu0 %v4303
      %v4462 = vpop.f32.mrf.mxu0
      %v4463 = vadd.f32 0.0, %v4462
      %v4464 = vpop.f32.mrf.mxu0
      %v4465 = vpop.f32.mrf.mxu0
      %v4466 = vadd.f32 0.0, %v4465
      %v4467 = vpop.f32.mrf.mxu0
      %4468 = vmatprep.mubr.bf16.mxu0 0
      %4469 = vmatmul.mubr.bf16.gmra.mxu0 %v4306
      %v4470 = vpop.f32.mrf.mxu0
      %v4471 = vadd.f32 0.0, %v4470
      %v4472 = vpop.f32.mrf.mxu0
      %v4473 = vpop.f32.mrf.mxu0
      %v4474 = vadd.f32 0.0, %v4473
      %v4475 = vpop.f32.mrf.mxu0
      %4476 = vmatprep.mubr.bf16.mxu0 0
      %4477 = vmatmul.mubr.bf16.gmra.mxu0 %v4309
      %v4478 = vpop.f32.mrf.mxu0
      %v4479 = vadd.f32 0.0, %v4478
      %v4480 = vpop.f32.mrf.mxu0
      %v4481 = vpop.f32.mrf.mxu0
      %v4482 = vadd.f32 0.0, %v4481
      %v4483 = vpop.f32.mrf.mxu0
      %4484 = vmatprep.mubr.bf16.mxu0 0
      %4485 = vmatmul.mubr.bf16.gmra.mxu0 %v4312
      %v4486 = vpop.f32.mrf.mxu0
      %v4487 = vadd.f32 0.0, %v4486
      %v4488 = vpop.f32.mrf.mxu0
      %v4489 = vpop.f32.mrf.mxu0
      %v4490 = vadd.f32 0.0, %v4489
      %v4491 = vpop.f32.mrf.mxu0
      %4492 = vmatprep.mubr.bf16.mxu0 0
      %4493 = vmatmul.mubr.bf16.gmra.mxu0 %v4315
      %v4494 = vpop.f32.mrf.mxu0
      %v4495 = vadd.f32 0.0, %v4494
      %v4496 = vpop.f32.mrf.mxu0
      %v4497 = vpop.f32.mrf.mxu0
      %v4498 = vadd.f32 0.0, %v4497
      %v4499 = vpop.f32.mrf.mxu0
      %4500 = vmatprep.mubr.bf16.mxu0 0
      %4501 = vmatmul.mubr.bf16.gmra.mxu0 %v4318
      %v4502 = vpop.f32.mrf.mxu0
      %v4503 = vadd.f32 0.0, %v4502
      %v4504 = vpop.f32.mrf.mxu0
      %v4505 = vpop.f32.mrf.mxu0
      %v4506 = vadd.f32 0.0, %v4505
      %v4507 = vpop.f32.mrf.mxu0
      %4508 = vmatprep.mubr.bf16.mxu0 0
      %4509 = vmatmul.mubr.bf16.gmra.mxu0 %v4321
      %v4510 = vpop.f32.mrf.mxu0
      %v4511 = vadd.f32 0.0, %v4510
      %v4512 = vpop.f32.mrf.mxu0
      %v4513 = vpop.f32.mrf.mxu0
      %v4514 = vadd.f32 0.0, %v4513
      %v4515 = vpop.f32.mrf.mxu0
      %4516 = vmatprep.mubr.bf16.mxu0 0
      %4517 = vmatmul.mubr.bf16.gmra.mxu0 %v4324
      %v4518 = vpop.f32.mrf.mxu0
      %v4519 = vadd.f32 0.0, %v4518
      %v4520 = vpop.f32.mrf.mxu0
      %v4521 = vpop.f32.mrf.mxu0
      %v4522 = vadd.f32 0.0, %v4521
      %v4523 = vpop.f32.mrf.mxu0
      %4524 = vmatprep.mubr.bf16.mxu0 0
      %4525 = vmatmul.mubr.bf16.gmra.mxu0 %v4327
      %v4526 = vpop.f32.mrf.mxu0
      %v4527 = vadd.f32 0.0, %v4526
      %v4528 = vpop.f32.mrf.mxu0
      %v4529 = vpop.f32.mrf.mxu0
      %v4530 = vadd.f32 0.0, %v4529
      %v4531 = vpop.f32.mrf.mxu0
      %4532 = vmatprep.mubr.bf16.mxu0 0
      %4533 = vmatmul.mubr.bf16.gmra.mxu0 %v4330
      %v4534 = vpop.f32.mrf.mxu0
      %v4535 = vadd.f32 0.0, %v4534
      %v4536 = vpop.f32.mrf.mxu0
      %v4537 = vpop.f32.mrf.mxu0
      %v4538 = vadd.f32 0.0, %v4537
      %v4539 = vpop.f32.mrf.mxu0
      %4540 = vmatprep.mubr.bf16.mxu0 0
      %4541 = vmatmul.mubr.bf16.gmra.mxu0 %v4333
      %v4542 = vpop.f32.mrf.mxu0
      %v4543 = vadd.f32 0.0, %v4542
      %v4544 = vpop.f32.mrf.mxu0
      %v4545 = vpop.f32.mrf.mxu0
      %v4546 = vadd.f32 0.0, %v4545
      %v4547 = vpop.f32.mrf.mxu0
      %4548 = vmatprep.mubr.bf16.mxu0 0
      %4549 = vmatmul.mubr.bf16.gmra.mxu0 %v4336
      %v4550 = vpop.f32.mrf.mxu0
      %v4551 = vadd.f32 0.0, %v4550
      %v4552 = vpop.f32.mrf.mxu0
      %v4553 = vpop.f32.mrf.mxu0
      %v4554 = vadd.f32 0.0, %v4553
      %v4555 = vpop.f32.mrf.mxu0
      %4556 = vmatprep.mubr.bf16.mxu0 0
      %4557 = vmatmul.mubr.bf16.gmra.mxu0 %v4339
      %v4558 = vpop.f32.mrf.mxu0
      %v4559 = vadd.f32 0.0, %v4558
      %v4560 = vpop.f32.mrf.mxu0
      %v4561 = vpop.f32.mrf.mxu0
      %v4562 = vadd.f32 0.0, %v4561
      %v4563 = vpop.f32.mrf.mxu0
      %4564 = vmatprep.mubr.bf16.mxu0 0
      %4565 = vmatmul.mubr.bf16.gmra.mxu0 %v4342
      %v4566 = vpop.f32.mrf.mxu0
      %v4567 = vadd.f32 0.0, %v4566
      %v4568 = vpop.f32.mrf.mxu0
      %v4569 = vpop.f32.mrf.mxu0
      %v4570 = vadd.f32 0.0, %v4569
      %v4571 = vpop.f32.mrf.mxu0
      %4572 = vmatprep.mubr.bf16.mxu0 0
      %4573 = vmatmul.mubr.bf16.gmra.mxu0 %v4345
      %v4574 = vpop.f32.mrf.mxu0
      %v4575 = vadd.f32 0.0, %v4574
      %v4576 = vpop.f32.mrf.mxu0
      %v4577 = vpop.f32.mrf.mxu0
      %v4578 = vadd.f32 0.0, %v4577
      %v4579 = vpop.f32.mrf.mxu0
      %4580 = vmatprep.mubr.bf16.mxu0 0
      %4581 = vmatmul.mubr.bf16.gmra.mxu0 %v4348
      %v4582 = vpop.f32.mrf.mxu0
      %v4583 = vadd.f32 0.0, %v4582
      %v4584 = vpop.f32.mrf.mxu0
      %v4585 = vpop.f32.mrf.mxu0
      %v4586 = vadd.f32 0.0, %v4585
      %v4587 = vpop.f32.mrf.mxu0
      %4588 = vmatprep.mubr.bf16.mxu0 0
      %4589 = vmatmul.mubr.bf16.gmra.mxu0 %v4351
      %v4590 = vpop.f32.mrf.mxu0
      %v4591 = vadd.f32 0.0, %v4590
      %v4592 = vpop.f32.mrf.mxu0
      %v4593 = vpop.f32.mrf.mxu0
      %v4594 = vpop.f32.mrf.mxu0
      %4595 = vdwg.mxu0
      %v4596 = vadd.f32 %v3947, %v4391
      %v4597 = vadd.f32 %v3948, %v4394
      %v4598 = vadd.f32 %v3949, %v4399
      %v4599 = vadd.f32 %v3950, %v4402
      %v4600 = vadd.f32 %v3951, %v4407
      %v4601 = vadd.f32 %v3952, %v4410
      %v4602 = vadd.f32 %v3953, %v4415
      %v4603 = vadd.f32 %v3954, %v4418
      %v4604 = vadd.f32 %v3955, %v4423
      %v4605 = vadd.f32 %v3956, %v4426
      %v4606 = vadd.f32 %v3957, %v4431
      %v4607 = vadd.f32 %v3958, %v4434
      %v4608 = vadd.f32 %v3959, %v4439
      %v4609 = vadd.f32 %v3960, %v4442
      %v4610 = vadd.f32 %v3961, %v4447
      %v4611 = vadd.f32 %v3962, %v4450
      %v4612 = vadd.f32 %v3963, %v4455
      %v4613 = vadd.f32 %v3964, %v4458
      %v4614 = vadd.f32 %v3965, %v4463
      %v4615 = vadd.f32 %v3966, %v4466
      %v4616 = vadd.f32 %v3967, %v4471
      %v4617 = vadd.f32 %v3968, %v4474
      %v4618 = vadd.f32 %v3969, %v4479
      %v4619 = vadd.f32 %v3970, %v4482
      %v4620 = vadd.f32 %v3971, %v4487
      %v4621 = vadd.f32 %v3972, %v4490
      %v4622 = vadd.f32 %v3973, %v4495
      %v4623 = vadd.f32 %v3974, %v4498
      %v4624 = vadd.f32 %v3975, %v4503
      %v4625 = vadd.f32 %v3976, %v4506
      %v4626 = vadd.f32 %v3977, %v4511
      %v4627 = vadd.f32 %v3978, %v4514
      %v4628 = vadd.f32 %v3979, %v4519
      %v4629 = vadd.f32 %v3980, %v4522
      %v4630 = vadd.f32 %v3981, %v4527
      %v4631 = vadd.f32 %v3982, %v4530
      %v4632 = vadd.f32 %v3983, %v4535
      %v4633 = vadd.f32 %v3984, %v4538
      %v4634 = vadd.f32 %v3985, %v4543
      %v4635 = vadd.f32 %v3986, %v4546
      %v4636 = vadd.f32 %v3987, %v4551
      %v4637 = vadd.f32 %v3988, %v4554
      %v4638 = vadd.f32 %v3989, %v4559
      %v4639 = vadd.f32 %v3990, %v4562
      %v4640 = vadd.f32 %v3991, %v4567
      %v4641 = vadd.f32 %v3992, %v4570
      %v4642 = vadd.f32 %v3993, %v4575
      %v4643 = vadd.f32 %v3994, %v4578
      %v4644 = vadd.f32 %v3995, %v4583
      %v4645 = vadd.f32 %v3996, %v4586
      %v4646 = vadd.f32 %v3997, %v4591
      %s4647 = sadd.s32 %s195, 1
      %s4648 = smul.u32 %s4647, 8
      %s4649 = smul.addr %s4648, 4
      %s4650 = scalar_lea.vmem %s184, %s4649
      %v4651 = vld [vmem:[%s4650] sm:$0xf]
      %v4652 = vld [vmem:[%s4650 + $0x4] sm:$0xf]
      %v4653 = vld [vmem:[%s4650 + $0x8] sm:$0xf]
      %v4654 = vld [vmem:[%s4650 + $0xc] sm:$0x1]
      %v4655 = vld [vmem:[%s4650 + $0x20] sm:$0xf]
      %v4656 = vld [vmem:[%s4650 + $0x24] sm:$0xf]
      %v4657 = vld [vmem:[%s4650 + $0x28] sm:$0xf]
      %v4658 = vld [vmem:[%s4650 + $0x2c] sm:$0x1]
      %v4659 = vld [vmem:[%s4650 + $0x40] sm:$0xf]
      %v4660 = vld [vmem:[%s4650 + $0x44] sm:$0xf]
      %v4661 = vld [vmem:[%s4650 + $0x48] sm:$0xf]
      %v4662 = vld [vmem:[%s4650 + $0x4c] sm:$0x1]
      %v4663 = vld [vmem:[%s4650 + $0x60] sm:$0xf]
      %v4664 = vld [vmem:[%s4650 + $0x64] sm:$0xf]
      %v4665 = vld [vmem:[%s4650 + $0x68] sm:$0xf]
      %v4666 = vld [vmem:[%s4650 + $0x6c] sm:$0x1]
      %v4667 = vld [vmem:[%s4650 + $0x80] sm:$0xf]
      %v4668 = vld [vmem:[%s4650 + $0x84] sm:$0xf]
      %v4669 = vld [vmem:[%s4650 + $0x88] sm:$0xf]
      %v4670 = vld [vmem:[%s4650 + $0x8c] sm:$0x1]
      %v4671 = vld [vmem:[%s4650 + $0xa0] sm:$0xf]
      %v4672 = vld [vmem:[%s4650 + $0xa4] sm:$0xf]
      %v4673 = vld [vmem:[%s4650 + $0xa8] sm:$0xf]
      %v4674 = vld [vmem:[%s4650 + $0xac] sm:$0x1]
      %v4675 = vld [vmem:[%s4650 + $0xc0] sm:$0xf]
      %v4676 = vld [vmem:[%s4650 + $0xc4] sm:$0xf]
      %v4677 = vld [vmem:[%s4650 + $0xc8] sm:$0xf]
      %v4678 = vld [vmem:[%s4650 + $0xcc] sm:$0x1]
      %v4679 = vld [vmem:[%s4650 + $0xe0] sm:$0xf]
      %v4680 = vld [vmem:[%s4650 + $0xe4] sm:$0xf]
      %v4681 = vld [vmem:[%s4650 + $0xe8] sm:$0xf]
      %v4682 = vld [vmem:[%s4650 + $0xec] sm:$0x1]
      %v4683 = vld [vmem:[%s4650 + $0x100] sm:$0xf]
      %v4684 = vld [vmem:[%s4650 + $0x104] sm:$0xf]
      %v4685 = vld [vmem:[%s4650 + $0x108] sm:$0xf]
      %v4686 = vld [vmem:[%s4650 + $0x10c] sm:$0x1]
      %v4687 = vld [vmem:[%s4650 + $0x120] sm:$0xf]
      %v4688 = vld [vmem:[%s4650 + $0x124] sm:$0xf]
      %v4689 = vld [vmem:[%s4650 + $0x128] sm:$0xf]
      %v4690 = vld [vmem:[%s4650 + $0x12c] sm:$0x1]
      %v4691 = vld [vmem:[%s4650 + $0x140] sm:$0xf]
      %v4692 = vld [vmem:[%s4650 + $0x144] sm:$0xf]
      %v4693 = vld [vmem:[%s4650 + $0x148] sm:$0xf]
      %v4694 = vld [vmem:[%s4650 + $0x14c] sm:$0x1]
      %v4695 = vld [vmem:[%s4650 + $0x160] sm:$0xf]
      %v4696 = vld [vmem:[%s4650 + $0x164] sm:$0xf]
      %v4697 = vld [vmem:[%s4650 + $0x168] sm:$0xf]
      %v4698 = vld [vmem:[%s4650 + $0x16c] sm:$0x1]
      %v4699 = vld [vmem:[%s4650 + $0x180] sm:$0xf]
      %v4700 = vld [vmem:[%s4650 + $0x184] sm:$0xf]
      %v4701 = vld [vmem:[%s4650 + $0x188] sm:$0xf]
      %v4702 = vld [vmem:[%s4650 + $0x18c] sm:$0x1]
      %v4703 = vld [vmem:[%s4650 + $0x1a0] sm:$0xf]
      %v4704 = vld [vmem:[%s4650 + $0x1a4] sm:$0xf]
      %v4705 = vld [vmem:[%s4650 + $0x1a8] sm:$0xf]
      %v4706 = vld [vmem:[%s4650 + $0x1ac] sm:$0x1]
      %v4707 = vld [vmem:[%s4650 + $0x1c0] sm:$0xf]
      %v4708 = vld [vmem:[%s4650 + $0x1c4] sm:$0xf]
      %v4709 = vld [vmem:[%s4650 + $0x1c8] sm:$0xf]
      %v4710 = vld [vmem:[%s4650 + $0x1cc] sm:$0x1]
      %v4711 = vld [vmem:[%s4650 + $0x1e0] sm:$0xf]
      %v4712 = vld [vmem:[%s4650 + $0x1e4] sm:$0xf]
      %v4713 = vld [vmem:[%s4650 + $0x1e8] sm:$0xf]
      %v4714 = vld [vmem:[%s4650 + $0x1ec] sm:$0x1]
      %v4715 = vld [vmem:[%s4650 + $0x200] sm:$0xf]
      %v4716 = vld [vmem:[%s4650 + $0x204] sm:$0xf]
      %v4717 = vld [vmem:[%s4650 + $0x208] sm:$0xf]
      %v4718 = vld [vmem:[%s4650 + $0x20c] sm:$0x1]
      %s4719 = scalar_lea.vmem %s1, 72
      %v4720 = vld [vmem:[%s4719] sm:$0xf]
      %v4721 = vld [vmem:[%s4719 + $0x4] sm:$0xf]
      %v4722 = vld [vmem:[%s4719 + $0x8] sm:$0x3]
      %v4774 = vunpack.c.l.b16 %v4651
      %v4775 = vunpack.c.l.b16 %v4652
      %v4776 = vunpack.c.l.b16 %v4653
      %v4777 = vunpack.c.l.b16 %v4655
      %v4778 = vunpack.c.l.b16 %v4656
      %v4779 = vunpack.c.l.b16 %v4657
      %v4780 = vunpack.c.l.b16 %v4659
      %v4781 = vunpack.c.l.b16 %v4660
      %v4782 = vunpack.c.l.b16 %v4661
      %v4783 = vunpack.c.l.b16 %v4663
      %v4784 = vunpack.c.l.b16 %v4664
      %v4785 = vunpack.c.l.b16 %v4665
      %v4786 = vunpack.c.l.b16 %v4667
      %v4787 = vunpack.c.l.b16 %v4668
      %v4788 = vunpack.c.l.b16 %v4669
      %v4789 = vunpack.c.l.b16 %v4671
      %v4790 = vunpack.c.l.b16 %v4672
      %v4791 = vunpack.c.l.b16 %v4673
      %v4792 = vunpack.c.l.b16 %v4675
      %v4793 = vunpack.c.l.b16 %v4676
      %v4794 = vunpack.c.l.b16 %v4677
      %v4795 = vunpack.c.l.b16 %v4679
      %v4796 = vunpack.c.l.b16 %v4680
      %v4797 = vunpack.c.l.b16 %v4681
      %v4798 = vunpack.c.l.b16 %v4683
      %v4799 = vunpack.c.l.b16 %v4684
      %v4800 = vunpack.c.l.b16 %v4685
      %v4801 = vunpack.c.l.b16 %v4687
      %v4802 = vunpack.c.l.b16 %v4688
      %v4803 = vunpack.c.l.b16 %v4689
      %v4804 = vunpack.c.l.b16 %v4691
      %v4805 = vunpack.c.l.b16 %v4692
      %v4806 = vunpack.c.l.b16 %v4693
      %v4807 = vunpack.c.l.b16 %v4695
      %v4808 = vunpack.c.l.b16 %v4696
      %v4809 = vunpack.c.l.b16 %v4697
      %v4810 = vunpack.c.l.b16 %v4699
      %v4811 = vunpack.c.l.b16 %v4700
      %v4812 = vunpack.c.l.b16 %v4701
      %v4813 = vunpack.c.l.b16 %v4703
      %v4814 = vunpack.c.l.b16 %v4704
      %v4815 = vunpack.c.l.b16 %v4705
      %v4816 = vunpack.c.l.b16 %v4707
      %v4817 = vunpack.c.l.b16 %v4708
      %v4818 = vunpack.c.l.b16 %v4709
      %v4819 = vunpack.c.l.b16 %v4711
      %v4820 = vunpack.c.l.b16 %v4712
      %v4821 = vunpack.c.l.b16 %v4713
      %v4822 = vunpack.c.l.b16 %v4715
      %v4823 = vunpack.c.l.b16 %v4716
      %v4824 = vunpack.c.l.b16 %v4717
      %v4825 = vpack.c.b16 %v4775, %v4774
      %v4826 = vpack.c.b16 %v4777, %v4776
      %v4827 = vpack.c.b16 %v4779, %v4778
      %v4828 = vpack.c.b16 %v4781, %v4780
      %v4829 = vpack.c.b16 %v4783, %v4782
      %v4830 = vpack.c.b16 %v4785, %v4784
      %v4831 = vpack.c.b16 %v4787, %v4786
      %v4832 = vpack.c.b16 %v4789, %v4788
      %v4833 = vpack.c.b16 %v4791, %v4790
      %v4834 = vpack.c.b16 %v4793, %v4792
      %v4835 = vpack.c.b16 %v4795, %v4794
      %v4836 = vpack.c.b16 %v4797, %v4796
      %v4837 = vpack.c.b16 %v4799, %v4798
      %v4838 = vpack.c.b16 %v4801, %v4800
      %v4839 = vpack.c.b16 %v4803, %v4802
      %v4840 = vpack.c.b16 %v4805, %v4804
      %v4841 = vpack.c.b16 %v4807, %v4806
      %v4842 = vpack.c.b16 %v4809, %v4808
      %v4843 = vpack.c.b16 %v4811, %v4810
      %v4844 = vpack.c.b16 %v4813, %v4812
      %v4845 = vpack.c.b16 %v4815, %v4814
      %v4846 = vpack.c.b16 %v4817, %v4816
      %v4847 = vpack.c.b16 %v4819, %v4818
      %v4848 = vpack.c.b16 %v4821, %v4820
      %v4849 = vpack.c.b16 %v4823, %v4822
      %v4850 = vpack.c.b16 %v4824, %v4824
      %v4854 = vunpack.c.l.b16 %v4720
      %v4855 = vunpack.c.l.b16 %v4721
      %v4856 = vunpack.c.l.b16 %v4722
      %v4857 = vpack.c.b16 %v4855, %v4854
      %v4858 = vpack.c.b16 %v4856, %v4856
      %v4861 = vsel %vm941, %v4825, 0
      %v4864 = vsel %vm941, %v4826, 0
      %v4867 = vsel %vm941, %v4827, 0
      %v4870 = vsel %vm941, %v4828, 0
      %v4873 = vsel %vm941, %v4829, 0
      %v4876 = vsel %vm941, %v4830, 0
      %v4879 = vsel %vm941, %v4831, 0
      %v4882 = vsel %vm941, %v4832, 0
      %v4885 = vsel %vm941, %v4833, 0
      %v4888 = vsel %vm941, %v4834, 0
      %v4891 = vsel %vm941, %v4835, 0
      %v4894 = vsel %vm941, %v4836, 0
      %v4897 = vsel %vm941, %v4837, 0
      %v4900 = vsel %vm941, %v4838, 0
      %v4903 = vsel %vm941, %v4839, 0
      %v4906 = vsel %vm941, %v4840, 0
      %v4909 = vsel %vm941, %v4841, 0
      %v4912 = vsel %vm941, %v4842, 0
      %v4915 = vsel %vm941, %v4843, 0
      %v4918 = vsel %vm941, %v4844, 0
      %v4921 = vsel %vm941, %v4845, 0
      %v4924 = vsel %vm941, %v4846, 0
      %v4927 = vsel %vm941, %v4847, 0
      %v4930 = vsel %vm941, %v4848, 0
      %v4933 = vsel %vm941, %v4849, 0
      %v4936 = vsel %vm941, %v4850, 0
      %v4939 = vsel %vm1020, %v4858, 0
      %4941 = vmatprep.subr.bf16.mxu0 0
      %4942 = vmatpush1.bf16.msra.mxu0 0
      %4943 = vmatprep.subr.bf16.mxu0 0
      %4944 = vmatpush1.bf16.msra.mxu0 0
      %4945 = vmatprep.subr.bf16.mxu0 0
      %4946 = vmatpush1.bf16.msra.mxu0 0
      %4947 = vmatprep.subr.bf16.mxu0 0
      %4948 = vmatpush1.bf16.msra.mxu0 0
      %4949 = vmatprep.subr.bf16.mxu0 0
      %4950 = vmatpush1.bf16.msra.mxu0 0
      %4951 = vmatprep.subr.bf16.mxu0 0
      %4952 = vmatpush1.bf16.msra.mxu0 0
      %4953 = vmatprep.subr.bf16.mxu0 0
      %4954 = vmatpush1.bf16.msra.mxu0 %v4939
      %4955 = vmatprep.subr.bf16.mxu0 0
      %4956 = vmatpush1.bf16.msra.mxu0 %v4857
      %4957 = vmatprep.subr.bf16.mxu0 0
      %4958 = vmatpush2.bf16.msra.mxu0 0
      %4959 = vmatprep.subr.bf16.mxu0 0
      %4960 = vmatpush2.bf16.msra.mxu0 0
      %4961 = vmatprep.subr.bf16.mxu0 0
      %4962 = vmatpush2.bf16.msra.mxu0 0
      %4963 = vmatprep.subr.bf16.mxu0 0
      %4964 = vmatpush2.bf16.msra.mxu0 0
      %4965 = vmatprep.subr.bf16.mxu0 0
      %4966 = vmatpush2.bf16.msra.mxu0 0
      %4967 = vmatprep.subr.bf16.mxu0 0
      %4968 = vmatpush2.bf16.msra.mxu0 0
      %4969 = vmatprep.subr.bf16.mxu0 0
      %4970 = vmatpush2.bf16.msra.mxu0 0
      %4971 = vmatprep.subr.bf16.mxu0 0
      %4972 = vmatpush2.bf16.msra.mxu0 0
      %4973 = vmatprep.mubr.bf16.mxu0 0
      %4974 = vmatmul.mubr.bf16.gmra.mxu0 %v4861
      %v4975 = vpop.f32.mrf.mxu0
      %v4976 = vadd.f32 0.0, %v4975
      %v4977 = vpop.f32.mrf.mxu0
      %v4978 = vpop.f32.mrf.mxu0
      %v4979 = vadd.f32 0.0, %v4978
      %v4980 = vpop.f32.mrf.mxu0
      %4981 = vmatprep.mubr.bf16.mxu0 0
      %4982 = vmatmul.mubr.bf16.gmra.mxu0 %v4864
      %v4983 = vpop.f32.mrf.mxu0
      %v4984 = vadd.f32 0.0, %v4983
      %v4985 = vpop.f32.mrf.mxu0
      %v4986 = vpop.f32.mrf.mxu0
      %v4987 = vadd.f32 0.0, %v4986
      %v4988 = vpop.f32.mrf.mxu0
      %4989 = vmatprep.mubr.bf16.mxu0 0
      %4990 = vmatmul.mubr.bf16.gmra.mxu0 %v4867
      %v4991 = vpop.f32.mrf.mxu0
      %v4992 = vadd.f32 0.0, %v4991
      %v4993 = vpop.f32.mrf.mxu0
      %v4994 = vpop.f32.mrf.mxu0
      %v4995 = vadd.f32 0.0, %v4994
      %v4996 = vpop.f32.mrf.mxu0
      %4997 = vmatprep.mubr.bf16.mxu0 0
      %4998 = vmatmul.mubr.bf16.gmra.mxu0 %v4870
      %v4999 = vpop.f32.mrf.mxu0
      %v5000 = vadd.f32 0.0, %v4999
      %v5001 = vpop.f32.mrf.mxu0
      %v5002 = vpop.f32.mrf.mxu0
      %v5003 = vadd.f32 0.0, %v5002
      %v5004 = vpop.f32.mrf.mxu0
      %5005 = vmatprep.mubr.bf16.mxu0 0
      %5006 = vmatmul.mubr.bf16.gmra.mxu0 %v4873
      %v5007 = vpop.f32.mrf.mxu0
      %v5008 = vadd.f32 0.0, %v5007
      %v5009 = vpop.f32.mrf.mxu0
      %v5010 = vpop.f32.mrf.mxu0
      %v5011 = vadd.f32 0.0, %v5010
      %v5012 = vpop.f32.mrf.mxu0
      %5013 = vmatprep.mubr.bf16.mxu0 0
      %5014 = vmatmul.mubr.bf16.gmra.mxu0 %v4876
      %v5015 = vpop.f32.mrf.mxu0
      %v5016 = vadd.f32 0.0, %v5015
      %v5017 = vpop.f32.mrf.mxu0
      %v5018 = vpop.f32.mrf.mxu0
      %v5019 = vadd.f32 0.0, %v5018
      %v5020 = vpop.f32.mrf.mxu0
      %5021 = vmatprep.mubr.bf16.mxu0 0
      %5022 = vmatmul.mubr.bf16.gmra.mxu0 %v4879
      %v5023 = vpop.f32.mrf.mxu0
      %v5024 = vadd.f32 0.0, %v5023
      %v5025 = vpop.f32.mrf.mxu0
      %v5026 = vpop.f32.mrf.mxu0
      %v5027 = vadd.f32 0.0, %v5026
      %v5028 = vpop.f32.mrf.mxu0
      %5029 = vmatprep.mubr.bf16.mxu0 0
      %5030 = vmatmul.mubr.bf16.gmra.mxu0 %v4882
      %v5031 = vpop.f32.mrf.mxu0
      %v5032 = vadd.f32 0.0, %v5031
      %v5033 = vpop.f32.mrf.mxu0
      %v5034 = vpop.f32.mrf.mxu0
      %v5035 = vadd.f32 0.0, %v5034
      %v5036 = vpop.f32.mrf.mxu0
      %5037 = vmatprep.mubr.bf16.mxu0 0
      %5038 = vmatmul.mubr.bf16.gmra.mxu0 %v4885
      %v5039 = vpop.f32.mrf.mxu0
      %v5040 = vadd.f32 0.0, %v5039
      %v5041 = vpop.f32.mrf.mxu0
      %v5042 = vpop.f32.mrf.mxu0
      %v5043 = vadd.f32 0.0, %v5042
      %v5044 = vpop.f32.mrf.mxu0
      %5045 = vmatprep.mubr.bf16.mxu0 0
      %5046 = vmatmul.mubr.bf16.gmra.mxu0 %v4888
      %v5047 = vpop.f32.mrf.mxu0
      %v5048 = vadd.f32 0.0, %v5047
      %v5049 = vpop.f32.mrf.mxu0
      %v5050 = vpop.f32.mrf.mxu0
      %v5051 = vadd.f32 0.0, %v5050
      %v5052 = vpop.f32.mrf.mxu0
      %5053 = vmatprep.mubr.bf16.mxu0 0
      %5054 = vmatmul.mubr.bf16.gmra.mxu0 %v4891
      %v5055 = vpop.f32.mrf.mxu0
      %v5056 = vadd.f32 0.0, %v5055
      %v5057 = vpop.f32.mrf.mxu0
      %v5058 = vpop.f32.mrf.mxu0
      %v5059 = vadd.f32 0.0, %v5058
      %v5060 = vpop.f32.mrf.mxu0
      %5061 = vmatprep.mubr.bf16.mxu0 0
      %5062 = vmatmul.mubr.bf16.gmra.mxu0 %v4894
      %v5063 = vpop.f32.mrf.mxu0
      %v5064 = vadd.f32 0.0, %v5063
      %v5065 = vpop.f32.mrf.mxu0
      %v5066 = vpop.f32.mrf.mxu0
      %v5067 = vadd.f32 0.0, %v5066
      %v5068 = vpop.f32.mrf.mxu0
      %5069 = vmatprep.mubr.bf16.mxu0 0
      %5070 = vmatmul.mubr.bf16.gmra.mxu0 %v4897
      %v5071 = vpop.f32.mrf.mxu0
      %v5072 = vadd.f32 0.0, %v5071
      %v5073 = vpop.f32.mrf.mxu0
      %v5074 = vpop.f32.mrf.mxu0
      %v5075 = vadd.f32 0.0, %v5074
      %v5076 = vpop.f32.mrf.mxu0
      %5077 = vmatprep.mubr.bf16.mxu0 0
      %5078 = vmatmul.mubr.bf16.gmra.mxu0 %v4900
      %v5079 = vpop.f32.mrf.mxu0
      %v5080 = vadd.f32 0.0, %v5079
      %v5081 = vpop.f32.mrf.mxu0
      %v5082 = vpop.f32.mrf.mxu0
      %v5083 = vadd.f32 0.0, %v5082
      %v5084 = vpop.f32.mrf.mxu0
      %5085 = vmatprep.mubr.bf16.mxu0 0
      %5086 = vmatmul.mubr.bf16.gmra.mxu0 %v4903
      %v5087 = vpop.f32.mrf.mxu0
      %v5088 = vadd.f32 0.0, %v5087
      %v5089 = vpop.f32.mrf.mxu0
      %v5090 = vpop.f32.mrf.mxu0
      %v5091 = vadd.f32 0.0, %v5090
      %v5092 = vpop.f32.mrf.mxu0
      %5093 = vmatprep.mubr.bf16.mxu0 0
      %5094 = vmatmul.mubr.bf16.gmra.mxu0 %v4906
      %v5095 = vpop.f32.mrf.mxu0
      %v5096 = vadd.f32 0.0, %v5095
      %v5097 = vpop.f32.mrf.mxu0
      %v5098 = vpop.f32.mrf.mxu0
      %v5099 = vadd.f32 0.0, %v5098
      %v5100 = vpop.f32.mrf.mxu0
      %5101 = vmatprep.mubr.bf16.mxu0 0
      %5102 = vmatmul.mubr.bf16.gmra.mxu0 %v4909
      %v5103 = vpop.f32.mrf.mxu0
      %v5104 = vadd.f32 0.0, %v5103
      %v5105 = vpop.f32.mrf.mxu0
      %v5106 = vpop.f32.mrf.mxu0
      %v5107 = vadd.f32 0.0, %v5106
      %v5108 = vpop.f32.mrf.mxu0
      %5109 = vmatprep.mubr.bf16.mxu0 0
      %5110 = vmatmul.mubr.bf16.gmra.mxu0 %v4912
      %v5111 = vpop.f32.mrf.mxu0
      %v5112 = vadd.f32 0.0, %v5111
      %v5113 = vpop.f32.mrf.mxu0
      %v5114 = vpop.f32.mrf.mxu0
      %v5115 = vadd.f32 0.0, %v5114
      %v5116 = vpop.f32.mrf.mxu0
      %5117 = vmatprep.mubr.bf16.mxu0 0
      %5118 = vmatmul.mubr.bf16.gmra.mxu0 %v4915
      %v5119 = vpop.f32.mrf.mxu0
      %v5120 = vadd.f32 0.0, %v5119
      %v5121 = vpop.f32.mrf.mxu0
      %v5122 = vpop.f32.mrf.mxu0
      %v5123 = vadd.f32 0.0, %v5122
      %v5124 = vpop.f32.mrf.mxu0
      %5125 = vmatprep.mubr.bf16.mxu0 0
      %5126 = vmatmul.mubr.bf16.gmra.mxu0 %v4918
      %v5127 = vpop.f32.mrf.mxu0
      %v5128 = vadd.f32 0.0, %v5127
      %v5129 = vpop.f32.mrf.mxu0
      %v5130 = vpop.f32.mrf.mxu0
      %v5131 = vadd.f32 0.0, %v5130
      %v5132 = vpop.f32.mrf.mxu0
      %5133 = vmatprep.mubr.bf16.mxu0 0
      %5134 = vmatmul.mubr.bf16.gmra.mxu0 %v4921
      %v5135 = vpop.f32.mrf.mxu0
      %v5136 = vadd.f32 0.0, %v5135
      %v5137 = vpop.f32.mrf.mxu0
      %v5138 = vpop.f32.mrf.mxu0
      %v5139 = vadd.f32 0.0, %v5138
      %v5140 = vpop.f32.mrf.mxu0
      %5141 = vmatprep.mubr.bf16.mxu0 0
      %5142 = vmatmul.mubr.bf16.gmra.mxu0 %v4924
      %v5143 = vpop.f32.mrf.mxu0
      %v5144 = vadd.f32 0.0, %v5143
      %v5145 = vpop.f32.mrf.mxu0
      %v5146 = vpop.f32.mrf.mxu0
      %v5147 = vadd.f32 0.0, %v5146
      %v5148 = vpop.f32.mrf.mxu0
      %5149 = vmatprep.mubr.bf16.mxu0 0
      %5150 = vmatmul.mubr.bf16.gmra.mxu0 %v4927
      %v5151 = vpop.f32.mrf.mxu0
      %v5152 = vadd.f32 0.0, %v5151
      %v5153 = vpop.f32.mrf.mxu0
      %v5154 = vpop.f32.mrf.mxu0
      %v5155 = vadd.f32 0.0, %v5154
      %v5156 = vpop.f32.mrf.mxu0
      %5157 = vmatprep.mubr.bf16.mxu0 0
      %5158 = vmatmul.mubr.bf16.gmra.mxu0 %v4930
      %v5159 = vpop.f32.mrf.mxu0
      %v5160 = vadd.f32 0.0, %v5159
      %v5161 = vpop.f32.mrf.mxu0
      %v5162 = vpop.f32.mrf.mxu0
      %v5163 = vadd.f32 0.0, %v5162
      %v5164 = vpop.f32.mrf.mxu0
      %5165 = vmatprep.mubr.bf16.mxu0 0
      %5166 = vmatmul.mubr.bf16.gmra.mxu0 %v4933
      %v5167 = vpop.f32.mrf.mxu0
      %v5168 = vadd.f32 0.0, %v5167
      %v5169 = vpop.f32.mrf.mxu0
      %v5170 = vpop.f32.mrf.mxu0
      %v5171 = vadd.f32 0.0, %v5170
      %v5172 = vpop.f32.mrf.mxu0
      %5173 = vmatprep.mubr.bf16.mxu0 0
      %5174 = vmatmul.mubr.bf16.gmra.mxu0 %v4936
      %v5175 = vpop.f32.mrf.mxu0
      %v5176 = vadd.f32 0.0, %v5175
      %v5177 = vpop.f32.mrf.mxu0
      %v5178 = vpop.f32.mrf.mxu0
      %v5179 = vpop.f32.mrf.mxu0
      %5180 = vdwg.mxu0
      %v5181 = vadd.f32 %v4596, %v4976
      %v5182 = vadd.f32 %v4597, %v4979
      %v5183 = vadd.f32 %v4598, %v4984
      %v5184 = vadd.f32 %v4599, %v4987
      %v5185 = vadd.f32 %v4600, %v4992
      %v5186 = vadd.f32 %v4601, %v4995
      %v5187 = vadd.f32 %v4602, %v5000
      %v5188 = vadd.f32 %v4603, %v5003
      %v5189 = vadd.f32 %v4604, %v5008
      %v5190 = vadd.f32 %v4605, %v5011
      %v5191 = vadd.f32 %v4606, %v5016
      %v5192 = vadd.f32 %v4607, %v5019
      %v5193 = vadd.f32 %v4608, %v5024
      %v5194 = vadd.f32 %v4609, %v5027
      %v5195 = vadd.f32 %v4610, %v5032
      %v5196 = vadd.f32 %v4611, %v5035
      %v5197 = vadd.f32 %v4612, %v5040
      %v5198 = vadd.f32 %v4613, %v5043
      %v5199 = vadd.f32 %v4614, %v5048
      %v5200 = vadd.f32 %v4615, %v5051
      %v5201 = vadd.f32 %v4616, %v5056
      %v5202 = vadd.f32 %v4617, %v5059
      %v5203 = vadd.f32 %v4618, %v5064
      %v5204 = vadd.f32 %v4619, %v5067
      %v5205 = vadd.f32 %v4620, %v5072
      %v5206 = vadd.f32 %v4621, %v5075
      %v5207 = vadd.f32 %v4622, %v5080
      %v5208 = vadd.f32 %v4623, %v5083
      %v5209 = vadd.f32 %v4624, %v5088
      %v5210 = vadd.f32 %v4625, %v5091
      %v5211 = vadd.f32 %v4626, %v5096
      %v5212 = vadd.f32 %v4627, %v5099
      %v5213 = vadd.f32 %v4628, %v5104
      %v5214 = vadd.f32 %v4629, %v5107
      %v5215 = vadd.f32 %v4630, %v5112
      %v5216 = vadd.f32 %v4631, %v5115
      %v5217 = vadd.f32 %v4632, %v5120
      %v5218 = vadd.f32 %v4633, %v5123
      %v5219 = vadd.f32 %v4634, %v5128
      %v5220 = vadd.f32 %v4635, %v5131
      %v5221 = vadd.f32 %v4636, %v5136
      %v5222 = vadd.f32 %v4637, %v5139
      %v5223 = vadd.f32 %v4638, %v5144
      %v5224 = vadd.f32 %v4639, %v5147
      %v5225 = vadd.f32 %v4640, %v5152
      %v5226 = vadd.f32 %v4641, %v5155
      %v5227 = vadd.f32 %v4642, %v5160
      %v5228 = vadd.f32 %v4643, %v5163
      %v5229 = vadd.f32 %v4644, %v5168
      %v5230 = vadd.f32 %v4645, %v5171
      %v5231 = vadd.f32 %v4646, %v5176
      %v5233 = vshrl.u32 %v4651, 16
      %v5235 = vrot.slane %v5233, 4
      %v5236 = vshll.u32 %v4651, 16
      %v5238 = vrot.slane %v5236, 5
      %v5239 = vor.u32 %v5235, %v5238
      %v5240 = vrot.slane %v5239, 4
      %v5242 = vshll.u32 %v4652, 16
      %v5244 = vrot.slane %v5242, 5
      %v5245 = vsel %vm272, %v5240, %v5244
      %v5246 = vshrl.u32 %v4652, 16
      %v5248 = vrot.slane %v5246, 4
      %v5249 = vor.u32 %v5248, %v5244
      %v5250 = vrot.slane %v5249, 4
      %v5252 = vshll.u32 %v4653, 16
      %v5254 = vrot.slane %v5252, 5
      %v5255 = vsel %vm272, %v5250, %v5254
      %v5256 = vshrl.u32 %v4653, 16
      %v5258 = vrot.slane %v5256, 4
      %v5259 = vor.u32 %v5258, %v5254
      %v5260 = vrot.slane %v5259, 4
      %v5262 = vshll.u32 %v4654, 16
      %v5264 = vrot.slane %v5262, 5
      %v5265 = vsel %vm272, %v5260, %v5264
      %v5267 = vshrl.u32 %v4655, 16
      %v5269 = vrot.slane %v5267, 4
      %v5270 = vshll.u32 %v4655, 16
      %v5272 = vrot.slane %v5270, 5
      %v5273 = vor.u32 %v5269, %v5272
      %v5274 = vrot.slane %v5273, 4
      %v5276 = vshll.u32 %v4656, 16
      %v5278 = vrot.slane %v5276, 5
      %v5279 = vsel %vm272, %v5274, %v5278
      %v5280 = vshrl.u32 %v4656, 16
      %v5282 = vrot.slane %v5280, 4
      %v5283 = vor.u32 %v5282, %v5278
      %v5284 = vrot.slane %v5283, 4
      %v5286 = vshll.u32 %v4657, 16
      %v5288 = vrot.slane %v5286, 5
      %v5289 = vsel %vm272, %v5284, %v5288
      %v5290 = vshrl.u32 %v4657, 16
      %v5292 = vrot.slane %v5290, 4
      %v5293 = vor.u32 %v5292, %v5288
      %v5294 = vrot.slane %v5293, 4
      %v5296 = vshll.u32 %v4658, 16
      %v5298 = vrot.slane %v5296, 5
      %v5299 = vsel %vm272, %v5294, %v5298
      %v5301 = vshrl.u32 %v4659, 16
      %v5303 = vrot.slane %v5301, 4
      %v5304 = vshll.u32 %v4659, 16
      %v5306 = vrot.slane %v5304, 5
      %v5307 = vor.u32 %v5303, %v5306
      %v5308 = vrot.slane %v5307, 4
      %v5310 = vshll.u32 %v4660, 16
      %v5312 = vrot.slane %v5310, 5
      %v5313 = vsel %vm272, %v5308, %v5312
      %v5314 = vshrl.u32 %v4660, 16
      %v5316 = vrot.slane %v5314, 4
      %v5317 = vor.u32 %v5316, %v5312
      %v5318 = vrot.slane %v5317, 4
      %v5320 = vshll.u32 %v4661, 16
      %v5322 = vrot.slane %v5320, 5
      %v5323 = vsel %vm272, %v5318, %v5322
      %v5324 = vshrl.u32 %v4661, 16
      %v5326 = vrot.slane %v5324, 4
      %v5327 = vor.u32 %v5326, %v5322
      %v5328 = vrot.slane %v5327, 4
      %v5330 = vshll.u32 %v4662, 16
      %v5332 = vrot.slane %v5330, 5
      %v5333 = vsel %vm272, %v5328, %v5332
      %v5335 = vshrl.u32 %v4663, 16
      %v5337 = vrot.slane %v5335, 4
      %v5338 = vshll.u32 %v4663, 16
      %v5340 = vrot.slane %v5338, 5
      %v5341 = vor.u32 %v5337, %v5340
      %v5342 = vrot.slane %v5341, 4
      %v5344 = vshll.u32 %v4664, 16
      %v5346 = vrot.slane %v5344, 5
      %v5347 = vsel %vm272, %v5342, %v5346
      %v5348 = vshrl.u32 %v4664, 16
      %v5350 = vrot.slane %v5348, 4
      %v5351 = vor.u32 %v5350, %v5346
      %v5352 = vrot.slane %v5351, 4
      %v5354 = vshll.u32 %v4665, 16
      %v5356 = vrot.slane %v5354, 5
      %v5357 = vsel %vm272, %v5352, %v5356
      %v5358 = vshrl.u32 %v4665, 16
      %v5360 = vrot.slane %v5358, 4
      %v5361 = vor.u32 %v5360, %v5356
      %v5362 = vrot.slane %v5361, 4
      %v5364 = vshll.u32 %v4666, 16
      %v5366 = vrot.slane %v5364, 5
      %v5367 = vsel %vm272, %v5362, %v5366
      %v5369 = vshrl.u32 %v4667, 16
      %v5371 = vrot.slane %v5369, 4
      %v5372 = vshll.u32 %v4667, 16
      %v5374 = vrot.slane %v5372, 5
      %v5375 = vor.u32 %v5371, %v5374
      %v5376 = vrot.slane %v5375, 4
      %v5378 = vshll.u32 %v4668, 16
      %v5380 = vrot.slane %v5378, 5
      %v5381 = vsel %vm272, %v5376, %v5380
      %v5382 = vshrl.u32 %v4668, 16
      %v5384 = vrot.slane %v5382, 4
      %v5385 = vor.u32 %v5384, %v5380
      %v5386 = vrot.slane %v5385, 4
      %v5388 = vshll.u32 %v4669, 16
      %v5390 = vrot.slane %v5388, 5
      %v5391 = vsel %vm272, %v5386, %v5390
      %v5392 = vshrl.u32 %v4669, 16
      %v5394 = vrot.slane %v5392, 4
      %v5395 = vor.u32 %v5394, %v5390
      %v5396 = vrot.slane %v5395, 4
      %v5398 = vshll.u32 %v4670, 16
      %v5400 = vrot.slane %v5398, 5
      %v5401 = vsel %vm272, %v5396, %v5400
      %v5403 = vshrl.u32 %v4671, 16
      %v5405 = vrot.slane %v5403, 4
      %v5406 = vshll.u32 %v4671, 16
      %v5408 = vrot.slane %v5406, 5
      %v5409 = vor.u32 %v5405, %v5408
      %v5410 = vrot.slane %v5409, 4
      %v5412 = vshll.u32 %v4672, 16
      %v5414 = vrot.slane %v5412, 5
      %v5415 = vsel %vm272, %v5410, %v5414
      %v5416 = vshrl.u32 %v4672, 16
      %v5418 = vrot.slane %v5416, 4
      %v5419 = vor.u32 %v5418, %v5414
      %v5420 = vrot.slane %v5419, 4
      %v5422 = vshll.u32 %v4673, 16
      %v5424 = vrot.slane %v5422, 5
      %v5425 = vsel %vm272, %v5420, %v5424
      %v5426 = vshrl.u32 %v4673, 16
      %v5428 = vrot.slane %v5426, 4
      %v5429 = vor.u32 %v5428, %v5424
      %v5430 = vrot.slane %v5429, 4
      %v5432 = vshll.u32 %v4674, 16
      %v5434 = vrot.slane %v5432, 5
      %v5435 = vsel %vm272, %v5430, %v5434
      %v5437 = vshrl.u32 %v4675, 16
      %v5439 = vrot.slane %v5437, 4
      %v5440 = vshll.u32 %v4675, 16
      %v5442 = vrot.slane %v5440, 5
      %v5443 = vor.u32 %v5439, %v5442
      %v5444 = vrot.slane %v5443, 4
      %v5446 = vshll.u32 %v4676, 16
      %v5448 = vrot.slane %v5446, 5
      %v5449 = vsel %vm272, %v5444, %v5448
      %v5450 = vshrl.u32 %v4676, 16
      %v5452 = vrot.slane %v5450, 4
      %v5453 = vor.u32 %v5452, %v5448
      %v5454 = vrot.slane %v5453, 4
      %v5456 = vshll.u32 %v4677, 16
      %v5458 = vrot.slane %v5456, 5
      %v5459 = vsel %vm272, %v5454, %v5458
      %v5460 = vshrl.u32 %v4677, 16
      %v5462 = vrot.slane %v5460, 4
      %v5463 = vor.u32 %v5462, %v5458
      %v5464 = vrot.slane %v5463, 4
      %v5466 = vshll.u32 %v4678, 16
      %v5468 = vrot.slane %v5466, 5
      %v5469 = vsel %vm272, %v5464, %v5468
      %v5471 = vshrl.u32 %v4679, 16
      %v5473 = vrot.slane %v5471, 4
      %v5474 = vshll.u32 %v4679, 16
      %v5476 = vrot.slane %v5474, 5
      %v5477 = vor.u32 %v5473, %v5476
      %v5478 = vrot.slane %v5477, 4
      %v5480 = vshll.u32 %v4680, 16
      %v5482 = vrot.slane %v5480, 5
      %v5483 = vsel %vm272, %v5478, %v5482
      %v5484 = vshrl.u32 %v4680, 16
      %v5486 = vrot.slane %v5484, 4
      %v5487 = vor.u32 %v5486, %v5482
      %v5488 = vrot.slane %v5487, 4
      %v5490 = vshll.u32 %v4681, 16
      %v5492 = vrot.slane %v5490, 5
      %v5493 = vsel %vm272, %v5488, %v5492
      %v5494 = vshrl.u32 %v4681, 16
      %v5496 = vrot.slane %v5494, 4
      %v5497 = vor.u32 %v5496, %v5492
      %v5498 = vrot.slane %v5497, 4
      %v5500 = vshll.u32 %v4682, 16
      %v5502 = vrot.slane %v5500, 5
      %v5503 = vsel %vm272, %v5498, %v5502
      %v5505 = vshrl.u32 %v4683, 16
      %v5507 = vrot.slane %v5505, 4
      %v5508 = vshll.u32 %v4683, 16
      %v5510 = vrot.slane %v5508, 5
      %v5511 = vor.u32 %v5507, %v5510
      %v5512 = vrot.slane %v5511, 4
      %v5514 = vshll.u32 %v4684, 16
      %v5516 = vrot.slane %v5514, 5
      %v5517 = vsel %vm272, %v5512, %v5516
      %v5518 = vshrl.u32 %v4684, 16
      %v5520 = vrot.slane %v5518, 4
      %v5521 = vor.u32 %v5520, %v5516
      %v5522 = vrot.slane %v5521, 4
      %v5524 = vshll.u32 %v4685, 16
      %v5526 = vrot.slane %v5524, 5
      %v5527 = vsel %vm272, %v5522, %v5526
      %v5528 = vshrl.u32 %v4685, 16
      %v5530 = vrot.slane %v5528, 4
      %v5531 = vor.u32 %v5530, %v5526
      %v5532 = vrot.slane %v5531, 4
      %v5534 = vshll.u32 %v4686, 16
      %v5536 = vrot.slane %v5534, 5
      %v5537 = vsel %vm272, %v5532, %v5536
      %v5539 = vshrl.u32 %v4687, 16
      %v5541 = vrot.slane %v5539, 4
      %v5542 = vshll.u32 %v4687, 16
      %v5544 = vrot.slane %v5542, 5
      %v5545 = vor.u32 %v5541, %v5544
      %v5546 = vrot.slane %v5545, 4
      %v5548 = vshll.u32 %v4688, 16
      %v5550 = vrot.slane %v5548, 5
      %v5551 = vsel %vm272, %v5546, %v5550
      %v5552 = vshrl.u32 %v4688, 16
      %v5554 = vrot.slane %v5552, 4
      %v5555 = vor.u32 %v5554, %v5550
      %v5556 = vrot.slane %v5555, 4
      %v5558 = vshll.u32 %v4689, 16
      %v5560 = vrot.slane %v5558, 5
      %v5561 = vsel %vm272, %v5556, %v5560
      %v5562 = vshrl.u32 %v4689, 16
      %v5564 = vrot.slane %v5562, 4
      %v5565 = vor.u32 %v5564, %v5560
      %v5566 = vrot.slane %v5565, 4
      %v5568 = vshll.u32 %v4690, 16
      %v5570 = vrot.slane %v5568, 5
      %v5571 = vsel %vm272, %v5566, %v5570
      %v5573 = vshrl.u32 %v4691, 16
      %v5575 = vrot.slane %v5573, 4
      %v5576 = vshll.u32 %v4691, 16
      %v5578 = vrot.slane %v5576, 5
      %v5579 = vor.u32 %v5575, %v5578
      %v5580 = vrot.slane %v5579, 4
      %v5582 = vshll.u32 %v4692, 16
      %v5584 = vrot.slane %v5582, 5
      %v5585 = vsel %vm272, %v5580, %v5584
      %v5586 = vshrl.u32 %v4692, 16
      %v5588 = vrot.slane %v5586, 4
      %v5589 = vor.u32 %v5588, %v5584
      %v5590 = vrot.slane %v5589, 4
      %v5592 = vshll.u32 %v4693, 16
      %v5594 = vrot.slane %v5592, 5
      %v5595 = vsel %vm272, %v5590, %v5594
      %v5596 = vshrl.u32 %v4693, 16
      %v5598 = vrot.slane %v5596, 4
      %v5599 = vor.u32 %v5598, %v5594
      %v5600 = vrot.slane %v5599, 4
      %v5602 = vshll.u32 %v4694, 16
      %v5604 = vrot.slane %v5602, 5
      %v5605 = vsel %vm272, %v5600, %v5604
      %v5607 = vshrl.u32 %v4695, 16
      %v5609 = vrot.slane %v5607, 4
      %v5610 = vshll.u32 %v4695, 16
      %v5612 = vrot.slane %v5610, 5
      %v5613 = vor.u32 %v5609, %v5612
      %v5614 = vrot.slane %v5613, 4
      %v5616 = vshll.u32 %v4696, 16
      %v5618 = vrot.slane %v5616, 5
      %v5619 = vsel %vm272, %v5614, %v5618
      %v5620 = vshrl.u32 %v4696, 16
      %v5622 = vrot.slane %v5620, 4
      %v5623 = vor.u32 %v5622, %v5618
      %v5624 = vrot.slane %v5623, 4
      %v5626 = vshll.u32 %v4697, 16
      %v5628 = vrot.slane %v5626, 5
      %v5629 = vsel %vm272, %v5624, %v5628
      %v5630 = vshrl.u32 %v4697, 16
      %v5632 = vrot.slane %v5630, 4
      %v5633 = vor.u32 %v5632, %v5628
      %v5634 = vrot.slane %v5633, 4
      %v5636 = vshll.u32 %v4698, 16
      %v5638 = vrot.slane %v5636, 5
      %v5639 = vsel %vm272, %v5634, %v5638
      %v5641 = vshrl.u32 %v4699, 16
      %v5643 = vrot.slane %v5641, 4
      %v5644 = vshll.u32 %v4699, 16
      %v5646 = vrot.slane %v5644, 5
      %v5647 = vor.u32 %v5643, %v5646
      %v5648 = vrot.slane %v5647, 4
      %v5650 = vshll.u32 %v4700, 16
      %v5652 = vrot.slane %v5650, 5
      %v5653 = vsel %vm272, %v5648, %v5652
      %v5654 = vshrl.u32 %v4700, 16
      %v5656 = vrot.slane %v5654, 4
      %v5657 = vor.u32 %v5656, %v5652
      %v5658 = vrot.slane %v5657, 4
      %v5660 = vshll.u32 %v4701, 16
      %v5662 = vrot.slane %v5660, 5
      %v5663 = vsel %vm272, %v5658, %v5662
      %v5664 = vshrl.u32 %v4701, 16
      %v5666 = vrot.slane %v5664, 4
      %v5667 = vor.u32 %v5666, %v5662
      %v5668 = vrot.slane %v5667, 4
      %v5670 = vshll.u32 %v4702, 16
      %v5672 = vrot.slane %v5670, 5
      %v5673 = vsel %vm272, %v5668, %v5672
      %v5675 = vshrl.u32 %v4703, 16
      %v5677 = vrot.slane %v5675, 4
      %v5678 = vshll.u32 %v4703, 16
      %v5680 = vrot.slane %v5678, 5
      %v5681 = vor.u32 %v5677, %v5680
      %v5682 = vrot.slane %v5681, 4
      %v5684 = vshll.u32 %v4704, 16
      %v5686 = vrot.slane %v5684, 5
      %v5687 = vsel %vm272, %v5682, %v5686
      %v5688 = vshrl.u32 %v4704, 16
      %v5690 = vrot.slane %v5688, 4
      %v5691 = vor.u32 %v5690, %v5686
      %v5692 = vrot.slane %v5691, 4
      %v5694 = vshll.u32 %v4705, 16
      %v5696 = vrot.slane %v5694, 5
      %v5697 = vsel %vm272, %v5692, %v5696
      %v5698 = vshrl.u32 %v4705, 16
      %v5700 = vrot.slane %v5698, 4
      %v5701 = vor.u32 %v5700, %v5696
      %v5702 = vrot.slane %v5701, 4
      %v5704 = vshll.u32 %v4706, 16
      %v5706 = vrot.slane %v5704, 5
      %v5707 = vsel %vm272, %v5702, %v5706
      %v5709 = vshrl.u32 %v4707, 16
      %v5711 = vrot.slane %v5709, 4
      %v5712 = vshll.u32 %v4707, 16
      %v5714 = vrot.slane %v5712, 5
      %v5715 = vor.u32 %v5711, %v5714
      %v5716 = vrot.slane %v5715, 4
      %v5718 = vshll.u32 %v4708, 16
      %v5720 = vrot.slane %v5718, 5
      %v5721 = vsel %vm272, %v5716, %v5720
      %v5722 = vshrl.u32 %v4708, 16
      %v5724 = vrot.slane %v5722, 4
      %v5725 = vor.u32 %v5724, %v5720
      %v5726 = vrot.slane %v5725, 4
      %v5728 = vshll.u32 %v4709, 16
      %v5730 = vrot.slane %v5728, 5
      %v5731 = vsel %vm272, %v5726, %v5730
      %v5732 = vshrl.u32 %v4709, 16
      %v5734 = vrot.slane %v5732, 4
      %v5735 = vor.u32 %v5734, %v5730
      %v5736 = vrot.slane %v5735, 4
      %v5738 = vshll.u32 %v4710, 16
      %v5740 = vrot.slane %v5738, 5
      %v5741 = vsel %vm272, %v5736, %v5740
      %v5743 = vshrl.u32 %v4711, 16
      %v5745 = vrot.slane %v5743, 4
      %v5746 = vshll.u32 %v4711, 16
      %v5748 = vrot.slane %v5746, 5
      %v5749 = vor.u32 %v5745, %v5748
      %v5750 = vrot.slane %v5749, 4
      %v5752 = vshll.u32 %v4712, 16
      %v5754 = vrot.slane %v5752, 5
      %v5755 = vsel %vm272, %v5750, %v5754
      %v5756 = vshrl.u32 %v4712, 16
      %v5758 = vrot.slane %v5756, 4
      %v5759 = vor.u32 %v5758, %v5754
      %v5760 = vrot.slane %v5759, 4
      %v5762 = vshll.u32 %v4713, 16
      %v5764 = vrot.slane %v5762, 5
      %v5765 = vsel %vm272, %v5760, %v5764
      %v5766 = vshrl.u32 %v4713, 16
      %v5768 = vrot.slane %v5766, 4
      %v5769 = vor.u32 %v5768, %v5764
      %v5770 = vrot.slane %v5769, 4
      %v5772 = vshll.u32 %v4714, 16
      %v5774 = vrot.slane %v5772, 5
      %v5775 = vsel %vm272, %v5770, %v5774
      %v5777 = vshrl.u32 %v4715, 16
      %v5779 = vrot.slane %v5777, 4
      %v5780 = vshll.u32 %v4715, 16
      %v5782 = vrot.slane %v5780, 5
      %v5783 = vor.u32 %v5779, %v5782
      %v5784 = vrot.slane %v5783, 4
      %v5786 = vshll.u32 %v4716, 16
      %v5788 = vrot.slane %v5786, 5
      %v5789 = vsel %vm272, %v5784, %v5788
      %v5790 = vshrl.u32 %v4716, 16
      %v5792 = vrot.slane %v5790, 4
      %v5793 = vor.u32 %v5792, %v5788
      %v5794 = vrot.slane %v5793, 4
      %v5796 = vshll.u32 %v4717, 16
      %v5798 = vrot.slane %v5796, 5
      %v5799 = vsel %vm272, %v5794, %v5798
      %v5800 = vshrl.u32 %v4717, 16
      %v5802 = vrot.slane %v5800, 4
      %v5803 = vor.u32 %v5802, %v5798
      %v5804 = vrot.slane %v5803, 4
      %v5806 = vshll.u32 %v4718, 16
      %v5808 = vrot.slane %v5806, 5
      %v5809 = vsel %vm272, %v5804, %v5808
      %s5810 = scalar_lea.vmem %s1, 84
      %v5811 = vld [vmem:[%s5810] sm:$0xf]
      %v5812 = vld [vmem:[%s5810 + $0x4] sm:$0xf]
      %v5813 = vld [vmem:[%s5810 + $0x8] sm:$0x3]
      %v5814 = vunpack.c.l.b16 %v5245
      %v5815 = vunpack.c.l.b16 %v5255
      %v5816 = vunpack.c.l.b16 %v5265
      %v5817 = vunpack.c.l.b16 %v5279
      %v5818 = vunpack.c.l.b16 %v5289
      %v5819 = vunpack.c.l.b16 %v5299
      %v5820 = vunpack.c.l.b16 %v5313
      %v5821 = vunpack.c.l.b16 %v5323
      %v5822 = vunpack.c.l.b16 %v5333
      %v5823 = vunpack.c.l.b16 %v5347
      %v5824 = vunpack.c.l.b16 %v5357
      %v5825 = vunpack.c.l.b16 %v5367
      %v5826 = vunpack.c.l.b16 %v5381
      %v5827 = vunpack.c.l.b16 %v5391
      %v5828 = vunpack.c.l.b16 %v5401
      %v5829 = vunpack.c.l.b16 %v5415
      %v5830 = vunpack.c.l.b16 %v5425
      %v5831 = vunpack.c.l.b16 %v5435
      %v5832 = vunpack.c.l.b16 %v5449
      %v5833 = vunpack.c.l.b16 %v5459
      %v5834 = vunpack.c.l.b16 %v5469
      %v5835 = vunpack.c.l.b16 %v5483
      %v5836 = vunpack.c.l.b16 %v5493
      %v5837 = vunpack.c.l.b16 %v5503
      %v5838 = vunpack.c.l.b16 %v5517
      %v5839 = vunpack.c.l.b16 %v5527
      %v5840 = vunpack.c.l.b16 %v5537
      %v5841 = vunpack.c.l.b16 %v5551
      %v5842 = vunpack.c.l.b16 %v5561
      %v5843 = vunpack.c.l.b16 %v5571
      %v5844 = vunpack.c.l.b16 %v5585
      %v5845 = vunpack.c.l.b16 %v5595
      %v5846 = vunpack.c.l.b16 %v5605
      %v5847 = vunpack.c.l.b16 %v5619
      %v5848 = vunpack.c.l.b16 %v5629
      %v5849 = vunpack.c.l.b16 %v5639
      %v5850 = vunpack.c.l.b16 %v5653
      %v5851 = vunpack.c.l.b16 %v5663
      %v5852 = vunpack.c.l.b16 %v5673
      %v5853 = vunpack.c.l.b16 %v5687
      %v5854 = vunpack.c.l.b16 %v5697
      %v5855 = vunpack.c.l.b16 %v5707
      %v5856 = vunpack.c.l.b16 %v5721
      %v5857 = vunpack.c.l.b16 %v5731
      %v5858 = vunpack.c.l.b16 %v5741
      %v5859 = vunpack.c.l.b16 %v5755
      %v5860 = vunpack.c.l.b16 %v5765
      %v5861 = vunpack.c.l.b16 %v5775
      %v5862 = vunpack.c.l.b16 %v5789
      %v5863 = vunpack.c.l.b16 %v5799
      %v5864 = vunpack.c.l.b16 %v5809
      %v5865 = vpack.c.b16 %v5815, %v5814
      %v5866 = vpack.c.b16 %v5817, %v5816
      %v5867 = vpack.c.b16 %v5819, %v5818
      %v5868 = vpack.c.b16 %v5821, %v5820
      %v5869 = vpack.c.b16 %v5823, %v5822
      %v5870 = vpack.c.b16 %v5825, %v5824
      %v5871 = vpack.c.b16 %v5827, %v5826
      %v5872 = vpack.c.b16 %v5829, %v5828
      %v5873 = vpack.c.b16 %v5831, %v5830
      %v5874 = vpack.c.b16 %v5833, %v5832
      %v5875 = vpack.c.b16 %v5835, %v5834
      %v5876 = vpack.c.b16 %v5837, %v5836
      %v5877 = vpack.c.b16 %v5839, %v5838
      %v5878 = vpack.c.b16 %v5841, %v5840
      %v5879 = vpack.c.b16 %v5843, %v5842
      %v5880 = vpack.c.b16 %v5845, %v5844
      %v5881 = vpack.c.b16 %v5847, %v5846
      %v5882 = vpack.c.b16 %v5849, %v5848
      %v5883 = vpack.c.b16 %v5851, %v5850
      %v5884 = vpack.c.b16 %v5853, %v5852
      %v5885 = vpack.c.b16 %v5855, %v5854
      %v5886 = vpack.c.b16 %v5857, %v5856
      %v5887 = vpack.c.b16 %v5859, %v5858
      %v5888 = vpack.c.b16 %v5861, %v5860
      %v5889 = vpack.c.b16 %v5863, %v5862
      %v5890 = vpack.c.b16 %v5864, %v5864
      %v5894 = vunpack.c.l.b16 %v5811
      %v5895 = vunpack.c.l.b16 %v5812
      %v5896 = vunpack.c.l.b16 %v5813
      %v5897 = vpack.c.b16 %v5895, %v5894
      %v5898 = vpack.c.b16 %v5896, %v5896
      %v5901 = vsel %vm941, %v5865, 0
      %v5904 = vsel %vm941, %v5866, 0
      %v5907 = vsel %vm941, %v5867, 0
      %v5910 = vsel %vm941, %v5868, 0
      %v5913 = vsel %vm941, %v5869, 0
      %v5916 = vsel %vm941, %v5870, 0
      %v5919 = vsel %vm941, %v5871, 0
      %v5922 = vsel %vm941, %v5872, 0
      %v5925 = vsel %vm941, %v5873, 0
      %v5928 = vsel %vm941, %v5874, 0
      %v5931 = vsel %vm941, %v5875, 0
      %v5934 = vsel %vm941, %v5876, 0
      %v5937 = vsel %vm941, %v5877, 0
      %v5940 = vsel %vm941, %v5878, 0
      %v5943 = vsel %vm941, %v5879, 0
      %v5946 = vsel %vm941, %v5880, 0
      %v5949 = vsel %vm941, %v5881, 0
      %v5952 = vsel %vm941, %v5882, 0
      %v5955 = vsel %vm941, %v5883, 0
      %v5958 = vsel %vm941, %v5884, 0
      %v5961 = vsel %vm941, %v5885, 0
      %v5964 = vsel %vm941, %v5886, 0
      %v5967 = vsel %vm941, %v5887, 0
      %v5970 = vsel %vm941, %v5888, 0
      %v5973 = vsel %vm941, %v5889, 0
      %v5976 = vsel %vm941, %v5890, 0
      %v5979 = vsel %vm1020, %v5898, 0
      %5981 = vmatprep.subr.bf16.mxu0 0
      %5982 = vmatpush1.bf16.msra.mxu0 0
      %5983 = vmatprep.subr.bf16.mxu0 0
      %5984 = vmatpush1.bf16.msra.mxu0 0
      %5985 = vmatprep.subr.bf16.mxu0 0
      %5986 = vmatpush1.bf16.msra.mxu0 0
      %5987 = vmatprep.subr.bf16.mxu0 0
      %5988 = vmatpush1.bf16.msra.mxu0 0
      %5989 = vmatprep.subr.bf16.mxu0 0
      %5990 = vmatpush1.bf16.msra.mxu0 0
      %5991 = vmatprep.subr.bf16.mxu0 0
      %5992 = vmatpush1.bf16.msra.mxu0 0
      %5993 = vmatprep.subr.bf16.mxu0 0
      %5994 = vmatpush1.bf16.msra.mxu0 %v5979
      %5995 = vmatprep.subr.bf16.mxu0 0
      %5996 = vmatpush1.bf16.msra.mxu0 %v5897
      %5997 = vmatprep.subr.bf16.mxu0 0
      %5998 = vmatpush2.bf16.msra.mxu0 0
      %5999 = vmatprep.subr.bf16.mxu0 0
      %6000 = vmatpush2.bf16.msra.mxu0 0
      %6001 = vmatprep.subr.bf16.mxu0 0
      %6002 = vmatpush2.bf16.msra.mxu0 0
      %6003 = vmatprep.subr.bf16.mxu0 0
      %6004 = vmatpush2.bf16.msra.mxu0 0
      %6005 = vmatprep.subr.bf16.mxu0 0
      %6006 = vmatpush2.bf16.msra.mxu0 0
      %6007 = vmatprep.subr.bf16.mxu0 0
      %6008 = vmatpush2.bf16.msra.mxu0 0
      %6009 = vmatprep.subr.bf16.mxu0 0
      %6010 = vmatpush2.bf16.msra.mxu0 0
      %6011 = vmatprep.subr.bf16.mxu0 0
      %6012 = vmatpush2.bf16.msra.mxu0 0
      %6013 = vmatprep.mubr.bf16.mxu0 0
      %6014 = vmatmul.mubr.bf16.gmra.mxu0 %v5901
      %v6015 = vpop.f32.mrf.mxu0
      %v6016 = vadd.f32 0.0, %v6015
      %v6017 = vpop.f32.mrf.mxu0
      %v6018 = vpop.f32.mrf.mxu0
      %v6019 = vadd.f32 0.0, %v6018
      %v6020 = vpop.f32.mrf.mxu0
      %6021 = vmatprep.mubr.bf16.mxu0 0
      %6022 = vmatmul.mubr.bf16.gmra.mxu0 %v5904
      %v6023 = vpop.f32.mrf.mxu0
      %v6024 = vadd.f32 0.0, %v6023
      %v6025 = vpop.f32.mrf.mxu0
      %v6026 = vpop.f32.mrf.mxu0
      %v6027 = vadd.f32 0.0, %v6026
      %v6028 = vpop.f32.mrf.mxu0
      %6029 = vmatprep.mubr.bf16.mxu0 0
      %6030 = vmatmul.mubr.bf16.gmra.mxu0 %v5907
      %v6031 = vpop.f32.mrf.mxu0
      %v6032 = vadd.f32 0.0, %v6031
      %v6033 = vpop.f32.mrf.mxu0
      %v6034 = vpop.f32.mrf.mxu0
      %v6035 = vadd.f32 0.0, %v6034
      %v6036 = vpop.f32.mrf.mxu0
      %6037 = vmatprep.mubr.bf16.mxu0 0
      %6038 = vmatmul.mubr.bf16.gmra.mxu0 %v5910
      %v6039 = vpop.f32.mrf.mxu0
      %v6040 = vadd.f32 0.0, %v6039
      %v6041 = vpop.f32.mrf.mxu0
      %v6042 = vpop.f32.mrf.mxu0
      %v6043 = vadd.f32 0.0, %v6042
      %v6044 = vpop.f32.mrf.mxu0
      %6045 = vmatprep.mubr.bf16.mxu0 0
      %6046 = vmatmul.mubr.bf16.gmra.mxu0 %v5913
      %v6047 = vpop.f32.mrf.mxu0
      %v6048 = vadd.f32 0.0, %v6047
      %v6049 = vpop.f32.mrf.mxu0
      %v6050 = vpop.f32.mrf.mxu0
      %v6051 = vadd.f32 0.0, %v6050
      %v6052 = vpop.f32.mrf.mxu0
      %6053 = vmatprep.mubr.bf16.mxu0 0
      %6054 = vmatmul.mubr.bf16.gmra.mxu0 %v5916
      %v6055 = vpop.f32.mrf.mxu0
      %v6056 = vadd.f32 0.0, %v6055
      %v6057 = vpop.f32.mrf.mxu0
      %v6058 = vpop.f32.mrf.mxu0
      %v6059 = vadd.f32 0.0, %v6058
      %v6060 = vpop.f32.mrf.mxu0
      %6061 = vmatprep.mubr.bf16.mxu0 0
      %6062 = vmatmul.mubr.bf16.gmra.mxu0 %v5919
      %v6063 = vpop.f32.mrf.mxu0
      %v6064 = vadd.f32 0.0, %v6063
      %v6065 = vpop.f32.mrf.mxu0
      %v6066 = vpop.f32.mrf.mxu0
      %v6067 = vadd.f32 0.0, %v6066
      %v6068 = vpop.f32.mrf.mxu0
      %6069 = vmatprep.mubr.bf16.mxu0 0
      %6070 = vmatmul.mubr.bf16.gmra.mxu0 %v5922
      %v6071 = vpop.f32.mrf.mxu0
      %v6072 = vadd.f32 0.0, %v6071
      %v6073 = vpop.f32.mrf.mxu0
      %v6074 = vpop.f32.mrf.mxu0
      %v6075 = vadd.f32 0.0, %v6074
      %v6076 = vpop.f32.mrf.mxu0
      %6077 = vmatprep.mubr.bf16.mxu0 0
      %6078 = vmatmul.mubr.bf16.gmra.mxu0 %v5925
      %v6079 = vpop.f32.mrf.mxu0
      %v6080 = vadd.f32 0.0, %v6079
      %v6081 = vpop.f32.mrf.mxu0
      %v6082 = vpop.f32.mrf.mxu0
      %v6083 = vadd.f32 0.0, %v6082
      %v6084 = vpop.f32.mrf.mxu0
      %6085 = vmatprep.mubr.bf16.mxu0 0
      %6086 = vmatmul.mubr.bf16.gmra.mxu0 %v5928
      %v6087 = vpop.f32.mrf.mxu0
      %v6088 = vadd.f32 0.0, %v6087
      %v6089 = vpop.f32.mrf.mxu0
      %v6090 = vpop.f32.mrf.mxu0
      %v6091 = vadd.f32 0.0, %v6090
      %v6092 = vpop.f32.mrf.mxu0
      %6093 = vmatprep.mubr.bf16.mxu0 0
      %6094 = vmatmul.mubr.bf16.gmra.mxu0 %v5931
      %v6095 = vpop.f32.mrf.mxu0
      %v6096 = vadd.f32 0.0, %v6095
      %v6097 = vpop.f32.mrf.mxu0
      %v6098 = vpop.f32.mrf.mxu0
      %v6099 = vadd.f32 0.0, %v6098
      %v6100 = vpop.f32.mrf.mxu0
      %6101 = vmatprep.mubr.bf16.mxu0 0
      %6102 = vmatmul.mubr.bf16.gmra.mxu0 %v5934
      %v6103 = vpop.f32.mrf.mxu0
      %v6104 = vadd.f32 0.0, %v6103
      %v6105 = vpop.f32.mrf.mxu0
      %v6106 = vpop.f32.mrf.mxu0
      %v6107 = vadd.f32 0.0, %v6106
      %v6108 = vpop.f32.mrf.mxu0
      %6109 = vmatprep.mubr.bf16.mxu0 0
      %6110 = vmatmul.mubr.bf16.gmra.mxu0 %v5937
      %v6111 = vpop.f32.mrf.mxu0
      %v6112 = vadd.f32 0.0, %v6111
      %v6113 = vpop.f32.mrf.mxu0
      %v6114 = vpop.f32.mrf.mxu0
      %v6115 = vadd.f32 0.0, %v6114
      %v6116 = vpop.f32.mrf.mxu0
      %6117 = vmatprep.mubr.bf16.mxu0 0
      %6118 = vmatmul.mubr.bf16.gmra.mxu0 %v5940
      %v6119 = vpop.f32.mrf.mxu0
      %v6120 = vadd.f32 0.0, %v6119
      %v6121 = vpop.f32.mrf.mxu0
      %v6122 = vpop.f32.mrf.mxu0
      %v6123 = vadd.f32 0.0, %v6122
      %v6124 = vpop.f32.mrf.mxu0
      %6125 = vmatprep.mubr.bf16.mxu0 0
      %6126 = vmatmul.mubr.bf16.gmra.mxu0 %v5943
      %v6127 = vpop.f32.mrf.mxu0
      %v6128 = vadd.f32 0.0, %v6127
      %v6129 = vpop.f32.mrf.mxu0
      %v6130 = vpop.f32.mrf.mxu0
      %v6131 = vadd.f32 0.0, %v6130
      %v6132 = vpop.f32.mrf.mxu0
      %6133 = vmatprep.mubr.bf16.mxu0 0
      %6134 = vmatmul.mubr.bf16.gmra.mxu0 %v5946
      %v6135 = vpop.f32.mrf.mxu0
      %v6136 = vadd.f32 0.0, %v6135
      %v6137 = vpop.f32.mrf.mxu0
      %v6138 = vpop.f32.mrf.mxu0
      %v6139 = vadd.f32 0.0, %v6138
      %v6140 = vpop.f32.mrf.mxu0
      %6141 = vmatprep.mubr.bf16.mxu0 0
      %6142 = vmatmul.mubr.bf16.gmra.mxu0 %v5949
      %v6143 = vpop.f32.mrf.mxu0
      %v6144 = vadd.f32 0.0, %v6143
      %v6145 = vpop.f32.mrf.mxu0
      %v6146 = vpop.f32.mrf.mxu0
      %v6147 = vadd.f32 0.0, %v6146
      %v6148 = vpop.f32.mrf.mxu0
      %6149 = vmatprep.mubr.bf16.mxu0 0
      %6150 = vmatmul.mubr.bf16.gmra.mxu0 %v5952
      %v6151 = vpop.f32.mrf.mxu0
      %v6152 = vadd.f32 0.0, %v6151
      %v6153 = vpop.f32.mrf.mxu0
      %v6154 = vpop.f32.mrf.mxu0
      %v6155 = vadd.f32 0.0, %v6154
      %v6156 = vpop.f32.mrf.mxu0
      %6157 = vmatprep.mubr.bf16.mxu0 0
      %6158 = vmatmul.mubr.bf16.gmra.mxu0 %v5955
      %v6159 = vpop.f32.mrf.mxu0
      %v6160 = vadd.f32 0.0, %v6159
      %v6161 = vpop.f32.mrf.mxu0
      %v6162 = vpop.f32.mrf.mxu0
      %v6163 = vadd.f32 0.0, %v6162
      %v6164 = vpop.f32.mrf.mxu0
      %6165 = vmatprep.mubr.bf16.mxu0 0
      %6166 = vmatmul.mubr.bf16.gmra.mxu0 %v5958
      %v6167 = vpop.f32.mrf.mxu0
      %v6168 = vadd.f32 0.0, %v6167
      %v6169 = vpop.f32.mrf.mxu0
      %v6170 = vpop.f32.mrf.mxu0
      %v6171 = vadd.f32 0.0, %v6170
      %v6172 = vpop.f32.mrf.mxu0
      %6173 = vmatprep.mubr.bf16.mxu0 0
      %6174 = vmatmul.mubr.bf16.gmra.mxu0 %v5961
      %v6175 = vpop.f32.mrf.mxu0
      %v6176 = vadd.f32 0.0, %v6175
      %v6177 = vpop.f32.mrf.mxu0
      %v6178 = vpop.f32.mrf.mxu0
      %v6179 = vadd.f32 0.0, %v6178
      %v6180 = vpop.f32.mrf.mxu0
      %6181 = vmatprep.mubr.bf16.mxu0 0
      %6182 = vmatmul.mubr.bf16.gmra.mxu0 %v5964
      %v6183 = vpop.f32.mrf.mxu0
      %v6184 = vadd.f32 0.0, %v6183
      %v6185 = vpop.f32.mrf.mxu0
      %v6186 = vpop.f32.mrf.mxu0
      %v6187 = vadd.f32 0.0, %v6186
      %v6188 = vpop.f32.mrf.mxu0
      %6189 = vmatprep.mubr.bf16.mxu0 0
      %6190 = vmatmul.mubr.bf16.gmra.mxu0 %v5967
      %v6191 = vpop.f32.mrf.mxu0
      %v6192 = vadd.f32 0.0, %v6191
      %v6193 = vpop.f32.mrf.mxu0
      %v6194 = vpop.f32.mrf.mxu0
      %v6195 = vadd.f32 0.0, %v6194
      %v6196 = vpop.f32.mrf.mxu0
      %6197 = vmatprep.mubr.bf16.mxu0 0
      %6198 = vmatmul.mubr.bf16.gmra.mxu0 %v5970
      %v6199 = vpop.f32.mrf.mxu0
      %v6200 = vadd.f32 0.0, %v6199
      %v6201 = vpop.f32.mrf.mxu0
      %v6202 = vpop.f32.mrf.mxu0
      %v6203 = vadd.f32 0.0, %v6202
      %v6204 = vpop.f32.mrf.mxu0
      %6205 = vmatprep.mubr.bf16.mxu0 0
      %6206 = vmatmul.mubr.bf16.gmra.mxu0 %v5973
      %v6207 = vpop.f32.mrf.mxu0
      %v6208 = vadd.f32 0.0, %v6207
      %v6209 = vpop.f32.mrf.mxu0
      %v6210 = vpop.f32.mrf.mxu0
      %v6211 = vadd.f32 0.0, %v6210
      %v6212 = vpop.f32.mrf.mxu0
      %6213 = vmatprep.mubr.bf16.mxu0 0
      %6214 = vmatmul.mubr.bf16.gmra.mxu0 %v5976
      %v6215 = vpop.f32.mrf.mxu0
      %v6216 = vadd.f32 0.0, %v6215
      %v6217 = vpop.f32.mrf.mxu0
      %v6218 = vpop.f32.mrf.mxu0
      %v6219 = vpop.f32.mrf.mxu0
      %6220 = vdwg.mxu0
      %v6221 = vadd.f32 %v5181, %v6016
      %v6222 = vadd.f32 %v5182, %v6019
      %v6223 = vadd.f32 %v5183, %v6024
      %v6224 = vadd.f32 %v5184, %v6027
      %v6225 = vadd.f32 %v5185, %v6032
      %v6226 = vadd.f32 %v5186, %v6035
      %v6227 = vadd.f32 %v5187, %v6040
      %v6228 = vadd.f32 %v5188, %v6043
      %v6229 = vadd.f32 %v5189, %v6048
      %v6230 = vadd.f32 %v5190, %v6051
      %v6231 = vadd.f32 %v5191, %v6056
      %v6232 = vadd.f32 %v5192, %v6059
      %v6233 = vadd.f32 %v5193, %v6064
      %v6234 = vadd.f32 %v5194, %v6067
      %v6235 = vadd.f32 %v5195, %v6072
      %v6236 = vadd.f32 %v5196, %v6075
      %v6237 = vadd.f32 %v5197, %v6080
      %v6238 = vadd.f32 %v5198, %v6083
      %v6239 = vadd.f32 %v5199, %v6088
      %v6240 = vadd.f32 %v5200, %v6091
      %v6241 = vadd.f32 %v5201, %v6096
      %v6242 = vadd.f32 %v5202, %v6099
      %v6243 = vadd.f32 %v5203, %v6104
      %v6244 = vadd.f32 %v5204, %v6107
      %v6245 = vadd.f32 %v5205, %v6112
      %v6246 = vadd.f32 %v5206, %v6115
      %v6247 = vadd.f32 %v5207, %v6120
      %v6248 = vadd.f32 %v5208, %v6123
      %v6249 = vadd.f32 %v5209, %v6128
      %v6250 = vadd.f32 %v5210, %v6131
      %v6251 = vadd.f32 %v5211, %v6136
      %v6252 = vadd.f32 %v5212, %v6139
      %v6253 = vadd.f32 %v5213, %v6144
      %v6254 = vadd.f32 %v5214, %v6147
      %v6255 = vadd.f32 %v5215, %v6152
      %v6256 = vadd.f32 %v5216, %v6155
      %v6257 = vadd.f32 %v5217, %v6160
      %v6258 = vadd.f32 %v5218, %v6163
      %v6259 = vadd.f32 %v5219, %v6168
      %v6260 = vadd.f32 %v5220, %v6171
      %v6261 = vadd.f32 %v5221, %v6176
      %v6262 = vadd.f32 %v5222, %v6179
      %v6263 = vadd.f32 %v5223, %v6184
      %v6264 = vadd.f32 %v5224, %v6187
      %v6265 = vadd.f32 %v5225, %v6192
      %v6266 = vadd.f32 %v5226, %v6195
      %v6267 = vadd.f32 %v5227, %v6200
      %v6268 = vadd.f32 %v5228, %v6203
      %v6269 = vadd.f32 %v5229, %v6208
      %v6270 = vadd.f32 %v5230, %v6211
      %v6271 = vadd.f32 %v5231, %v6216
      %v6289 = vrot.slane %v4651, 5
      %v6290 = vrot.slane %v6289, 4
      %v6291 = vrot.slane %v4652, 5
      %v6292 = vsel %vm1741, %v6290, %v6291
      %v6293 = vrot.slane %v6291, 4
      %v6294 = vrot.slane %v4653, 5
      %v6295 = vsel %vm1741, %v6293, %v6294
      %v6296 = vrot.slane %v6294, 4
      %v6297 = vrot.slane %v4654, 5
      %v6298 = vsel %vm1741, %v6296, %v6297
      %v6299 = vrot.slane %v4655, 5
      %v6300 = vrot.slane %v6299, 4
      %v6301 = vrot.slane %v4656, 5
      %v6302 = vsel %vm1741, %v6300, %v6301
      %v6303 = vrot.slane %v6301, 4
      %v6304 = vrot.slane %v4657, 5
      %v6305 = vsel %vm1741, %v6303, %v6304
      %v6306 = vrot.slane %v6304, 4
      %v6307 = vrot.slane %v4658, 5
      %v6308 = vsel %vm1741, %v6306, %v6307
      %v6309 = vrot.slane %v4659, 5
      %v6310 = vrot.slane %v6309, 4
      %v6311 = vrot.slane %v4660, 5
      %v6312 = vsel %vm1741, %v6310, %v6311
      %v6313 = vrot.slane %v6311, 4
      %v6314 = vrot.slane %v4661, 5
      %v6315 = vsel %vm1741, %v6313, %v6314
      %v6316 = vrot.slane %v6314, 4
      %v6317 = vrot.slane %v4662, 5
      %v6318 = vsel %vm1741, %v6316, %v6317
      %v6319 = vrot.slane %v4663, 5
      %v6320 = vrot.slane %v6319, 4
      %v6321 = vrot.slane %v4664, 5
      %v6322 = vsel %vm1741, %v6320, %v6321
      %v6323 = vrot.slane %v6321, 4
      %v6324 = vrot.slane %v4665, 5
      %v6325 = vsel %vm1741, %v6323, %v6324
      %v6326 = vrot.slane %v6324, 4
      %v6327 = vrot.slane %v4666, 5
      %v6328 = vsel %vm1741, %v6326, %v6327
      %v6329 = vrot.slane %v4667, 5
      %v6330 = vrot.slane %v6329, 4
      %v6331 = vrot.slane %v4668, 5
      %v6332 = vsel %vm1741, %v6330, %v6331
      %v6333 = vrot.slane %v6331, 4
      %v6334 = vrot.slane %v4669, 5
      %v6335 = vsel %vm1741, %v6333, %v6334
      %v6336 = vrot.slane %v6334, 4
      %v6337 = vrot.slane %v4670, 5
      %v6338 = vsel %vm1741, %v6336, %v6337
      %v6339 = vrot.slane %v4671, 5
      %v6340 = vrot.slane %v6339, 4
      %v6341 = vrot.slane %v4672, 5
      %v6342 = vsel %vm1741, %v6340, %v6341
      %v6343 = vrot.slane %v6341, 4
      %v6344 = vrot.slane %v4673, 5
      %v6345 = vsel %vm1741, %v6343, %v6344
      %v6346 = vrot.slane %v6344, 4
      %v6347 = vrot.slane %v4674, 5
      %v6348 = vsel %vm1741, %v6346, %v6347
      %v6349 = vrot.slane %v4675, 5
      %v6350 = vrot.slane %v6349, 4
      %v6351 = vrot.slane %v4676, 5
      %v6352 = vsel %vm1741, %v6350, %v6351
      %v6353 = vrot.slane %v6351, 4
      %v6354 = vrot.slane %v4677, 5
      %v6355 = vsel %vm1741, %v6353, %v6354
      %v6356 = vrot.slane %v6354, 4
      %v6357 = vrot.slane %v4678, 5
      %v6358 = vsel %vm1741, %v6356, %v6357
      %v6359 = vrot.slane %v4679, 5
      %v6360 = vrot.slane %v6359, 4
      %v6361 = vrot.slane %v4680, 5
      %v6362 = vsel %vm1741, %v6360, %v6361
      %v6363 = vrot.slane %v6361, 4
      %v6364 = vrot.slane %v4681, 5
      %v6365 = vsel %vm1741, %v6363, %v6364
      %v6366 = vrot.slane %v6364, 4
      %v6367 = vrot.slane %v4682, 5
      %v6368 = vsel %vm1741, %v6366, %v6367
      %v6369 = vrot.slane %v4683, 5
      %v6370 = vrot.slane %v6369, 4
      %v6371 = vrot.slane %v4684, 5
      %v6372 = vsel %vm1741, %v6370, %v6371
      %v6373 = vrot.slane %v6371, 4
      %v6374 = vrot.slane %v4685, 5
      %v6375 = vsel %vm1741, %v6373, %v6374
      %v6376 = vrot.slane %v6374, 4
      %v6377 = vrot.slane %v4686, 5
      %v6378 = vsel %vm1741, %v6376, %v6377
      %v6379 = vrot.slane %v4687, 5
      %v6380 = vrot.slane %v6379, 4
      %v6381 = vrot.slane %v4688, 5
      %v6382 = vsel %vm1741, %v6380, %v6381
      %v6383 = vrot.slane %v6381, 4
      %v6384 = vrot.slane %v4689, 5
      %v6385 = vsel %vm1741, %v6383, %v6384
      %v6386 = vrot.slane %v6384, 4
      %v6387 = vrot.slane %v4690, 5
      %v6388 = vsel %vm1741, %v6386, %v6387
      %v6389 = vrot.slane %v4691, 5
      %v6390 = vrot.slane %v6389, 4
      %v6391 = vrot.slane %v4692, 5
      %v6392 = vsel %vm1741, %v6390, %v6391
      %v6393 = vrot.slane %v6391, 4
      %v6394 = vrot.slane %v4693, 5
      %v6395 = vsel %vm1741, %v6393, %v6394
      %v6396 = vrot.slane %v6394, 4
      %v6397 = vrot.slane %v4694, 5
      %v6398 = vsel %vm1741, %v6396, %v6397
      %v6399 = vrot.slane %v4695, 5
      %v6400 = vrot.slane %v6399, 4
      %v6401 = vrot.slane %v4696, 5
      %v6402 = vsel %vm1741, %v6400, %v6401
      %v6403 = vrot.slane %v6401, 4
      %v6404 = vrot.slane %v4697, 5
      %v6405 = vsel %vm1741, %v6403, %v6404
      %v6406 = vrot.slane %v6404, 4
      %v6407 = vrot.slane %v4698, 5
      %v6408 = vsel %vm1741, %v6406, %v6407
      %v6409 = vrot.slane %v4699, 5
      %v6410 = vrot.slane %v6409, 4
      %v6411 = vrot.slane %v4700, 5
      %v6412 = vsel %vm1741, %v6410, %v6411
      %v6413 = vrot.slane %v6411, 4
      %v6414 = vrot.slane %v4701, 5
      %v6415 = vsel %vm1741, %v6413, %v6414
      %v6416 = vrot.slane %v6414, 4
      %v6417 = vrot.slane %v4702, 5
      %v6418 = vsel %vm1741, %v6416, %v6417
      %v6419 = vrot.slane %v4703, 5
      %v6420 = vrot.slane %v6419, 4
      %v6421 = vrot.slane %v4704, 5
      %v6422 = vsel %vm1741, %v6420, %v6421
      %v6423 = vrot.slane %v6421, 4
      %v6424 = vrot.slane %v4705, 5
      %v6425 = vsel %vm1741, %v6423, %v6424
      %v6426 = vrot.slane %v6424, 4
      %v6427 = vrot.slane %v4706, 5
      %v6428 = vsel %vm1741, %v6426, %v6427
      %v6429 = vrot.slane %v4707, 5
      %v6430 = vrot.slane %v6429, 4
      %v6431 = vrot.slane %v4708, 5
      %v6432 = vsel %vm1741, %v6430, %v6431
      %v6433 = vrot.slane %v6431, 4
      %v6434 = vrot.slane %v4709, 5
      %v6435 = vsel %vm1741, %v6433, %v6434
      %v6436 = vrot.slane %v6434, 4
      %v6437 = vrot.slane %v4710, 5
      %v6438 = vsel %vm1741, %v6436, %v6437
      %v6439 = vrot.slane %v4711, 5
      %v6440 = vrot.slane %v6439, 4
      %v6441 = vrot.slane %v4712, 5
      %v6442 = vsel %vm1741, %v6440, %v6441
      %v6443 = vrot.slane %v6441, 4
      %v6444 = vrot.slane %v4713, 5
      %v6445 = vsel %vm1741, %v6443, %v6444
      %v6446 = vrot.slane %v6444, 4
      %v6447 = vrot.slane %v4714, 5
      %v6448 = vsel %vm1741, %v6446, %v6447
      %v6449 = vrot.slane %v4715, 5
      %v6450 = vrot.slane %v6449, 4
      %v6451 = vrot.slane %v4716, 5
      %v6452 = vsel %vm1741, %v6450, %v6451
      %v6453 = vrot.slane %v6451, 4
      %v6454 = vrot.slane %v4717, 5
      %v6455 = vsel %vm1741, %v6453, %v6454
      %v6456 = vrot.slane %v6454, 4
      %v6457 = vrot.slane %v4718, 5
      %v6458 = vsel %vm1741, %v6456, %v6457
      %s6459 = scalar_lea.vmem %s1, 96
      %v6460 = vld [vmem:[%s6459] sm:$0xf]
      %v6461 = vld [vmem:[%s6459 + $0x4] sm:$0xf]
      %v6462 = vld [vmem:[%s6459 + $0x8] sm:$0x3]
      %v6463 = vunpack.c.l.b16 %v6292
      %v6464 = vunpack.c.l.b16 %v6295
      %v6465 = vunpack.c.l.b16 %v6298
      %v6466 = vunpack.c.l.b16 %v6302
      %v6467 = vunpack.c.l.b16 %v6305
      %v6468 = vunpack.c.l.b16 %v6308
      %v6469 = vunpack.c.l.b16 %v6312
      %v6470 = vunpack.c.l.b16 %v6315
      %v6471 = vunpack.c.l.b16 %v6318
      %v6472 = vunpack.c.l.b16 %v6322
      %v6473 = vunpack.c.l.b16 %v6325
      %v6474 = vunpack.c.l.b16 %v6328
      %v6475 = vunpack.c.l.b16 %v6332
      %v6476 = vunpack.c.l.b16 %v6335
      %v6477 = vunpack.c.l.b16 %v6338
      %v6478 = vunpack.c.l.b16 %v6342
      %v6479 = vunpack.c.l.b16 %v6345
      %v6480 = vunpack.c.l.b16 %v6348
      %v6481 = vunpack.c.l.b16 %v6352
      %v6482 = vunpack.c.l.b16 %v6355
      %v6483 = vunpack.c.l.b16 %v6358
      %v6484 = vunpack.c.l.b16 %v6362
      %v6485 = vunpack.c.l.b16 %v6365
      %v6486 = vunpack.c.l.b16 %v6368
      %v6487 = vunpack.c.l.b16 %v6372
      %v6488 = vunpack.c.l.b16 %v6375
      %v6489 = vunpack.c.l.b16 %v6378
      %v6490 = vunpack.c.l.b16 %v6382
      %v6491 = vunpack.c.l.b16 %v6385
      %v6492 = vunpack.c.l.b16 %v6388
      %v6493 = vunpack.c.l.b16 %v6392
      %v6494 = vunpack.c.l.b16 %v6395
      %v6495 = vunpack.c.l.b16 %v6398
      %v6496 = vunpack.c.l.b16 %v6402
      %v6497 = vunpack.c.l.b16 %v6405
      %v6498 = vunpack.c.l.b16 %v6408
      %v6499 = vunpack.c.l.b16 %v6412
      %v6500 = vunpack.c.l.b16 %v6415
      %v6501 = vunpack.c.l.b16 %v6418
      %v6502 = vunpack.c.l.b16 %v6422
      %v6503 = vunpack.c.l.b16 %v6425
      %v6504 = vunpack.c.l.b16 %v6428
      %v6505 = vunpack.c.l.b16 %v6432
      %v6506 = vunpack.c.l.b16 %v6435
      %v6507 = vunpack.c.l.b16 %v6438
      %v6508 = vunpack.c.l.b16 %v6442
      %v6509 = vunpack.c.l.b16 %v6445
      %v6510 = vunpack.c.l.b16 %v6448
      %v6511 = vunpack.c.l.b16 %v6452
      %v6512 = vunpack.c.l.b16 %v6455
      %v6513 = vunpack.c.l.b16 %v6458
      %v6514 = vpack.c.b16 %v6464, %v6463
      %v6515 = vpack.c.b16 %v6466, %v6465
      %v6516 = vpack.c.b16 %v6468, %v6467
      %v6517 = vpack.c.b16 %v6470, %v6469
      %v6518 = vpack.c.b16 %v6472, %v6471
      %v6519 = vpack.c.b16 %v6474, %v6473
      %v6520 = vpack.c.b16 %v6476, %v6475
      %v6521 = vpack.c.b16 %v6478, %v6477
      %v6522 = vpack.c.b16 %v6480, %v6479
      %v6523 = vpack.c.b16 %v6482, %v6481
      %v6524 = vpack.c.b16 %v6484, %v6483
      %v6525 = vpack.c.b16 %v6486, %v6485
      %v6526 = vpack.c.b16 %v6488, %v6487
      %v6527 = vpack.c.b16 %v6490, %v6489
      %v6528 = vpack.c.b16 %v6492, %v6491
      %v6529 = vpack.c.b16 %v6494, %v6493
      %v6530 = vpack.c.b16 %v6496, %v6495
      %v6531 = vpack.c.b16 %v6498, %v6497
      %v6532 = vpack.c.b16 %v6500, %v6499
      %v6533 = vpack.c.b16 %v6502, %v6501
      %v6534 = vpack.c.b16 %v6504, %v6503
      %v6535 = vpack.c.b16 %v6506, %v6505
      %v6536 = vpack.c.b16 %v6508, %v6507
      %v6537 = vpack.c.b16 %v6510, %v6509
      %v6538 = vpack.c.b16 %v6512, %v6511
      %v6539 = vpack.c.b16 %v6513, %v6513
      %v6543 = vunpack.c.l.b16 %v6460
      %v6544 = vunpack.c.l.b16 %v6461
      %v6545 = vunpack.c.l.b16 %v6462
      %v6546 = vpack.c.b16 %v6544, %v6543
      %v6547 = vpack.c.b16 %v6545, %v6545
      %v6550 = vsel %vm941, %v6514, 0
      %v6553 = vsel %vm941, %v6515, 0
      %v6556 = vsel %vm941, %v6516, 0
      %v6559 = vsel %vm941, %v6517, 0
      %v6562 = vsel %vm941, %v6518, 0
      %v6565 = vsel %vm941, %v6519, 0
      %v6568 = vsel %vm941, %v6520, 0
      %v6571 = vsel %vm941, %v6521, 0
      %v6574 = vsel %vm941, %v6522, 0
      %v6577 = vsel %vm941, %v6523, 0
      %v6580 = vsel %vm941, %v6524, 0
      %v6583 = vsel %vm941, %v6525, 0
      %v6586 = vsel %vm941, %v6526, 0
      %v6589 = vsel %vm941, %v6527, 0
      %v6592 = vsel %vm941, %v6528, 0
      %v6595 = vsel %vm941, %v6529, 0
      %v6598 = vsel %vm941, %v6530, 0
      %v6601 = vsel %vm941, %v6531, 0
      %v6604 = vsel %vm941, %v6532, 0
      %v6607 = vsel %vm941, %v6533, 0
      %v6610 = vsel %vm941, %v6534, 0
      %v6613 = vsel %vm941, %v6535, 0
      %v6616 = vsel %vm941, %v6536, 0
      %v6619 = vsel %vm941, %v6537, 0
      %v6622 = vsel %vm941, %v6538, 0
      %v6625 = vsel %vm941, %v6539, 0
      %v6628 = vsel %vm1020, %v6547, 0
      %6630 = vmatprep.subr.bf16.mxu0 0
      %6631 = vmatpush1.bf16.msra.mxu0 0
      %6632 = vmatprep.subr.bf16.mxu0 0
      %6633 = vmatpush1.bf16.msra.mxu0 0
      %6634 = vmatprep.subr.bf16.mxu0 0
      %6635 = vmatpush1.bf16.msra.mxu0 0
      %6636 = vmatprep.subr.bf16.mxu0 0
      %6637 = vmatpush1.bf16.msra.mxu0 0
      %6638 = vmatprep.subr.bf16.mxu0 0
      %6639 = vmatpush1.bf16.msra.mxu0 0
      %6640 = vmatprep.subr.bf16.mxu0 0
      %6641 = vmatpush1.bf16.msra.mxu0 0
      %6642 = vmatprep.subr.bf16.mxu0 0
      %6643 = vmatpush1.bf16.msra.mxu0 %v6628
      %6644 = vmatprep.subr.bf16.mxu0 0
      %6645 = vmatpush1.bf16.msra.mxu0 %v6546
      %6646 = vmatprep.subr.bf16.mxu0 0
      %6647 = vmatpush2.bf16.msra.mxu0 0
      %6648 = vmatprep.subr.bf16.mxu0 0
      %6649 = vmatpush2.bf16.msra.mxu0 0
      %6650 = vmatprep.subr.bf16.mxu0 0
      %6651 = vmatpush2.bf16.msra.mxu0 0
      %6652 = vmatprep.subr.bf16.mxu0 0
      %6653 = vmatpush2.bf16.msra.mxu0 0
      %6654 = vmatprep.subr.bf16.mxu0 0
      %6655 = vmatpush2.bf16.msra.mxu0 0
      %6656 = vmatprep.subr.bf16.mxu0 0
      %6657 = vmatpush2.bf16.msra.mxu0 0
      %6658 = vmatprep.subr.bf16.mxu0 0
      %6659 = vmatpush2.bf16.msra.mxu0 0
      %6660 = vmatprep.subr.bf16.mxu0 0
      %6661 = vmatpush2.bf16.msra.mxu0 0
      %6662 = vmatprep.mubr.bf16.mxu0 0
      %6663 = vmatmul.mubr.bf16.gmra.mxu0 %v6550
      %v6664 = vpop.f32.mrf.mxu0
      %v6665 = vadd.f32 0.0, %v6664
      %v6666 = vpop.f32.mrf.mxu0
      %v6667 = vpop.f32.mrf.mxu0
      %v6668 = vadd.f32 0.0, %v6667
      %v6669 = vpop.f32.mrf.mxu0
      %6670 = vmatprep.mubr.bf16.mxu0 0
      %6671 = vmatmul.mubr.bf16.gmra.mxu0 %v6553
      %v6672 = vpop.f32.mrf.mxu0
      %v6673 = vadd.f32 0.0, %v6672
      %v6674 = vpop.f32.mrf.mxu0
      %v6675 = vpop.f32.mrf.mxu0
      %v6676 = vadd.f32 0.0, %v6675
      %v6677 = vpop.f32.mrf.mxu0
      %6678 = vmatprep.mubr.bf16.mxu0 0
      %6679 = vmatmul.mubr.bf16.gmra.mxu0 %v6556
      %v6680 = vpop.f32.mrf.mxu0
      %v6681 = vadd.f32 0.0, %v6680
      %v6682 = vpop.f32.mrf.mxu0
      %v6683 = vpop.f32.mrf.mxu0
      %v6684 = vadd.f32 0.0, %v6683
      %v6685 = vpop.f32.mrf.mxu0
      %6686 = vmatprep.mubr.bf16.mxu0 0
      %6687 = vmatmul.mubr.bf16.gmra.mxu0 %v6559
      %v6688 = vpop.f32.mrf.mxu0
      %v6689 = vadd.f32 0.0, %v6688
      %v6690 = vpop.f32.mrf.mxu0
      %v6691 = vpop.f32.mrf.mxu0
      %v6692 = vadd.f32 0.0, %v6691
      %v6693 = vpop.f32.mrf.mxu0
      %6694 = vmatprep.mubr.bf16.mxu0 0
      %6695 = vmatmul.mubr.bf16.gmra.mxu0 %v6562
      %v6696 = vpop.f32.mrf.mxu0
      %v6697 = vadd.f32 0.0, %v6696
      %v6698 = vpop.f32.mrf.mxu0
      %v6699 = vpop.f32.mrf.mxu0
      %v6700 = vadd.f32 0.0, %v6699
      %v6701 = vpop.f32.mrf.mxu0
      %6702 = vmatprep.mubr.bf16.mxu0 0
      %6703 = vmatmul.mubr.bf16.gmra.mxu0 %v6565
      %v6704 = vpop.f32.mrf.mxu0
      %v6705 = vadd.f32 0.0, %v6704
      %v6706 = vpop.f32.mrf.mxu0
      %v6707 = vpop.f32.mrf.mxu0
      %v6708 = vadd.f32 0.0, %v6707
      %v6709 = vpop.f32.mrf.mxu0
      %6710 = vmatprep.mubr.bf16.mxu0 0
      %6711 = vmatmul.mubr.bf16.gmra.mxu0 %v6568
      %v6712 = vpop.f32.mrf.mxu0
      %v6713 = vadd.f32 0.0, %v6712
      %v6714 = vpop.f32.mrf.mxu0
      %v6715 = vpop.f32.mrf.mxu0
      %v6716 = vadd.f32 0.0, %v6715
      %v6717 = vpop.f32.mrf.mxu0
      %6718 = vmatprep.mubr.bf16.mxu0 0
      %6719 = vmatmul.mubr.bf16.gmra.mxu0 %v6571
      %v6720 = vpop.f32.mrf.mxu0
      %v6721 = vadd.f32 0.0, %v6720
      %v6722 = vpop.f32.mrf.mxu0
      %v6723 = vpop.f32.mrf.mxu0
      %v6724 = vadd.f32 0.0, %v6723
      %v6725 = vpop.f32.mrf.mxu0
      %6726 = vmatprep.mubr.bf16.mxu0 0
      %6727 = vmatmul.mubr.bf16.gmra.mxu0 %v6574
      %v6728 = vpop.f32.mrf.mxu0
      %v6729 = vadd.f32 0.0, %v6728
      %v6730 = vpop.f32.mrf.mxu0
      %v6731 = vpop.f32.mrf.mxu0
      %v6732 = vadd.f32 0.0, %v6731
      %v6733 = vpop.f32.mrf.mxu0
      %6734 = vmatprep.mubr.bf16.mxu0 0
      %6735 = vmatmul.mubr.bf16.gmra.mxu0 %v6577
      %v6736 = vpop.f32.mrf.mxu0
      %v6737 = vadd.f32 0.0, %v6736
      %v6738 = vpop.f32.mrf.mxu0
      %v6739 = vpop.f32.mrf.mxu0
      %v6740 = vadd.f32 0.0, %v6739
      %v6741 = vpop.f32.mrf.mxu0
      %6742 = vmatprep.mubr.bf16.mxu0 0
      %6743 = vmatmul.mubr.bf16.gmra.mxu0 %v6580
      %v6744 = vpop.f32.mrf.mxu0
      %v6745 = vadd.f32 0.0, %v6744
      %v6746 = vpop.f32.mrf.mxu0
      %v6747 = vpop.f32.mrf.mxu0
      %v6748 = vadd.f32 0.0, %v6747
      %v6749 = vpop.f32.mrf.mxu0
      %6750 = vmatprep.mubr.bf16.mxu0 0
      %6751 = vmatmul.mubr.bf16.gmra.mxu0 %v6583
      %v6752 = vpop.f32.mrf.mxu0
      %v6753 = vadd.f32 0.0, %v6752
      %v6754 = vpop.f32.mrf.mxu0
      %v6755 = vpop.f32.mrf.mxu0
      %v6756 = vadd.f32 0.0, %v6755
      %v6757 = vpop.f32.mrf.mxu0
      %6758 = vmatprep.mubr.bf16.mxu0 0
      %6759 = vmatmul.mubr.bf16.gmra.mxu0 %v6586
      %v6760 = vpop.f32.mrf.mxu0
      %v6761 = vadd.f32 0.0, %v6760
      %v6762 = vpop.f32.mrf.mxu0
      %v6763 = vpop.f32.mrf.mxu0
      %v6764 = vadd.f32 0.0, %v6763
      %v6765 = vpop.f32.mrf.mxu0
      %6766 = vmatprep.mubr.bf16.mxu0 0
      %6767 = vmatmul.mubr.bf16.gmra.mxu0 %v6589
      %v6768 = vpop.f32.mrf.mxu0
      %v6769 = vadd.f32 0.0, %v6768
      %v6770 = vpop.f32.mrf.mxu0
      %v6771 = vpop.f32.mrf.mxu0
      %v6772 = vadd.f32 0.0, %v6771
      %v6773 = vpop.f32.mrf.mxu0
      %6774 = vmatprep.mubr.bf16.mxu0 0
      %6775 = vmatmul.mubr.bf16.gmra.mxu0 %v6592
      %v6776 = vpop.f32.mrf.mxu0
      %v6777 = vadd.f32 0.0, %v6776
      %v6778 = vpop.f32.mrf.mxu0
      %v6779 = vpop.f32.mrf.mxu0
      %v6780 = vadd.f32 0.0, %v6779
      %v6781 = vpop.f32.mrf.mxu0
      %6782 = vmatprep.mubr.bf16.mxu0 0
      %6783 = vmatmul.mubr.bf16.gmra.mxu0 %v6595
      %v6784 = vpop.f32.mrf.mxu0
      %v6785 = vadd.f32 0.0, %v6784
      %v6786 = vpop.f32.mrf.mxu0
      %v6787 = vpop.f32.mrf.mxu0
      %v6788 = vadd.f32 0.0, %v6787
      %v6789 = vpop.f32.mrf.mxu0
      %6790 = vmatprep.mubr.bf16.mxu0 0
      %6791 = vmatmul.mubr.bf16.gmra.mxu0 %v6598
      %v6792 = vpop.f32.mrf.mxu0
      %v6793 = vadd.f32 0.0, %v6792
      %v6794 = vpop.f32.mrf.mxu0
      %v6795 = vpop.f32.mrf.mxu0
      %v6796 = vadd.f32 0.0, %v6795
      %v6797 = vpop.f32.mrf.mxu0
      %6798 = vmatprep.mubr.bf16.mxu0 0
      %6799 = vmatmul.mubr.bf16.gmra.mxu0 %v6601
      %v6800 = vpop.f32.mrf.mxu0
      %v6801 = vadd.f32 0.0, %v6800
      %v6802 = vpop.f32.mrf.mxu0
      %v6803 = vpop.f32.mrf.mxu0
      %v6804 = vadd.f32 0.0, %v6803
      %v6805 = vpop.f32.mrf.mxu0
      %6806 = vmatprep.mubr.bf16.mxu0 0
      %6807 = vmatmul.mubr.bf16.gmra.mxu0 %v6604
      %v6808 = vpop.f32.mrf.mxu0
      %v6809 = vadd.f32 0.0, %v6808
      %v6810 = vpop.f32.mrf.mxu0
      %v6811 = vpop.f32.mrf.mxu0
      %v6812 = vadd.f32 0.0, %v6811
      %v6813 = vpop.f32.mrf.mxu0
      %6814 = vmatprep.mubr.bf16.mxu0 0
      %6815 = vmatmul.mubr.bf16.gmra.mxu0 %v6607
      %v6816 = vpop.f32.mrf.mxu0
      %v6817 = vadd.f32 0.0, %v6816
      %v6818 = vpop.f32.mrf.mxu0
      %v6819 = vpop.f32.mrf.mxu0
      %v6820 = vadd.f32 0.0, %v6819
      %v6821 = vpop.f32.mrf.mxu0
      %6822 = vmatprep.mubr.bf16.mxu0 0
      %6823 = vmatmul.mubr.bf16.gmra.mxu0 %v6610
      %v6824 = vpop.f32.mrf.mxu0
      %v6825 = vadd.f32 0.0, %v6824
      %v6826 = vpop.f32.mrf.mxu0
      %v6827 = vpop.f32.mrf.mxu0
      %v6828 = vadd.f32 0.0, %v6827
      %v6829 = vpop.f32.mrf.mxu0
      %6830 = vmatprep.mubr.bf16.mxu0 0
      %6831 = vmatmul.mubr.bf16.gmra.mxu0 %v6613
      %v6832 = vpop.f32.mrf.mxu0
      %v6833 = vadd.f32 0.0, %v6832
      %v6834 = vpop.f32.mrf.mxu0
      %v6835 = vpop.f32.mrf.mxu0
      %v6836 = vadd.f32 0.0, %v6835
      %v6837 = vpop.f32.mrf.mxu0
      %6838 = vmatprep.mubr.bf16.mxu0 0
      %6839 = vmatmul.mubr.bf16.gmra.mxu0 %v6616
      %v6840 = vpop.f32.mrf.mxu0
      %v6841 = vadd.f32 0.0, %v6840
      %v6842 = vpop.f32.mrf.mxu0
      %v6843 = vpop.f32.mrf.mxu0
      %v6844 = vadd.f32 0.0, %v6843
      %v6845 = vpop.f32.mrf.mxu0
      %6846 = vmatprep.mubr.bf16.mxu0 0
      %6847 = vmatmul.mubr.bf16.gmra.mxu0 %v6619
      %v6848 = vpop.f32.mrf.mxu0
      %v6849 = vadd.f32 0.0, %v6848
      %v6850 = vpop.f32.mrf.mxu0
      %v6851 = vpop.f32.mrf.mxu0
      %v6852 = vadd.f32 0.0, %v6851
      %v6853 = vpop.f32.mrf.mxu0
      %6854 = vmatprep.mubr.bf16.mxu0 0
      %6855 = vmatmul.mubr.bf16.gmra.mxu0 %v6622
      %v6856 = vpop.f32.mrf.mxu0
      %v6857 = vadd.f32 0.0, %v6856
      %v6858 = vpop.f32.mrf.mxu0
      %v6859 = vpop.f32.mrf.mxu0
      %v6860 = vadd.f32 0.0, %v6859
      %v6861 = vpop.f32.mrf.mxu0
      %6862 = vmatprep.mubr.bf16.mxu0 0
      %6863 = vmatmul.mubr.bf16.gmra.mxu0 %v6625
      %v6864 = vpop.f32.mrf.mxu0
      %v6865 = vadd.f32 0.0, %v6864
      %v6866 = vpop.f32.mrf.mxu0
      %v6867 = vpop.f32.mrf.mxu0
      %v6868 = vpop.f32.mrf.mxu0
      %6869 = vdwg.mxu0
      %v6870 = vadd.f32 %v6221, %v6665
      %v6871 = vadd.f32 %v6222, %v6668
      %v6872 = vadd.f32 %v6223, %v6673
      %v6873 = vadd.f32 %v6224, %v6676
      %v6874 = vadd.f32 %v6225, %v6681
      %v6875 = vadd.f32 %v6226, %v6684
      %v6876 = vadd.f32 %v6227, %v6689
      %v6877 = vadd.f32 %v6228, %v6692
      %v6878 = vadd.f32 %v6229, %v6697
      %v6879 = vadd.f32 %v6230, %v6700
      %v6880 = vadd.f32 %v6231, %v6705
      %v6881 = vadd.f32 %v6232, %v6708
      %v6882 = vadd.f32 %v6233, %v6713
      %v6883 = vadd.f32 %v6234, %v6716
      %v6884 = vadd.f32 %v6235, %v6721
      %v6885 = vadd.f32 %v6236, %v6724
      %v6886 = vadd.f32 %v6237, %v6729
      %v6887 = vadd.f32 %v6238, %v6732
      %v6888 = vadd.f32 %v6239, %v6737
      %v6889 = vadd.f32 %v6240, %v6740
      %v6890 = vadd.f32 %v6241, %v6745
      %v6891 = vadd.f32 %v6242, %v6748
      %v6892 = vadd.f32 %v6243, %v6753
      %v6893 = vadd.f32 %v6244, %v6756
      %v6894 = vadd.f32 %v6245, %v6761
      %v6895 = vadd.f32 %v6246, %v6764
      %v6896 = vadd.f32 %v6247, %v6769
      %v6897 = vadd.f32 %v6248, %v6772
      %v6898 = vadd.f32 %v6249, %v6777
      %v6899 = vadd.f32 %v6250, %v6780
      %v6900 = vadd.f32 %v6251, %v6785
      %v6901 = vadd.f32 %v6252, %v6788
      %v6902 = vadd.f32 %v6253, %v6793
      %v6903 = vadd.f32 %v6254, %v6796
      %v6904 = vadd.f32 %v6255, %v6801
      %v6905 = vadd.f32 %v6256, %v6804
      %v6906 = vadd.f32 %v6257, %v6809
      %v6907 = vadd.f32 %v6258, %v6812
      %v6908 = vadd.f32 %v6259, %v6817
      %v6909 = vadd.f32 %v6260, %v6820
      %v6910 = vadd.f32 %v6261, %v6825
      %v6911 = vadd.f32 %v6262, %v6828
      %v6912 = vadd.f32 %v6263, %v6833
      %v6913 = vadd.f32 %v6264, %v6836
      %v6914 = vadd.f32 %v6265, %v6841
      %v6915 = vadd.f32 %v6266, %v6844
      %v6916 = vadd.f32 %v6267, %v6849
      %v6917 = vadd.f32 %v6268, %v6852
      %v6918 = vadd.f32 %v6269, %v6857
      %v6919 = vadd.f32 %v6270, %v6860
      %v6920 = vadd.f32 %v6271, %v6865
      %s6921 = sadd.s32 4, %s4648
      %s6922 = smul.addr %s6921, 4
      %s6923 = scalar_lea.vmem %s184, %s6922
      %v6924 = vld [vmem:[%s6923] sm:$0xf]
      %v6925 = vld [vmem:[%s6923 + $0x4] sm:$0xf]
      %v6926 = vld [vmem:[%s6923 + $0x8] sm:$0xf]
      %v6927 = vld [vmem:[%s6923 + $0xc] sm:$0x1]
      %v6928 = vld [vmem:[%s6923 + $0x20] sm:$0xf]
      %v6929 = vld [vmem:[%s6923 + $0x24] sm:$0xf]
      %v6930 = vld [vmem:[%s6923 + $0x28] sm:$0xf]
      %v6931 = vld [vmem:[%s6923 + $0x2c] sm:$0x1]
      %v6932 = vld [vmem:[%s6923 + $0x40] sm:$0xf]
      %v6933 = vld [vmem:[%s6923 + $0x44] sm:$0xf]
      %v6934 = vld [vmem:[%s6923 + $0x48] sm:$0xf]
      %v6935 = vld [vmem:[%s6923 + $0x4c] sm:$0x1]
      %v6936 = vld [vmem:[%s6923 + $0x60] sm:$0xf]
      %v6937 = vld [vmem:[%s6923 + $0x64] sm:$0xf]
      %v6938 = vld [vmem:[%s6923 + $0x68] sm:$0xf]
      %v6939 = vld [vmem:[%s6923 + $0x6c] sm:$0x1]
      %v6940 = vld [vmem:[%s6923 + $0x80] sm:$0xf]
      %v6941 = vld [vmem:[%s6923 + $0x84] sm:$0xf]
      %v6942 = vld [vmem:[%s6923 + $0x88] sm:$0xf]
      %v6943 = vld [vmem:[%s6923 + $0x8c] sm:$0x1]
      %v6944 = vld [vmem:[%s6923 + $0xa0] sm:$0xf]
      %v6945 = vld [vmem:[%s6923 + $0xa4] sm:$0xf]
      %v6946 = vld [vmem:[%s6923 + $0xa8] sm:$0xf]
      %v6947 = vld [vmem:[%s6923 + $0xac] sm:$0x1]
      %v6948 = vld [vmem:[%s6923 + $0xc0] sm:$0xf]
      %v6949 = vld [vmem:[%s6923 + $0xc4] sm:$0xf]
      %v6950 = vld [vmem:[%s6923 + $0xc8] sm:$0xf]
      %v6951 = vld [vmem:[%s6923 + $0xcc] sm:$0x1]
      %v6952 = vld [vmem:[%s6923 + $0xe0] sm:$0xf]
      %v6953 = vld [vmem:[%s6923 + $0xe4] sm:$0xf]
      %v6954 = vld [vmem:[%s6923 + $0xe8] sm:$0xf]
      %v6955 = vld [vmem:[%s6923 + $0xec] sm:$0x1]
      %v6956 = vld [vmem:[%s6923 + $0x100] sm:$0xf]
      %v6957 = vld [vmem:[%s6923 + $0x104] sm:$0xf]
      %v6958 = vld [vmem:[%s6923 + $0x108] sm:$0xf]
      %v6959 = vld [vmem:[%s6923 + $0x10c] sm:$0x1]
      %v6960 = vld [vmem:[%s6923 + $0x120] sm:$0xf]
      %v6961 = vld [vmem:[%s6923 + $0x124] sm:$0xf]
      %v6962 = vld [vmem:[%s6923 + $0x128] sm:$0xf]
      %v6963 = vld [vmem:[%s6923 + $0x12c] sm:$0x1]
      %v6964 = vld [vmem:[%s6923 + $0x140] sm:$0xf]
      %v6965 = vld [vmem:[%s6923 + $0x144] sm:$0xf]
      %v6966 = vld [vmem:[%s6923 + $0x148] sm:$0xf]
      %v6967 = vld [vmem:[%s6923 + $0x14c] sm:$0x1]
      %v6968 = vld [vmem:[%s6923 + $0x160] sm:$0xf]
      %v6969 = vld [vmem:[%s6923 + $0x164] sm:$0xf]
      %v6970 = vld [vmem:[%s6923 + $0x168] sm:$0xf]
      %v6971 = vld [vmem:[%s6923 + $0x16c] sm:$0x1]
      %v6972 = vld [vmem:[%s6923 + $0x180] sm:$0xf]
      %v6973 = vld [vmem:[%s6923 + $0x184] sm:$0xf]
      %v6974 = vld [vmem:[%s6923 + $0x188] sm:$0xf]
      %v6975 = vld [vmem:[%s6923 + $0x18c] sm:$0x1]
      %v6976 = vld [vmem:[%s6923 + $0x1a0] sm:$0xf]
      %v6977 = vld [vmem:[%s6923 + $0x1a4] sm:$0xf]
      %v6978 = vld [vmem:[%s6923 + $0x1a8] sm:$0xf]
      %v6979 = vld [vmem:[%s6923 + $0x1ac] sm:$0x1]
      %v6980 = vld [vmem:[%s6923 + $0x1c0] sm:$0xf]
      %v6981 = vld [vmem:[%s6923 + $0x1c4] sm:$0xf]
      %v6982 = vld [vmem:[%s6923 + $0x1c8] sm:$0xf]
      %v6983 = vld [vmem:[%s6923 + $0x1cc] sm:$0x1]
      %v6984 = vld [vmem:[%s6923 + $0x1e0] sm:$0xf]
      %v6985 = vld [vmem:[%s6923 + $0x1e4] sm:$0xf]
      %v6986 = vld [vmem:[%s6923 + $0x1e8] sm:$0xf]
      %v6987 = vld [vmem:[%s6923 + $0x1ec] sm:$0x1]
      %v6988 = vld [vmem:[%s6923 + $0x200] sm:$0xf]
      %v6989 = vld [vmem:[%s6923 + $0x204] sm:$0xf]
      %v6990 = vld [vmem:[%s6923 + $0x208] sm:$0xf]
      %v6991 = vld [vmem:[%s6923 + $0x20c] sm:$0x1]
      %s6992 = scalar_lea.vmem %s1, 108
      %v6993 = vld [vmem:[%s6992] sm:$0xf]
      %v6994 = vld [vmem:[%s6992 + $0x4] sm:$0xf]
      %v6995 = vld [vmem:[%s6992 + $0x8] sm:$0x3]
      %v7047 = vunpack.c.l.b16 %v6924
      %v7048 = vunpack.c.l.b16 %v6925
      %v7049 = vunpack.c.l.b16 %v6926
      %v7050 = vunpack.c.l.b16 %v6928
      %v7051 = vunpack.c.l.b16 %v6929
      %v7052 = vunpack.c.l.b16 %v6930
      %v7053 = vunpack.c.l.b16 %v6932
      %v7054 = vunpack.c.l.b16 %v6933
      %v7055 = vunpack.c.l.b16 %v6934
      %v7056 = vunpack.c.l.b16 %v6936
      %v7057 = vunpack.c.l.b16 %v6937
      %v7058 = vunpack.c.l.b16 %v6938
      %v7059 = vunpack.c.l.b16 %v6940
      %v7060 = vunpack.c.l.b16 %v6941
      %v7061 = vunpack.c.l.b16 %v6942
      %v7062 = vunpack.c.l.b16 %v6944
      %v7063 = vunpack.c.l.b16 %v6945
      %v7064 = vunpack.c.l.b16 %v6946
      %v7065 = vunpack.c.l.b16 %v6948
      %v7066 = vunpack.c.l.b16 %v6949
      %v7067 = vunpack.c.l.b16 %v6950
      %v7068 = vunpack.c.l.b16 %v6952
      %v7069 = vunpack.c.l.b16 %v6953
      %v7070 = vunpack.c.l.b16 %v6954
      %v7071 = vunpack.c.l.b16 %v6956
      %v7072 = vunpack.c.l.b16 %v6957
      %v7073 = vunpack.c.l.b16 %v6958
      %v7074 = vunpack.c.l.b16 %v6960
      %v7075 = vunpack.c.l.b16 %v6961
      %v7076 = vunpack.c.l.b16 %v6962
      %v7077 = vunpack.c.l.b16 %v6964
      %v7078 = vunpack.c.l.b16 %v6965
      %v7079 = vunpack.c.l.b16 %v6966
      %v7080 = vunpack.c.l.b16 %v6968
      %v7081 = vunpack.c.l.b16 %v6969
      %v7082 = vunpack.c.l.b16 %v6970
      %v7083 = vunpack.c.l.b16 %v6972
      %v7084 = vunpack.c.l.b16 %v6973
      %v7085 = vunpack.c.l.b16 %v6974
      %v7086 = vunpack.c.l.b16 %v6976
      %v7087 = vunpack.c.l.b16 %v6977
      %v7088 = vunpack.c.l.b16 %v6978
      %v7089 = vunpack.c.l.b16 %v6980
      %v7090 = vunpack.c.l.b16 %v6981
      %v7091 = vunpack.c.l.b16 %v6982
      %v7092 = vunpack.c.l.b16 %v6984
      %v7093 = vunpack.c.l.b16 %v6985
      %v7094 = vunpack.c.l.b16 %v6986
      %v7095 = vunpack.c.l.b16 %v6988
      %v7096 = vunpack.c.l.b16 %v6989
      %v7097 = vunpack.c.l.b16 %v6990
      %v7098 = vpack.c.b16 %v7048, %v7047
      %v7099 = vpack.c.b16 %v7050, %v7049
      %v7100 = vpack.c.b16 %v7052, %v7051
      %v7101 = vpack.c.b16 %v7054, %v7053
      %v7102 = vpack.c.b16 %v7056, %v7055
      %v7103 = vpack.c.b16 %v7058, %v7057
      %v7104 = vpack.c.b16 %v7060, %v7059
      %v7105 = vpack.c.b16 %v7062, %v7061
      %v7106 = vpack.c.b16 %v7064, %v7063
      %v7107 = vpack.c.b16 %v7066, %v7065
      %v7108 = vpack.c.b16 %v7068, %v7067
      %v7109 = vpack.c.b16 %v7070, %v7069
      %v7110 = vpack.c.b16 %v7072, %v7071
      %v7111 = vpack.c.b16 %v7074, %v7073
      %v7112 = vpack.c.b16 %v7076, %v7075
      %v7113 = vpack.c.b16 %v7078, %v7077
      %v7114 = vpack.c.b16 %v7080, %v7079
      %v7115 = vpack.c.b16 %v7082, %v7081
      %v7116 = vpack.c.b16 %v7084, %v7083
      %v7117 = vpack.c.b16 %v7086, %v7085
      %v7118 = vpack.c.b16 %v7088, %v7087
      %v7119 = vpack.c.b16 %v7090, %v7089
      %v7120 = vpack.c.b16 %v7092, %v7091
      %v7121 = vpack.c.b16 %v7094, %v7093
      %v7122 = vpack.c.b16 %v7096, %v7095
      %v7123 = vpack.c.b16 %v7097, %v7097
      %v7127 = vunpack.c.l.b16 %v6993
      %v7128 = vunpack.c.l.b16 %v6994
      %v7129 = vunpack.c.l.b16 %v6995
      %v7130 = vpack.c.b16 %v7128, %v7127
      %v7131 = vpack.c.b16 %v7129, %v7129
      %v7134 = vsel %vm941, %v7098, 0
      %v7137 = vsel %vm941, %v7099, 0
      %v7140 = vsel %vm941, %v7100, 0
      %v7143 = vsel %vm941, %v7101, 0
      %v7146 = vsel %vm941, %v7102, 0
      %v7149 = vsel %vm941, %v7103, 0
      %v7152 = vsel %vm941, %v7104, 0
      %v7155 = vsel %vm941, %v7105, 0
      %v7158 = vsel %vm941, %v7106, 0
      %v7161 = vsel %vm941, %v7107, 0
      %v7164 = vsel %vm941, %v7108, 0
      %v7167 = vsel %vm941, %v7109, 0
      %v7170 = vsel %vm941, %v7110, 0
      %v7173 = vsel %vm941, %v7111, 0
      %v7176 = vsel %vm941, %v7112, 0
      %v7179 = vsel %vm941, %v7113, 0
      %v7182 = vsel %vm941, %v7114, 0
      %v7185 = vsel %vm941, %v7115, 0
      %v7188 = vsel %vm941, %v7116, 0
      %v7191 = vsel %vm941, %v7117, 0
      %v7194 = vsel %vm941, %v7118, 0
      %v7197 = vsel %vm941, %v7119, 0
      %v7200 = vsel %vm941, %v7120, 0
      %v7203 = vsel %vm941, %v7121, 0
      %v7206 = vsel %vm941, %v7122, 0
      %v7209 = vsel %vm941, %v7123, 0
      %v7212 = vsel %vm1020, %v7131, 0
      %7214 = vmatprep.subr.bf16.mxu0 0
      %7215 = vmatpush1.bf16.msra.mxu0 0
      %7216 = vmatprep.subr.bf16.mxu0 0
      %7217 = vmatpush1.bf16.msra.mxu0 0
      %7218 = vmatprep.subr.bf16.mxu0 0
      %7219 = vmatpush1.bf16.msra.mxu0 0
      %7220 = vmatprep.subr.bf16.mxu0 0
      %7221 = vmatpush1.bf16.msra.mxu0 0
      %7222 = vmatprep.subr.bf16.mxu0 0
      %7223 = vmatpush1.bf16.msra.mxu0 0
      %7224 = vmatprep.subr.bf16.mxu0 0
      %7225 = vmatpush1.bf16.msra.mxu0 0
      %7226 = vmatprep.subr.bf16.mxu0 0
      %7227 = vmatpush1.bf16.msra.mxu0 %v7212
      %7228 = vmatprep.subr.bf16.mxu0 0
      %7229 = vmatpush1.bf16.msra.mxu0 %v7130
      %7230 = vmatprep.subr.bf16.mxu0 0
      %7231 = vmatpush2.bf16.msra.mxu0 0
      %7232 = vmatprep.subr.bf16.mxu0 0
      %7233 = vmatpush2.bf16.msra.mxu0 0
      %7234 = vmatprep.subr.bf16.mxu0 0
      %7235 = vmatpush2.bf16.msra.mxu0 0
      %7236 = vmatprep.subr.bf16.mxu0 0
      %7237 = vmatpush2.bf16.msra.mxu0 0
      %7238 = vmatprep.subr.bf16.mxu0 0
      %7239 = vmatpush2.bf16.msra.mxu0 0
      %7240 = vmatprep.subr.bf16.mxu0 0
      %7241 = vmatpush2.bf16.msra.mxu0 0
      %7242 = vmatprep.subr.bf16.mxu0 0
      %7243 = vmatpush2.bf16.msra.mxu0 0
      %7244 = vmatprep.subr.bf16.mxu0 0
      %7245 = vmatpush2.bf16.msra.mxu0 0
      %7246 = vmatprep.mubr.bf16.mxu0 0
      %7247 = vmatmul.mubr.bf16.gmra.mxu0 %v7134
      %v7248 = vpop.f32.mrf.mxu0
      %v7249 = vadd.f32 0.0, %v7248
      %v7250 = vpop.f32.mrf.mxu0
      %v7251 = vpop.f32.mrf.mxu0
      %v7252 = vadd.f32 0.0, %v7251
      %v7253 = vpop.f32.mrf.mxu0
      %7254 = vmatprep.mubr.bf16.mxu0 0
      %7255 = vmatmul.mubr.bf16.gmra.mxu0 %v7137
      %v7256 = vpop.f32.mrf.mxu0
      %v7257 = vadd.f32 0.0, %v7256
      %v7258 = vpop.f32.mrf.mxu0
      %v7259 = vpop.f32.mrf.mxu0
      %v7260 = vadd.f32 0.0, %v7259
      %v7261 = vpop.f32.mrf.mxu0
      %7262 = vmatprep.mubr.bf16.mxu0 0
      %7263 = vmatmul.mubr.bf16.gmra.mxu0 %v7140
      %v7264 = vpop.f32.mrf.mxu0
      %v7265 = vadd.f32 0.0, %v7264
      %v7266 = vpop.f32.mrf.mxu0
      %v7267 = vpop.f32.mrf.mxu0
      %v7268 = vadd.f32 0.0, %v7267
      %v7269 = vpop.f32.mrf.mxu0
      %7270 = vmatprep.mubr.bf16.mxu0 0
      %7271 = vmatmul.mubr.bf16.gmra.mxu0 %v7143
      %v7272 = vpop.f32.mrf.mxu0
      %v7273 = vadd.f32 0.0, %v7272
      %v7274 = vpop.f32.mrf.mxu0
      %v7275 = vpop.f32.mrf.mxu0
      %v7276 = vadd.f32 0.0, %v7275
      %v7277 = vpop.f32.mrf.mxu0
      %7278 = vmatprep.mubr.bf16.mxu0 0
      %7279 = vmatmul.mubr.bf16.gmra.mxu0 %v7146
      %v7280 = vpop.f32.mrf.mxu0
      %v7281 = vadd.f32 0.0, %v7280
      %v7282 = vpop.f32.mrf.mxu0
      %v7283 = vpop.f32.mrf.mxu0
      %v7284 = vadd.f32 0.0, %v7283
      %v7285 = vpop.f32.mrf.mxu0
      %7286 = vmatprep.mubr.bf16.mxu0 0
      %7287 = vmatmul.mubr.bf16.gmra.mxu0 %v7149
      %v7288 = vpop.f32.mrf.mxu0
      %v7289 = vadd.f32 0.0, %v7288
      %v7290 = vpop.f32.mrf.mxu0
      %v7291 = vpop.f32.mrf.mxu0
      %v7292 = vadd.f32 0.0, %v7291
      %v7293 = vpop.f32.mrf.mxu0
      %7294 = vmatprep.mubr.bf16.mxu0 0
      %7295 = vmatmul.mubr.bf16.gmra.mxu0 %v7152
      %v7296 = vpop.f32.mrf.mxu0
      %v7297 = vadd.f32 0.0, %v7296
      %v7298 = vpop.f32.mrf.mxu0
      %v7299 = vpop.f32.mrf.mxu0
      %v7300 = vadd.f32 0.0, %v7299
      %v7301 = vpop.f32.mrf.mxu0
      %7302 = vmatprep.mubr.bf16.mxu0 0
      %7303 = vmatmul.mubr.bf16.gmra.mxu0 %v7155
      %v7304 = vpop.f32.mrf.mxu0
      %v7305 = vadd.f32 0.0, %v7304
      %v7306 = vpop.f32.mrf.mxu0
      %v7307 = vpop.f32.mrf.mxu0
      %v7308 = vadd.f32 0.0, %v7307
      %v7309 = vpop.f32.mrf.mxu0
      %7310 = vmatprep.mubr.bf16.mxu0 0
      %7311 = vmatmul.mubr.bf16.gmra.mxu0 %v7158
      %v7312 = vpop.f32.mrf.mxu0
      %v7313 = vadd.f32 0.0, %v7312
      %v7314 = vpop.f32.mrf.mxu0
      %v7315 = vpop.f32.mrf.mxu0
      %v7316 = vadd.f32 0.0, %v7315
      %v7317 = vpop.f32.mrf.mxu0
      %7318 = vmatprep.mubr.bf16.mxu0 0
      %7319 = vmatmul.mubr.bf16.gmra.mxu0 %v7161
      %v7320 = vpop.f32.mrf.mxu0
      %v7321 = vadd.f32 0.0, %v7320
      %v7322 = vpop.f32.mrf.mxu0
      %v7323 = vpop.f32.mrf.mxu0
      %v7324 = vadd.f32 0.0, %v7323
      %v7325 = vpop.f32.mrf.mxu0
      %7326 = vmatprep.mubr.bf16.mxu0 0
      %7327 = vmatmul.mubr.bf16.gmra.mxu0 %v7164
      %v7328 = vpop.f32.mrf.mxu0
      %v7329 = vadd.f32 0.0, %v7328
      %v7330 = vpop.f32.mrf.mxu0
      %v7331 = vpop.f32.mrf.mxu0
      %v7332 = vadd.f32 0.0, %v7331
      %v7333 = vpop.f32.mrf.mxu0
      %7334 = vmatprep.mubr.bf16.mxu0 0
      %7335 = vmatmul.mubr.bf16.gmra.mxu0 %v7167
      %v7336 = vpop.f32.mrf.mxu0
      %v7337 = vadd.f32 0.0, %v7336
      %v7338 = vpop.f32.mrf.mxu0
      %v7339 = vpop.f32.mrf.mxu0
      %v7340 = vadd.f32 0.0, %v7339
      %v7341 = vpop.f32.mrf.mxu0
      %7342 = vmatprep.mubr.bf16.mxu0 0
      %7343 = vmatmul.mubr.bf16.gmra.mxu0 %v7170
      %v7344 = vpop.f32.mrf.mxu0
      %v7345 = vadd.f32 0.0, %v7344
      %v7346 = vpop.f32.mrf.mxu0
      %v7347 = vpop.f32.mrf.mxu0
      %v7348 = vadd.f32 0.0, %v7347
      %v7349 = vpop.f32.mrf.mxu0
      %7350 = vmatprep.mubr.bf16.mxu0 0
      %7351 = vmatmul.mubr.bf16.gmra.mxu0 %v7173
      %v7352 = vpop.f32.mrf.mxu0
      %v7353 = vadd.f32 0.0, %v7352
      %v7354 = vpop.f32.mrf.mxu0
      %v7355 = vpop.f32.mrf.mxu0
      %v7356 = vadd.f32 0.0, %v7355
      %v7357 = vpop.f32.mrf.mxu0
      %7358 = vmatprep.mubr.bf16.mxu0 0
      %7359 = vmatmul.mubr.bf16.gmra.mxu0 %v7176
      %v7360 = vpop.f32.mrf.mxu0
      %v7361 = vadd.f32 0.0, %v7360
      %v7362 = vpop.f32.mrf.mxu0
      %v7363 = vpop.f32.mrf.mxu0
      %v7364 = vadd.f32 0.0, %v7363
      %v7365 = vpop.f32.mrf.mxu0
      %7366 = vmatprep.mubr.bf16.mxu0 0
      %7367 = vmatmul.mubr.bf16.gmra.mxu0 %v7179
      %v7368 = vpop.f32.mrf.mxu0
      %v7369 = vadd.f32 0.0, %v7368
      %v7370 = vpop.f32.mrf.mxu0
      %v7371 = vpop.f32.mrf.mxu0
      %v7372 = vadd.f32 0.0, %v7371
      %v7373 = vpop.f32.mrf.mxu0
      %7374 = vmatprep.mubr.bf16.mxu0 0
      %7375 = vmatmul.mubr.bf16.gmra.mxu0 %v7182
      %v7376 = vpop.f32.mrf.mxu0
      %v7377 = vadd.f32 0.0, %v7376
      %v7378 = vpop.f32.mrf.mxu0
      %v7379 = vpop.f32.mrf.mxu0
      %v7380 = vadd.f32 0.0, %v7379
      %v7381 = vpop.f32.mrf.mxu0
      %7382 = vmatprep.mubr.bf16.mxu0 0
      %7383 = vmatmul.mubr.bf16.gmra.mxu0 %v7185
      %v7384 = vpop.f32.mrf.mxu0
      %v7385 = vadd.f32 0.0, %v7384
      %v7386 = vpop.f32.mrf.mxu0
      %v7387 = vpop.f32.mrf.mxu0
      %v7388 = vadd.f32 0.0, %v7387
      %v7389 = vpop.f32.mrf.mxu0
      %7390 = vmatprep.mubr.bf16.mxu0 0
      %7391 = vmatmul.mubr.bf16.gmra.mxu0 %v7188
      %v7392 = vpop.f32.mrf.mxu0
      %v7393 = vadd.f32 0.0, %v7392
      %v7394 = vpop.f32.mrf.mxu0
      %v7395 = vpop.f32.mrf.mxu0
      %v7396 = vadd.f32 0.0, %v7395
      %v7397 = vpop.f32.mrf.mxu0
      %7398 = vmatprep.mubr.bf16.mxu0 0
      %7399 = vmatmul.mubr.bf16.gmra.mxu0 %v7191
      %v7400 = vpop.f32.mrf.mxu0
      %v7401 = vadd.f32 0.0, %v7400
      %v7402 = vpop.f32.mrf.mxu0
      %v7403 = vpop.f32.mrf.mxu0
      %v7404 = vadd.f32 0.0, %v7403
      %v7405 = vpop.f32.mrf.mxu0
      %7406 = vmatprep.mubr.bf16.mxu0 0
      %7407 = vmatmul.mubr.bf16.gmra.mxu0 %v7194
      %v7408 = vpop.f32.mrf.mxu0
      %v7409 = vadd.f32 0.0, %v7408
      %v7410 = vpop.f32.mrf.mxu0
      %v7411 = vpop.f32.mrf.mxu0
      %v7412 = vadd.f32 0.0, %v7411
      %v7413 = vpop.f32.mrf.mxu0
      %7414 = vmatprep.mubr.bf16.mxu0 0
      %7415 = vmatmul.mubr.bf16.gmra.mxu0 %v7197
      %v7416 = vpop.f32.mrf.mxu0
      %v7417 = vadd.f32 0.0, %v7416
      %v7418 = vpop.f32.mrf.mxu0
      %v7419 = vpop.f32.mrf.mxu0
      %v7420 = vadd.f32 0.0, %v7419
      %v7421 = vpop.f32.mrf.mxu0
      %7422 = vmatprep.mubr.bf16.mxu0 0
      %7423 = vmatmul.mubr.bf16.gmra.mxu0 %v7200
      %v7424 = vpop.f32.mrf.mxu0
      %v7425 = vadd.f32 0.0, %v7424
      %v7426 = vpop.f32.mrf.mxu0
      %v7427 = vpop.f32.mrf.mxu0
      %v7428 = vadd.f32 0.0, %v7427
      %v7429 = vpop.f32.mrf.mxu0
      %7430 = vmatprep.mubr.bf16.mxu0 0
      %7431 = vmatmul.mubr.bf16.gmra.mxu0 %v7203
      %v7432 = vpop.f32.mrf.mxu0
      %v7433 = vadd.f32 0.0, %v7432
      %v7434 = vpop.f32.mrf.mxu0
      %v7435 = vpop.f32.mrf.mxu0
      %v7436 = vadd.f32 0.0, %v7435
      %v7437 = vpop.f32.mrf.mxu0
      %7438 = vmatprep.mubr.bf16.mxu0 0
      %7439 = vmatmul.mubr.bf16.gmra.mxu0 %v7206
      %v7440 = vpop.f32.mrf.mxu0
      %v7441 = vadd.f32 0.0, %v7440
      %v7442 = vpop.f32.mrf.mxu0
      %v7443 = vpop.f32.mrf.mxu0
      %v7444 = vadd.f32 0.0, %v7443
      %v7445 = vpop.f32.mrf.mxu0
      %7446 = vmatprep.mubr.bf16.mxu0 0
      %7447 = vmatmul.mubr.bf16.gmra.mxu0 %v7209
      %v7448 = vpop.f32.mrf.mxu0
      %v7449 = vadd.f32 0.0, %v7448
      %v7450 = vpop.f32.mrf.mxu0
      %v7451 = vpop.f32.mrf.mxu0
      %v7452 = vpop.f32.mrf.mxu0
      %7453 = vdwg.mxu0
      %v7454 = vadd.f32 %v6870, %v7249
      %v7455 = vadd.f32 %v6871, %v7252
      %v7456 = vadd.f32 %v6872, %v7257
      %v7457 = vadd.f32 %v6873, %v7260
      %v7458 = vadd.f32 %v6874, %v7265
      %v7459 = vadd.f32 %v6875, %v7268
      %v7460 = vadd.f32 %v6876, %v7273
      %v7461 = vadd.f32 %v6877, %v7276
      %v7462 = vadd.f32 %v6878, %v7281
      %v7463 = vadd.f32 %v6879, %v7284
      %v7464 = vadd.f32 %v6880, %v7289
      %v7465 = vadd.f32 %v6881, %v7292
      %v7466 = vadd.f32 %v6882, %v7297
      %v7467 = vadd.f32 %v6883, %v7300
      %v7468 = vadd.f32 %v6884, %v7305
      %v7469 = vadd.f32 %v6885, %v7308
      %v7470 = vadd.f32 %v6886, %v7313
      %v7471 = vadd.f32 %v6887, %v7316
      %v7472 = vadd.f32 %v6888, %v7321
      %v7473 = vadd.f32 %v6889, %v7324
      %v7474 = vadd.f32 %v6890, %v7329
      %v7475 = vadd.f32 %v6891, %v7332
      %v7476 = vadd.f32 %v6892, %v7337
      %v7477 = vadd.f32 %v6893, %v7340
      %v7478 = vadd.f32 %v6894, %v7345
      %v7479 = vadd.f32 %v6895, %v7348
      %v7480 = vadd.f32 %v6896, %v7353
      %v7481 = vadd.f32 %v6897, %v7356
      %v7482 = vadd.f32 %v6898, %v7361
      %v7483 = vadd.f32 %v6899, %v7364
      %v7484 = vadd.f32 %v6900, %v7369
      %v7485 = vadd.f32 %v6901, %v7372
      %v7486 = vadd.f32 %v6902, %v7377
      %v7487 = vadd.f32 %v6903, %v7380
      %v7488 = vadd.f32 %v6904, %v7385
      %v7489 = vadd.f32 %v6905, %v7388
      %v7490 = vadd.f32 %v6906, %v7393
      %v7491 = vadd.f32 %v6907, %v7396
      %v7492 = vadd.f32 %v6908, %v7401
      %v7493 = vadd.f32 %v6909, %v7404
      %v7494 = vadd.f32 %v6910, %v7409
      %v7495 = vadd.f32 %v6911, %v7412
      %v7496 = vadd.f32 %v6912, %v7417
      %v7497 = vadd.f32 %v6913, %v7420
      %v7498 = vadd.f32 %v6914, %v7425
      %v7499 = vadd.f32 %v6915, %v7428
      %v7500 = vadd.f32 %v6916, %v7433
      %v7501 = vadd.f32 %v6917, %v7436
      %v7502 = vadd.f32 %v6918, %v7441
      %v7503 = vadd.f32 %v6919, %v7444
      %v7504 = vadd.f32 %v6920, %v7449
      %v7506 = vshrl.u32 %v6924, 16
      %v7508 = vrot.slane %v7506, 4
      %v7509 = vshll.u32 %v6924, 16
      %v7511 = vrot.slane %v7509, 5
      %v7512 = vor.u32 %v7508, %v7511
      %v7513 = vrot.slane %v7512, 4
      %v7515 = vshll.u32 %v6925, 16
      %v7517 = vrot.slane %v7515, 5
      %v7518 = vsel %vm272, %v7513, %v7517
      %v7519 = vshrl.u32 %v6925, 16
      %v7521 = vrot.slane %v7519, 4
      %v7522 = vor.u32 %v7521, %v7517
      %v7523 = vrot.slane %v7522, 4
      %v7525 = vshll.u32 %v6926, 16
      %v7527 = vrot.slane %v7525, 5
      %v7528 = vsel %vm272, %v7523, %v7527
      %v7529 = vshrl.u32 %v6926, 16
      %v7531 = vrot.slane %v7529, 4
      %v7532 = vor.u32 %v7531, %v7527
      %v7533 = vrot.slane %v7532, 4
      %v7535 = vshll.u32 %v6927, 16
      %v7537 = vrot.slane %v7535, 5
      %v7538 = vsel %vm272, %v7533, %v7537
      %v7540 = vshrl.u32 %v6928, 16
      %v7542 = vrot.slane %v7540, 4
      %v7543 = vshll.u32 %v6928, 16
      %v7545 = vrot.slane %v7543, 5
      %v7546 = vor.u32 %v7542, %v7545
      %v7547 = vrot.slane %v7546, 4
      %v7549 = vshll.u32 %v6929, 16
      %v7551 = vrot.slane %v7549, 5
      %v7552 = vsel %vm272, %v7547, %v7551
      %v7553 = vshrl.u32 %v6929, 16
      %v7555 = vrot.slane %v7553, 4
      %v7556 = vor.u32 %v7555, %v7551
      %v7557 = vrot.slane %v7556, 4
      %v7559 = vshll.u32 %v6930, 16
      %v7561 = vrot.slane %v7559, 5
      %v7562 = vsel %vm272, %v7557, %v7561
      %v7563 = vshrl.u32 %v6930, 16
      %v7565 = vrot.slane %v7563, 4
      %v7566 = vor.u32 %v7565, %v7561
      %v7567 = vrot.slane %v7566, 4
      %v7569 = vshll.u32 %v6931, 16
      %v7571 = vrot.slane %v7569, 5
      %v7572 = vsel %vm272, %v7567, %v7571
      %v7574 = vshrl.u32 %v6932, 16
      %v7576 = vrot.slane %v7574, 4
      %v7577 = vshll.u32 %v6932, 16
      %v7579 = vrot.slane %v7577, 5
      %v7580 = vor.u32 %v7576, %v7579
      %v7581 = vrot.slane %v7580, 4
      %v7583 = vshll.u32 %v6933, 16
      %v7585 = vrot.slane %v7583, 5
      %v7586 = vsel %vm272, %v7581, %v7585
      %v7587 = vshrl.u32 %v6933, 16
      %v7589 = vrot.slane %v7587, 4
      %v7590 = vor.u32 %v7589, %v7585
      %v7591 = vrot.slane %v7590, 4
      %v7593 = vshll.u32 %v6934, 16
      %v7595 = vrot.slane %v7593, 5
      %v7596 = vsel %vm272, %v7591, %v7595
      %v7597 = vshrl.u32 %v6934, 16
      %v7599 = vrot.slane %v7597, 4
      %v7600 = vor.u32 %v7599, %v7595
      %v7601 = vrot.slane %v7600, 4
      %v7603 = vshll.u32 %v6935, 16
      %v7605 = vrot.slane %v7603, 5
      %v7606 = vsel %vm272, %v7601, %v7605
      %v7608 = vshrl.u32 %v6936, 16
      %v7610 = vrot.slane %v7608, 4
      %v7611 = vshll.u32 %v6936, 16
      %v7613 = vrot.slane %v7611, 5
      %v7614 = vor.u32 %v7610, %v7613
      %v7615 = vrot.slane %v7614, 4
      %v7617 = vshll.u32 %v6937, 16
      %v7619 = vrot.slane %v7617, 5
      %v7620 = vsel %vm272, %v7615, %v7619
      %v7621 = vshrl.u32 %v6937, 16
      %v7623 = vrot.slane %v7621, 4
      %v7624 = vor.u32 %v7623, %v7619
      %v7625 = vrot.slane %v7624, 4
      %v7627 = vshll.u32 %v6938, 16
      %v7629 = vrot.slane %v7627, 5
      %v7630 = vsel %vm272, %v7625, %v7629
      %v7631 = vshrl.u32 %v6938, 16
      %v7633 = vrot.slane %v7631, 4
      %v7634 = vor.u32 %v7633, %v7629
      %v7635 = vrot.slane %v7634, 4
      %v7637 = vshll.u32 %v6939, 16
      %v7639 = vrot.slane %v7637, 5
      %v7640 = vsel %vm272, %v7635, %v7639
      %v7642 = vshrl.u32 %v6940, 16
      %v7644 = vrot.slane %v7642, 4
      %v7645 = vshll.u32 %v6940, 16
      %v7647 = vrot.slane %v7645, 5
      %v7648 = vor.u32 %v7644, %v7647
      %v7649 = vrot.slane %v7648, 4
      %v7651 = vshll.u32 %v6941, 16
      %v7653 = vrot.slane %v7651, 5
      %v7654 = vsel %vm272, %v7649, %v7653
      %v7655 = vshrl.u32 %v6941, 16
      %v7657 = vrot.slane %v7655, 4
      %v7658 = vor.u32 %v7657, %v7653
      %v7659 = vrot.slane %v7658, 4
      %v7661 = vshll.u32 %v6942, 16
      %v7663 = vrot.slane %v7661, 5
      %v7664 = vsel %vm272, %v7659, %v7663
      %v7665 = vshrl.u32 %v6942, 16
      %v7667 = vrot.slane %v7665, 4
      %v7668 = vor.u32 %v7667, %v7663
      %v7669 = vrot.slane %v7668, 4
      %v7671 = vshll.u32 %v6943, 16
      %v7673 = vrot.slane %v7671, 5
      %v7674 = vsel %vm272, %v7669, %v7673
      %v7676 = vshrl.u32 %v6944, 16
      %v7678 = vrot.slane %v7676, 4
      %v7679 = vshll.u32 %v6944, 16
      %v7681 = vrot.slane %v7679, 5
      %v7682 = vor.u32 %v7678, %v7681
      %v7683 = vrot.slane %v7682, 4
      %v7685 = vshll.u32 %v6945, 16
      %v7687 = vrot.slane %v7685, 5
      %v7688 = vsel %vm272, %v7683, %v7687
      %v7689 = vshrl.u32 %v6945, 16
      %v7691 = vrot.slane %v7689, 4
      %v7692 = vor.u32 %v7691, %v7687
      %v7693 = vrot.slane %v7692, 4
      %v7695 = vshll.u32 %v6946, 16
      %v7697 = vrot.slane %v7695, 5
      %v7698 = vsel %vm272, %v7693, %v7697
      %v7699 = vshrl.u32 %v6946, 16
      %v7701 = vrot.slane %v7699, 4
      %v7702 = vor.u32 %v7701, %v7697
      %v7703 = vrot.slane %v7702, 4
      %v7705 = vshll.u32 %v6947, 16
      %v7707 = vrot.slane %v7705, 5
      %v7708 = vsel %vm272, %v7703, %v7707
      %v7710 = vshrl.u32 %v6948, 16
      %v7712 = vrot.slane %v7710, 4
      %v7713 = vshll.u32 %v6948, 16
      %v7715 = vrot.slane %v7713, 5
      %v7716 = vor.u32 %v7712, %v7715
      %v7717 = vrot.slane %v7716, 4
      %v7719 = vshll.u32 %v6949, 16
      %v7721 = vrot.slane %v7719, 5
      %v7722 = vsel %vm272, %v7717, %v7721
      %v7723 = vshrl.u32 %v6949, 16
      %v7725 = vrot.slane %v7723, 4
      %v7726 = vor.u32 %v7725, %v7721
      %v7727 = vrot.slane %v7726, 4
      %v7729 = vshll.u32 %v6950, 16
      %v7731 = vrot.slane %v7729, 5
      %v7732 = vsel %vm272, %v7727, %v7731
      %v7733 = vshrl.u32 %v6950, 16
      %v7735 = vrot.slane %v7733, 4
      %v7736 = vor.u32 %v7735, %v7731
      %v7737 = vrot.slane %v7736, 4
      %v7739 = vshll.u32 %v6951, 16
      %v7741 = vrot.slane %v7739, 5
      %v7742 = vsel %vm272, %v7737, %v7741
      %v7744 = vshrl.u32 %v6952, 16
      %v7746 = vrot.slane %v7744, 4
      %v7747 = vshll.u32 %v6952, 16
      %v7749 = vrot.slane %v7747, 5
      %v7750 = vor.u32 %v7746, %v7749
      %v7751 = vrot.slane %v7750, 4
      %v7753 = vshll.u32 %v6953, 16
      %v7755 = vrot.slane %v7753, 5
      %v7756 = vsel %vm272, %v7751, %v7755
      %v7757 = vshrl.u32 %v6953, 16
      %v7759 = vrot.slane %v7757, 4
      %v7760 = vor.u32 %v7759, %v7755
      %v7761 = vrot.slane %v7760, 4
      %v7763 = vshll.u32 %v6954, 16
      %v7765 = vrot.slane %v7763, 5
      %v7766 = vsel %vm272, %v7761, %v7765
      %v7767 = vshrl.u32 %v6954, 16
      %v7769 = vrot.slane %v7767, 4
      %v7770 = vor.u32 %v7769, %v7765
      %v7771 = vrot.slane %v7770, 4
      %v7773 = vshll.u32 %v6955, 16
      %v7775 = vrot.slane %v7773, 5
      %v7776 = vsel %vm272, %v7771, %v7775
      %v7778 = vshrl.u32 %v6956, 16
      %v7780 = vrot.slane %v7778, 4
      %v7781 = vshll.u32 %v6956, 16
      %v7783 = vrot.slane %v7781, 5
      %v7784 = vor.u32 %v7780, %v7783
      %v7785 = vrot.slane %v7784, 4
      %v7787 = vshll.u32 %v6957, 16
      %v7789 = vrot.slane %v7787, 5
      %v7790 = vsel %vm272, %v7785, %v7789
      %v7791 = vshrl.u32 %v6957, 16
      %v7793 = vrot.slane %v7791, 4
      %v7794 = vor.u32 %v7793, %v7789
      %v7795 = vrot.slane %v7794, 4
      %v7797 = vshll.u32 %v6958, 16
      %v7799 = vrot.slane %v7797, 5
      %v7800 = vsel %vm272, %v7795, %v7799
      %v7801 = vshrl.u32 %v6958, 16
      %v7803 = vrot.slane %v7801, 4
      %v7804 = vor.u32 %v7803, %v7799
      %v7805 = vrot.slane %v7804, 4
      %v7807 = vshll.u32 %v6959, 16
      %v7809 = vrot.slane %v7807, 5
      %v7810 = vsel %vm272, %v7805, %v7809
      %v7812 = vshrl.u32 %v6960, 16
      %v7814 = vrot.slane %v7812, 4
      %v7815 = vshll.u32 %v6960, 16
      %v7817 = vrot.slane %v7815, 5
      %v7818 = vor.u32 %v7814, %v7817
      %v7819 = vrot.slane %v7818, 4
      %v7821 = vshll.u32 %v6961, 16
      %v7823 = vrot.slane %v7821, 5
      %v7824 = vsel %vm272, %v7819, %v7823
      %v7825 = vshrl.u32 %v6961, 16
      %v7827 = vrot.slane %v7825, 4
      %v7828 = vor.u32 %v7827, %v7823
      %v7829 = vrot.slane %v7828, 4
      %v7831 = vshll.u32 %v6962, 16
      %v7833 = vrot.slane %v7831, 5
      %v7834 = vsel %vm272, %v7829, %v7833
      %v7835 = vshrl.u32 %v6962, 16
      %v7837 = vrot.slane %v7835, 4
      %v7838 = vor.u32 %v7837, %v7833
      %v7839 = vrot.slane %v7838, 4
      %v7841 = vshll.u32 %v6963, 16
      %v7843 = vrot.slane %v7841, 5
      %v7844 = vsel %vm272, %v7839, %v7843
      %v7846 = vshrl.u32 %v6964, 16
      %v7848 = vrot.slane %v7846, 4
      %v7849 = vshll.u32 %v6964, 16
      %v7851 = vrot.slane %v7849, 5
      %v7852 = vor.u32 %v7848, %v7851
      %v7853 = vrot.slane %v7852, 4
      %v7855 = vshll.u32 %v6965, 16
      %v7857 = vrot.slane %v7855, 5
      %v7858 = vsel %vm272, %v7853, %v7857
      %v7859 = vshrl.u32 %v6965, 16
      %v7861 = vrot.slane %v7859, 4
      %v7862 = vor.u32 %v7861, %v7857
      %v7863 = vrot.slane %v7862, 4
      %v7865 = vshll.u32 %v6966, 16
      %v7867 = vrot.slane %v7865, 5
      %v7868 = vsel %vm272, %v7863, %v7867
      %v7869 = vshrl.u32 %v6966, 16
      %v7871 = vrot.slane %v7869, 4
      %v7872 = vor.u32 %v7871, %v7867
      %v7873 = vrot.slane %v7872, 4
      %v7875 = vshll.u32 %v6967, 16
      %v7877 = vrot.slane %v7875, 5
      %v7878 = vsel %vm272, %v7873, %v7877
      %v7880 = vshrl.u32 %v6968, 16
      %v7882 = vrot.slane %v7880, 4
      %v7883 = vshll.u32 %v6968, 16
      %v7885 = vrot.slane %v7883, 5
      %v7886 = vor.u32 %v7882, %v7885
      %v7887 = vrot.slane %v7886, 4
      %v7889 = vshll.u32 %v6969, 16
      %v7891 = vrot.slane %v7889, 5
      %v7892 = vsel %vm272, %v7887, %v7891
      %v7893 = vshrl.u32 %v6969, 16
      %v7895 = vrot.slane %v7893, 4
      %v7896 = vor.u32 %v7895, %v7891
      %v7897 = vrot.slane %v7896, 4
      %v7899 = vshll.u32 %v6970, 16
      %v7901 = vrot.slane %v7899, 5
      %v7902 = vsel %vm272, %v7897, %v7901
      %v7903 = vshrl.u32 %v6970, 16
      %v7905 = vrot.slane %v7903, 4
      %v7906 = vor.u32 %v7905, %v7901
      %v7907 = vrot.slane %v7906, 4
      %v7909 = vshll.u32 %v6971, 16
      %v7911 = vrot.slane %v7909, 5
      %v7912 = vsel %vm272, %v7907, %v7911
      %v7914 = vshrl.u32 %v6972, 16
      %v7916 = vrot.slane %v7914, 4
      %v7917 = vshll.u32 %v6972, 16
      %v7919 = vrot.slane %v7917, 5
      %v7920 = vor.u32 %v7916, %v7919
      %v7921 = vrot.slane %v7920, 4
      %v7923 = vshll.u32 %v6973, 16
      %v7925 = vrot.slane %v7923, 5
      %v7926 = vsel %vm272, %v7921, %v7925
      %v7927 = vshrl.u32 %v6973, 16
      %v7929 = vrot.slane %v7927, 4
      %v7930 = vor.u32 %v7929, %v7925
      %v7931 = vrot.slane %v7930, 4
      %v7933 = vshll.u32 %v6974, 16
      %v7935 = vrot.slane %v7933, 5
      %v7936 = vsel %vm272, %v7931, %v7935
      %v7937 = vshrl.u32 %v6974, 16
      %v7939 = vrot.slane %v7937, 4
      %v7940 = vor.u32 %v7939, %v7935
      %v7941 = vrot.slane %v7940, 4
      %v7943 = vshll.u32 %v6975, 16
      %v7945 = vrot.slane %v7943, 5
      %v7946 = vsel %vm272, %v7941, %v7945
      %v7948 = vshrl.u32 %v6976, 16
      %v7950 = vrot.slane %v7948, 4
      %v7951 = vshll.u32 %v6976, 16
      %v7953 = vrot.slane %v7951, 5
      %v7954 = vor.u32 %v7950, %v7953
      %v7955 = vrot.slane %v7954, 4
      %v7957 = vshll.u32 %v6977, 16
      %v7959 = vrot.slane %v7957, 5
      %v7960 = vsel %vm272, %v7955, %v7959
      %v7961 = vshrl.u32 %v6977, 16
      %v7963 = vrot.slane %v7961, 4
      %v7964 = vor.u32 %v7963, %v7959
      %v7965 = vrot.slane %v7964, 4
      %v7967 = vshll.u32 %v6978, 16
      %v7969 = vrot.slane %v7967, 5
      %v7970 = vsel %vm272, %v7965, %v7969
      %v7971 = vshrl.u32 %v6978, 16
      %v7973 = vrot.slane %v7971, 4
      %v7974 = vor.u32 %v7973, %v7969
      %v7975 = vrot.slane %v7974, 4
      %v7977 = vshll.u32 %v6979, 16
      %v7979 = vrot.slane %v7977, 5
      %v7980 = vsel %vm272, %v7975, %v7979
      %v7982 = vshrl.u32 %v6980, 16
      %v7984 = vrot.slane %v7982, 4
      %v7985 = vshll.u32 %v6980, 16
      %v7987 = vrot.slane %v7985, 5
      %v7988 = vor.u32 %v7984, %v7987
      %v7989 = vrot.slane %v7988, 4
      %v7991 = vshll.u32 %v6981, 16
      %v7993 = vrot.slane %v7991, 5
      %v7994 = vsel %vm272, %v7989, %v7993
      %v7995 = vshrl.u32 %v6981, 16
      %v7997 = vrot.slane %v7995, 4
      %v7998 = vor.u32 %v7997, %v7993
      %v7999 = vrot.slane %v7998, 4
      %v8001 = vshll.u32 %v6982, 16
      %v8003 = vrot.slane %v8001, 5
      %v8004 = vsel %vm272, %v7999, %v8003
      %v8005 = vshrl.u32 %v6982, 16
      %v8007 = vrot.slane %v8005, 4
      %v8008 = vor.u32 %v8007, %v8003
      %v8009 = vrot.slane %v8008, 4
      %v8011 = vshll.u32 %v6983, 16
      %v8013 = vrot.slane %v8011, 5
      %v8014 = vsel %vm272, %v8009, %v8013
      %v8016 = vshrl.u32 %v6984, 16
      %v8018 = vrot.slane %v8016, 4
      %v8019 = vshll.u32 %v6984, 16
      %v8021 = vrot.slane %v8019, 5
      %v8022 = vor.u32 %v8018, %v8021
      %v8023 = vrot.slane %v8022, 4
      %v8025 = vshll.u32 %v6985, 16
      %v8027 = vrot.slane %v8025, 5
      %v8028 = vsel %vm272, %v8023, %v8027
      %v8029 = vshrl.u32 %v6985, 16
      %v8031 = vrot.slane %v8029, 4
      %v8032 = vor.u32 %v8031, %v8027
      %v8033 = vrot.slane %v8032, 4
      %v8035 = vshll.u32 %v6986, 16
      %v8037 = vrot.slane %v8035, 5
      %v8038 = vsel %vm272, %v8033, %v8037
      %v8039 = vshrl.u32 %v6986, 16
      %v8041 = vrot.slane %v8039, 4
      %v8042 = vor.u32 %v8041, %v8037
      %v8043 = vrot.slane %v8042, 4
      %v8045 = vshll.u32 %v6987, 16
      %v8047 = vrot.slane %v8045, 5
      %v8048 = vsel %vm272, %v8043, %v8047
      %v8050 = vshrl.u32 %v6988, 16
      %v8052 = vrot.slane %v8050, 4
      %v8053 = vshll.u32 %v6988, 16
      %v8055 = vrot.slane %v8053, 5
      %v8056 = vor.u32 %v8052, %v8055
      %v8057 = vrot.slane %v8056, 4
      %v8059 = vshll.u32 %v6989, 16
      %v8061 = vrot.slane %v8059, 5
      %v8062 = vsel %vm272, %v8057, %v8061
      %v8063 = vshrl.u32 %v6989, 16
      %v8065 = vrot.slane %v8063, 4
      %v8066 = vor.u32 %v8065, %v8061
      %v8067 = vrot.slane %v8066, 4
      %v8069 = vshll.u32 %v6990, 16
      %v8071 = vrot.slane %v8069, 5
      %v8072 = vsel %vm272, %v8067, %v8071
      %v8073 = vshrl.u32 %v6990, 16
      %v8075 = vrot.slane %v8073, 4
      %v8076 = vor.u32 %v8075, %v8071
      %v8077 = vrot.slane %v8076, 4
      %v8079 = vshll.u32 %v6991, 16
      %v8081 = vrot.slane %v8079, 5
      %v8082 = vsel %vm272, %v8077, %v8081
      %s8083 = scalar_lea.vmem %s1, 120
      %v8084 = vld [vmem:[%s8083] sm:$0xf]
      %v8085 = vld [vmem:[%s8083 + $0x4] sm:$0xf]
      %v8086 = vld [vmem:[%s8083 + $0x8] sm:$0x3]
      %v8087 = vunpack.c.l.b16 %v7518
      %v8088 = vunpack.c.l.b16 %v7528
      %v8089 = vunpack.c.l.b16 %v7538
      %v8090 = vunpack.c.l.b16 %v7552
      %v8091 = vunpack.c.l.b16 %v7562
      %v8092 = vunpack.c.l.b16 %v7572
      %v8093 = vunpack.c.l.b16 %v7586
      %v8094 = vunpack.c.l.b16 %v7596
      %v8095 = vunpack.c.l.b16 %v7606
      %v8096 = vunpack.c.l.b16 %v7620
      %v8097 = vunpack.c.l.b16 %v7630
      %v8098 = vunpack.c.l.b16 %v7640
      %v8099 = vunpack.c.l.b16 %v7654
      %v8100 = vunpack.c.l.b16 %v7664
      %v8101 = vunpack.c.l.b16 %v7674
      %v8102 = vunpack.c.l.b16 %v7688
      %v8103 = vunpack.c.l.b16 %v7698
      %v8104 = vunpack.c.l.b16 %v7708
      %v8105 = vunpack.c.l.b16 %v7722
      %v8106 = vunpack.c.l.b16 %v7732
      %v8107 = vunpack.c.l.b16 %v7742
      %v8108 = vunpack.c.l.b16 %v7756
      %v8109 = vunpack.c.l.b16 %v7766
      %v8110 = vunpack.c.l.b16 %v7776
      %v8111 = vunpack.c.l.b16 %v7790
      %v8112 = vunpack.c.l.b16 %v7800
      %v8113 = vunpack.c.l.b16 %v7810
      %v8114 = vunpack.c.l.b16 %v7824
      %v8115 = vunpack.c.l.b16 %v7834
      %v8116 = vunpack.c.l.b16 %v7844
      %v8117 = vunpack.c.l.b16 %v7858
      %v8118 = vunpack.c.l.b16 %v7868
      %v8119 = vunpack.c.l.b16 %v7878
      %v8120 = vunpack.c.l.b16 %v7892
      %v8121 = vunpack.c.l.b16 %v7902
      %v8122 = vunpack.c.l.b16 %v7912
      %v8123 = vunpack.c.l.b16 %v7926
      %v8124 = vunpack.c.l.b16 %v7936
      %v8125 = vunpack.c.l.b16 %v7946
      %v8126 = vunpack.c.l.b16 %v7960
      %v8127 = vunpack.c.l.b16 %v7970
      %v8128 = vunpack.c.l.b16 %v7980
      %v8129 = vunpack.c.l.b16 %v7994
      %v8130 = vunpack.c.l.b16 %v8004
      %v8131 = vunpack.c.l.b16 %v8014
      %v8132 = vunpack.c.l.b16 %v8028
      %v8133 = vunpack.c.l.b16 %v8038
      %v8134 = vunpack.c.l.b16 %v8048
      %v8135 = vunpack.c.l.b16 %v8062
      %v8136 = vunpack.c.l.b16 %v8072
      %v8137 = vunpack.c.l.b16 %v8082
      %v8138 = vpack.c.b16 %v8088, %v8087
      %v8139 = vpack.c.b16 %v8090, %v8089
      %v8140 = vpack.c.b16 %v8092, %v8091
      %v8141 = vpack.c.b16 %v8094, %v8093
      %v8142 = vpack.c.b16 %v8096, %v8095
      %v8143 = vpack.c.b16 %v8098, %v8097
      %v8144 = vpack.c.b16 %v8100, %v8099
      %v8145 = vpack.c.b16 %v8102, %v8101
      %v8146 = vpack.c.b16 %v8104, %v8103
      %v8147 = vpack.c.b16 %v8106, %v8105
      %v8148 = vpack.c.b16 %v8108, %v8107
      %v8149 = vpack.c.b16 %v8110, %v8109
      %v8150 = vpack.c.b16 %v8112, %v8111
      %v8151 = vpack.c.b16 %v8114, %v8113
      %v8152 = vpack.c.b16 %v8116, %v8115
      %v8153 = vpack.c.b16 %v8118, %v8117
      %v8154 = vpack.c.b16 %v8120, %v8119
      %v8155 = vpack.c.b16 %v8122, %v8121
      %v8156 = vpack.c.b16 %v8124, %v8123
      %v8157 = vpack.c.b16 %v8126, %v8125
      %v8158 = vpack.c.b16 %v8128, %v8127
      %v8159 = vpack.c.b16 %v8130, %v8129
      %v8160 = vpack.c.b16 %v8132, %v8131
      %v8161 = vpack.c.b16 %v8134, %v8133
      %v8162 = vpack.c.b16 %v8136, %v8135
      %v8163 = vpack.c.b16 %v8137, %v8137
      %v8167 = vunpack.c.l.b16 %v8084
      %v8168 = vunpack.c.l.b16 %v8085
      %v8169 = vunpack.c.l.b16 %v8086
      %v8170 = vpack.c.b16 %v8168, %v8167
      %v8171 = vpack.c.b16 %v8169, %v8169
      %v8174 = vsel %vm941, %v8138, 0
      %v8177 = vsel %vm941, %v8139, 0
      %v8180 = vsel %vm941, %v8140, 0
      %v8183 = vsel %vm941, %v8141, 0
      %v8186 = vsel %vm941, %v8142, 0
      %v8189 = vsel %vm941, %v8143, 0
      %v8192 = vsel %vm941, %v8144, 0
      %v8195 = vsel %vm941, %v8145, 0
      %v8198 = vsel %vm941, %v8146, 0
      %v8201 = vsel %vm941, %v8147, 0
      %v8204 = vsel %vm941, %v8148, 0
      %v8207 = vsel %vm941, %v8149, 0
      %v8210 = vsel %vm941, %v8150, 0
      %v8213 = vsel %vm941, %v8151, 0
      %v8216 = vsel %vm941, %v8152, 0
      %v8219 = vsel %vm941, %v8153, 0
      %v8222 = vsel %vm941, %v8154, 0
      %v8225 = vsel %vm941, %v8155, 0
      %v8228 = vsel %vm941, %v8156, 0
      %v8231 = vsel %vm941, %v8157, 0
      %v8234 = vsel %vm941, %v8158, 0
      %v8237 = vsel %vm941, %v8159, 0
      %v8240 = vsel %vm941, %v8160, 0
      %v8243 = vsel %vm941, %v8161, 0
      %v8246 = vsel %vm941, %v8162, 0
      %v8249 = vsel %vm941, %v8163, 0
      %v8252 = vsel %vm1020, %v8171, 0
      %8254 = vmatprep.subr.bf16.mxu0 0
      %8255 = vmatpush1.bf16.msra.mxu0 0
      %8256 = vmatprep.subr.bf16.mxu0 0
      %8257 = vmatpush1.bf16.msra.mxu0 0
      %8258 = vmatprep.subr.bf16.mxu0 0
      %8259 = vmatpush1.bf16.msra.mxu0 0
      %8260 = vmatprep.subr.bf16.mxu0 0
      %8261 = vmatpush1.bf16.msra.mxu0 0
      %8262 = vmatprep.subr.bf16.mxu0 0
      %8263 = vmatpush1.bf16.msra.mxu0 0
      %8264 = vmatprep.subr.bf16.mxu0 0
      %8265 = vmatpush1.bf16.msra.mxu0 0
      %8266 = vmatprep.subr.bf16.mxu0 0
      %8267 = vmatpush1.bf16.msra.mxu0 %v8252
      %8268 = vmatprep.subr.bf16.mxu0 0
      %8269 = vmatpush1.bf16.msra.mxu0 %v8170
      %8270 = vmatprep.subr.bf16.mxu0 0
      %8271 = vmatpush2.bf16.msra.mxu0 0
      %8272 = vmatprep.subr.bf16.mxu0 0
      %8273 = vmatpush2.bf16.msra.mxu0 0
      %8274 = vmatprep.subr.bf16.mxu0 0
      %8275 = vmatpush2.bf16.msra.mxu0 0
      %8276 = vmatprep.subr.bf16.mxu0 0
      %8277 = vmatpush2.bf16.msra.mxu0 0
      %8278 = vmatprep.subr.bf16.mxu0 0
      %8279 = vmatpush2.bf16.msra.mxu0 0
      %8280 = vmatprep.subr.bf16.mxu0 0
      %8281 = vmatpush2.bf16.msra.mxu0 0
      %8282 = vmatprep.subr.bf16.mxu0 0
      %8283 = vmatpush2.bf16.msra.mxu0 0
      %8284 = vmatprep.subr.bf16.mxu0 0
      %8285 = vmatpush2.bf16.msra.mxu0 0
      %8286 = vmatprep.mubr.bf16.mxu0 0
      %8287 = vmatmul.mubr.bf16.gmra.mxu0 %v8174
      %v8288 = vpop.f32.mrf.mxu0
      %v8289 = vadd.f32 0.0, %v8288
      %v8290 = vpop.f32.mrf.mxu0
      %v8291 = vpop.f32.mrf.mxu0
      %v8292 = vadd.f32 0.0, %v8291
      %v8293 = vpop.f32.mrf.mxu0
      %8294 = vmatprep.mubr.bf16.mxu0 0
      %8295 = vmatmul.mubr.bf16.gmra.mxu0 %v8177
      %v8296 = vpop.f32.mrf.mxu0
      %v8297 = vadd.f32 0.0, %v8296
      %v8298 = vpop.f32.mrf.mxu0
      %v8299 = vpop.f32.mrf.mxu0
      %v8300 = vadd.f32 0.0, %v8299
      %v8301 = vpop.f32.mrf.mxu0
      %8302 = vmatprep.mubr.bf16.mxu0 0
      %8303 = vmatmul.mubr.bf16.gmra.mxu0 %v8180
      %v8304 = vpop.f32.mrf.mxu0
      %v8305 = vadd.f32 0.0, %v8304
      %v8306 = vpop.f32.mrf.mxu0
      %v8307 = vpop.f32.mrf.mxu0
      %v8308 = vadd.f32 0.0, %v8307
      %v8309 = vpop.f32.mrf.mxu0
      %8310 = vmatprep.mubr.bf16.mxu0 0
      %8311 = vmatmul.mubr.bf16.gmra.mxu0 %v8183
      %v8312 = vpop.f32.mrf.mxu0
      %v8313 = vadd.f32 0.0, %v8312
      %v8314 = vpop.f32.mrf.mxu0
      %v8315 = vpop.f32.mrf.mxu0
      %v8316 = vadd.f32 0.0, %v8315
      %v8317 = vpop.f32.mrf.mxu0
      %8318 = vmatprep.mubr.bf16.mxu0 0
      %8319 = vmatmul.mubr.bf16.gmra.mxu0 %v8186
      %v8320 = vpop.f32.mrf.mxu0
      %v8321 = vadd.f32 0.0, %v8320
      %v8322 = vpop.f32.mrf.mxu0
      %v8323 = vpop.f32.mrf.mxu0
      %v8324 = vadd.f32 0.0, %v8323
      %v8325 = vpop.f32.mrf.mxu0
      %8326 = vmatprep.mubr.bf16.mxu0 0
      %8327 = vmatmul.mubr.bf16.gmra.mxu0 %v8189
      %v8328 = vpop.f32.mrf.mxu0
      %v8329 = vadd.f32 0.0, %v8328
      %v8330 = vpop.f32.mrf.mxu0
      %v8331 = vpop.f32.mrf.mxu0
      %v8332 = vadd.f32 0.0, %v8331
      %v8333 = vpop.f32.mrf.mxu0
      %8334 = vmatprep.mubr.bf16.mxu0 0
      %8335 = vmatmul.mubr.bf16.gmra.mxu0 %v8192
      %v8336 = vpop.f32.mrf.mxu0
      %v8337 = vadd.f32 0.0, %v8336
      %v8338 = vpop.f32.mrf.mxu0
      %v8339 = vpop.f32.mrf.mxu0
      %v8340 = vadd.f32 0.0, %v8339
      %v8341 = vpop.f32.mrf.mxu0
      %8342 = vmatprep.mubr.bf16.mxu0 0
      %8343 = vmatmul.mubr.bf16.gmra.mxu0 %v8195
      %v8344 = vpop.f32.mrf.mxu0
      %v8345 = vadd.f32 0.0, %v8344
      %v8346 = vpop.f32.mrf.mxu0
      %v8347 = vpop.f32.mrf.mxu0
      %v8348 = vadd.f32 0.0, %v8347
      %v8349 = vpop.f32.mrf.mxu0
      %8350 = vmatprep.mubr.bf16.mxu0 0
      %8351 = vmatmul.mubr.bf16.gmra.mxu0 %v8198
      %v8352 = vpop.f32.mrf.mxu0
      %v8353 = vadd.f32 0.0, %v8352
      %v8354 = vpop.f32.mrf.mxu0
      %v8355 = vpop.f32.mrf.mxu0
      %v8356 = vadd.f32 0.0, %v8355
      %v8357 = vpop.f32.mrf.mxu0
      %8358 = vmatprep.mubr.bf16.mxu0 0
      %8359 = vmatmul.mubr.bf16.gmra.mxu0 %v8201
      %v8360 = vpop.f32.mrf.mxu0
      %v8361 = vadd.f32 0.0, %v8360
      %v8362 = vpop.f32.mrf.mxu0
      %v8363 = vpop.f32.mrf.mxu0
      %v8364 = vadd.f32 0.0, %v8363
      %v8365 = vpop.f32.mrf.mxu0
      %8366 = vmatprep.mubr.bf16.mxu0 0
      %8367 = vmatmul.mubr.bf16.gmra.mxu0 %v8204
      %v8368 = vpop.f32.mrf.mxu0
      %v8369 = vadd.f32 0.0, %v8368
      %v8370 = vpop.f32.mrf.mxu0
      %v8371 = vpop.f32.mrf.mxu0
      %v8372 = vadd.f32 0.0, %v8371
      %v8373 = vpop.f32.mrf.mxu0
      %8374 = vmatprep.mubr.bf16.mxu0 0
      %8375 = vmatmul.mubr.bf16.gmra.mxu0 %v8207
      %v8376 = vpop.f32.mrf.mxu0
      %v8377 = vadd.f32 0.0, %v8376
      %v8378 = vpop.f32.mrf.mxu0
      %v8379 = vpop.f32.mrf.mxu0
      %v8380 = vadd.f32 0.0, %v8379
      %v8381 = vpop.f32.mrf.mxu0
      %8382 = vmatprep.mubr.bf16.mxu0 0
      %8383 = vmatmul.mubr.bf16.gmra.mxu0 %v8210
      %v8384 = vpop.f32.mrf.mxu0
      %v8385 = vadd.f32 0.0, %v8384
      %v8386 = vpop.f32.mrf.mxu0
      %v8387 = vpop.f32.mrf.mxu0
      %v8388 = vadd.f32 0.0, %v8387
      %v8389 = vpop.f32.mrf.mxu0
      %8390 = vmatprep.mubr.bf16.mxu0 0
      %8391 = vmatmul.mubr.bf16.gmra.mxu0 %v8213
      %v8392 = vpop.f32.mrf.mxu0
      %v8393 = vadd.f32 0.0, %v8392
      %v8394 = vpop.f32.mrf.mxu0
      %v8395 = vpop.f32.mrf.mxu0
      %v8396 = vadd.f32 0.0, %v8395
      %v8397 = vpop.f32.mrf.mxu0
      %8398 = vmatprep.mubr.bf16.mxu0 0
      %8399 = vmatmul.mubr.bf16.gmra.mxu0 %v8216
      %v8400 = vpop.f32.mrf.mxu0
      %v8401 = vadd.f32 0.0, %v8400
      %v8402 = vpop.f32.mrf.mxu0
      %v8403 = vpop.f32.mrf.mxu0
      %v8404 = vadd.f32 0.0, %v8403
      %v8405 = vpop.f32.mrf.mxu0
      %8406 = vmatprep.mubr.bf16.mxu0 0
      %8407 = vmatmul.mubr.bf16.gmra.mxu0 %v8219
      %v8408 = vpop.f32.mrf.mxu0
      %v8409 = vadd.f32 0.0, %v8408
      %v8410 = vpop.f32.mrf.mxu0
      %v8411 = vpop.f32.mrf.mxu0
      %v8412 = vadd.f32 0.0, %v8411
      %v8413 = vpop.f32.mrf.mxu0
      %8414 = vmatprep.mubr.bf16.mxu0 0
      %8415 = vmatmul.mubr.bf16.gmra.mxu0 %v8222
      %v8416 = vpop.f32.mrf.mxu0
      %v8417 = vadd.f32 0.0, %v8416
      %v8418 = vpop.f32.mrf.mxu0
      %v8419 = vpop.f32.mrf.mxu0
      %v8420 = vadd.f32 0.0, %v8419
      %v8421 = vpop.f32.mrf.mxu0
      %8422 = vmatprep.mubr.bf16.mxu0 0
      %8423 = vmatmul.mubr.bf16.gmra.mxu0 %v8225
      %v8424 = vpop.f32.mrf.mxu0
      %v8425 = vadd.f32 0.0, %v8424
      %v8426 = vpop.f32.mrf.mxu0
      %v8427 = vpop.f32.mrf.mxu0
      %v8428 = vadd.f32 0.0, %v8427
      %v8429 = vpop.f32.mrf.mxu0
      %8430 = vmatprep.mubr.bf16.mxu0 0
      %8431 = vmatmul.mubr.bf16.gmra.mxu0 %v8228
      %v8432 = vpop.f32.mrf.mxu0
      %v8433 = vadd.f32 0.0, %v8432
      %v8434 = vpop.f32.mrf.mxu0
      %v8435 = vpop.f32.mrf.mxu0
      %v8436 = vadd.f32 0.0, %v8435
      %v8437 = vpop.f32.mrf.mxu0
      %8438 = vmatprep.mubr.bf16.mxu0 0
      %8439 = vmatmul.mubr.bf16.gmra.mxu0 %v8231
      %v8440 = vpop.f32.mrf.mxu0
      %v8441 = vadd.f32 0.0, %v8440
      %v8442 = vpop.f32.mrf.mxu0
      %v8443 = vpop.f32.mrf.mxu0
      %v8444 = vadd.f32 0.0, %v8443
      %v8445 = vpop.f32.mrf.mxu0
      %8446 = vmatprep.mubr.bf16.mxu0 0
      %8447 = vmatmul.mubr.bf16.gmra.mxu0 %v8234
      %v8448 = vpop.f32.mrf.mxu0
      %v8449 = vadd.f32 0.0, %v8448
      %v8450 = vpop.f32.mrf.mxu0
      %v8451 = vpop.f32.mrf.mxu0
      %v8452 = vadd.f32 0.0, %v8451
      %v8453 = vpop.f32.mrf.mxu0
      %8454 = vmatprep.mubr.bf16.mxu0 0
      %8455 = vmatmul.mubr.bf16.gmra.mxu0 %v8237
      %v8456 = vpop.f32.mrf.mxu0
      %v8457 = vadd.f32 0.0, %v8456
      %v8458 = vpop.f32.mrf.mxu0
      %v8459 = vpop.f32.mrf.mxu0
      %v8460 = vadd.f32 0.0, %v8459
      %v8461 = vpop.f32.mrf.mxu0
      %8462 = vmatprep.mubr.bf16.mxu0 0
      %8463 = vmatmul.mubr.bf16.gmra.mxu0 %v8240
      %v8464 = vpop.f32.mrf.mxu0
      %v8465 = vadd.f32 0.0, %v8464
      %v8466 = vpop.f32.mrf.mxu0
      %v8467 = vpop.f32.mrf.mxu0
      %v8468 = vadd.f32 0.0, %v8467
      %v8469 = vpop.f32.mrf.mxu0
      %8470 = vmatprep.mubr.bf16.mxu0 0
      %8471 = vmatmul.mubr.bf16.gmra.mxu0 %v8243
      %v8472 = vpop.f32.mrf.mxu0
      %v8473 = vadd.f32 0.0, %v8472
      %v8474 = vpop.f32.mrf.mxu0
      %v8475 = vpop.f32.mrf.mxu0
      %v8476 = vadd.f32 0.0, %v8475
      %v8477 = vpop.f32.mrf.mxu0
      %8478 = vmatprep.mubr.bf16.mxu0 0
      %8479 = vmatmul.mubr.bf16.gmra.mxu0 %v8246
      %v8480 = vpop.f32.mrf.mxu0
      %v8481 = vadd.f32 0.0, %v8480
      %v8482 = vpop.f32.mrf.mxu0
      %v8483 = vpop.f32.mrf.mxu0
      %v8484 = vadd.f32 0.0, %v8483
      %v8485 = vpop.f32.mrf.mxu0
      %8486 = vmatprep.mubr.bf16.mxu0 0
      %8487 = vmatmul.mubr.bf16.gmra.mxu0 %v8249
      %v8488 = vpop.f32.mrf.mxu0
      %v8489 = vadd.f32 0.0, %v8488
      %v8490 = vpop.f32.mrf.mxu0
      %v8491 = vpop.f32.mrf.mxu0
      %v8492 = vpop.f32.mrf.mxu0
      %8493 = vdwg.mxu0
      %v8494 = vadd.f32 %v7454, %v8289
      %v8495 = vadd.f32 %v7455, %v8292
      %v8496 = vadd.f32 %v7456, %v8297
      %v8497 = vadd.f32 %v7457, %v8300
      %v8498 = vadd.f32 %v7458, %v8305
      %v8499 = vadd.f32 %v7459, %v8308
      %v8500 = vadd.f32 %v7460, %v8313
      %v8501 = vadd.f32 %v7461, %v8316
      %v8502 = vadd.f32 %v7462, %v8321
      %v8503 = vadd.f32 %v7463, %v8324
      %v8504 = vadd.f32 %v7464, %v8329
      %v8505 = vadd.f32 %v7465, %v8332
      %v8506 = vadd.f32 %v7466, %v8337
      %v8507 = vadd.f32 %v7467, %v8340
      %v8508 = vadd.f32 %v7468, %v8345
      %v8509 = vadd.f32 %v7469, %v8348
      %v8510 = vadd.f32 %v7470, %v8353
      %v8511 = vadd.f32 %v7471, %v8356
      %v8512 = vadd.f32 %v7472, %v8361
      %v8513 = vadd.f32 %v7473, %v8364
      %v8514 = vadd.f32 %v7474, %v8369
      %v8515 = vadd.f32 %v7475, %v8372
      %v8516 = vadd.f32 %v7476, %v8377
      %v8517 = vadd.f32 %v7477, %v8380
      %v8518 = vadd.f32 %v7478, %v8385
      %v8519 = vadd.f32 %v7479, %v8388
      %v8520 = vadd.f32 %v7480, %v8393
      %v8521 = vadd.f32 %v7481, %v8396
      %v8522 = vadd.f32 %v7482, %v8401
      %v8523 = vadd.f32 %v7483, %v8404
      %v8524 = vadd.f32 %v7484, %v8409
      %v8525 = vadd.f32 %v7485, %v8412
      %v8526 = vadd.f32 %v7486, %v8417
      %v8527 = vadd.f32 %v7487, %v8420
      %v8528 = vadd.f32 %v7488, %v8425
      %v8529 = vadd.f32 %v7489, %v8428
      %v8530 = vadd.f32 %v7490, %v8433
      %v8531 = vadd.f32 %v7491, %v8436
      %v8532 = vadd.f32 %v7492, %v8441
      %v8533 = vadd.f32 %v7493, %v8444
      %v8534 = vadd.f32 %v7494, %v8449
      %v8535 = vadd.f32 %v7495, %v8452
      %v8536 = vadd.f32 %v7496, %v8457
      %v8537 = vadd.f32 %v7497, %v8460
      %v8538 = vadd.f32 %v7498, %v8465
      %v8539 = vadd.f32 %v7499, %v8468
      %v8540 = vadd.f32 %v7500, %v8473
      %v8541 = vadd.f32 %v7501, %v8476
      %v8542 = vadd.f32 %v7502, %v8481
      %v8543 = vadd.f32 %v7503, %v8484
      %v8544 = vadd.f32 %v7504, %v8489
      %v8562 = vrot.slane %v6924, 5
      %v8563 = vrot.slane %v8562, 4
      %v8564 = vrot.slane %v6925, 5
      %v8565 = vsel %vm1741, %v8563, %v8564
      %v8566 = vrot.slane %v8564, 4
      %v8567 = vrot.slane %v6926, 5
      %v8568 = vsel %vm1741, %v8566, %v8567
      %v8569 = vrot.slane %v8567, 4
      %v8570 = vrot.slane %v6927, 5
      %v8571 = vsel %vm1741, %v8569, %v8570
      %v8572 = vrot.slane %v6928, 5
      %v8573 = vrot.slane %v8572, 4
      %v8574 = vrot.slane %v6929, 5
      %v8575 = vsel %vm1741, %v8573, %v8574
      %v8576 = vrot.slane %v8574, 4
      %v8577 = vrot.slane %v6930, 5
      %v8578 = vsel %vm1741, %v8576, %v8577
      %v8579 = vrot.slane %v8577, 4
      %v8580 = vrot.slane %v6931, 5
      %v8581 = vsel %vm1741, %v8579, %v8580
      %v8582 = vrot.slane %v6932, 5
      %v8583 = vrot.slane %v8582, 4
      %v8584 = vrot.slane %v6933, 5
      %v8585 = vsel %vm1741, %v8583, %v8584
      %v8586 = vrot.slane %v8584, 4
      %v8587 = vrot.slane %v6934, 5
      %v8588 = vsel %vm1741, %v8586, %v8587
      %v8589 = vrot.slane %v8587, 4
      %v8590 = vrot.slane %v6935, 5
      %v8591 = vsel %vm1741, %v8589, %v8590
      %v8592 = vrot.slane %v6936, 5
      %v8593 = vrot.slane %v8592, 4
      %v8594 = vrot.slane %v6937, 5
      %v8595 = vsel %vm1741, %v8593, %v8594
      %v8596 = vrot.slane %v8594, 4
      %v8597 = vrot.slane %v6938, 5
      %v8598 = vsel %vm1741, %v8596, %v8597
      %v8599 = vrot.slane %v8597, 4
      %v8600 = vrot.slane %v6939, 5
      %v8601 = vsel %vm1741, %v8599, %v8600
      %v8602 = vrot.slane %v6940, 5
      %v8603 = vrot.slane %v8602, 4
      %v8604 = vrot.slane %v6941, 5
      %v8605 = vsel %vm1741, %v8603, %v8604
      %v8606 = vrot.slane %v8604, 4
      %v8607 = vrot.slane %v6942, 5
      %v8608 = vsel %vm1741, %v8606, %v8607
      %v8609 = vrot.slane %v8607, 4
      %v8610 = vrot.slane %v6943, 5
      %v8611 = vsel %vm1741, %v8609, %v8610
      %v8612 = vrot.slane %v6944, 5
      %v8613 = vrot.slane %v8612, 4
      %v8614 = vrot.slane %v6945, 5
      %v8615 = vsel %vm1741, %v8613, %v8614
      %v8616 = vrot.slane %v8614, 4
      %v8617 = vrot.slane %v6946, 5
      %v8618 = vsel %vm1741, %v8616, %v8617
      %v8619 = vrot.slane %v8617, 4
      %v8620 = vrot.slane %v6947, 5
      %v8621 = vsel %vm1741, %v8619, %v8620
      %v8622 = vrot.slane %v6948, 5
      %v8623 = vrot.slane %v8622, 4
      %v8624 = vrot.slane %v6949, 5
      %v8625 = vsel %vm1741, %v8623, %v8624
      %v8626 = vrot.slane %v8624, 4
      %v8627 = vrot.slane %v6950, 5
      %v8628 = vsel %vm1741, %v8626, %v8627
      %v8629 = vrot.slane %v8627, 4
      %v8630 = vrot.slane %v6951, 5
      %v8631 = vsel %vm1741, %v8629, %v8630
      %v8632 = vrot.slane %v6952, 5
      %v8633 = vrot.slane %v8632, 4
      %v8634 = vrot.slane %v6953, 5
      %v8635 = vsel %vm1741, %v8633, %v8634
      %v8636 = vrot.slane %v8634, 4
      %v8637 = vrot.slane %v6954, 5
      %v8638 = vsel %vm1741, %v8636, %v8637
      %v8639 = vrot.slane %v8637, 4
      %v8640 = vrot.slane %v6955, 5
      %v8641 = vsel %vm1741, %v8639, %v8640
      %v8642 = vrot.slane %v6956, 5
      %v8643 = vrot.slane %v8642, 4
      %v8644 = vrot.slane %v6957, 5
      %v8645 = vsel %vm1741, %v8643, %v8644
      %v8646 = vrot.slane %v8644, 4
      %v8647 = vrot.slane %v6958, 5
      %v8648 = vsel %vm1741, %v8646, %v8647
      %v8649 = vrot.slane %v8647, 4
      %v8650 = vrot.slane %v6959, 5
      %v8651 = vsel %vm1741, %v8649, %v8650
      %v8652 = vrot.slane %v6960, 5
      %v8653 = vrot.slane %v8652, 4
      %v8654 = vrot.slane %v6961, 5
      %v8655 = vsel %vm1741, %v8653, %v8654
      %v8656 = vrot.slane %v8654, 4
      %v8657 = vrot.slane %v6962, 5
      %v8658 = vsel %vm1741, %v8656, %v8657
      %v8659 = vrot.slane %v8657, 4
      %v8660 = vrot.slane %v6963, 5
      %v8661 = vsel %vm1741, %v8659, %v8660
      %v8662 = vrot.slane %v6964, 5
      %v8663 = vrot.slane %v8662, 4
      %v8664 = vrot.slane %v6965, 5
      %v8665 = vsel %vm1741, %v8663, %v8664
      %v8666 = vrot.slane %v8664, 4
      %v8667 = vrot.slane %v6966, 5
      %v8668 = vsel %vm1741, %v8666, %v8667
      %v8669 = vrot.slane %v8667, 4
      %v8670 = vrot.slane %v6967, 5
      %v8671 = vsel %vm1741, %v8669, %v8670
      %v8672 = vrot.slane %v6968, 5
      %v8673 = vrot.slane %v8672, 4
      %v8674 = vrot.slane %v6969, 5
      %v8675 = vsel %vm1741, %v8673, %v8674
      %v8676 = vrot.slane %v8674, 4
      %v8677 = vrot.slane %v6970, 5
      %v8678 = vsel %vm1741, %v8676, %v8677
      %v8679 = vrot.slane %v8677, 4
      %v8680 = vrot.slane %v6971, 5
      %v8681 = vsel %vm1741, %v8679, %v8680
      %v8682 = vrot.slane %v6972, 5
      %v8683 = vrot.slane %v8682, 4
      %v8684 = vrot.slane %v6973, 5
      %v8685 = vsel %vm1741, %v8683, %v8684
      %v8686 = vrot.slane %v8684, 4
      %v8687 = vrot.slane %v6974, 5
      %v8688 = vsel %vm1741, %v8686, %v8687
      %v8689 = vrot.slane %v8687, 4
      %v8690 = vrot.slane %v6975, 5
      %v8691 = vsel %vm1741, %v8689, %v8690
      %v8692 = vrot.slane %v6976, 5
      %v8693 = vrot.slane %v8692, 4
      %v8694 = vrot.slane %v6977, 5
      %v8695 = vsel %vm1741, %v8693, %v8694
      %v8696 = vrot.slane %v8694, 4
      %v8697 = vrot.slane %v6978, 5
      %v8698 = vsel %vm1741, %v8696, %v8697
      %v8699 = vrot.slane %v8697, 4
      %v8700 = vrot.slane %v6979, 5
      %v8701 = vsel %vm1741, %v8699, %v8700
      %v8702 = vrot.slane %v6980, 5
      %v8703 = vrot.slane %v8702, 4
      %v8704 = vrot.slane %v6981, 5
      %v8705 = vsel %vm1741, %v8703, %v8704
      %v8706 = vrot.slane %v8704, 4
      %v8707 = vrot.slane %v6982, 5
      %v8708 = vsel %vm1741, %v8706, %v8707
      %v8709 = vrot.slane %v8707, 4
      %v8710 = vrot.slane %v6983, 5
      %v8711 = vsel %vm1741, %v8709, %v8710
      %v8712 = vrot.slane %v6984, 5
      %v8713 = vrot.slane %v8712, 4
      %v8714 = vrot.slane %v6985, 5
      %v8715 = vsel %vm1741, %v8713, %v8714
      %v8716 = vrot.slane %v8714, 4
      %v8717 = vrot.slane %v6986, 5
      %v8718 = vsel %vm1741, %v8716, %v8717
      %v8719 = vrot.slane %v8717, 4
      %v8720 = vrot.slane %v6987, 5
      %v8721 = vsel %vm1741, %v8719, %v8720
      %v8722 = vrot.slane %v6988, 5
      %v8723 = vrot.slane %v8722, 4
      %v8724 = vrot.slane %v6989, 5
      %v8725 = vsel %vm1741, %v8723, %v8724
      %v8726 = vrot.slane %v8724, 4
      %v8727 = vrot.slane %v6990, 5
      %v8728 = vsel %vm1741, %v8726, %v8727
      %v8729 = vrot.slane %v8727, 4
      %v8730 = vrot.slane %v6991, 5
      %v8731 = vsel %vm1741, %v8729, %v8730
      %s8732 = scalar_lea.vmem %s1, 132
      %v8733 = vld [vmem:[%s8732] sm:$0xf]
      %v8734 = vld [vmem:[%s8732 + $0x4] sm:$0xf]
      %v8735 = vld [vmem:[%s8732 + $0x8] sm:$0x3]
      %v8736 = vunpack.c.l.b16 %v8565
      %v8737 = vunpack.c.l.b16 %v8568
      %v8738 = vunpack.c.l.b16 %v8571
      %v8739 = vunpack.c.l.b16 %v8575
      %v8740 = vunpack.c.l.b16 %v8578
      %v8741 = vunpack.c.l.b16 %v8581
      %v8742 = vunpack.c.l.b16 %v8585
      %v8743 = vunpack.c.l.b16 %v8588
      %v8744 = vunpack.c.l.b16 %v8591
      %v8745 = vunpack.c.l.b16 %v8595
      %v8746 = vunpack.c.l.b16 %v8598
      %v8747 = vunpack.c.l.b16 %v8601
      %v8748 = vunpack.c.l.b16 %v8605
      %v8749 = vunpack.c.l.b16 %v8608
      %v8750 = vunpack.c.l.b16 %v8611
      %v8751 = vunpack.c.l.b16 %v8615
      %v8752 = vunpack.c.l.b16 %v8618
      %v8753 = vunpack.c.l.b16 %v8621
      %v8754 = vunpack.c.l.b16 %v8625
      %v8755 = vunpack.c.l.b16 %v8628
      %v8756 = vunpack.c.l.b16 %v8631
      %v8757 = vunpack.c.l.b16 %v8635
      %v8758 = vunpack.c.l.b16 %v8638
      %v8759 = vunpack.c.l.b16 %v8641
      %v8760 = vunpack.c.l.b16 %v8645
      %v8761 = vunpack.c.l.b16 %v8648
      %v8762 = vunpack.c.l.b16 %v8651
      %v8763 = vunpack.c.l.b16 %v8655
      %v8764 = vunpack.c.l.b16 %v8658
      %v8765 = vunpack.c.l.b16 %v8661
      %v8766 = vunpack.c.l.b16 %v8665
      %v8767 = vunpack.c.l.b16 %v8668
      %v8768 = vunpack.c.l.b16 %v8671
      %v8769 = vunpack.c.l.b16 %v8675
      %v8770 = vunpack.c.l.b16 %v8678
      %v8771 = vunpack.c.l.b16 %v8681
      %v8772 = vunpack.c.l.b16 %v8685
      %v8773 = vunpack.c.l.b16 %v8688
      %v8774 = vunpack.c.l.b16 %v8691
      %v8775 = vunpack.c.l.b16 %v8695
      %v8776 = vunpack.c.l.b16 %v8698
      %v8777 = vunpack.c.l.b16 %v8701
      %v8778 = vunpack.c.l.b16 %v8705
      %v8779 = vunpack.c.l.b16 %v8708
      %v8780 = vunpack.c.l.b16 %v8711
      %v8781 = vunpack.c.l.b16 %v8715
      %v8782 = vunpack.c.l.b16 %v8718
      %v8783 = vunpack.c.l.b16 %v8721
      %v8784 = vunpack.c.l.b16 %v8725
      %v8785 = vunpack.c.l.b16 %v8728
      %v8786 = vunpack.c.l.b16 %v8731
      %v8787 = vpack.c.b16 %v8737, %v8736
      %v8788 = vpack.c.b16 %v8739, %v8738
      %v8789 = vpack.c.b16 %v8741, %v8740
      %v8790 = vpack.c.b16 %v8743, %v8742
      %v8791 = vpack.c.b16 %v8745, %v8744
      %v8792 = vpack.c.b16 %v8747, %v8746
      %v8793 = vpack.c.b16 %v8749, %v8748
      %v8794 = vpack.c.b16 %v8751, %v8750
      %v8795 = vpack.c.b16 %v8753, %v8752
      %v8796 = vpack.c.b16 %v8755, %v8754
      %v8797 = vpack.c.b16 %v8757, %v8756
      %v8798 = vpack.c.b16 %v8759, %v8758
      %v8799 = vpack.c.b16 %v8761, %v8760
      %v8800 = vpack.c.b16 %v8763, %v8762
      %v8801 = vpack.c.b16 %v8765, %v8764
      %v8802 = vpack.c.b16 %v8767, %v8766
      %v8803 = vpack.c.b16 %v8769, %v8768
      %v8804 = vpack.c.b16 %v8771, %v8770
      %v8805 = vpack.c.b16 %v8773, %v8772
      %v8806 = vpack.c.b16 %v8775, %v8774
      %v8807 = vpack.c.b16 %v8777, %v8776
      %v8808 = vpack.c.b16 %v8779, %v8778
      %v8809 = vpack.c.b16 %v8781, %v8780
      %v8810 = vpack.c.b16 %v8783, %v8782
      %v8811 = vpack.c.b16 %v8785, %v8784
      %v8812 = vpack.c.b16 %v8786, %v8786
      %v8816 = vunpack.c.l.b16 %v8733
      %v8817 = vunpack.c.l.b16 %v8734
      %v8818 = vunpack.c.l.b16 %v8735
      %v8819 = vpack.c.b16 %v8817, %v8816
      %v8820 = vpack.c.b16 %v8818, %v8818
      %v8823 = vsel %vm941, %v8787, 0
      %v8826 = vsel %vm941, %v8788, 0
      %v8829 = vsel %vm941, %v8789, 0
      %v8832 = vsel %vm941, %v8790, 0
      %v8835 = vsel %vm941, %v8791, 0
      %v8838 = vsel %vm941, %v8792, 0
      %v8841 = vsel %vm941, %v8793, 0
      %v8844 = vsel %vm941, %v8794, 0
      %v8847 = vsel %vm941, %v8795, 0
      %v8850 = vsel %vm941, %v8796, 0
      %v8853 = vsel %vm941, %v8797, 0
      %v8856 = vsel %vm941, %v8798, 0
      %v8859 = vsel %vm941, %v8799, 0
      %v8862 = vsel %vm941, %v8800, 0
      %v8865 = vsel %vm941, %v8801, 0
      %v8868 = vsel %vm941, %v8802, 0
      %v8871 = vsel %vm941, %v8803, 0
      %v8874 = vsel %vm941, %v8804, 0
      %v8877 = vsel %vm941, %v8805, 0
      %v8880 = vsel %vm941, %v8806, 0
      %v8883 = vsel %vm941, %v8807, 0
      %v8886 = vsel %vm941, %v8808, 0
      %v8889 = vsel %vm941, %v8809, 0
      %v8892 = vsel %vm941, %v8810, 0
      %v8895 = vsel %vm941, %v8811, 0
      %v8898 = vsel %vm941, %v8812, 0
      %v8901 = vsel %vm1020, %v8820, 0
      %8903 = vmatprep.subr.bf16.mxu0 0
      %8904 = vmatpush1.bf16.msra.mxu0 0
      %8905 = vmatprep.subr.bf16.mxu0 0
      %8906 = vmatpush1.bf16.msra.mxu0 0
      %8907 = vmatprep.subr.bf16.mxu0 0
      %8908 = vmatpush1.bf16.msra.mxu0 0
      %8909 = vmatprep.subr.bf16.mxu0 0
      %8910 = vmatpush1.bf16.msra.mxu0 0
      %8911 = vmatprep.subr.bf16.mxu0 0
      %8912 = vmatpush1.bf16.msra.mxu0 0
      %8913 = vmatprep.subr.bf16.mxu0 0
      %8914 = vmatpush1.bf16.msra.mxu0 0
      %8915 = vmatprep.subr.bf16.mxu0 0
      %8916 = vmatpush1.bf16.msra.mxu0 %v8901
      %8917 = vmatprep.subr.bf16.mxu0 0
      %8918 = vmatpush1.bf16.msra.mxu0 %v8819
      %8919 = vmatprep.subr.bf16.mxu0 0
      %8920 = vmatpush2.bf16.msra.mxu0 0
      %8921 = vmatprep.subr.bf16.mxu0 0
      %8922 = vmatpush2.bf16.msra.mxu0 0
      %8923 = vmatprep.subr.bf16.mxu0 0
      %8924 = vmatpush2.bf16.msra.mxu0 0
      %8925 = vmatprep.subr.bf16.mxu0 0
      %8926 = vmatpush2.bf16.msra.mxu0 0
      %8927 = vmatprep.subr.bf16.mxu0 0
      %8928 = vmatpush2.bf16.msra.mxu0 0
      %8929 = vmatprep.subr.bf16.mxu0 0
      %8930 = vmatpush2.bf16.msra.mxu0 0
      %8931 = vmatprep.subr.bf16.mxu0 0
      %8932 = vmatpush2.bf16.msra.mxu0 0
      %8933 = vmatprep.subr.bf16.mxu0 0
      %8934 = vmatpush2.bf16.msra.mxu0 0
      %8935 = vmatprep.mubr.bf16.mxu0 0
      %8936 = vmatmul.mubr.bf16.gmra.mxu0 %v8823
      %v8937 = vpop.f32.mrf.mxu0
      %v8938 = vadd.f32 0.0, %v8937
      %v8939 = vpop.f32.mrf.mxu0
      %v8940 = vpop.f32.mrf.mxu0
      %v8941 = vadd.f32 0.0, %v8940
      %v8942 = vpop.f32.mrf.mxu0
      %8943 = vmatprep.mubr.bf16.mxu0 0
      %8944 = vmatmul.mubr.bf16.gmra.mxu0 %v8826
      %v8945 = vpop.f32.mrf.mxu0
      %v8946 = vadd.f32 0.0, %v8945
      %v8947 = vpop.f32.mrf.mxu0
      %v8948 = vpop.f32.mrf.mxu0
      %v8949 = vadd.f32 0.0, %v8948
      %v8950 = vpop.f32.mrf.mxu0
      %8951 = vmatprep.mubr.bf16.mxu0 0
      %8952 = vmatmul.mubr.bf16.gmra.mxu0 %v8829
      %v8953 = vpop.f32.mrf.mxu0
      %v8954 = vadd.f32 0.0, %v8953
      %v8955 = vpop.f32.mrf.mxu0
      %v8956 = vpop.f32.mrf.mxu0
      %v8957 = vadd.f32 0.0, %v8956
      %v8958 = vpop.f32.mrf.mxu0
      %8959 = vmatprep.mubr.bf16.mxu0 0
      %8960 = vmatmul.mubr.bf16.gmra.mxu0 %v8832
      %v8961 = vpop.f32.mrf.mxu0
      %v8962 = vadd.f32 0.0, %v8961
      %v8963 = vpop.f32.mrf.mxu0
      %v8964 = vpop.f32.mrf.mxu0
      %v8965 = vadd.f32 0.0, %v8964
      %v8966 = vpop.f32.mrf.mxu0
      %8967 = vmatprep.mubr.bf16.mxu0 0
      %8968 = vmatmul.mubr.bf16.gmra.mxu0 %v8835
      %v8969 = vpop.f32.mrf.mxu0
      %v8970 = vadd.f32 0.0, %v8969
      %v8971 = vpop.f32.mrf.mxu0
      %v8972 = vpop.f32.mrf.mxu0
      %v8973 = vadd.f32 0.0, %v8972
      %v8974 = vpop.f32.mrf.mxu0
      %8975 = vmatprep.mubr.bf16.mxu0 0
      %8976 = vmatmul.mubr.bf16.gmra.mxu0 %v8838
      %v8977 = vpop.f32.mrf.mxu0
      %v8978 = vadd.f32 0.0, %v8977
      %v8979 = vpop.f32.mrf.mxu0
      %v8980 = vpop.f32.mrf.mxu0
      %v8981 = vadd.f32 0.0, %v8980
      %v8982 = vpop.f32.mrf.mxu0
      %8983 = vmatprep.mubr.bf16.mxu0 0
      %8984 = vmatmul.mubr.bf16.gmra.mxu0 %v8841
      %v8985 = vpop.f32.mrf.mxu0
      %v8986 = vadd.f32 0.0, %v8985
      %v8987 = vpop.f32.mrf.mxu0
      %v8988 = vpop.f32.mrf.mxu0
      %v8989 = vadd.f32 0.0, %v8988
      %v8990 = vpop.f32.mrf.mxu0
      %8991 = vmatprep.mubr.bf16.mxu0 0
      %8992 = vmatmul.mubr.bf16.gmra.mxu0 %v8844
      %v8993 = vpop.f32.mrf.mxu0
      %v8994 = vadd.f32 0.0, %v8993
      %v8995 = vpop.f32.mrf.mxu0
      %v8996 = vpop.f32.mrf.mxu0
      %v8997 = vadd.f32 0.0, %v8996
      %v8998 = vpop.f32.mrf.mxu0
      %8999 = vmatprep.mubr.bf16.mxu0 0
      %9000 = vmatmul.mubr.bf16.gmra.mxu0 %v8847
      %v9001 = vpop.f32.mrf.mxu0
      %v9002 = vadd.f32 0.0, %v9001
      %v9003 = vpop.f32.mrf.mxu0
      %v9004 = vpop.f32.mrf.mxu0
      %v9005 = vadd.f32 0.0, %v9004
      %v9006 = vpop.f32.mrf.mxu0
      %9007 = vmatprep.mubr.bf16.mxu0 0
      %9008 = vmatmul.mubr.bf16.gmra.mxu0 %v8850
      %v9009 = vpop.f32.mrf.mxu0
      %v9010 = vadd.f32 0.0, %v9009
      %v9011 = vpop.f32.mrf.mxu0
      %v9012 = vpop.f32.mrf.mxu0
      %v9013 = vadd.f32 0.0, %v9012
      %v9014 = vpop.f32.mrf.mxu0
      %9015 = vmatprep.mubr.bf16.mxu0 0
      %9016 = vmatmul.mubr.bf16.gmra.mxu0 %v8853
      %v9017 = vpop.f32.mrf.mxu0
      %v9018 = vadd.f32 0.0, %v9017
      %v9019 = vpop.f32.mrf.mxu0
      %v9020 = vpop.f32.mrf.mxu0
      %v9021 = vadd.f32 0.0, %v9020
      %v9022 = vpop.f32.mrf.mxu0
      %9023 = vmatprep.mubr.bf16.mxu0 0
      %9024 = vmatmul.mubr.bf16.gmra.mxu0 %v8856
      %v9025 = vpop.f32.mrf.mxu0
      %v9026 = vadd.f32 0.0, %v9025
      %v9027 = vpop.f32.mrf.mxu0
      %v9028 = vpop.f32.mrf.mxu0
      %v9029 = vadd.f32 0.0, %v9028
      %v9030 = vpop.f32.mrf.mxu0
      %9031 = vmatprep.mubr.bf16.mxu0 0
      %9032 = vmatmul.mubr.bf16.gmra.mxu0 %v8859
      %v9033 = vpop.f32.mrf.mxu0
      %v9034 = vadd.f32 0.0, %v9033
      %v9035 = vpop.f32.mrf.mxu0
      %v9036 = vpop.f32.mrf.mxu0
      %v9037 = vadd.f32 0.0, %v9036
      %v9038 = vpop.f32.mrf.mxu0
      %9039 = vmatprep.mubr.bf16.mxu0 0
      %9040 = vmatmul.mubr.bf16.gmra.mxu0 %v8862
      %v9041 = vpop.f32.mrf.mxu0
      %v9042 = vadd.f32 0.0, %v9041
      %v9043 = vpop.f32.mrf.mxu0
      %v9044 = vpop.f32.mrf.mxu0
      %v9045 = vadd.f32 0.0, %v9044
      %v9046 = vpop.f32.mrf.mxu0
      %9047 = vmatprep.mubr.bf16.mxu0 0
      %9048 = vmatmul.mubr.bf16.gmra.mxu0 %v8865
      %v9049 = vpop.f32.mrf.mxu0
      %v9050 = vadd.f32 0.0, %v9049
      %v9051 = vpop.f32.mrf.mxu0
      %v9052 = vpop.f32.mrf.mxu0
      %v9053 = vadd.f32 0.0, %v9052
      %v9054 = vpop.f32.mrf.mxu0
      %9055 = vmatprep.mubr.bf16.mxu0 0
      %9056 = vmatmul.mubr.bf16.gmra.mxu0 %v8868
      %v9057 = vpop.f32.mrf.mxu0
      %v9058 = vadd.f32 0.0, %v9057
      %v9059 = vpop.f32.mrf.mxu0
      %v9060 = vpop.f32.mrf.mxu0
      %v9061 = vadd.f32 0.0, %v9060
      %v9062 = vpop.f32.mrf.mxu0
      %9063 = vmatprep.mubr.bf16.mxu0 0
      %9064 = vmatmul.mubr.bf16.gmra.mxu0 %v8871
      %v9065 = vpop.f32.mrf.mxu0
      %v9066 = vadd.f32 0.0, %v9065
      %v9067 = vpop.f32.mrf.mxu0
      %v9068 = vpop.f32.mrf.mxu0
      %v9069 = vadd.f32 0.0, %v9068
      %v9070 = vpop.f32.mrf.mxu0
      %9071 = vmatprep.mubr.bf16.mxu0 0
      %9072 = vmatmul.mubr.bf16.gmra.mxu0 %v8874
      %v9073 = vpop.f32.mrf.mxu0
      %v9074 = vadd.f32 0.0, %v9073
      %v9075 = vpop.f32.mrf.mxu0
      %v9076 = vpop.f32.mrf.mxu0
      %v9077 = vadd.f32 0.0, %v9076
      %v9078 = vpop.f32.mrf.mxu0
      %9079 = vmatprep.mubr.bf16.mxu0 0
      %9080 = vmatmul.mubr.bf16.gmra.mxu0 %v8877
      %v9081 = vpop.f32.mrf.mxu0
      %v9082 = vadd.f32 0.0, %v9081
      %v9083 = vpop.f32.mrf.mxu0
      %v9084 = vpop.f32.mrf.mxu0
      %v9085 = vadd.f32 0.0, %v9084
      %v9086 = vpop.f32.mrf.mxu0
      %9087 = vmatprep.mubr.bf16.mxu0 0
      %9088 = vmatmul.mubr.bf16.gmra.mxu0 %v8880
      %v9089 = vpop.f32.mrf.mxu0
      %v9090 = vadd.f32 0.0, %v9089
      %v9091 = vpop.f32.mrf.mxu0
      %v9092 = vpop.f32.mrf.mxu0
      %v9093 = vadd.f32 0.0, %v9092
      %v9094 = vpop.f32.mrf.mxu0
      %9095 = vmatprep.mubr.bf16.mxu0 0
      %9096 = vmatmul.mubr.bf16.gmra.mxu0 %v8883
      %v9097 = vpop.f32.mrf.mxu0
      %v9098 = vadd.f32 0.0, %v9097
      %v9099 = vpop.f32.mrf.mxu0
      %v9100 = vpop.f32.mrf.mxu0
      %v9101 = vadd.f32 0.0, %v9100
      %v9102 = vpop.f32.mrf.mxu0
      %9103 = vmatprep.mubr.bf16.mxu0 0
      %9104 = vmatmul.mubr.bf16.gmra.mxu0 %v8886
      %v9105 = vpop.f32.mrf.mxu0
      %v9106 = vadd.f32 0.0, %v9105
      %v9107 = vpop.f32.mrf.mxu0
      %v9108 = vpop.f32.mrf.mxu0
      %v9109 = vadd.f32 0.0, %v9108
      %v9110 = vpop.f32.mrf.mxu0
      %9111 = vmatprep.mubr.bf16.mxu0 0
      %9112 = vmatmul.mubr.bf16.gmra.mxu0 %v8889
      %v9113 = vpop.f32.mrf.mxu0
      %v9114 = vadd.f32 0.0, %v9113
      %v9115 = vpop.f32.mrf.mxu0
      %v9116 = vpop.f32.mrf.mxu0
      %v9117 = vadd.f32 0.0, %v9116
      %v9118 = vpop.f32.mrf.mxu0
      %9119 = vmatprep.mubr.bf16.mxu0 0
      %9120 = vmatmul.mubr.bf16.gmra.mxu0 %v8892
      %v9121 = vpop.f32.mrf.mxu0
      %v9122 = vadd.f32 0.0, %v9121
      %v9123 = vpop.f32.mrf.mxu0
      %v9124 = vpop.f32.mrf.mxu0
      %v9125 = vadd.f32 0.0, %v9124
      %v9126 = vpop.f32.mrf.mxu0
      %9127 = vmatprep.mubr.bf16.mxu0 0
      %9128 = vmatmul.mubr.bf16.gmra.mxu0 %v8895
      %v9129 = vpop.f32.mrf.mxu0
      %v9130 = vadd.f32 0.0, %v9129
      %v9131 = vpop.f32.mrf.mxu0
      %v9132 = vpop.f32.mrf.mxu0
      %v9133 = vadd.f32 0.0, %v9132
      %v9134 = vpop.f32.mrf.mxu0
      %9135 = vmatprep.mubr.bf16.mxu0 0
      %9136 = vmatmul.mubr.bf16.gmra.mxu0 %v8898
      %v9137 = vpop.f32.mrf.mxu0
      %v9138 = vadd.f32 0.0, %v9137
      %v9139 = vpop.f32.mrf.mxu0
      %v9140 = vpop.f32.mrf.mxu0
      %v9141 = vpop.f32.mrf.mxu0
      %9142 = vdwg.mxu0
      %v9143 = vadd.f32 %v8494, %v8938
      %v9144 = vadd.f32 %v8495, %v8941
      %v9145 = vadd.f32 %v8496, %v8946
      %v9146 = vadd.f32 %v8497, %v8949
      %v9147 = vadd.f32 %v8498, %v8954
      %v9148 = vadd.f32 %v8499, %v8957
      %v9149 = vadd.f32 %v8500, %v8962
      %v9150 = vadd.f32 %v8501, %v8965
      %v9151 = vadd.f32 %v8502, %v8970
      %v9152 = vadd.f32 %v8503, %v8973
      %v9153 = vadd.f32 %v8504, %v8978
      %v9154 = vadd.f32 %v8505, %v8981
      %v9155 = vadd.f32 %v8506, %v8986
      %v9156 = vadd.f32 %v8507, %v8989
      %v9157 = vadd.f32 %v8508, %v8994
      %v9158 = vadd.f32 %v8509, %v8997
      %v9159 = vadd.f32 %v8510, %v9002
      %v9160 = vadd.f32 %v8511, %v9005
      %v9161 = vadd.f32 %v8512, %v9010
      %v9162 = vadd.f32 %v8513, %v9013
      %v9163 = vadd.f32 %v8514, %v9018
      %v9164 = vadd.f32 %v8515, %v9021
      %v9165 = vadd.f32 %v8516, %v9026
      %v9166 = vadd.f32 %v8517, %v9029
      %v9167 = vadd.f32 %v8518, %v9034
      %v9168 = vadd.f32 %v8519, %v9037
      %v9169 = vadd.f32 %v8520, %v9042
      %v9170 = vadd.f32 %v8521, %v9045
      %v9171 = vadd.f32 %v8522, %v9050
      %v9172 = vadd.f32 %v8523, %v9053
      %v9173 = vadd.f32 %v8524, %v9058
      %v9174 = vadd.f32 %v8525, %v9061
      %v9175 = vadd.f32 %v8526, %v9066
      %v9176 = vadd.f32 %v8527, %v9069
      %v9177 = vadd.f32 %v8528, %v9074
      %v9178 = vadd.f32 %v8529, %v9077
      %v9179 = vadd.f32 %v8530, %v9082
      %v9180 = vadd.f32 %v8531, %v9085
      %v9181 = vadd.f32 %v8532, %v9090
      %v9182 = vadd.f32 %v8533, %v9093
      %v9183 = vadd.f32 %v8534, %v9098
      %v9184 = vadd.f32 %v8535, %v9101
      %v9185 = vadd.f32 %v8536, %v9106
      %v9186 = vadd.f32 %v8537, %v9109
      %v9187 = vadd.f32 %v8538, %v9114
      %v9188 = vadd.f32 %v8539, %v9117
      %v9189 = vadd.f32 %v8540, %v9122
      %v9190 = vadd.f32 %v8541, %v9125
      %v9191 = vadd.f32 %v8542, %v9130
      %v9192 = vadd.f32 %v8543, %v9133
      %v9193 = vadd.f32 %v8544, %v9138
      %s9194 = sadd.s32 %s195, 2
      %s9195 = smul.u32 %s9194, 8
      %s9196 = smul.addr %s9195, 4
      %s9197 = scalar_lea.vmem %s184, %s9196
      %v9198 = vld [vmem:[%s9197] sm:$0xf]
      %v9199 = vld [vmem:[%s9197 + $0x4] sm:$0xf]
      %v9200 = vld [vmem:[%s9197 + $0x8] sm:$0xf]
      %v9201 = vld [vmem:[%s9197 + $0xc] sm:$0x1]
      %v9202 = vld [vmem:[%s9197 + $0x20] sm:$0xf]
      %v9203 = vld [vmem:[%s9197 + $0x24] sm:$0xf]
      %v9204 = vld [vmem:[%s9197 + $0x28] sm:$0xf]
      %v9205 = vld [vmem:[%s9197 + $0x2c] sm:$0x1]
      %v9206 = vld [vmem:[%s9197 + $0x40] sm:$0xf]
      %v9207 = vld [vmem:[%s9197 + $0x44] sm:$0xf]
      %v9208 = vld [vmem:[%s9197 + $0x48] sm:$0xf]
      %v9209 = vld [vmem:[%s9197 + $0x4c] sm:$0x1]
      %v9210 = vld [vmem:[%s9197 + $0x60] sm:$0xf]
      %v9211 = vld [vmem:[%s9197 + $0x64] sm:$0xf]
      %v9212 = vld [vmem:[%s9197 + $0x68] sm:$0xf]
      %v9213 = vld [vmem:[%s9197 + $0x6c] sm:$0x1]
      %v9214 = vld [vmem:[%s9197 + $0x80] sm:$0xf]
      %v9215 = vld [vmem:[%s9197 + $0x84] sm:$0xf]
      %v9216 = vld [vmem:[%s9197 + $0x88] sm:$0xf]
      %v9217 = vld [vmem:[%s9197 + $0x8c] sm:$0x1]
      %v9218 = vld [vmem:[%s9197 + $0xa0] sm:$0xf]
      %v9219 = vld [vmem:[%s9197 + $0xa4] sm:$0xf]
      %v9220 = vld [vmem:[%s9197 + $0xa8] sm:$0xf]
      %v9221 = vld [vmem:[%s9197 + $0xac] sm:$0x1]
      %v9222 = vld [vmem:[%s9197 + $0xc0] sm:$0xf]
      %v9223 = vld [vmem:[%s9197 + $0xc4] sm:$0xf]
      %v9224 = vld [vmem:[%s9197 + $0xc8] sm:$0xf]
      %v9225 = vld [vmem:[%s9197 + $0xcc] sm:$0x1]
      %v9226 = vld [vmem:[%s9197 + $0xe0] sm:$0xf]
      %v9227 = vld [vmem:[%s9197 + $0xe4] sm:$0xf]
      %v9228 = vld [vmem:[%s9197 + $0xe8] sm:$0xf]
      %v9229 = vld [vmem:[%s9197 + $0xec] sm:$0x1]
      %v9230 = vld [vmem:[%s9197 + $0x100] sm:$0xf]
      %v9231 = vld [vmem:[%s9197 + $0x104] sm:$0xf]
      %v9232 = vld [vmem:[%s9197 + $0x108] sm:$0xf]
      %v9233 = vld [vmem:[%s9197 + $0x10c] sm:$0x1]
      %v9234 = vld [vmem:[%s9197 + $0x120] sm:$0xf]
      %v9235 = vld [vmem:[%s9197 + $0x124] sm:$0xf]
      %v9236 = vld [vmem:[%s9197 + $0x128] sm:$0xf]
      %v9237 = vld [vmem:[%s9197 + $0x12c] sm:$0x1]
      %v9238 = vld [vmem:[%s9197 + $0x140] sm:$0xf]
      %v9239 = vld [vmem:[%s9197 + $0x144] sm:$0xf]
      %v9240 = vld [vmem:[%s9197 + $0x148] sm:$0xf]
      %v9241 = vld [vmem:[%s9197 + $0x14c] sm:$0x1]
      %v9242 = vld [vmem:[%s9197 + $0x160] sm:$0xf]
      %v9243 = vld [vmem:[%s9197 + $0x164] sm:$0xf]
      %v9244 = vld [vmem:[%s9197 + $0x168] sm:$0xf]
      %v9245 = vld [vmem:[%s9197 + $0x16c] sm:$0x1]
      %v9246 = vld [vmem:[%s9197 + $0x180] sm:$0xf]
      %v9247 = vld [vmem:[%s9197 + $0x184] sm:$0xf]
      %v9248 = vld [vmem:[%s9197 + $0x188] sm:$0xf]
      %v9249 = vld [vmem:[%s9197 + $0x18c] sm:$0x1]
      %v9250 = vld [vmem:[%s9197 + $0x1a0] sm:$0xf]
      %v9251 = vld [vmem:[%s9197 + $0x1a4] sm:$0xf]
      %v9252 = vld [vmem:[%s9197 + $0x1a8] sm:$0xf]
      %v9253 = vld [vmem:[%s9197 + $0x1ac] sm:$0x1]
      %v9254 = vld [vmem:[%s9197 + $0x1c0] sm:$0xf]
      %v9255 = vld [vmem:[%s9197 + $0x1c4] sm:$0xf]
      %v9256 = vld [vmem:[%s9197 + $0x1c8] sm:$0xf]
      %v9257 = vld [vmem:[%s9197 + $0x1cc] sm:$0x1]
      %v9258 = vld [vmem:[%s9197 + $0x1e0] sm:$0xf]
      %v9259 = vld [vmem:[%s9197 + $0x1e4] sm:$0xf]
      %v9260 = vld [vmem:[%s9197 + $0x1e8] sm:$0xf]
      %v9261 = vld [vmem:[%s9197 + $0x1ec] sm:$0x1]
      %v9262 = vld [vmem:[%s9197 + $0x200] sm:$0xf]
      %v9263 = vld [vmem:[%s9197 + $0x204] sm:$0xf]
      %v9264 = vld [vmem:[%s9197 + $0x208] sm:$0xf]
      %v9265 = vld [vmem:[%s9197 + $0x20c] sm:$0x1]
      %s9266 = scalar_lea.vmem %s1, 144
      %v9267 = vld [vmem:[%s9266] sm:$0xf]
      %v9268 = vld [vmem:[%s9266 + $0x4] sm:$0xf]
      %v9269 = vld [vmem:[%s9266 + $0x8] sm:$0x3]
      %v9321 = vunpack.c.l.b16 %v9198
      %v9322 = vunpack.c.l.b16 %v9199
      %v9323 = vunpack.c.l.b16 %v9200
      %v9324 = vunpack.c.l.b16 %v9202
      %v9325 = vunpack.c.l.b16 %v9203
      %v9326 = vunpack.c.l.b16 %v9204
      %v9327 = vunpack.c.l.b16 %v9206
      %v9328 = vunpack.c.l.b16 %v9207
      %v9329 = vunpack.c.l.b16 %v9208
      %v9330 = vunpack.c.l.b16 %v9210
      %v9331 = vunpack.c.l.b16 %v9211
      %v9332 = vunpack.c.l.b16 %v9212
      %v9333 = vunpack.c.l.b16 %v9214
      %v9334 = vunpack.c.l.b16 %v9215
      %v9335 = vunpack.c.l.b16 %v9216
      %v9336 = vunpack.c.l.b16 %v9218
      %v9337 = vunpack.c.l.b16 %v9219
      %v9338 = vunpack.c.l.b16 %v9220
      %v9339 = vunpack.c.l.b16 %v9222
      %v9340 = vunpack.c.l.b16 %v9223
      %v9341 = vunpack.c.l.b16 %v9224
      %v9342 = vunpack.c.l.b16 %v9226
      %v9343 = vunpack.c.l.b16 %v9227
      %v9344 = vunpack.c.l.b16 %v9228
      %v9345 = vunpack.c.l.b16 %v9230
      %v9346 = vunpack.c.l.b16 %v9231
      %v9347 = vunpack.c.l.b16 %v9232
      %v9348 = vunpack.c.l.b16 %v9234
      %v9349 = vunpack.c.l.b16 %v9235
      %v9350 = vunpack.c.l.b16 %v9236
      %v9351 = vunpack.c.l.b16 %v9238
      %v9352 = vunpack.c.l.b16 %v9239
      %v9353 = vunpack.c.l.b16 %v9240
      %v9354 = vunpack.c.l.b16 %v9242
      %v9355 = vunpack.c.l.b16 %v9243
      %v9356 = vunpack.c.l.b16 %v9244
      %v9357 = vunpack.c.l.b16 %v9246
      %v9358 = vunpack.c.l.b16 %v9247
      %v9359 = vunpack.c.l.b16 %v9248
      %v9360 = vunpack.c.l.b16 %v9250
      %v9361 = vunpack.c.l.b16 %v9251
      %v9362 = vunpack.c.l.b16 %v9252
      %v9363 = vunpack.c.l.b16 %v9254
      %v9364 = vunpack.c.l.b16 %v9255
      %v9365 = vunpack.c.l.b16 %v9256
      %v9366 = vunpack.c.l.b16 %v9258
      %v9367 = vunpack.c.l.b16 %v9259
      %v9368 = vunpack.c.l.b16 %v9260
      %v9369 = vunpack.c.l.b16 %v9262
      %v9370 = vunpack.c.l.b16 %v9263
      %v9371 = vunpack.c.l.b16 %v9264
      %v9372 = vpack.c.b16 %v9322, %v9321
      %v9373 = vpack.c.b16 %v9324, %v9323
      %v9374 = vpack.c.b16 %v9326, %v9325
      %v9375 = vpack.c.b16 %v9328, %v9327
      %v9376 = vpack.c.b16 %v9330, %v9329
      %v9377 = vpack.c.b16 %v9332, %v9331
      %v9378 = vpack.c.b16 %v9334, %v9333
      %v9379 = vpack.c.b16 %v9336, %v9335
      %v9380 = vpack.c.b16 %v9338, %v9337
      %v9381 = vpack.c.b16 %v9340, %v9339
      %v9382 = vpack.c.b16 %v9342, %v9341
      %v9383 = vpack.c.b16 %v9344, %v9343
      %v9384 = vpack.c.b16 %v9346, %v9345
      %v9385 = vpack.c.b16 %v9348, %v9347
      %v9386 = vpack.c.b16 %v9350, %v9349
      %v9387 = vpack.c.b16 %v9352, %v9351
      %v9388 = vpack.c.b16 %v9354, %v9353
      %v9389 = vpack.c.b16 %v9356, %v9355
      %v9390 = vpack.c.b16 %v9358, %v9357
      %v9391 = vpack.c.b16 %v9360, %v9359
      %v9392 = vpack.c.b16 %v9362, %v9361
      %v9393 = vpack.c.b16 %v9364, %v9363
      %v9394 = vpack.c.b16 %v9366, %v9365
      %v9395 = vpack.c.b16 %v9368, %v9367
      %v9396 = vpack.c.b16 %v9370, %v9369
      %v9397 = vpack.c.b16 %v9371, %v9371
      %v9401 = vunpack.c.l.b16 %v9267
      %v9402 = vunpack.c.l.b16 %v9268
      %v9403 = vunpack.c.l.b16 %v9269
      %v9404 = vpack.c.b16 %v9402, %v9401
      %v9405 = vpack.c.b16 %v9403, %v9403
      %v9408 = vsel %vm941, %v9372, 0
      %v9411 = vsel %vm941, %v9373, 0
      %v9414 = vsel %vm941, %v9374, 0
      %v9417 = vsel %vm941, %v9375, 0
      %v9420 = vsel %vm941, %v9376, 0
      %v9423 = vsel %vm941, %v9377, 0
      %v9426 = vsel %vm941, %v9378, 0
      %v9429 = vsel %vm941, %v9379, 0
      %v9432 = vsel %vm941, %v9380, 0
      %v9435 = vsel %vm941, %v9381, 0
      %v9438 = vsel %vm941, %v9382, 0
      %v9441 = vsel %vm941, %v9383, 0
      %v9444 = vsel %vm941, %v9384, 0
      %v9447 = vsel %vm941, %v9385, 0
      %v9450 = vsel %vm941, %v9386, 0
      %v9453 = vsel %vm941, %v9387, 0
      %v9456 = vsel %vm941, %v9388, 0
      %v9459 = vsel %vm941, %v9389, 0
      %v9462 = vsel %vm941, %v9390, 0
      %v9465 = vsel %vm941, %v9391, 0
      %v9468 = vsel %vm941, %v9392, 0
      %v9471 = vsel %vm941, %v9393, 0
      %v9474 = vsel %vm941, %v9394, 0
      %v9477 = vsel %vm941, %v9395, 0
      %v9480 = vsel %vm941, %v9396, 0
      %v9483 = vsel %vm941, %v9397, 0
      %v9486 = vsel %vm1020, %v9405, 0
      %9488 = vmatprep.subr.bf16.mxu0 0
      %9489 = vmatpush1.bf16.msra.mxu0 0
      %9490 = vmatprep.subr.bf16.mxu0 0
      %9491 = vmatpush1.bf16.msra.mxu0 0
      %9492 = vmatprep.subr.bf16.mxu0 0
      %9493 = vmatpush1.bf16.msra.mxu0 0
      %9494 = vmatprep.subr.bf16.mxu0 0
      %9495 = vmatpush1.bf16.msra.mxu0 0
      %9496 = vmatprep.subr.bf16.mxu0 0
      %9497 = vmatpush1.bf16.msra.mxu0 0
      %9498 = vmatprep.subr.bf16.mxu0 0
      %9499 = vmatpush1.bf16.msra.mxu0 0
      %9500 = vmatprep.subr.bf16.mxu0 0
      %9501 = vmatpush1.bf16.msra.mxu0 %v9486
      %9502 = vmatprep.subr.bf16.mxu0 0
      %9503 = vmatpush1.bf16.msra.mxu0 %v9404
      %9504 = vmatprep.subr.bf16.mxu0 0
      %9505 = vmatpush2.bf16.msra.mxu0 0
      %9506 = vmatprep.subr.bf16.mxu0 0
      %9507 = vmatpush2.bf16.msra.mxu0 0
      %9508 = vmatprep.subr.bf16.mxu0 0
      %9509 = vmatpush2.bf16.msra.mxu0 0
      %9510 = vmatprep.subr.bf16.mxu0 0
      %9511 = vmatpush2.bf16.msra.mxu0 0
      %9512 = vmatprep.subr.bf16.mxu0 0
      %9513 = vmatpush2.bf16.msra.mxu0 0
      %9514 = vmatprep.subr.bf16.mxu0 0
      %9515 = vmatpush2.bf16.msra.mxu0 0
      %9516 = vmatprep.subr.bf16.mxu0 0
      %9517 = vmatpush2.bf16.msra.mxu0 0
      %9518 = vmatprep.subr.bf16.mxu0 0
      %9519 = vmatpush2.bf16.msra.mxu0 0
      %9520 = vmatprep.mubr.bf16.mxu0 0
      %9521 = vmatmul.mubr.bf16.gmra.mxu0 %v9408
      %v9522 = vpop.f32.mrf.mxu0
      %v9523 = vadd.f32 0.0, %v9522
      %v9524 = vpop.f32.mrf.mxu0
      %v9525 = vpop.f32.mrf.mxu0
      %v9526 = vadd.f32 0.0, %v9525
      %v9527 = vpop.f32.mrf.mxu0
      %9528 = vmatprep.mubr.bf16.mxu0 0
      %9529 = vmatmul.mubr.bf16.gmra.mxu0 %v9411
      %v9530 = vpop.f32.mrf.mxu0
      %v9531 = vadd.f32 0.0, %v9530
      %v9532 = vpop.f32.mrf.mxu0
      %v9533 = vpop.f32.mrf.mxu0
      %v9534 = vadd.f32 0.0, %v9533
      %v9535 = vpop.f32.mrf.mxu0
      %9536 = vmatprep.mubr.bf16.mxu0 0
      %9537 = vmatmul.mubr.bf16.gmra.mxu0 %v9414
      %v9538 = vpop.f32.mrf.mxu0
      %v9539 = vadd.f32 0.0, %v9538
      %v9540 = vpop.f32.mrf.mxu0
      %v9541 = vpop.f32.mrf.mxu0
      %v9542 = vadd.f32 0.0, %v9541
      %v9543 = vpop.f32.mrf.mxu0
      %9544 = vmatprep.mubr.bf16.mxu0 0
      %9545 = vmatmul.mubr.bf16.gmra.mxu0 %v9417
      %v9546 = vpop.f32.mrf.mxu0
      %v9547 = vadd.f32 0.0, %v9546
      %v9548 = vpop.f32.mrf.mxu0
      %v9549 = vpop.f32.mrf.mxu0
      %v9550 = vadd.f32 0.0, %v9549
      %v9551 = vpop.f32.mrf.mxu0
      %9552 = vmatprep.mubr.bf16.mxu0 0
      %9553 = vmatmul.mubr.bf16.gmra.mxu0 %v9420
      %v9554 = vpop.f32.mrf.mxu0
      %v9555 = vadd.f32 0.0, %v9554
      %v9556 = vpop.f32.mrf.mxu0
      %v9557 = vpop.f32.mrf.mxu0
      %v9558 = vadd.f32 0.0, %v9557
      %v9559 = vpop.f32.mrf.mxu0
      %9560 = vmatprep.mubr.bf16.mxu0 0
      %9561 = vmatmul.mubr.bf16.gmra.mxu0 %v9423
      %v9562 = vpop.f32.mrf.mxu0
      %v9563 = vadd.f32 0.0, %v9562
      %v9564 = vpop.f32.mrf.mxu0
      %v9565 = vpop.f32.mrf.mxu0
      %v9566 = vadd.f32 0.0, %v9565
      %v9567 = vpop.f32.mrf.mxu0
      %9568 = vmatprep.mubr.bf16.mxu0 0
      %9569 = vmatmul.mubr.bf16.gmra.mxu0 %v9426
      %v9570 = vpop.f32.mrf.mxu0
      %v9571 = vadd.f32 0.0, %v9570
      %v9572 = vpop.f32.mrf.mxu0
      %v9573 = vpop.f32.mrf.mxu0
      %v9574 = vadd.f32 0.0, %v9573
      %v9575 = vpop.f32.mrf.mxu0
      %9576 = vmatprep.mubr.bf16.mxu0 0
      %9577 = vmatmul.mubr.bf16.gmra.mxu0 %v9429
      %v9578 = vpop.f32.mrf.mxu0
      %v9579 = vadd.f32 0.0, %v9578
      %v9580 = vpop.f32.mrf.mxu0
      %v9581 = vpop.f32.mrf.mxu0
      %v9582 = vadd.f32 0.0, %v9581
      %v9583 = vpop.f32.mrf.mxu0
      %9584 = vmatprep.mubr.bf16.mxu0 0
      %9585 = vmatmul.mubr.bf16.gmra.mxu0 %v9432
      %v9586 = vpop.f32.mrf.mxu0
      %v9587 = vadd.f32 0.0, %v9586
      %v9588 = vpop.f32.mrf.mxu0
      %v9589 = vpop.f32.mrf.mxu0
      %v9590 = vadd.f32 0.0, %v9589
      %v9591 = vpop.f32.mrf.mxu0
      %9592 = vmatprep.mubr.bf16.mxu0 0
      %9593 = vmatmul.mubr.bf16.gmra.mxu0 %v9435
      %v9594 = vpop.f32.mrf.mxu0
      %v9595 = vadd.f32 0.0, %v9594
      %v9596 = vpop.f32.mrf.mxu0
      %v9597 = vpop.f32.mrf.mxu0
      %v9598 = vadd.f32 0.0, %v9597
      %v9599 = vpop.f32.mrf.mxu0
      %9600 = vmatprep.mubr.bf16.mxu0 0
      %9601 = vmatmul.mubr.bf16.gmra.mxu0 %v9438
      %v9602 = vpop.f32.mrf.mxu0
      %v9603 = vadd.f32 0.0, %v9602
      %v9604 = vpop.f32.mrf.mxu0
      %v9605 = vpop.f32.mrf.mxu0
      %v9606 = vadd.f32 0.0, %v9605
      %v9607 = vpop.f32.mrf.mxu0
      %9608 = vmatprep.mubr.bf16.mxu0 0
      %9609 = vmatmul.mubr.bf16.gmra.mxu0 %v9441
      %v9610 = vpop.f32.mrf.mxu0
      %v9611 = vadd.f32 0.0, %v9610
      %v9612 = vpop.f32.mrf.mxu0
      %v9613 = vpop.f32.mrf.mxu0
      %v9614 = vadd.f32 0.0, %v9613
      %v9615 = vpop.f32.mrf.mxu0
      %9616 = vmatprep.mubr.bf16.mxu0 0
      %9617 = vmatmul.mubr.bf16.gmra.mxu0 %v9444
      %v9618 = vpop.f32.mrf.mxu0
      %v9619 = vadd.f32 0.0, %v9618
      %v9620 = vpop.f32.mrf.mxu0
      %v9621 = vpop.f32.mrf.mxu0
      %v9622 = vadd.f32 0.0, %v9621
      %v9623 = vpop.f32.mrf.mxu0
      %9624 = vmatprep.mubr.bf16.mxu0 0
      %9625 = vmatmul.mubr.bf16.gmra.mxu0 %v9447
      %v9626 = vpop.f32.mrf.mxu0
      %v9627 = vadd.f32 0.0, %v9626
      %v9628 = vpop.f32.mrf.mxu0
      %v9629 = vpop.f32.mrf.mxu0
      %v9630 = vadd.f32 0.0, %v9629
      %v9631 = vpop.f32.mrf.mxu0
      %9632 = vmatprep.mubr.bf16.mxu0 0
      %9633 = vmatmul.mubr.bf16.gmra.mxu0 %v9450
      %v9634 = vpop.f32.mrf.mxu0
      %v9635 = vadd.f32 0.0, %v9634
      %v9636 = vpop.f32.mrf.mxu0
      %v9637 = vpop.f32.mrf.mxu0
      %v9638 = vadd.f32 0.0, %v9637
      %v9639 = vpop.f32.mrf.mxu0
      %9640 = vmatprep.mubr.bf16.mxu0 0
      %9641 = vmatmul.mubr.bf16.gmra.mxu0 %v9453
      %v9642 = vpop.f32.mrf.mxu0
      %v9643 = vadd.f32 0.0, %v9642
      %v9644 = vpop.f32.mrf.mxu0
      %v9645 = vpop.f32.mrf.mxu0
      %v9646 = vadd.f32 0.0, %v9645
      %v9647 = vpop.f32.mrf.mxu0
      %9648 = vmatprep.mubr.bf16.mxu0 0
      %9649 = vmatmul.mubr.bf16.gmra.mxu0 %v9456
      %v9650 = vpop.f32.mrf.mxu0
      %v9651 = vadd.f32 0.0, %v9650
      %v9652 = vpop.f32.mrf.mxu0
      %v9653 = vpop.f32.mrf.mxu0
      %v9654 = vadd.f32 0.0, %v9653
      %v9655 = vpop.f32.mrf.mxu0
      %9656 = vmatprep.mubr.bf16.mxu0 0
      %9657 = vmatmul.mubr.bf16.gmra.mxu0 %v9459
      %v9658 = vpop.f32.mrf.mxu0
      %v9659 = vadd.f32 0.0, %v9658
      %v9660 = vpop.f32.mrf.mxu0
      %v9661 = vpop.f32.mrf.mxu0
      %v9662 = vadd.f32 0.0, %v9661
      %v9663 = vpop.f32.mrf.mxu0
      %9664 = vmatprep.mubr.bf16.mxu0 0
      %9665 = vmatmul.mubr.bf16.gmra.mxu0 %v9462
      %v9666 = vpop.f32.mrf.mxu0
      %v9667 = vadd.f32 0.0, %v9666
      %v9668 = vpop.f32.mrf.mxu0
      %v9669 = vpop.f32.mrf.mxu0
      %v9670 = vadd.f32 0.0, %v9669
      %v9671 = vpop.f32.mrf.mxu0
      %9672 = vmatprep.mubr.bf16.mxu0 0
      %9673 = vmatmul.mubr.bf16.gmra.mxu0 %v9465
      %v9674 = vpop.f32.mrf.mxu0
      %v9675 = vadd.f32 0.0, %v9674
      %v9676 = vpop.f32.mrf.mxu0
      %v9677 = vpop.f32.mrf.mxu0
      %v9678 = vadd.f32 0.0, %v9677
      %v9679 = vpop.f32.mrf.mxu0
      %9680 = vmatprep.mubr.bf16.mxu0 0
      %9681 = vmatmul.mubr.bf16.gmra.mxu0 %v9468
      %v9682 = vpop.f32.mrf.mxu0
      %v9683 = vadd.f32 0.0, %v9682
      %v9684 = vpop.f32.mrf.mxu0
      %v9685 = vpop.f32.mrf.mxu0
      %v9686 = vadd.f32 0.0, %v9685
      %v9687 = vpop.f32.mrf.mxu0
      %9688 = vmatprep.mubr.bf16.mxu0 0
      %9689 = vmatmul.mubr.bf16.gmra.mxu0 %v9471
      %v9690 = vpop.f32.mrf.mxu0
      %v9691 = vadd.f32 0.0, %v9690
      %v9692 = vpop.f32.mrf.mxu0
      %v9693 = vpop.f32.mrf.mxu0
      %v9694 = vadd.f32 0.0, %v9693
      %v9695 = vpop.f32.mrf.mxu0
      %9696 = vmatprep.mubr.bf16.mxu0 0
      %9697 = vmatmul.mubr.bf16.gmra.mxu0 %v9474
      %v9698 = vpop.f32.mrf.mxu0
      %v9699 = vadd.f32 0.0, %v9698
      %v9700 = vpop.f32.mrf.mxu0
      %v9701 = vpop.f32.mrf.mxu0
      %v9702 = vadd.f32 0.0, %v9701
      %v9703 = vpop.f32.mrf.mxu0
      %9704 = vmatprep.mubr.bf16.mxu0 0
      %9705 = vmatmul.mubr.bf16.gmra.mxu0 %v9477
      %v9706 = vpop.f32.mrf.mxu0
      %v9707 = vadd.f32 0.0, %v9706
      %v9708 = vpop.f32.mrf.mxu0
      %v9709 = vpop.f32.mrf.mxu0
      %v9710 = vadd.f32 0.0, %v9709
      %v9711 = vpop.f32.mrf.mxu0
      %9712 = vmatprep.mubr.bf16.mxu0 0
      %9713 = vmatmul.mubr.bf16.gmra.mxu0 %v9480
      %v9714 = vpop.f32.mrf.mxu0
      %v9715 = vadd.f32 0.0, %v9714
      %v9716 = vpop.f32.mrf.mxu0
      %v9717 = vpop.f32.mrf.mxu0
      %v9718 = vadd.f32 0.0, %v9717
      %v9719 = vpop.f32.mrf.mxu0
      %9720 = vmatprep.mubr.bf16.mxu0 0
      %9721 = vmatmul.mubr.bf16.gmra.mxu0 %v9483
      %v9722 = vpop.f32.mrf.mxu0
      %v9723 = vadd.f32 0.0, %v9722
      %v9724 = vpop.f32.mrf.mxu0
      %v9725 = vpop.f32.mrf.mxu0
      %v9726 = vpop.f32.mrf.mxu0
      %9727 = vdwg.mxu0
      %v9728 = vadd.f32 %v9143, %v9523
      %v9729 = vadd.f32 %v9144, %v9526
      %v9730 = vadd.f32 %v9145, %v9531
      %v9731 = vadd.f32 %v9146, %v9534
      %v9732 = vadd.f32 %v9147, %v9539
      %v9733 = vadd.f32 %v9148, %v9542
      %v9734 = vadd.f32 %v9149, %v9547
      %v9735 = vadd.f32 %v9150, %v9550
      %v9736 = vadd.f32 %v9151, %v9555
      %v9737 = vadd.f32 %v9152, %v9558
      %v9738 = vadd.f32 %v9153, %v9563
      %v9739 = vadd.f32 %v9154, %v9566
      %v9740 = vadd.f32 %v9155, %v9571
      %v9741 = vadd.f32 %v9156, %v9574
      %v9742 = vadd.f32 %v9157, %v9579
      %v9743 = vadd.f32 %v9158, %v9582
      %v9744 = vadd.f32 %v9159, %v9587
      %v9745 = vadd.f32 %v9160, %v9590
      %v9746 = vadd.f32 %v9161, %v9595
      %v9747 = vadd.f32 %v9162, %v9598
      %v9748 = vadd.f32 %v9163, %v9603
      %v9749 = vadd.f32 %v9164, %v9606
      %v9750 = vadd.f32 %v9165, %v9611
      %v9751 = vadd.f32 %v9166, %v9614
      %v9752 = vadd.f32 %v9167, %v9619
      %v9753 = vadd.f32 %v9168, %v9622
      %v9754 = vadd.f32 %v9169, %v9627
      %v9755 = vadd.f32 %v9170, %v9630
      %v9756 = vadd.f32 %v9171, %v9635
      %v9757 = vadd.f32 %v9172, %v9638
      %v9758 = vadd.f32 %v9173, %v9643
      %v9759 = vadd.f32 %v9174, %v9646
      %v9760 = vadd.f32 %v9175, %v9651
      %v9761 = vadd.f32 %v9176, %v9654
      %v9762 = vadd.f32 %v9177, %v9659
      %v9763 = vadd.f32 %v9178, %v9662
      %v9764 = vadd.f32 %v9179, %v9667
      %v9765 = vadd.f32 %v9180, %v9670
      %v9766 = vadd.f32 %v9181, %v9675
      %v9767 = vadd.f32 %v9182, %v9678
      %v9768 = vadd.f32 %v9183, %v9683
      %v9769 = vadd.f32 %v9184, %v9686
      %v9770 = vadd.f32 %v9185, %v9691
      %v9771 = vadd.f32 %v9186, %v9694
      %v9772 = vadd.f32 %v9187, %v9699
      %v9773 = vadd.f32 %v9188, %v9702
      %v9774 = vadd.f32 %v9189, %v9707
      %v9775 = vadd.f32 %v9190, %v9710
      %v9776 = vadd.f32 %v9191, %v9715
      %v9777 = vadd.f32 %v9192, %v9718
      %v9778 = vadd.f32 %v9193, %v9723
      %v9780 = vshrl.u32 %v9198, 16
      %v9782 = vrot.slane %v9780, 4
      %v9783 = vshll.u32 %v9198, 16
      %v9785 = vrot.slane %v9783, 5
      %v9786 = vor.u32 %v9782, %v9785
      %v9787 = vrot.slane %v9786, 4
      %v9789 = vshll.u32 %v9199, 16
      %v9791 = vrot.slane %v9789, 5
      %v9792 = vsel %vm272, %v9787, %v9791
      %v9793 = vshrl.u32 %v9199, 16
      %v9795 = vrot.slane %v9793, 4
      %v9796 = vor.u32 %v9795, %v9791
      %v9797 = vrot.slane %v9796, 4
      %v9799 = vshll.u32 %v9200, 16
      %v9801 = vrot.slane %v9799, 5
      %v9802 = vsel %vm272, %v9797, %v9801
      %v9803 = vshrl.u32 %v9200, 16
      %v9805 = vrot.slane %v9803, 4
      %v9806 = vor.u32 %v9805, %v9801
      %v9807 = vrot.slane %v9806, 4
      %v9809 = vshll.u32 %v9201, 16
      %v9811 = vrot.slane %v9809, 5
      %v9812 = vsel %vm272, %v9807, %v9811
      %v9814 = vshrl.u32 %v9202, 16
      %v9816 = vrot.slane %v9814, 4
      %v9817 = vshll.u32 %v9202, 16
      %v9819 = vrot.slane %v9817, 5
      %v9820 = vor.u32 %v9816, %v9819
      %v9821 = vrot.slane %v9820, 4
      %v9823 = vshll.u32 %v9203, 16
      %v9825 = vrot.slane %v9823, 5
      %v9826 = vsel %vm272, %v9821, %v9825
      %v9827 = vshrl.u32 %v9203, 16
      %v9829 = vrot.slane %v9827, 4
      %v9830 = vor.u32 %v9829, %v9825
      %v9831 = vrot.slane %v9830, 4
      %v9833 = vshll.u32 %v9204, 16
      %v9835 = vrot.slane %v9833, 5
      %v9836 = vsel %vm272, %v9831, %v9835
      %v9837 = vshrl.u32 %v9204, 16
      %v9839 = vrot.slane %v9837, 4
      %v9840 = vor.u32 %v9839, %v9835
      %v9841 = vrot.slane %v9840, 4
      %v9843 = vshll.u32 %v9205, 16
      %v9845 = vrot.slane %v9843, 5
      %v9846 = vsel %vm272, %v9841, %v9845
      %v9848 = vshrl.u32 %v9206, 16
      %v9850 = vrot.slane %v9848, 4
      %v9851 = vshll.u32 %v9206, 16
      %v9853 = vrot.slane %v9851, 5
      %v9854 = vor.u32 %v9850, %v9853
      %v9855 = vrot.slane %v9854, 4
      %v9857 = vshll.u32 %v9207, 16
      %v9859 = vrot.slane %v9857, 5
      %v9860 = vsel %vm272, %v9855, %v9859
      %v9861 = vshrl.u32 %v9207, 16
      %v9863 = vrot.slane %v9861, 4
      %v9864 = vor.u32 %v9863, %v9859
      %v9865 = vrot.slane %v9864, 4
      %v9867 = vshll.u32 %v9208, 16
      %v9869 = vrot.slane %v9867, 5
      %v9870 = vsel %vm272, %v9865, %v9869
      %v9871 = vshrl.u32 %v9208, 16
      %v9873 = vrot.slane %v9871, 4
      %v9874 = vor.u32 %v9873, %v9869
      %v9875 = vrot.slane %v9874, 4
      %v9877 = vshll.u32 %v9209, 16
      %v9879 = vrot.slane %v9877, 5
      %v9880 = vsel %vm272, %v9875, %v9879
      %v9882 = vshrl.u32 %v9210, 16
      %v9884 = vrot.slane %v9882, 4
      %v9885 = vshll.u32 %v9210, 16
      %v9887 = vrot.slane %v9885, 5
      %v9888 = vor.u32 %v9884, %v9887
      %v9889 = vrot.slane %v9888, 4
      %v9891 = vshll.u32 %v9211, 16
      %v9893 = vrot.slane %v9891, 5
      %v9894 = vsel %vm272, %v9889, %v9893
      %v9895 = vshrl.u32 %v9211, 16
      %v9897 = vrot.slane %v9895, 4
      %v9898 = vor.u32 %v9897, %v9893
      %v9899 = vrot.slane %v9898, 4
      %v9901 = vshll.u32 %v9212, 16
      %v9903 = vrot.slane %v9901, 5
      %v9904 = vsel %vm272, %v9899, %v9903
      %v9905 = vshrl.u32 %v9212, 16
      %v9907 = vrot.slane %v9905, 4
      %v9908 = vor.u32 %v9907, %v9903
      %v9909 = vrot.slane %v9908, 4
      %v9911 = vshll.u32 %v9213, 16
      %v9913 = vrot.slane %v9911, 5
      %v9914 = vsel %vm272, %v9909, %v9913
      %v9916 = vshrl.u32 %v9214, 16
      %v9918 = vrot.slane %v9916, 4
      %v9919 = vshll.u32 %v9214, 16
      %v9921 = vrot.slane %v9919, 5
      %v9922 = vor.u32 %v9918, %v9921
      %v9923 = vrot.slane %v9922, 4
      %v9925 = vshll.u32 %v9215, 16
      %v9927 = vrot.slane %v9925, 5
      %v9928 = vsel %vm272, %v9923, %v9927
      %v9929 = vshrl.u32 %v9215, 16
      %v9931 = vrot.slane %v9929, 4
      %v9932 = vor.u32 %v9931, %v9927
      %v9933 = vrot.slane %v9932, 4
      %v9935 = vshll.u32 %v9216, 16
      %v9937 = vrot.slane %v9935, 5
      %v9938 = vsel %vm272, %v9933, %v9937
      %v9939 = vshrl.u32 %v9216, 16
      %v9941 = vrot.slane %v9939, 4
      %v9942 = vor.u32 %v9941, %v9937
      %v9943 = vrot.slane %v9942, 4
      %v9945 = vshll.u32 %v9217, 16
      %v9947 = vrot.slane %v9945, 5
      %v9948 = vsel %vm272, %v9943, %v9947
      %v9950 = vshrl.u32 %v9218, 16
      %v9952 = vrot.slane %v9950, 4
      %v9953 = vshll.u32 %v9218, 16
      %v9955 = vrot.slane %v9953, 5
      %v9956 = vor.u32 %v9952, %v9955
      %v9957 = vrot.slane %v9956, 4
      %v9959 = vshll.u32 %v9219, 16
      %v9961 = vrot.slane %v9959, 5
      %v9962 = vsel %vm272, %v9957, %v9961
      %v9963 = vshrl.u32 %v9219, 16
      %v9965 = vrot.slane %v9963, 4
      %v9966 = vor.u32 %v9965, %v9961
      %v9967 = vrot.slane %v9966, 4
      %v9969 = vshll.u32 %v9220, 16
      %v9971 = vrot.slane %v9969, 5
      %v9972 = vsel %vm272, %v9967, %v9971
      %v9973 = vshrl.u32 %v9220, 16
      %v9975 = vrot.slane %v9973, 4
      %v9976 = vor.u32 %v9975, %v9971
      %v9977 = vrot.slane %v9976, 4
      %v9979 = vshll.u32 %v9221, 16
      %v9981 = vrot.slane %v9979, 5
      %v9982 = vsel %vm272, %v9977, %v9981
      %v9984 = vshrl.u32 %v9222, 16
      %v9986 = vrot.slane %v9984, 4
      %v9987 = vshll.u32 %v9222, 16
      %v9989 = vrot.slane %v9987, 5
      %v9990 = vor.u32 %v9986, %v9989
      %v9991 = vrot.slane %v9990, 4
      %v9993 = vshll.u32 %v9223, 16
      %v9995 = vrot.slane %v9993, 5
      %v9996 = vsel %vm272, %v9991, %v9995
      %v9997 = vshrl.u32 %v9223, 16
      %v9999 = vrot.slane %v9997, 4
      %v10000 = vor.u32 %v9999, %v9995
      %v10001 = vrot.slane %v10000, 4
      %v10003 = vshll.u32 %v9224, 16
      %v10005 = vrot.slane %v10003, 5
      %v10006 = vsel %vm272, %v10001, %v10005
      %v10007 = vshrl.u32 %v9224, 16
      %v10009 = vrot.slane %v10007, 4
      %v10010 = vor.u32 %v10009, %v10005
      %v10011 = vrot.slane %v10010, 4
      %v10013 = vshll.u32 %v9225, 16
      %v10015 = vrot.slane %v10013, 5
      %v10016 = vsel %vm272, %v10011, %v10015
      %v10018 = vshrl.u32 %v9226, 16
      %v10020 = vrot.slane %v10018, 4
      %v10021 = vshll.u32 %v9226, 16
      %v10023 = vrot.slane %v10021, 5
      %v10024 = vor.u32 %v10020, %v10023
      %v10025 = vrot.slane %v10024, 4
      %v10027 = vshll.u32 %v9227, 16
      %v10029 = vrot.slane %v10027, 5
      %v10030 = vsel %vm272, %v10025, %v10029
      %v10031 = vshrl.u32 %v9227, 16
      %v10033 = vrot.slane %v10031, 4
      %v10034 = vor.u32 %v10033, %v10029
      %v10035 = vrot.slane %v10034, 4
      %v10037 = vshll.u32 %v9228, 16
      %v10039 = vrot.slane %v10037, 5
      %v10040 = vsel %vm272, %v10035, %v10039
      %v10041 = vshrl.u32 %v9228, 16
      %v10043 = vrot.slane %v10041, 4
      %v10044 = vor.u32 %v10043, %v10039
      %v10045 = vrot.slane %v10044, 4
      %v10047 = vshll.u32 %v9229, 16
      %v10049 = vrot.slane %v10047, 5
      %v10050 = vsel %vm272, %v10045, %v10049
      %v10052 = vshrl.u32 %v9230, 16
      %v10054 = vrot.slane %v10052, 4
      %v10055 = vshll.u32 %v9230, 16
      %v10057 = vrot.slane %v10055, 5
      %v10058 = vor.u32 %v10054, %v10057
      %v10059 = vrot.slane %v10058, 4
      %v10061 = vshll.u32 %v9231, 16
      %v10063 = vrot.slane %v10061, 5
      %v10064 = vsel %vm272, %v10059, %v10063
      %v10065 = vshrl.u32 %v9231, 16
      %v10067 = vrot.slane %v10065, 4
      %v10068 = vor.u32 %v10067, %v10063
      %v10069 = vrot.slane %v10068, 4
      %v10071 = vshll.u32 %v9232, 16
      %v10073 = vrot.slane %v10071, 5
      %v10074 = vsel %vm272, %v10069, %v10073
      %v10075 = vshrl.u32 %v9232, 16
      %v10077 = vrot.slane %v10075, 4
      %v10078 = vor.u32 %v10077, %v10073
      %v10079 = vrot.slane %v10078, 4
      %v10081 = vshll.u32 %v9233, 16
      %v10083 = vrot.slane %v10081, 5
      %v10084 = vsel %vm272, %v10079, %v10083
      %v10086 = vshrl.u32 %v9234, 16
      %v10088 = vrot.slane %v10086, 4
      %v10089 = vshll.u32 %v9234, 16
      %v10091 = vrot.slane %v10089, 5
      %v10092 = vor.u32 %v10088, %v10091
      %v10093 = vrot.slane %v10092, 4
      %v10095 = vshll.u32 %v9235, 16
      %v10097 = vrot.slane %v10095, 5
      %v10098 = vsel %vm272, %v10093, %v10097
      %v10099 = vshrl.u32 %v9235, 16
      %v10101 = vrot.slane %v10099, 4
      %v10102 = vor.u32 %v10101, %v10097
      %v10103 = vrot.slane %v10102, 4
      %v10105 = vshll.u32 %v9236, 16
      %v10107 = vrot.slane %v10105, 5
      %v10108 = vsel %vm272, %v10103, %v10107
      %v10109 = vshrl.u32 %v9236, 16
      %v10111 = vrot.slane %v10109, 4
      %v10112 = vor.u32 %v10111, %v10107
      %v10113 = vrot.slane %v10112, 4
      %v10115 = vshll.u32 %v9237, 16
      %v10117 = vrot.slane %v10115, 5
      %v10118 = vsel %vm272, %v10113, %v10117
      %v10120 = vshrl.u32 %v9238, 16
      %v10122 = vrot.slane %v10120, 4
      %v10123 = vshll.u32 %v9238, 16
      %v10125 = vrot.slane %v10123, 5
      %v10126 = vor.u32 %v10122, %v10125
      %v10127 = vrot.slane %v10126, 4
      %v10129 = vshll.u32 %v9239, 16
      %v10131 = vrot.slane %v10129, 5
      %v10132 = vsel %vm272, %v10127, %v10131
      %v10133 = vshrl.u32 %v9239, 16
      %v10135 = vrot.slane %v10133, 4
      %v10136 = vor.u32 %v10135, %v10131
      %v10137 = vrot.slane %v10136, 4
      %v10139 = vshll.u32 %v9240, 16
      %v10141 = vrot.slane %v10139, 5
      %v10142 = vsel %vm272, %v10137, %v10141
      %v10143 = vshrl.u32 %v9240, 16
      %v10145 = vrot.slane %v10143, 4
      %v10146 = vor.u32 %v10145, %v10141
      %v10147 = vrot.slane %v10146, 4
      %v10149 = vshll.u32 %v9241, 16
      %v10151 = vrot.slane %v10149, 5
      %v10152 = vsel %vm272, %v10147, %v10151
      %v10154 = vshrl.u32 %v9242, 16
      %v10156 = vrot.slane %v10154, 4
      %v10157 = vshll.u32 %v9242, 16
      %v10159 = vrot.slane %v10157, 5
      %v10160 = vor.u32 %v10156, %v10159
      %v10161 = vrot.slane %v10160, 4
      %v10163 = vshll.u32 %v9243, 16
      %v10165 = vrot.slane %v10163, 5
      %v10166 = vsel %vm272, %v10161, %v10165
      %v10167 = vshrl.u32 %v9243, 16
      %v10169 = vrot.slane %v10167, 4
      %v10170 = vor.u32 %v10169, %v10165
      %v10171 = vrot.slane %v10170, 4
      %v10173 = vshll.u32 %v9244, 16
      %v10175 = vrot.slane %v10173, 5
      %v10176 = vsel %vm272, %v10171, %v10175
      %v10177 = vshrl.u32 %v9244, 16
      %v10179 = vrot.slane %v10177, 4
      %v10180 = vor.u32 %v10179, %v10175
      %v10181 = vrot.slane %v10180, 4
      %v10183 = vshll.u32 %v9245, 16
      %v10185 = vrot.slane %v10183, 5
      %v10186 = vsel %vm272, %v10181, %v10185
      %v10188 = vshrl.u32 %v9246, 16
      %v10190 = vrot.slane %v10188, 4
      %v10191 = vshll.u32 %v9246, 16
      %v10193 = vrot.slane %v10191, 5
      %v10194 = vor.u32 %v10190, %v10193
      %v10195 = vrot.slane %v10194, 4
      %v10197 = vshll.u32 %v9247, 16
      %v10199 = vrot.slane %v10197, 5
      %v10200 = vsel %vm272, %v10195, %v10199
      %v10201 = vshrl.u32 %v9247, 16
      %v10203 = vrot.slane %v10201, 4
      %v10204 = vor.u32 %v10203, %v10199
      %v10205 = vrot.slane %v10204, 4
      %v10207 = vshll.u32 %v9248, 16
      %v10209 = vrot.slane %v10207, 5
      %v10210 = vsel %vm272, %v10205, %v10209
      %v10211 = vshrl.u32 %v9248, 16
      %v10213 = vrot.slane %v10211, 4
      %v10214 = vor.u32 %v10213, %v10209
      %v10215 = vrot.slane %v10214, 4
      %v10217 = vshll.u32 %v9249, 16
      %v10219 = vrot.slane %v10217, 5
      %v10220 = vsel %vm272, %v10215, %v10219
      %v10222 = vshrl.u32 %v9250, 16
      %v10224 = vrot.slane %v10222, 4
      %v10225 = vshll.u32 %v9250, 16
      %v10227 = vrot.slane %v10225, 5
      %v10228 = vor.u32 %v10224, %v10227
      %v10229 = vrot.slane %v10228, 4
      %v10231 = vshll.u32 %v9251, 16
      %v10233 = vrot.slane %v10231, 5
      %v10234 = vsel %vm272, %v10229, %v10233
      %v10235 = vshrl.u32 %v9251, 16
      %v10237 = vrot.slane %v10235, 4
      %v10238 = vor.u32 %v10237, %v10233
      %v10239 = vrot.slane %v10238, 4
      %v10241 = vshll.u32 %v9252, 16
      %v10243 = vrot.slane %v10241, 5
      %v10244 = vsel %vm272, %v10239, %v10243
      %v10245 = vshrl.u32 %v9252, 16
      %v10247 = vrot.slane %v10245, 4
      %v10248 = vor.u32 %v10247, %v10243
      %v10249 = vrot.slane %v10248, 4
      %v10251 = vshll.u32 %v9253, 16
      %v10253 = vrot.slane %v10251, 5
      %v10254 = vsel %vm272, %v10249, %v10253
      %v10256 = vshrl.u32 %v9254, 16
      %v10258 = vrot.slane %v10256, 4
      %v10259 = vshll.u32 %v9254, 16
      %v10261 = vrot.slane %v10259, 5
      %v10262 = vor.u32 %v10258, %v10261
      %v10263 = vrot.slane %v10262, 4
      %v10265 = vshll.u32 %v9255, 16
      %v10267 = vrot.slane %v10265, 5
      %v10268 = vsel %vm272, %v10263, %v10267
      %v10269 = vshrl.u32 %v9255, 16
      %v10271 = vrot.slane %v10269, 4
      %v10272 = vor.u32 %v10271, %v10267
      %v10273 = vrot.slane %v10272, 4
      %v10275 = vshll.u32 %v9256, 16
      %v10277 = vrot.slane %v10275, 5
      %v10278 = vsel %vm272, %v10273, %v10277
      %v10279 = vshrl.u32 %v9256, 16
      %v10281 = vrot.slane %v10279, 4
      %v10282 = vor.u32 %v10281, %v10277
      %v10283 = vrot.slane %v10282, 4
      %v10285 = vshll.u32 %v9257, 16
      %v10287 = vrot.slane %v10285, 5
      %v10288 = vsel %vm272, %v10283, %v10287
      %v10290 = vshrl.u32 %v9258, 16
      %v10292 = vrot.slane %v10290, 4
      %v10293 = vshll.u32 %v9258, 16
      %v10295 = vrot.slane %v10293, 5
      %v10296 = vor.u32 %v10292, %v10295
      %v10297 = vrot.slane %v10296, 4
      %v10299 = vshll.u32 %v9259, 16
      %v10301 = vrot.slane %v10299, 5
      %v10302 = vsel %vm272, %v10297, %v10301
      %v10303 = vshrl.u32 %v9259, 16
      %v10305 = vrot.slane %v10303, 4
      %v10306 = vor.u32 %v10305, %v10301
      %v10307 = vrot.slane %v10306, 4
      %v10309 = vshll.u32 %v9260, 16
      %v10311 = vrot.slane %v10309, 5
      %v10312 = vsel %vm272, %v10307, %v10311
      %v10313 = vshrl.u32 %v9260, 16
      %v10315 = vrot.slane %v10313, 4
      %v10316 = vor.u32 %v10315, %v10311
      %v10317 = vrot.slane %v10316, 4
      %v10319 = vshll.u32 %v9261, 16
      %v10321 = vrot.slane %v10319, 5
      %v10322 = vsel %vm272, %v10317, %v10321
      %v10324 = vshrl.u32 %v9262, 16
      %v10326 = vrot.slane %v10324, 4
      %v10327 = vshll.u32 %v9262, 16
      %v10329 = vrot.slane %v10327, 5
      %v10330 = vor.u32 %v10326, %v10329
      %v10331 = vrot.slane %v10330, 4
      %v10333 = vshll.u32 %v9263, 16
      %v10335 = vrot.slane %v10333, 5
      %v10336 = vsel %vm272, %v10331, %v10335
      %v10337 = vshrl.u32 %v9263, 16
      %v10339 = vrot.slane %v10337, 4
      %v10340 = vor.u32 %v10339, %v10335
      %v10341 = vrot.slane %v10340, 4
      %v10343 = vshll.u32 %v9264, 16
      %v10345 = vrot.slane %v10343, 5
      %v10346 = vsel %vm272, %v10341, %v10345
      %v10347 = vshrl.u32 %v9264, 16
      %v10349 = vrot.slane %v10347, 4
      %v10350 = vor.u32 %v10349, %v10345
      %v10351 = vrot.slane %v10350, 4
      %v10353 = vshll.u32 %v9265, 16
      %v10355 = vrot.slane %v10353, 5
      %v10356 = vsel %vm272, %v10351, %v10355
      %s10357 = scalar_lea.vmem %s1, 156
      %v10358 = vld [vmem:[%s10357] sm:$0xf]
      %v10359 = vld [vmem:[%s10357 + $0x4] sm:$0xf]
      %v10360 = vld [vmem:[%s10357 + $0x8] sm:$0x3]
      %v10361 = vunpack.c.l.b16 %v9792
      %v10362 = vunpack.c.l.b16 %v9802
      %v10363 = vunpack.c.l.b16 %v9812
      %v10364 = vunpack.c.l.b16 %v9826
      %v10365 = vunpack.c.l.b16 %v9836
      %v10366 = vunpack.c.l.b16 %v9846
      %v10367 = vunpack.c.l.b16 %v9860
      %v10368 = vunpack.c.l.b16 %v9870
      %v10369 = vunpack.c.l.b16 %v9880
      %v10370 = vunpack.c.l.b16 %v9894
      %v10371 = vunpack.c.l.b16 %v9904
      %v10372 = vunpack.c.l.b16 %v9914
      %v10373 = vunpack.c.l.b16 %v9928
      %v10374 = vunpack.c.l.b16 %v9938
      %v10375 = vunpack.c.l.b16 %v9948
      %v10376 = vunpack.c.l.b16 %v9962
      %v10377 = vunpack.c.l.b16 %v9972
      %v10378 = vunpack.c.l.b16 %v9982
      %v10379 = vunpack.c.l.b16 %v9996
      %v10380 = vunpack.c.l.b16 %v10006
      %v10381 = vunpack.c.l.b16 %v10016
      %v10382 = vunpack.c.l.b16 %v10030
      %v10383 = vunpack.c.l.b16 %v10040
      %v10384 = vunpack.c.l.b16 %v10050
      %v10385 = vunpack.c.l.b16 %v10064
      %v10386 = vunpack.c.l.b16 %v10074
      %v10387 = vunpack.c.l.b16 %v10084
      %v10388 = vunpack.c.l.b16 %v10098
      %v10389 = vunpack.c.l.b16 %v10108
      %v10390 = vunpack.c.l.b16 %v10118
      %v10391 = vunpack.c.l.b16 %v10132
      %v10392 = vunpack.c.l.b16 %v10142
      %v10393 = vunpack.c.l.b16 %v10152
      %v10394 = vunpack.c.l.b16 %v10166
      %v10395 = vunpack.c.l.b16 %v10176
      %v10396 = vunpack.c.l.b16 %v10186
      %v10397 = vunpack.c.l.b16 %v10200
      %v10398 = vunpack.c.l.b16 %v10210
      %v10399 = vunpack.c.l.b16 %v10220
      %v10400 = vunpack.c.l.b16 %v10234
      %v10401 = vunpack.c.l.b16 %v10244
      %v10402 = vunpack.c.l.b16 %v10254
      %v10403 = vunpack.c.l.b16 %v10268
      %v10404 = vunpack.c.l.b16 %v10278
      %v10405 = vunpack.c.l.b16 %v10288
      %v10406 = vunpack.c.l.b16 %v10302
      %v10407 = vunpack.c.l.b16 %v10312
      %v10408 = vunpack.c.l.b16 %v10322
      %v10409 = vunpack.c.l.b16 %v10336
      %v10410 = vunpack.c.l.b16 %v10346
      %v10411 = vunpack.c.l.b16 %v10356
      %v10412 = vpack.c.b16 %v10362, %v10361
      %v10413 = vpack.c.b16 %v10364, %v10363
      %v10414 = vpack.c.b16 %v10366, %v10365
      %v10415 = vpack.c.b16 %v10368, %v10367
      %v10416 = vpack.c.b16 %v10370, %v10369
      %v10417 = vpack.c.b16 %v10372, %v10371
      %v10418 = vpack.c.b16 %v10374, %v10373
      %v10419 = vpack.c.b16 %v10376, %v10375
      %v10420 = vpack.c.b16 %v10378, %v10377
      %v10421 = vpack.c.b16 %v10380, %v10379
      %v10422 = vpack.c.b16 %v10382, %v10381
      %v10423 = vpack.c.b16 %v10384, %v10383
      %v10424 = vpack.c.b16 %v10386, %v10385
      %v10425 = vpack.c.b16 %v10388, %v10387
      %v10426 = vpack.c.b16 %v10390, %v10389
      %v10427 = vpack.c.b16 %v10392, %v10391
      %v10428 = vpack.c.b16 %v10394, %v10393
      %v10429 = vpack.c.b16 %v10396, %v10395
      %v10430 = vpack.c.b16 %v10398, %v10397
      %v10431 = vpack.c.b16 %v10400, %v10399
      %v10432 = vpack.c.b16 %v10402, %v10401
      %v10433 = vpack.c.b16 %v10404, %v10403
      %v10434 = vpack.c.b16 %v10406, %v10405
      %v10435 = vpack.c.b16 %v10408, %v10407
      %v10436 = vpack.c.b16 %v10410, %v10409
      %v10437 = vpack.c.b16 %v10411, %v10411
      %v10441 = vunpack.c.l.b16 %v10358
      %v10442 = vunpack.c.l.b16 %v10359
      %v10443 = vunpack.c.l.b16 %v10360
      %v10444 = vpack.c.b16 %v10442, %v10441
      %v10445 = vpack.c.b16 %v10443, %v10443
      %v10448 = vsel %vm941, %v10412, 0
      %v10451 = vsel %vm941, %v10413, 0
      %v10454 = vsel %vm941, %v10414, 0
      %v10457 = vsel %vm941, %v10415, 0
      %v10460 = vsel %vm941, %v10416, 0
      %v10463 = vsel %vm941, %v10417, 0
      %v10466 = vsel %vm941, %v10418, 0
      %v10469 = vsel %vm941, %v10419, 0
      %v10472 = vsel %vm941, %v10420, 0
      %v10475 = vsel %vm941, %v10421, 0
      %v10478 = vsel %vm941, %v10422, 0
      %v10481 = vsel %vm941, %v10423, 0
      %v10484 = vsel %vm941, %v10424, 0
      %v10487 = vsel %vm941, %v10425, 0
      %v10490 = vsel %vm941, %v10426, 0
      %v10493 = vsel %vm941, %v10427, 0
      %v10496 = vsel %vm941, %v10428, 0
      %v10499 = vsel %vm941, %v10429, 0
      %v10502 = vsel %vm941, %v10430, 0
      %v10505 = vsel %vm941, %v10431, 0
      %v10508 = vsel %vm941, %v10432, 0
      %v10511 = vsel %vm941, %v10433, 0
      %v10514 = vsel %vm941, %v10434, 0
      %v10517 = vsel %vm941, %v10435, 0
      %v10520 = vsel %vm941, %v10436, 0
      %v10523 = vsel %vm941, %v10437, 0
      %v10526 = vsel %vm1020, %v10445, 0
      %10528 = vmatprep.subr.bf16.mxu0 0
      %10529 = vmatpush1.bf16.msra.mxu0 0
      %10530 = vmatprep.subr.bf16.mxu0 0
      %10531 = vmatpush1.bf16.msra.mxu0 0
      %10532 = vmatprep.subr.bf16.mxu0 0
      %10533 = vmatpush1.bf16.msra.mxu0 0
      %10534 = vmatprep.subr.bf16.mxu0 0
      %10535 = vmatpush1.bf16.msra.mxu0 0
      %10536 = vmatprep.subr.bf16.mxu0 0
      %10537 = vmatpush1.bf16.msra.mxu0 0
      %10538 = vmatprep.subr.bf16.mxu0 0
      %10539 = vmatpush1.bf16.msra.mxu0 0
      %10540 = vmatprep.subr.bf16.mxu0 0
      %10541 = vmatpush1.bf16.msra.mxu0 %v10526
      %10542 = vmatprep.subr.bf16.mxu0 0
      %10543 = vmatpush1.bf16.msra.mxu0 %v10444
      %10544 = vmatprep.subr.bf16.mxu0 0
      %10545 = vmatpush2.bf16.msra.mxu0 0
      %10546 = vmatprep.subr.bf16.mxu0 0
      %10547 = vmatpush2.bf16.msra.mxu0 0
      %10548 = vmatprep.subr.bf16.mxu0 0
      %10549 = vmatpush2.bf16.msra.mxu0 0
      %10550 = vmatprep.subr.bf16.mxu0 0
      %10551 = vmatpush2.bf16.msra.mxu0 0
      %10552 = vmatprep.subr.bf16.mxu0 0
      %10553 = vmatpush2.bf16.msra.mxu0 0
      %10554 = vmatprep.subr.bf16.mxu0 0
      %10555 = vmatpush2.bf16.msra.mxu0 0
      %10556 = vmatprep.subr.bf16.mxu0 0
      %10557 = vmatpush2.bf16.msra.mxu0 0
      %10558 = vmatprep.subr.bf16.mxu0 0
      %10559 = vmatpush2.bf16.msra.mxu0 0
      %10560 = vmatprep.mubr.bf16.mxu0 0
      %10561 = vmatmul.mubr.bf16.gmra.mxu0 %v10448
      %v10562 = vpop.f32.mrf.mxu0
      %v10563 = vadd.f32 0.0, %v10562
      %v10564 = vpop.f32.mrf.mxu0
      %v10565 = vpop.f32.mrf.mxu0
      %v10566 = vadd.f32 0.0, %v10565
      %v10567 = vpop.f32.mrf.mxu0
      %10568 = vmatprep.mubr.bf16.mxu0 0
      %10569 = vmatmul.mubr.bf16.gmra.mxu0 %v10451
      %v10570 = vpop.f32.mrf.mxu0
      %v10571 = vadd.f32 0.0, %v10570
      %v10572 = vpop.f32.mrf.mxu0
      %v10573 = vpop.f32.mrf.mxu0
      %v10574 = vadd.f32 0.0, %v10573
      %v10575 = vpop.f32.mrf.mxu0
      %10576 = vmatprep.mubr.bf16.mxu0 0
      %10577 = vmatmul.mubr.bf16.gmra.mxu0 %v10454
      %v10578 = vpop.f32.mrf.mxu0
      %v10579 = vadd.f32 0.0, %v10578
      %v10580 = vpop.f32.mrf.mxu0
      %v10581 = vpop.f32.mrf.mxu0
      %v10582 = vadd.f32 0.0, %v10581
      %v10583 = vpop.f32.mrf.mxu0
      %10584 = vmatprep.mubr.bf16.mxu0 0
      %10585 = vmatmul.mubr.bf16.gmra.mxu0 %v10457
      %v10586 = vpop.f32.mrf.mxu0
      %v10587 = vadd.f32 0.0, %v10586
      %v10588 = vpop.f32.mrf.mxu0
      %v10589 = vpop.f32.mrf.mxu0
      %v10590 = vadd.f32 0.0, %v10589
      %v10591 = vpop.f32.mrf.mxu0
      %10592 = vmatprep.mubr.bf16.mxu0 0
      %10593 = vmatmul.mubr.bf16.gmra.mxu0 %v10460
      %v10594 = vpop.f32.mrf.mxu0
      %v10595 = vadd.f32 0.0, %v10594
      %v10596 = vpop.f32.mrf.mxu0
      %v10597 = vpop.f32.mrf.mxu0
      %v10598 = vadd.f32 0.0, %v10597
      %v10599 = vpop.f32.mrf.mxu0
      %10600 = vmatprep.mubr.bf16.mxu0 0
      %10601 = vmatmul.mubr.bf16.gmra.mxu0 %v10463
      %v10602 = vpop.f32.mrf.mxu0
      %v10603 = vadd.f32 0.0, %v10602
      %v10604 = vpop.f32.mrf.mxu0
      %v10605 = vpop.f32.mrf.mxu0
      %v10606 = vadd.f32 0.0, %v10605
      %v10607 = vpop.f32.mrf.mxu0
      %10608 = vmatprep.mubr.bf16.mxu0 0
      %10609 = vmatmul.mubr.bf16.gmra.mxu0 %v10466
      %v10610 = vpop.f32.mrf.mxu0
      %v10611 = vadd.f32 0.0, %v10610
      %v10612 = vpop.f32.mrf.mxu0
      %v10613 = vpop.f32.mrf.mxu0
      %v10614 = vadd.f32 0.0, %v10613
      %v10615 = vpop.f32.mrf.mxu0
      %10616 = vmatprep.mubr.bf16.mxu0 0
      %10617 = vmatmul.mubr.bf16.gmra.mxu0 %v10469
      %v10618 = vpop.f32.mrf.mxu0
      %v10619 = vadd.f32 0.0, %v10618
      %v10620 = vpop.f32.mrf.mxu0
      %v10621 = vpop.f32.mrf.mxu0
      %v10622 = vadd.f32 0.0, %v10621
      %v10623 = vpop.f32.mrf.mxu0
      %10624 = vmatprep.mubr.bf16.mxu0 0
      %10625 = vmatmul.mubr.bf16.gmra.mxu0 %v10472
      %v10626 = vpop.f32.mrf.mxu0
      %v10627 = vadd.f32 0.0, %v10626
      %v10628 = vpop.f32.mrf.mxu0
      %v10629 = vpop.f32.mrf.mxu0
      %v10630 = vadd.f32 0.0, %v10629
      %v10631 = vpop.f32.mrf.mxu0
      %10632 = vmatprep.mubr.bf16.mxu0 0
      %10633 = vmatmul.mubr.bf16.gmra.mxu0 %v10475
      %v10634 = vpop.f32.mrf.mxu0
      %v10635 = vadd.f32 0.0, %v10634
      %v10636 = vpop.f32.mrf.mxu0
      %v10637 = vpop.f32.mrf.mxu0
      %v10638 = vadd.f32 0.0, %v10637
      %v10639 = vpop.f32.mrf.mxu0
      %10640 = vmatprep.mubr.bf16.mxu0 0
      %10641 = vmatmul.mubr.bf16.gmra.mxu0 %v10478
      %v10642 = vpop.f32.mrf.mxu0
      %v10643 = vadd.f32 0.0, %v10642
      %v10644 = vpop.f32.mrf.mxu0
      %v10645 = vpop.f32.mrf.mxu0
      %v10646 = vadd.f32 0.0, %v10645
      %v10647 = vpop.f32.mrf.mxu0
      %10648 = vmatprep.mubr.bf16.mxu0 0
      %10649 = vmatmul.mubr.bf16.gmra.mxu0 %v10481
      %v10650 = vpop.f32.mrf.mxu0
      %v10651 = vadd.f32 0.0, %v10650
      %v10652 = vpop.f32.mrf.mxu0
      %v10653 = vpop.f32.mrf.mxu0
      %v10654 = vadd.f32 0.0, %v10653
      %v10655 = vpop.f32.mrf.mxu0
      %10656 = vmatprep.mubr.bf16.mxu0 0
      %10657 = vmatmul.mubr.bf16.gmra.mxu0 %v10484
      %v10658 = vpop.f32.mrf.mxu0
      %v10659 = vadd.f32 0.0, %v10658
      %v10660 = vpop.f32.mrf.mxu0
      %v10661 = vpop.f32.mrf.mxu0
      %v10662 = vadd.f32 0.0, %v10661
      %v10663 = vpop.f32.mrf.mxu0
      %10664 = vmatprep.mubr.bf16.mxu0 0
      %10665 = vmatmul.mubr.bf16.gmra.mxu0 %v10487
      %v10666 = vpop.f32.mrf.mxu0
      %v10667 = vadd.f32 0.0, %v10666
      %v10668 = vpop.f32.mrf.mxu0
      %v10669 = vpop.f32.mrf.mxu0
      %v10670 = vadd.f32 0.0, %v10669
      %v10671 = vpop.f32.mrf.mxu0
      %10672 = vmatprep.mubr.bf16.mxu0 0
      %10673 = vmatmul.mubr.bf16.gmra.mxu0 %v10490
      %v10674 = vpop.f32.mrf.mxu0
      %v10675 = vadd.f32 0.0, %v10674
      %v10676 = vpop.f32.mrf.mxu0
      %v10677 = vpop.f32.mrf.mxu0
      %v10678 = vadd.f32 0.0, %v10677
      %v10679 = vpop.f32.mrf.mxu0
      %10680 = vmatprep.mubr.bf16.mxu0 0
      %10681 = vmatmul.mubr.bf16.gmra.mxu0 %v10493
      %v10682 = vpop.f32.mrf.mxu0
      %v10683 = vadd.f32 0.0, %v10682
      %v10684 = vpop.f32.mrf.mxu0
      %v10685 = vpop.f32.mrf.mxu0
      %v10686 = vadd.f32 0.0, %v10685
      %v10687 = vpop.f32.mrf.mxu0
      %10688 = vmatprep.mubr.bf16.mxu0 0
      %10689 = vmatmul.mubr.bf16.gmra.mxu0 %v10496
      %v10690 = vpop.f32.mrf.mxu0
      %v10691 = vadd.f32 0.0, %v10690
      %v10692 = vpop.f32.mrf.mxu0
      %v10693 = vpop.f32.mrf.mxu0
      %v10694 = vadd.f32 0.0, %v10693
      %v10695 = vpop.f32.mrf.mxu0
      %10696 = vmatprep.mubr.bf16.mxu0 0
      %10697 = vmatmul.mubr.bf16.gmra.mxu0 %v10499
      %v10698 = vpop.f32.mrf.mxu0
      %v10699 = vadd.f32 0.0, %v10698
      %v10700 = vpop.f32.mrf.mxu0
      %v10701 = vpop.f32.mrf.mxu0
      %v10702 = vadd.f32 0.0, %v10701
      %v10703 = vpop.f32.mrf.mxu0
      %10704 = vmatprep.mubr.bf16.mxu0 0
      %10705 = vmatmul.mubr.bf16.gmra.mxu0 %v10502
      %v10706 = vpop.f32.mrf.mxu0
      %v10707 = vadd.f32 0.0, %v10706
      %v10708 = vpop.f32.mrf.mxu0
      %v10709 = vpop.f32.mrf.mxu0
      %v10710 = vadd.f32 0.0, %v10709
      %v10711 = vpop.f32.mrf.mxu0
      %10712 = vmatprep.mubr.bf16.mxu0 0
      %10713 = vmatmul.mubr.bf16.gmra.mxu0 %v10505
      %v10714 = vpop.f32.mrf.mxu0
      %v10715 = vadd.f32 0.0, %v10714
      %v10716 = vpop.f32.mrf.mxu0
      %v10717 = vpop.f32.mrf.mxu0
      %v10718 = vadd.f32 0.0, %v10717
      %v10719 = vpop.f32.mrf.mxu0
      %10720 = vmatprep.mubr.bf16.mxu0 0
      %10721 = vmatmul.mubr.bf16.gmra.mxu0 %v10508
      %v10722 = vpop.f32.mrf.mxu0
      %v10723 = vadd.f32 0.0, %v10722
      %v10724 = vpop.f32.mrf.mxu0
      %v10725 = vpop.f32.mrf.mxu0
      %v10726 = vadd.f32 0.0, %v10725
      %v10727 = vpop.f32.mrf.mxu0
      %10728 = vmatprep.mubr.bf16.mxu0 0
      %10729 = vmatmul.mubr.bf16.gmra.mxu0 %v10511
      %v10730 = vpop.f32.mrf.mxu0
      %v10731 = vadd.f32 0.0, %v10730
      %v10732 = vpop.f32.mrf.mxu0
      %v10733 = vpop.f32.mrf.mxu0
      %v10734 = vadd.f32 0.0, %v10733
      %v10735 = vpop.f32.mrf.mxu0
      %10736 = vmatprep.mubr.bf16.mxu0 0
      %10737 = vmatmul.mubr.bf16.gmra.mxu0 %v10514
      %v10738 = vpop.f32.mrf.mxu0
      %v10739 = vadd.f32 0.0, %v10738
      %v10740 = vpop.f32.mrf.mxu0
      %v10741 = vpop.f32.mrf.mxu0
      %v10742 = vadd.f32 0.0, %v10741
      %v10743 = vpop.f32.mrf.mxu0
      %10744 = vmatprep.mubr.bf16.mxu0 0
      %10745 = vmatmul.mubr.bf16.gmra.mxu0 %v10517
      %v10746 = vpop.f32.mrf.mxu0
      %v10747 = vadd.f32 0.0, %v10746
      %v10748 = vpop.f32.mrf.mxu0
      %v10749 = vpop.f32.mrf.mxu0
      %v10750 = vadd.f32 0.0, %v10749
      %v10751 = vpop.f32.mrf.mxu0
      %10752 = vmatprep.mubr.bf16.mxu0 0
      %10753 = vmatmul.mubr.bf16.gmra.mxu0 %v10520
      %v10754 = vpop.f32.mrf.mxu0
      %v10755 = vadd.f32 0.0, %v10754
      %v10756 = vpop.f32.mrf.mxu0
      %v10757 = vpop.f32.mrf.mxu0
      %v10758 = vadd.f32 0.0, %v10757
      %v10759 = vpop.f32.mrf.mxu0
      %10760 = vmatprep.mubr.bf16.mxu0 0
      %10761 = vmatmul.mubr.bf16.gmra.mxu0 %v10523
      %v10762 = vpop.f32.mrf.mxu0
      %v10763 = vadd.f32 0.0, %v10762
      %v10764 = vpop.f32.mrf.mxu0
      %v10765 = vpop.f32.mrf.mxu0
      %v10766 = vpop.f32.mrf.mxu0
      %10767 = vdwg.mxu0
      %v10768 = vadd.f32 %v9728, %v10563
      %v10769 = vadd.f32 %v9729, %v10566
      %v10770 = vadd.f32 %v9730, %v10571
      %v10771 = vadd.f32 %v9731, %v10574
      %v10772 = vadd.f32 %v9732, %v10579
      %v10773 = vadd.f32 %v9733, %v10582
      %v10774 = vadd.f32 %v9734, %v10587
      %v10775 = vadd.f32 %v9735, %v10590
      %v10776 = vadd.f32 %v9736, %v10595
      %v10777 = vadd.f32 %v9737, %v10598
      %v10778 = vadd.f32 %v9738, %v10603
      %v10779 = vadd.f32 %v9739, %v10606
      %v10780 = vadd.f32 %v9740, %v10611
      %v10781 = vadd.f32 %v9741, %v10614
      %v10782 = vadd.f32 %v9742, %v10619
      %v10783 = vadd.f32 %v9743, %v10622
      %v10784 = vadd.f32 %v9744, %v10627
      %v10785 = vadd.f32 %v9745, %v10630
      %v10786 = vadd.f32 %v9746, %v10635
      %v10787 = vadd.f32 %v9747, %v10638
      %v10788 = vadd.f32 %v9748, %v10643
      %v10789 = vadd.f32 %v9749, %v10646
      %v10790 = vadd.f32 %v9750, %v10651
      %v10791 = vadd.f32 %v9751, %v10654
      %v10792 = vadd.f32 %v9752, %v10659
      %v10793 = vadd.f32 %v9753, %v10662
      %v10794 = vadd.f32 %v9754, %v10667
      %v10795 = vadd.f32 %v9755, %v10670
      %v10796 = vadd.f32 %v9756, %v10675
      %v10797 = vadd.f32 %v9757, %v10678
      %v10798 = vadd.f32 %v9758, %v10683
      %v10799 = vadd.f32 %v9759, %v10686
      %v10800 = vadd.f32 %v9760, %v10691
      %v10801 = vadd.f32 %v9761, %v10694
      %v10802 = vadd.f32 %v9762, %v10699
      %v10803 = vadd.f32 %v9763, %v10702
      %v10804 = vadd.f32 %v9764, %v10707
      %v10805 = vadd.f32 %v9765, %v10710
      %v10806 = vadd.f32 %v9766, %v10715
      %v10807 = vadd.f32 %v9767, %v10718
      %v10808 = vadd.f32 %v9768, %v10723
      %v10809 = vadd.f32 %v9769, %v10726
      %v10810 = vadd.f32 %v9770, %v10731
      %v10811 = vadd.f32 %v9771, %v10734
      %v10812 = vadd.f32 %v9772, %v10739
      %v10813 = vadd.f32 %v9773, %v10742
      %v10814 = vadd.f32 %v9774, %v10747
      %v10815 = vadd.f32 %v9775, %v10750
      %v10816 = vadd.f32 %v9776, %v10755
      %v10817 = vadd.f32 %v9777, %v10758
      %v10818 = vadd.f32 %v9778, %v10763
      %v10836 = vrot.slane %v9198, 5
      %v10837 = vrot.slane %v10836, 4
      %v10838 = vrot.slane %v9199, 5
      %v10839 = vsel %vm1741, %v10837, %v10838
      %v10840 = vrot.slane %v10838, 4
      %v10841 = vrot.slane %v9200, 5
      %v10842 = vsel %vm1741, %v10840, %v10841
      %v10843 = vrot.slane %v10841, 4
      %v10844 = vrot.slane %v9201, 5
      %v10845 = vsel %vm1741, %v10843, %v10844
      %v10846 = vrot.slane %v9202, 5
      %v10847 = vrot.slane %v10846, 4
      %v10848 = vrot.slane %v9203, 5
      %v10849 = vsel %vm1741, %v10847, %v10848
      %v10850 = vrot.slane %v10848, 4
      %v10851 = vrot.slane %v9204, 5
      %v10852 = vsel %vm1741, %v10850, %v10851
      %v10853 = vrot.slane %v10851, 4
      %v10854 = vrot.slane %v9205, 5
      %v10855 = vsel %vm1741, %v10853, %v10854
      %v10856 = vrot.slane %v9206, 5
      %v10857 = vrot.slane %v10856, 4
      %v10858 = vrot.slane %v9207, 5
      %v10859 = vsel %vm1741, %v10857, %v10858
      %v10860 = vrot.slane %v10858, 4
      %v10861 = vrot.slane %v9208, 5
      %v10862 = vsel %vm1741, %v10860, %v10861
      %v10863 = vrot.slane %v10861, 4
      %v10864 = vrot.slane %v9209, 5
      %v10865 = vsel %vm1741, %v10863, %v10864
      %v10866 = vrot.slane %v9210, 5
      %v10867 = vrot.slane %v10866, 4
      %v10868 = vrot.slane %v9211, 5
      %v10869 = vsel %vm1741, %v10867, %v10868
      %v10870 = vrot.slane %v10868, 4
      %v10871 = vrot.slane %v9212, 5
      %v10872 = vsel %vm1741, %v10870, %v10871
      %v10873 = vrot.slane %v10871, 4
      %v10874 = vrot.slane %v9213, 5
      %v10875 = vsel %vm1741, %v10873, %v10874
      %v10876 = vrot.slane %v9214, 5
      %v10877 = vrot.slane %v10876, 4
      %v10878 = vrot.slane %v9215, 5
      %v10879 = vsel %vm1741, %v10877, %v10878
      %v10880 = vrot.slane %v10878, 4
      %v10881 = vrot.slane %v9216, 5
      %v10882 = vsel %vm1741, %v10880, %v10881
      %v10883 = vrot.slane %v10881, 4
      %v10884 = vrot.slane %v9217, 5
      %v10885 = vsel %vm1741, %v10883, %v10884
      %v10886 = vrot.slane %v9218, 5
      %v10887 = vrot.slane %v10886, 4
      %v10888 = vrot.slane %v9219, 5
      %v10889 = vsel %vm1741, %v10887, %v10888
      %v10890 = vrot.slane %v10888, 4
      %v10891 = vrot.slane %v9220, 5
      %v10892 = vsel %vm1741, %v10890, %v10891
      %v10893 = vrot.slane %v10891, 4
      %v10894 = vrot.slane %v9221, 5
      %v10895 = vsel %vm1741, %v10893, %v10894
      %v10896 = vrot.slane %v9222, 5
      %v10897 = vrot.slane %v10896, 4
      %v10898 = vrot.slane %v9223, 5
      %v10899 = vsel %vm1741, %v10897, %v10898
      %v10900 = vrot.slane %v10898, 4
      %v10901 = vrot.slane %v9224, 5
      %v10902 = vsel %vm1741, %v10900, %v10901
      %v10903 = vrot.slane %v10901, 4
      %v10904 = vrot.slane %v9225, 5
      %v10905 = vsel %vm1741, %v10903, %v10904
      %v10906 = vrot.slane %v9226, 5
      %v10907 = vrot.slane %v10906, 4
      %v10908 = vrot.slane %v9227, 5
      %v10909 = vsel %vm1741, %v10907, %v10908
      %v10910 = vrot.slane %v10908, 4
      %v10911 = vrot.slane %v9228, 5
      %v10912 = vsel %vm1741, %v10910, %v10911
      %v10913 = vrot.slane %v10911, 4
      %v10914 = vrot.slane %v9229, 5
      %v10915 = vsel %vm1741, %v10913, %v10914
      %v10916 = vrot.slane %v9230, 5
      %v10917 = vrot.slane %v10916, 4
      %v10918 = vrot.slane %v9231, 5
      %v10919 = vsel %vm1741, %v10917, %v10918
      %v10920 = vrot.slane %v10918, 4
      %v10921 = vrot.slane %v9232, 5
      %v10922 = vsel %vm1741, %v10920, %v10921
      %v10923 = vrot.slane %v10921, 4
      %v10924 = vrot.slane %v9233, 5
      %v10925 = vsel %vm1741, %v10923, %v10924
      %v10926 = vrot.slane %v9234, 5
      %v10927 = vrot.slane %v10926, 4
      %v10928 = vrot.slane %v9235, 5
      %v10929 = vsel %vm1741, %v10927, %v10928
      %v10930 = vrot.slane %v10928, 4
      %v10931 = vrot.slane %v9236, 5
      %v10932 = vsel %vm1741, %v10930, %v10931
      %v10933 = vrot.slane %v10931, 4
      %v10934 = vrot.slane %v9237, 5
      %v10935 = vsel %vm1741, %v10933, %v10934
      %v10936 = vrot.slane %v9238, 5
      %v10937 = vrot.slane %v10936, 4
      %v10938 = vrot.slane %v9239, 5
      %v10939 = vsel %vm1741, %v10937, %v10938
      %v10940 = vrot.slane %v10938, 4
      %v10941 = vrot.slane %v9240, 5
      %v10942 = vsel %vm1741, %v10940, %v10941
      %v10943 = vrot.slane %v10941, 4
      %v10944 = vrot.slane %v9241, 5
      %v10945 = vsel %vm1741, %v10943, %v10944
      %v10946 = vrot.slane %v9242, 5
      %v10947 = vrot.slane %v10946, 4
      %v10948 = vrot.slane %v9243, 5
      %v10949 = vsel %vm1741, %v10947, %v10948
      %v10950 = vrot.slane %v10948, 4
      %v10951 = vrot.slane %v9244, 5
      %v10952 = vsel %vm1741, %v10950, %v10951
      %v10953 = vrot.slane %v10951, 4
      %v10954 = vrot.slane %v9245, 5
      %v10955 = vsel %vm1741, %v10953, %v10954
      %v10956 = vrot.slane %v9246, 5
      %v10957 = vrot.slane %v10956, 4
      %v10958 = vrot.slane %v9247, 5
      %v10959 = vsel %vm1741, %v10957, %v10958
      %v10960 = vrot.slane %v10958, 4
      %v10961 = vrot.slane %v9248, 5
      %v10962 = vsel %vm1741, %v10960, %v10961
      %v10963 = vrot.slane %v10961, 4
      %v10964 = vrot.slane %v9249, 5
      %v10965 = vsel %vm1741, %v10963, %v10964
      %v10966 = vrot.slane %v9250, 5
      %v10967 = vrot.slane %v10966, 4
      %v10968 = vrot.slane %v9251, 5
      %v10969 = vsel %vm1741, %v10967, %v10968
      %v10970 = vrot.slane %v10968, 4
      %v10971 = vrot.slane %v9252, 5
      %v10972 = vsel %vm1741, %v10970, %v10971
      %v10973 = vrot.slane %v10971, 4
      %v10974 = vrot.slane %v9253, 5
      %v10975 = vsel %vm1741, %v10973, %v10974
      %v10976 = vrot.slane %v9254, 5
      %v10977 = vrot.slane %v10976, 4
      %v10978 = vrot.slane %v9255, 5
      %v10979 = vsel %vm1741, %v10977, %v10978
      %v10980 = vrot.slane %v10978, 4
      %v10981 = vrot.slane %v9256, 5
      %v10982 = vsel %vm1741, %v10980, %v10981
      %v10983 = vrot.slane %v10981, 4
      %v10984 = vrot.slane %v9257, 5
      %v10985 = vsel %vm1741, %v10983, %v10984
      %v10986 = vrot.slane %v9258, 5
      %v10987 = vrot.slane %v10986, 4
      %v10988 = vrot.slane %v9259, 5
      %v10989 = vsel %vm1741, %v10987, %v10988
      %v10990 = vrot.slane %v10988, 4
      %v10991 = vrot.slane %v9260, 5
      %v10992 = vsel %vm1741, %v10990, %v10991
      %v10993 = vrot.slane %v10991, 4
      %v10994 = vrot.slane %v9261, 5
      %v10995 = vsel %vm1741, %v10993, %v10994
      %v10996 = vrot.slane %v9262, 5
      %v10997 = vrot.slane %v10996, 4
      %v10998 = vrot.slane %v9263, 5
      %v10999 = vsel %vm1741, %v10997, %v10998
      %v11000 = vrot.slane %v10998, 4
      %v11001 = vrot.slane %v9264, 5
      %v11002 = vsel %vm1741, %v11000, %v11001
      %v11003 = vrot.slane %v11001, 4
      %v11004 = vrot.slane %v9265, 5
      %v11005 = vsel %vm1741, %v11003, %v11004
      %s11006 = scalar_lea.vmem %s1, 168
      %v11007 = vld [vmem:[%s11006] sm:$0xf]
      %v11008 = vld [vmem:[%s11006 + $0x4] sm:$0xf]
      %v11009 = vld [vmem:[%s11006 + $0x8] sm:$0x3]
      %v11010 = vunpack.c.l.b16 %v10839
      %v11011 = vunpack.c.l.b16 %v10842
      %v11012 = vunpack.c.l.b16 %v10845
      %v11013 = vunpack.c.l.b16 %v10849
      %v11014 = vunpack.c.l.b16 %v10852
      %v11015 = vunpack.c.l.b16 %v10855
      %v11016 = vunpack.c.l.b16 %v10859
      %v11017 = vunpack.c.l.b16 %v10862
      %v11018 = vunpack.c.l.b16 %v10865
      %v11019 = vunpack.c.l.b16 %v10869
      %v11020 = vunpack.c.l.b16 %v10872
      %v11021 = vunpack.c.l.b16 %v10875
      %v11022 = vunpack.c.l.b16 %v10879
      %v11023 = vunpack.c.l.b16 %v10882
      %v11024 = vunpack.c.l.b16 %v10885
      %v11025 = vunpack.c.l.b16 %v10889
      %v11026 = vunpack.c.l.b16 %v10892
      %v11027 = vunpack.c.l.b16 %v10895
      %v11028 = vunpack.c.l.b16 %v10899
      %v11029 = vunpack.c.l.b16 %v10902
      %v11030 = vunpack.c.l.b16 %v10905
      %v11031 = vunpack.c.l.b16 %v10909
      %v11032 = vunpack.c.l.b16 %v10912
      %v11033 = vunpack.c.l.b16 %v10915
      %v11034 = vunpack.c.l.b16 %v10919
      %v11035 = vunpack.c.l.b16 %v10922
      %v11036 = vunpack.c.l.b16 %v10925
      %v11037 = vunpack.c.l.b16 %v10929
      %v11038 = vunpack.c.l.b16 %v10932
      %v11039 = vunpack.c.l.b16 %v10935
      %v11040 = vunpack.c.l.b16 %v10939
      %v11041 = vunpack.c.l.b16 %v10942
      %v11042 = vunpack.c.l.b16 %v10945
      %v11043 = vunpack.c.l.b16 %v10949
      %v11044 = vunpack.c.l.b16 %v10952
      %v11045 = vunpack.c.l.b16 %v10955
      %v11046 = vunpack.c.l.b16 %v10959
      %v11047 = vunpack.c.l.b16 %v10962
      %v11048 = vunpack.c.l.b16 %v10965
      %v11049 = vunpack.c.l.b16 %v10969
      %v11050 = vunpack.c.l.b16 %v10972
      %v11051 = vunpack.c.l.b16 %v10975
      %v11052 = vunpack.c.l.b16 %v10979
      %v11053 = vunpack.c.l.b16 %v10982
      %v11054 = vunpack.c.l.b16 %v10985
      %v11055 = vunpack.c.l.b16 %v10989
      %v11056 = vunpack.c.l.b16 %v10992
      %v11057 = vunpack.c.l.b16 %v10995
      %v11058 = vunpack.c.l.b16 %v10999
      %v11059 = vunpack.c.l.b16 %v11002
      %v11060 = vunpack.c.l.b16 %v11005
      %v11061 = vpack.c.b16 %v11011, %v11010
      %v11062 = vpack.c.b16 %v11013, %v11012
      %v11063 = vpack.c.b16 %v11015, %v11014
      %v11064 = vpack.c.b16 %v11017, %v11016
      %v11065 = vpack.c.b16 %v11019, %v11018
      %v11066 = vpack.c.b16 %v11021, %v11020
      %v11067 = vpack.c.b16 %v11023, %v11022
      %v11068 = vpack.c.b16 %v11025, %v11024
      %v11069 = vpack.c.b16 %v11027, %v11026
      %v11070 = vpack.c.b16 %v11029, %v11028
      %v11071 = vpack.c.b16 %v11031, %v11030
      %v11072 = vpack.c.b16 %v11033, %v11032
      %v11073 = vpack.c.b16 %v11035, %v11034
      %v11074 = vpack.c.b16 %v11037, %v11036
      %v11075 = vpack.c.b16 %v11039, %v11038
      %v11076 = vpack.c.b16 %v11041, %v11040
      %v11077 = vpack.c.b16 %v11043, %v11042
      %v11078 = vpack.c.b16 %v11045, %v11044
      %v11079 = vpack.c.b16 %v11047, %v11046
      %v11080 = vpack.c.b16 %v11049, %v11048
      %v11081 = vpack.c.b16 %v11051, %v11050
      %v11082 = vpack.c.b16 %v11053, %v11052
      %v11083 = vpack.c.b16 %v11055, %v11054
      %v11084 = vpack.c.b16 %v11057, %v11056
      %v11085 = vpack.c.b16 %v11059, %v11058
      %v11086 = vpack.c.b16 %v11060, %v11060
      %v11090 = vunpack.c.l.b16 %v11007
      %v11091 = vunpack.c.l.b16 %v11008
      %v11092 = vunpack.c.l.b16 %v11009
      %v11093 = vpack.c.b16 %v11091, %v11090
      %v11094 = vpack.c.b16 %v11092, %v11092
      %v11097 = vsel %vm941, %v11061, 0
      %v11100 = vsel %vm941, %v11062, 0
      %v11103 = vsel %vm941, %v11063, 0
      %v11106 = vsel %vm941, %v11064, 0
      %v11109 = vsel %vm941, %v11065, 0
      %v11112 = vsel %vm941, %v11066, 0
      %v11115 = vsel %vm941, %v11067, 0
      %v11118 = vsel %vm941, %v11068, 0
      %v11121 = vsel %vm941, %v11069, 0
      %v11124 = vsel %vm941, %v11070, 0
      %v11127 = vsel %vm941, %v11071, 0
      %v11130 = vsel %vm941, %v11072, 0
      %v11133 = vsel %vm941, %v11073, 0
      %v11136 = vsel %vm941, %v11074, 0
      %v11139 = vsel %vm941, %v11075, 0
      %v11142 = vsel %vm941, %v11076, 0
      %v11145 = vsel %vm941, %v11077, 0
      %v11148 = vsel %vm941, %v11078, 0
      %v11151 = vsel %vm941, %v11079, 0
      %v11154 = vsel %vm941, %v11080, 0
      %v11157 = vsel %vm941, %v11081, 0
      %v11160 = vsel %vm941, %v11082, 0
      %v11163 = vsel %vm941, %v11083, 0
      %v11166 = vsel %vm941, %v11084, 0
      %v11169 = vsel %vm941, %v11085, 0
      %v11172 = vsel %vm941, %v11086, 0
      %v11175 = vsel %vm1020, %v11094, 0
      %11177 = vmatprep.subr.bf16.mxu0 0
      %11178 = vmatpush1.bf16.msra.mxu0 0
      %11179 = vmatprep.subr.bf16.mxu0 0
      %11180 = vmatpush1.bf16.msra.mxu0 0
      %11181 = vmatprep.subr.bf16.mxu0 0
      %11182 = vmatpush1.bf16.msra.mxu0 0
      %11183 = vmatprep.subr.bf16.mxu0 0
      %11184 = vmatpush1.bf16.msra.mxu0 0
      %11185 = vmatprep.subr.bf16.mxu0 0
      %11186 = vmatpush1.bf16.msra.mxu0 0
      %11187 = vmatprep.subr.bf16.mxu0 0
      %11188 = vmatpush1.bf16.msra.mxu0 0
      %11189 = vmatprep.subr.bf16.mxu0 0
      %11190 = vmatpush1.bf16.msra.mxu0 %v11175
      %11191 = vmatprep.subr.bf16.mxu0 0
      %11192 = vmatpush1.bf16.msra.mxu0 %v11093
      %11193 = vmatprep.subr.bf16.mxu0 0
      %11194 = vmatpush2.bf16.msra.mxu0 0
      %11195 = vmatprep.subr.bf16.mxu0 0
      %11196 = vmatpush2.bf16.msra.mxu0 0
      %11197 = vmatprep.subr.bf16.mxu0 0
      %11198 = vmatpush2.bf16.msra.mxu0 0
      %11199 = vmatprep.subr.bf16.mxu0 0
      %11200 = vmatpush2.bf16.msra.mxu0 0
      %11201 = vmatprep.subr.bf16.mxu0 0
      %11202 = vmatpush2.bf16.msra.mxu0 0
      %11203 = vmatprep.subr.bf16.mxu0 0
      %11204 = vmatpush2.bf16.msra.mxu0 0
      %11205 = vmatprep.subr.bf16.mxu0 0
      %11206 = vmatpush2.bf16.msra.mxu0 0
      %11207 = vmatprep.subr.bf16.mxu0 0
      %11208 = vmatpush2.bf16.msra.mxu0 0
      %11209 = vmatprep.mubr.bf16.mxu0 0
      %11210 = vmatmul.mubr.bf16.gmra.mxu0 %v11097
      %v11211 = vpop.f32.mrf.mxu0
      %v11212 = vadd.f32 0.0, %v11211
      %v11213 = vpop.f32.mrf.mxu0
      %v11214 = vpop.f32.mrf.mxu0
      %v11215 = vadd.f32 0.0, %v11214
      %v11216 = vpop.f32.mrf.mxu0
      %11217 = vmatprep.mubr.bf16.mxu0 0
      %11218 = vmatmul.mubr.bf16.gmra.mxu0 %v11100
      %v11219 = vpop.f32.mrf.mxu0
      %v11220 = vadd.f32 0.0, %v11219
      %v11221 = vpop.f32.mrf.mxu0
      %v11222 = vpop.f32.mrf.mxu0
      %v11223 = vadd.f32 0.0, %v11222
      %v11224 = vpop.f32.mrf.mxu0
      %11225 = vmatprep.mubr.bf16.mxu0 0
      %11226 = vmatmul.mubr.bf16.gmra.mxu0 %v11103
      %v11227 = vpop.f32.mrf.mxu0
      %v11228 = vadd.f32 0.0, %v11227
      %v11229 = vpop.f32.mrf.mxu0
      %v11230 = vpop.f32.mrf.mxu0
      %v11231 = vadd.f32 0.0, %v11230
      %v11232 = vpop.f32.mrf.mxu0
      %11233 = vmatprep.mubr.bf16.mxu0 0
      %11234 = vmatmul.mubr.bf16.gmra.mxu0 %v11106
      %v11235 = vpop.f32.mrf.mxu0
      %v11236 = vadd.f32 0.0, %v11235
      %v11237 = vpop.f32.mrf.mxu0
      %v11238 = vpop.f32.mrf.mxu0
      %v11239 = vadd.f32 0.0, %v11238
      %v11240 = vpop.f32.mrf.mxu0
      %11241 = vmatprep.mubr.bf16.mxu0 0
      %11242 = vmatmul.mubr.bf16.gmra.mxu0 %v11109
      %v11243 = vpop.f32.mrf.mxu0
      %v11244 = vadd.f32 0.0, %v11243
      %v11245 = vpop.f32.mrf.mxu0
      %v11246 = vpop.f32.mrf.mxu0
      %v11247 = vadd.f32 0.0, %v11246
      %v11248 = vpop.f32.mrf.mxu0
      %11249 = vmatprep.mubr.bf16.mxu0 0
      %11250 = vmatmul.mubr.bf16.gmra.mxu0 %v11112
      %v11251 = vpop.f32.mrf.mxu0
      %v11252 = vadd.f32 0.0, %v11251
      %v11253 = vpop.f32.mrf.mxu0
      %v11254 = vpop.f32.mrf.mxu0
      %v11255 = vadd.f32 0.0, %v11254
      %v11256 = vpop.f32.mrf.mxu0
      %11257 = vmatprep.mubr.bf16.mxu0 0
      %11258 = vmatmul.mubr.bf16.gmra.mxu0 %v11115
      %v11259 = vpop.f32.mrf.mxu0
      %v11260 = vadd.f32 0.0, %v11259
      %v11261 = vpop.f32.mrf.mxu0
      %v11262 = vpop.f32.mrf.mxu0
      %v11263 = vadd.f32 0.0, %v11262
      %v11264 = vpop.f32.mrf.mxu0
      %11265 = vmatprep.mubr.bf16.mxu0 0
      %11266 = vmatmul.mubr.bf16.gmra.mxu0 %v11118
      %v11267 = vpop.f32.mrf.mxu0
      %v11268 = vadd.f32 0.0, %v11267
      %v11269 = vpop.f32.mrf.mxu0
      %v11270 = vpop.f32.mrf.mxu0
      %v11271 = vadd.f32 0.0, %v11270
      %v11272 = vpop.f32.mrf.mxu0
      %11273 = vmatprep.mubr.bf16.mxu0 0
      %11274 = vmatmul.mubr.bf16.gmra.mxu0 %v11121
      %v11275 = vpop.f32.mrf.mxu0
      %v11276 = vadd.f32 0.0, %v11275
      %v11277 = vpop.f32.mrf.mxu0
      %v11278 = vpop.f32.mrf.mxu0
      %v11279 = vadd.f32 0.0, %v11278
      %v11280 = vpop.f32.mrf.mxu0
      %11281 = vmatprep.mubr.bf16.mxu0 0
      %11282 = vmatmul.mubr.bf16.gmra.mxu0 %v11124
      %v11283 = vpop.f32.mrf.mxu0
      %v11284 = vadd.f32 0.0, %v11283
      %v11285 = vpop.f32.mrf.mxu0
      %v11286 = vpop.f32.mrf.mxu0
      %v11287 = vadd.f32 0.0, %v11286
      %v11288 = vpop.f32.mrf.mxu0
      %11289 = vmatprep.mubr.bf16.mxu0 0
      %11290 = vmatmul.mubr.bf16.gmra.mxu0 %v11127
      %v11291 = vpop.f32.mrf.mxu0
      %v11292 = vadd.f32 0.0, %v11291
      %v11293 = vpop.f32.mrf.mxu0
      %v11294 = vpop.f32.mrf.mxu0
      %v11295 = vadd.f32 0.0, %v11294
      %v11296 = vpop.f32.mrf.mxu0
      %11297 = vmatprep.mubr.bf16.mxu0 0
      %11298 = vmatmul.mubr.bf16.gmra.mxu0 %v11130
      %v11299 = vpop.f32.mrf.mxu0
      %v11300 = vadd.f32 0.0, %v11299
      %v11301 = vpop.f32.mrf.mxu0
      %v11302 = vpop.f32.mrf.mxu0
      %v11303 = vadd.f32 0.0, %v11302
      %v11304 = vpop.f32.mrf.mxu0
      %11305 = vmatprep.mubr.bf16.mxu0 0
      %11306 = vmatmul.mubr.bf16.gmra.mxu0 %v11133
      %v11307 = vpop.f32.mrf.mxu0
      %v11308 = vadd.f32 0.0, %v11307
      %v11309 = vpop.f32.mrf.mxu0
      %v11310 = vpop.f32.mrf.mxu0
      %v11311 = vadd.f32 0.0, %v11310
      %v11312 = vpop.f32.mrf.mxu0
      %11313 = vmatprep.mubr.bf16.mxu0 0
      %11314 = vmatmul.mubr.bf16.gmra.mxu0 %v11136
      %v11315 = vpop.f32.mrf.mxu0
      %v11316 = vadd.f32 0.0, %v11315
      %v11317 = vpop.f32.mrf.mxu0
      %v11318 = vpop.f32.mrf.mxu0
      %v11319 = vadd.f32 0.0, %v11318
      %v11320 = vpop.f32.mrf.mxu0
      %11321 = vmatprep.mubr.bf16.mxu0 0
      %11322 = vmatmul.mubr.bf16.gmra.mxu0 %v11139
      %v11323 = vpop.f32.mrf.mxu0
      %v11324 = vadd.f32 0.0, %v11323
      %v11325 = vpop.f32.mrf.mxu0
      %v11326 = vpop.f32.mrf.mxu0
      %v11327 = vadd.f32 0.0, %v11326
      %v11328 = vpop.f32.mrf.mxu0
      %11329 = vmatprep.mubr.bf16.mxu0 0
      %11330 = vmatmul.mubr.bf16.gmra.mxu0 %v11142
      %v11331 = vpop.f32.mrf.mxu0
      %v11332 = vadd.f32 0.0, %v11331
      %v11333 = vpop.f32.mrf.mxu0
      %v11334 = vpop.f32.mrf.mxu0
      %v11335 = vadd.f32 0.0, %v11334
      %v11336 = vpop.f32.mrf.mxu0
      %11337 = vmatprep.mubr.bf16.mxu0 0
      %11338 = vmatmul.mubr.bf16.gmra.mxu0 %v11145
      %v11339 = vpop.f32.mrf.mxu0
      %v11340 = vadd.f32 0.0, %v11339
      %v11341 = vpop.f32.mrf.mxu0
      %v11342 = vpop.f32.mrf.mxu0
      %v11343 = vadd.f32 0.0, %v11342
      %v11344 = vpop.f32.mrf.mxu0
      %11345 = vmatprep.mubr.bf16.mxu0 0
      %11346 = vmatmul.mubr.bf16.gmra.mxu0 %v11148
      %v11347 = vpop.f32.mrf.mxu0
      %v11348 = vadd.f32 0.0, %v11347
      %v11349 = vpop.f32.mrf.mxu0
      %v11350 = vpop.f32.mrf.mxu0
      %v11351 = vadd.f32 0.0, %v11350
      %v11352 = vpop.f32.mrf.mxu0
      %11353 = vmatprep.mubr.bf16.mxu0 0
      %11354 = vmatmul.mubr.bf16.gmra.mxu0 %v11151
      %v11355 = vpop.f32.mrf.mxu0
      %v11356 = vadd.f32 0.0, %v11355
      %v11357 = vpop.f32.mrf.mxu0
      %v11358 = vpop.f32.mrf.mxu0
      %v11359 = vadd.f32 0.0, %v11358
      %v11360 = vpop.f32.mrf.mxu0
      %11361 = vmatprep.mubr.bf16.mxu0 0
      %11362 = vmatmul.mubr.bf16.gmra.mxu0 %v11154
      %v11363 = vpop.f32.mrf.mxu0
      %v11364 = vadd.f32 0.0, %v11363
      %v11365 = vpop.f32.mrf.mxu0
      %v11366 = vpop.f32.mrf.mxu0
      %v11367 = vadd.f32 0.0, %v11366
      %v11368 = vpop.f32.mrf.mxu0
      %11369 = vmatprep.mubr.bf16.mxu0 0
      %11370 = vmatmul.mubr.bf16.gmra.mxu0 %v11157
      %v11371 = vpop.f32.mrf.mxu0
      %v11372 = vadd.f32 0.0, %v11371
      %v11373 = vpop.f32.mrf.mxu0
      %v11374 = vpop.f32.mrf.mxu0
      %v11375 = vadd.f32 0.0, %v11374
      %v11376 = vpop.f32.mrf.mxu0
      %11377 = vmatprep.mubr.bf16.mxu0 0
      %11378 = vmatmul.mubr.bf16.gmra.mxu0 %v11160
      %v11379 = vpop.f32.mrf.mxu0
      %v11380 = vadd.f32 0.0, %v11379
      %v11381 = vpop.f32.mrf.mxu0
      %v11382 = vpop.f32.mrf.mxu0
      %v11383 = vadd.f32 0.0, %v11382
      %v11384 = vpop.f32.mrf.mxu0
      %11385 = vmatprep.mubr.bf16.mxu0 0
      %11386 = vmatmul.mubr.bf16.gmra.mxu0 %v11163
      %v11387 = vpop.f32.mrf.mxu0
      %v11388 = vadd.f32 0.0, %v11387
      %v11389 = vpop.f32.mrf.mxu0
      %v11390 = vpop.f32.mrf.mxu0
      %v11391 = vadd.f32 0.0, %v11390
      %v11392 = vpop.f32.mrf.mxu0
      %11393 = vmatprep.mubr.bf16.mxu0 0
      %11394 = vmatmul.mubr.bf16.gmra.mxu0 %v11166
      %v11395 = vpop.f32.mrf.mxu0
      %v11396 = vadd.f32 0.0, %v11395
      %v11397 = vpop.f32.mrf.mxu0
      %v11398 = vpop.f32.mrf.mxu0
      %v11399 = vadd.f32 0.0, %v11398
      %v11400 = vpop.f32.mrf.mxu0
      %11401 = vmatprep.mubr.bf16.mxu0 0
      %11402 = vmatmul.mubr.bf16.gmra.mxu0 %v11169
      %v11403 = vpop.f32.mrf.mxu0
      %v11404 = vadd.f32 0.0, %v11403
      %v11405 = vpop.f32.mrf.mxu0
      %v11406 = vpop.f32.mrf.mxu0
      %v11407 = vadd.f32 0.0, %v11406
      %v11408 = vpop.f32.mrf.mxu0
      %11409 = vmatprep.mubr.bf16.mxu0 0
      %11410 = vmatmul.mubr.bf16.gmra.mxu0 %v11172
      %v11411 = vpop.f32.mrf.mxu0
      %v11412 = vadd.f32 0.0, %v11411
      %v11413 = vpop.f32.mrf.mxu0
      %v11414 = vpop.f32.mrf.mxu0
      %v11415 = vpop.f32.mrf.mxu0
      %11416 = vdwg.mxu0
      %v11417 = vadd.f32 %v10768, %v11212
      %v11418 = vadd.f32 %v10769, %v11215
      %v11419 = vadd.f32 %v10770, %v11220
      %v11420 = vadd.f32 %v10771, %v11223
      %v11421 = vadd.f32 %v10772, %v11228
      %v11422 = vadd.f32 %v10773, %v11231
      %v11423 = vadd.f32 %v10774, %v11236
      %v11424 = vadd.f32 %v10775, %v11239
      %v11425 = vadd.f32 %v10776, %v11244
      %v11426 = vadd.f32 %v10777, %v11247
      %v11427 = vadd.f32 %v10778, %v11252
      %v11428 = vadd.f32 %v10779, %v11255
      %v11429 = vadd.f32 %v10780, %v11260
      %v11430 = vadd.f32 %v10781, %v11263
      %v11431 = vadd.f32 %v10782, %v11268
      %v11432 = vadd.f32 %v10783, %v11271
      %v11433 = vadd.f32 %v10784, %v11276
      %v11434 = vadd.f32 %v10785, %v11279
      %v11435 = vadd.f32 %v10786, %v11284
      %v11436 = vadd.f32 %v10787, %v11287
      %v11437 = vadd.f32 %v10788, %v11292
      %v11438 = vadd.f32 %v10789, %v11295
      %v11439 = vadd.f32 %v10790, %v11300
      %v11440 = vadd.f32 %v10791, %v11303
      %v11441 = vadd.f32 %v10792, %v11308
      %v11442 = vadd.f32 %v10793, %v11311
      %v11443 = vadd.f32 %v10794, %v11316
      %v11444 = vadd.f32 %v10795, %v11319
      %v11445 = vadd.f32 %v10796, %v11324
      %v11446 = vadd.f32 %v10797, %v11327
      %v11447 = vadd.f32 %v10798, %v11332
      %v11448 = vadd.f32 %v10799, %v11335
      %v11449 = vadd.f32 %v10800, %v11340
      %v11450 = vadd.f32 %v10801, %v11343
      %v11451 = vadd.f32 %v10802, %v11348
      %v11452 = vadd.f32 %v10803, %v11351
      %v11453 = vadd.f32 %v10804, %v11356
      %v11454 = vadd.f32 %v10805, %v11359
      %v11455 = vadd.f32 %v10806, %v11364
      %v11456 = vadd.f32 %v10807, %v11367
      %v11457 = vadd.f32 %v10808, %v11372
      %v11458 = vadd.f32 %v10809, %v11375
      %v11459 = vadd.f32 %v10810, %v11380
      %v11460 = vadd.f32 %v10811, %v11383
      %v11461 = vadd.f32 %v10812, %v11388
      %v11462 = vadd.f32 %v10813, %v11391
      %v11463 = vadd.f32 %v10814, %v11396
      %v11464 = vadd.f32 %v10815, %v11399
      %v11465 = vadd.f32 %v10816, %v11404
      %v11466 = vadd.f32 %v10817, %v11407
      %v11467 = vadd.f32 %v10818, %v11412
      %v11468 = vld [vmem:[%s2] sm:$0x1]
      %v11470 = vlaneseq
      %v11471 = vshrl.u32 %v11470, 7
      %v11472 = vsub.s32 0, %v11471
      %v11473 = vrot.slane %v11468, %v11472
      %v11475 = vadd.f32 %v11417, %v11473
      %v11476 = vadd.f32 %v11418, %v11473
      %v11477 = vadd.f32 %v11419, %v11473
      %v11478 = vadd.f32 %v11420, %v11473
      %v11479 = vadd.f32 %v11421, %v11473
      %v11480 = vadd.f32 %v11422, %v11473
      %v11481 = vadd.f32 %v11423, %v11473
      %v11482 = vadd.f32 %v11424, %v11473
      %v11483 = vadd.f32 %v11425, %v11473
      %v11484 = vadd.f32 %v11426, %v11473
      %v11485 = vadd.f32 %v11427, %v11473
      %v11486 = vadd.f32 %v11428, %v11473
      %v11487 = vadd.f32 %v11429, %v11473
      %v11488 = vadd.f32 %v11430, %v11473
      %v11489 = vadd.f32 %v11431, %v11473
      %v11490 = vadd.f32 %v11432, %v11473
      %v11491 = vadd.f32 %v11433, %v11473
      %v11492 = vadd.f32 %v11434, %v11473
      %v11493 = vadd.f32 %v11435, %v11473
      %v11494 = vadd.f32 %v11436, %v11473
      %v11495 = vadd.f32 %v11437, %v11473
      %v11496 = vadd.f32 %v11438, %v11473
      %v11497 = vadd.f32 %v11439, %v11473
      %v11498 = vadd.f32 %v11440, %v11473
      %v11499 = vadd.f32 %v11441, %v11473
      %v11500 = vadd.f32 %v11442, %v11473
      %v11501 = vadd.f32 %v11443, %v11473
      %v11502 = vadd.f32 %v11444, %v11473
      %v11503 = vadd.f32 %v11445, %v11473
      %v11504 = vadd.f32 %v11446, %v11473
      %v11505 = vadd.f32 %v11447, %v11473
      %v11506 = vadd.f32 %v11448, %v11473
      %v11507 = vadd.f32 %v11449, %v11473
      %v11508 = vadd.f32 %v11450, %v11473
      %v11509 = vadd.f32 %v11451, %v11473
      %v11510 = vadd.f32 %v11452, %v11473
      %v11511 = vadd.f32 %v11453, %v11473
      %v11512 = vadd.f32 %v11454, %v11473
      %v11513 = vadd.f32 %v11455, %v11473
      %v11514 = vadd.f32 %v11456, %v11473
      %v11515 = vadd.f32 %v11457, %v11473
      %v11516 = vadd.f32 %v11458, %v11473
      %v11517 = vadd.f32 %v11459, %v11473
      %v11518 = vadd.f32 %v11460, %v11473
      %v11519 = vadd.f32 %v11461, %v11473
      %v11520 = vadd.f32 %v11462, %v11473
      %v11521 = vadd.f32 %v11463, %v11473
      %v11522 = vadd.f32 %v11464, %v11473
      %v11523 = vadd.f32 %v11465, %v11473
      %v11524 = vadd.f32 %v11466, %v11473
      %v11525 = vadd.f32 %v11467, %v11473
      %v11526 = vpack.c.bf16 %v11476, %v11475
      %v11527 = vpack.c.bf16 %v11478, %v11477
      %v11528 = vpack.c.bf16 %v11480, %v11479
      %v11529 = vpack.c.bf16 %v11482, %v11481
      %v11530 = vpack.c.bf16 %v11484, %v11483
      %v11531 = vpack.c.bf16 %v11486, %v11485
      %v11532 = vpack.c.bf16 %v11488, %v11487
      %v11533 = vpack.c.bf16 %v11490, %v11489
      %v11534 = vpack.c.bf16 %v11492, %v11491
      %v11535 = vpack.c.bf16 %v11494, %v11493
      %v11536 = vpack.c.bf16 %v11496, %v11495
      %v11537 = vpack.c.bf16 %v11498, %v11497
      %v11538 = vpack.c.bf16 %v11500, %v11499
      %v11539 = vpack.c.bf16 %v11502, %v11501
      %v11540 = vpack.c.bf16 %v11504, %v11503
      %v11541 = vpack.c.bf16 %v11506, %v11505
      %v11542 = vpack.c.bf16 %v11508, %v11507
      %v11543 = vpack.c.bf16 %v11510, %v11509
      %v11544 = vpack.c.bf16 %v11512, %v11511
      %v11545 = vpack.c.bf16 %v11514, %v11513
      %v11546 = vpack.c.bf16 %v11516, %v11515
      %v11547 = vpack.c.bf16 %v11518, %v11517
      %v11548 = vpack.c.bf16 %v11520, %v11519
      %v11549 = vpack.c.bf16 %v11522, %v11521
      %v11550 = vpack.c.bf16 %v11524, %v11523
      %v11551 = vpack.c.bf16 %v11525, %v11525
      %v11578 = vunpack.c.l.b16 %v11526
      %v11579 = vunpack.c.h.b16 %v11526
      %v11580 = vunpack.c.l.b16 %v11527
      %v11581 = vunpack.c.h.b16 %v11527
      %v11582 = vunpack.c.l.b16 %v11528
      %v11583 = vunpack.c.h.b16 %v11528
      %v11584 = vunpack.c.l.b16 %v11529
      %v11585 = vunpack.c.h.b16 %v11529
      %v11586 = vunpack.c.l.b16 %v11530
      %v11587 = vunpack.c.h.b16 %v11530
      %v11588 = vunpack.c.l.b16 %v11531
      %v11589 = vunpack.c.h.b16 %v11531
      %v11590 = vunpack.c.l.b16 %v11532
      %v11591 = vunpack.c.h.b16 %v11532
      %v11592 = vunpack.c.l.b16 %v11533
      %v11593 = vunpack.c.h.b16 %v11533
      %v11594 = vunpack.c.l.b16 %v11534
      %v11595 = vunpack.c.h.b16 %v11534
      %v11596 = vunpack.c.l.b16 %v11535
      %v11597 = vunpack.c.h.b16 %v11535
      %v11598 = vunpack.c.l.b16 %v11536
      %v11599 = vunpack.c.h.b16 %v11536
      %v11600 = vunpack.c.l.b16 %v11537
      %v11601 = vunpack.c.h.b16 %v11537
      %v11602 = vunpack.c.l.b16 %v11538
      %v11603 = vunpack.c.h.b16 %v11538
      %v11604 = vunpack.c.l.b16 %v11539
      %v11605 = vunpack.c.h.b16 %v11539
      %v11606 = vunpack.c.l.b16 %v11540
      %v11607 = vunpack.c.h.b16 %v11540
      %v11608 = vunpack.c.l.b16 %v11541
      %v11609 = vunpack.c.h.b16 %v11541
      %v11610 = vunpack.c.l.b16 %v11542
      %v11611 = vunpack.c.h.b16 %v11542
      %v11612 = vunpack.c.l.b16 %v11543
      %v11613 = vunpack.c.h.b16 %v11543
      %v11614 = vunpack.c.l.b16 %v11544
      %v11615 = vunpack.c.h.b16 %v11544
      %v11616 = vunpack.c.l.b16 %v11545
      %v11617 = vunpack.c.h.b16 %v11545
      %v11618 = vunpack.c.l.b16 %v11546
      %v11619 = vunpack.c.h.b16 %v11546
      %v11620 = vunpack.c.l.b16 %v11547
      %v11621 = vunpack.c.h.b16 %v11547
      %v11622 = vunpack.c.l.b16 %v11548
      %v11623 = vunpack.c.h.b16 %v11548
      %v11624 = vunpack.c.l.b16 %v11549
      %v11625 = vunpack.c.h.b16 %v11549
      %v11626 = vunpack.c.l.b16 %v11550
      %v11627 = vunpack.c.h.b16 %v11550
      %v11628 = vunpack.c.l.b16 %v11551
      %v11629 = vpack.c.b16 %v11578, %v11578
      %v11630 = vpack.c.b16 %v11579, %v11579
      %v11631 = vpack.c.b16 %v11580, %v11580
      %v11632 = vpack.c.b16 %v11581, %v11581
      %v11633 = vpack.c.b16 %v11582, %v11582
      %v11634 = vpack.c.b16 %v11583, %v11583
      %v11635 = vpack.c.b16 %v11584, %v11584
      %v11636 = vpack.c.b16 %v11585, %v11585
      %v11637 = vpack.c.b16 %v11586, %v11586
      %v11638 = vpack.c.b16 %v11587, %v11587
      %v11639 = vpack.c.b16 %v11588, %v11588
      %v11640 = vpack.c.b16 %v11589, %v11589
      %v11641 = vpack.c.b16 %v11590, %v11590
      %v11642 = vpack.c.b16 %v11591, %v11591
      %v11643 = vpack.c.b16 %v11592, %v11592
      %v11644 = vpack.c.b16 %v11593, %v11593
      %v11645 = vpack.c.b16 %v11594, %v11594
      %v11646 = vpack.c.b16 %v11595, %v11595
      %v11647 = vpack.c.b16 %v11596, %v11596
      %v11648 = vpack.c.b16 %v11597, %v11597
      %v11649 = vpack.c.b16 %v11598, %v11598
      %v11650 = vpack.c.b16 %v11599, %v11599
      %v11651 = vpack.c.b16 %v11600, %v11600
      %v11652 = vpack.c.b16 %v11601, %v11601
      %v11653 = vpack.c.b16 %v11602, %v11602
      %v11654 = vpack.c.b16 %v11603, %v11603
      %v11655 = vpack.c.b16 %v11604, %v11604
      %v11656 = vpack.c.b16 %v11605, %v11605
      %v11657 = vpack.c.b16 %v11606, %v11606
      %v11658 = vpack.c.b16 %v11607, %v11607
      %v11659 = vpack.c.b16 %v11608, %v11608
      %v11660 = vpack.c.b16 %v11609, %v11609
      %v11661 = vpack.c.b16 %v11610, %v11610
      %v11662 = vpack.c.b16 %v11611, %v11611
      %v11663 = vpack.c.b16 %v11612, %v11612
      %v11664 = vpack.c.b16 %v11613, %v11613
      %v11665 = vpack.c.b16 %v11614, %v11614
      %v11666 = vpack.c.b16 %v11615, %v11615
      %v11667 = vpack.c.b16 %v11616, %v11616
      %v11668 = vpack.c.b16 %v11617, %v11617
      %v11669 = vpack.c.b16 %v11618, %v11618
      %v11670 = vpack.c.b16 %v11619, %v11619
      %v11671 = vpack.c.b16 %v11620, %v11620
      %v11672 = vpack.c.b16 %v11621, %v11621
      %v11673 = vpack.c.b16 %v11622, %v11622
      %v11674 = vpack.c.b16 %v11623, %v11623
      %v11675 = vpack.c.b16 %v11624, %v11624
      %v11676 = vpack.c.b16 %v11625, %v11625
      %v11677 = vpack.c.b16 %v11626, %v11626
      %v11678 = vpack.c.b16 %v11627, %v11627
      %v11679 = vpack.c.b16 %v11628, %v11628
      %vm11731 = vcmask 125952
      %11732 = vst.msk [vmem:[%s191] sm:$0xf] %vm11731, %v11629
      %11733 = vst.msk [vmem:[%s191 + $0x4] sm:$0xf] %vm11731, %v11630
      %11734 = vst.msk [vmem:[%s191 + $0x8] sm:$0xf] %vm11731, %v11631
      %11735 = vst.msk [vmem:[%s191 + $0xc] sm:$0xf] %vm11731, %v11632
      %11736 = vst.msk [vmem:[%s191 + $0x10] sm:$0xf] %vm11731, %v11633
      %11737 = vst.msk [vmem:[%s191 + $0x14] sm:$0xf] %vm11731, %v11634
      %11738 = vst.msk [vmem:[%s191 + $0x18] sm:$0xf] %vm11731, %v11635
      %11739 = vst.msk [vmem:[%s191 + $0x1c] sm:$0xf] %vm11731, %v11636
      %11740 = vst.msk [vmem:[%s191 + $0x20] sm:$0xf] %vm11731, %v11637
      %11741 = vst.msk [vmem:[%s191 + $0x24] sm:$0xf] %vm11731, %v11638
      %11742 = vst.msk [vmem:[%s191 + $0x28] sm:$0xf] %vm11731, %v11639
      %11743 = vst.msk [vmem:[%s191 + $0x2c] sm:$0xf] %vm11731, %v11640
      %11744 = vst.msk [vmem:[%s191 + $0x30] sm:$0xf] %vm11731, %v11641
      %11745 = vst.msk [vmem:[%s191 + $0x34] sm:$0xf] %vm11731, %v11642
      %11746 = vst.msk [vmem:[%s191 + $0x38] sm:$0xf] %vm11731, %v11643
      %11747 = vst.msk [vmem:[%s191 + $0x3c] sm:$0xf] %vm11731, %v11644
      %11748 = vst.msk [vmem:[%s191 + $0x40] sm:$0xf] %vm11731, %v11645
      %11749 = vst.msk [vmem:[%s191 + $0x44] sm:$0xf] %vm11731, %v11646
      %11750 = vst.msk [vmem:[%s191 + $0x48] sm:$0xf] %vm11731, %v11647
      %11751 = vst.msk [vmem:[%s191 + $0x4c] sm:$0xf] %vm11731, %v11648
      %11752 = vst.msk [vmem:[%s191 + $0x50] sm:$0xf] %vm11731, %v11649
      %11753 = vst.msk [vmem:[%s191 + $0x54] sm:$0xf] %vm11731, %v11650
      %11754 = vst.msk [vmem:[%s191 + $0x58] sm:$0xf] %vm11731, %v11651
      %11755 = vst.msk [vmem:[%s191 + $0x5c] sm:$0xf] %vm11731, %v11652
      %11756 = vst.msk [vmem:[%s191 + $0x60] sm:$0xf] %vm11731, %v11653
      %11757 = vst.msk [vmem:[%s191 + $0x64] sm:$0xf] %vm11731, %v11654
      %11758 = vst.msk [vmem:[%s191 + $0x68] sm:$0xf] %vm11731, %v11655
      %11759 = vst.msk [vmem:[%s191 + $0x6c] sm:$0xf] %vm11731, %v11656
      %11760 = vst.msk [vmem:[%s191 + $0x70] sm:$0xf] %vm11731, %v11657
      %11761 = vst.msk [vmem:[%s191 + $0x74] sm:$0xf] %vm11731, %v11658
      %11762 = vst.msk [vmem:[%s191 + $0x78] sm:$0xf] %vm11731, %v11659
      %11763 = vst.msk [vmem:[%s191 + $0x7c] sm:$0xf] %vm11731, %v11660
      %11764 = vst.msk [vmem:[%s191 + $0x80] sm:$0xf] %vm11731, %v11661
      %11765 = vst.msk [vmem:[%s191 + $0x84] sm:$0xf] %vm11731, %v11662
      %11766 = vst.msk [vmem:[%s191 + $0x88] sm:$0xf] %vm11731, %v11663
      %11767 = vst.msk [vmem:[%s191 + $0x8c] sm:$0xf] %vm11731, %v11664
      %11768 = vst.msk [vmem:[%s191 + $0x90] sm:$0xf] %vm11731, %v11665
      %11769 = vst.msk [vmem:[%s191 + $0x94] sm:$0xf] %vm11731, %v11666
      %11770 = vst.msk [vmem:[%s191 + $0x98] sm:$0xf] %vm11731, %v11667
      %11771 = vst.msk [vmem:[%s191 + $0x9c] sm:$0xf] %vm11731, %v11668
      %11772 = vst.msk [vmem:[%s191 + $0xa0] sm:$0xf] %vm11731, %v11669
      %11773 = vst.msk [vmem:[%s191 + $0xa4] sm:$0xf] %vm11731, %v11670
      %11774 = vst.msk [vmem:[%s191 + $0xa8] sm:$0xf] %vm11731, %v11671
      %11775 = vst.msk [vmem:[%s191 + $0xac] sm:$0xf] %vm11731, %v11672
      %11776 = vst.msk [vmem:[%s191 + $0xb0] sm:$0xf] %vm11731, %v11673
      %11777 = vst.msk [vmem:[%s191 + $0xb4] sm:$0xf] %vm11731, %v11674
      %11778 = vst.msk [vmem:[%s191 + $0xb8] sm:$0xf] %vm11731, %v11675
      %11779 = vst.msk [vmem:[%s191 + $0xbc] sm:$0xf] %vm11731, %v11676
      %11780 = vst.msk [vmem:[%s191 + $0xc0] sm:$0xf] %vm11731, %v11677
      %11781 = vst.msk [vmem:[%s191 + $0xc4] sm:$0xf] %vm11731, %v11678
      %11782 = vst.msk [vmem:[%s191 + $0xc8] sm:$0xf] %vm11731, %v11679
      %s11783 = sadd.s32 %s18, %s19
      %s11784 = smul.u32 51, %s11783
      %p11785 = scmp.lt.s32.totalorder %s11784, 101
      %s11786 = scalar_select %p11785, %s11784, 101
      %s11787 = smul.addr %s11786, 4
      %s11788 = scalar_lea.vmem %s3, %s11787
      // Predicated region
      $region33: #{conv2d_nhwc.1} parent=31 // pred_check
        %p11789 = pneg %p114
      $region34: #{conv2d_nhwc.1} parent=31 // pred_check_branch
        %11791 = sbr.rel (%p11789) target = $region36
      $region35: #{conv2d_nhwc.1} parent=31 // pred_region
        %s11792 = sadd.s32 %s18, %s19
        %s11793 = smul.u32 51, %s11792
      $region36: #{conv2d_nhwc.1} parent=31 // pred_fallthru
        _
    $region32: #{conv2d_nhwc.1} parent=5 // pred_fallthru
      _
    %p11794 = scmp.le.s32.totalorder 2, %s9
    // Predicated region
    $region37: #{conv2d_nhwc.1} parent=5 // pred_check
      %p11795 = pneg %p11794
    $region38: #{conv2d_nhwc.1} parent=5 // pred_check_branch
      %11797 = sbr.rel (%p11795) target = $region40
    $region39: #{conv2d_nhwc.1} parent=5 // pred_region
      %s11798 = ssub.s32 %s9, 2
      // Predicated region
      $region41: #{conv2d_nhwc.1} parent=39 // pred_check
        %p11799 = pneg %p120
      $region42: #{conv2d_nhwc.1} parent=39 // pred_check_branch
        %11801 = sbr.rel (%p11799) target = $region44
      $region43: #{conv2d_nhwc.1} parent=39 // pred_region
        %s11802 = sadd.s32 %s20, %s21
        %s11803 = smul.u32 51, %s11802
        %p11804 = scmp.lt.s32.totalorder %s11803, 101
        %s11805 = scalar_select %p11804, %s11803, 101
        %s11806 = smul.addr %s11805, 4
        %s11807 = scalar_lea.vmem %s3, %s11806
      $region44: #{conv2d_nhwc.1} parent=39 // pred_fallthru
        _
    $region40: #{conv2d_nhwc.1} parent=5 // pred_fallthru
      _
  $region6: #{conv2d_nhwc.1} parent=0 // loop_footer
    %s13 = sadd.s32 1, %s9
  $region7: #{conv2d_nhwc.1} parent=0 // loop_footer_branch
    %8 = sbr.rel target = $region3
  $region8: #{conv2d_nhwc.1} parent=0 // loop_exit
    _

</llo_original>
